<compile_context>
chip_gen: v6e
topology: v6e:2x2x1
jax: 0.10.0
libtpu: 0.0.40
codegen_flags: <defaults>
</compile_context>

<pallas_src>
import math
from functools import partial

import jax
import jax.numpy as jnp
from jax.experimental import pallas as pl
from jax.experimental.pallas import tpu as pltpu

NEG_INF = -1e9
LN_EPS = 1e-5
VOCAB_TILE = 256      # 256-wide output tiles fill the 256-wide MXU on v6e / v7x


# --------------------------------------------------------------------- in-kernel helpers

def _ln(h, g, b):
    # LayerNorm over the last dim, f32 math.
    mu = jnp.mean(h, axis=-1, keepdims=True)
    var = jnp.mean(jnp.square(h - mu), axis=-1, keepdims=True)
    return (h - mu) * jax.lax.rsqrt(var + LN_EPS) * g + b


def _split_heads(m, b, t, nhead, dh):
    # (B*T, E) -> (B*H, T, dh)
    return jnp.swapaxes(m.reshape(b, t, nhead, dh), 1, 2).reshape(b * nhead, t, dh)


def _merge_heads(m, b, t, nhead, dh):
    # (B*H, T, dh) -> (B*T, E)
    return jnp.swapaxes(m.reshape(b, nhead, t, dh), 1, 2).reshape(b * t, nhead * dh)


def _attn_core(q, k, v, bias, wo, bo, b, tq, tk, nhead):
    # q: (B*Tq, E) f32 (softmax scale already folded into Wq), k/v: (B*Tk, E) f32,
    # bias: (B, 1 or Tq, Tk) f32 additive, wo: (E, E) bf16, bo: (1, E) f32.
    e = q.shape[-1]
    dh = e // nhead
    qh = _split_heads(q, b, tq, nhead, dh).astype(jnp.bfloat16)
    kh = _split_heads(k, b, tk, nhead, dh).astype(jnp.bfloat16)
    vh = _split_heads(v, b, tk, nhead, dh).astype(jnp.bfloat16)

    # TODO(synk): flash-style KV tiling with online-softmax accumulators for long
    # sequences (bounds the (B*H, Tq, Tk) f32 scores; critical on v7x's 64 MiB VMEM).
    s = jnp.einsum('gqd,gkd->gqk', qh, kh, preferred_element_type=jnp.float32)
    s = s.reshape(b, nhead, tq, tk) + bias[:, None]          # bias stays f32 (-1e9 masks)
    s = s - jnp.max(s, axis=-1, keepdims=True)
    p = jnp.exp(s)
    p = p * pl.reciprocal(jnp.sum(p, axis=-1, keepdims=True), approx=True)

    ctx = jnp.einsum('gqk,gkd->gqd',
                     p.reshape(b * nhead, tq, tk).astype(jnp.bfloat16), vh,
                     preferred_element_type=jnp.float32)
    ctx = _merge_heads(ctx, b, tq, nhead, dh)
    return jnp.dot(ctx.astype(jnp.bfloat16), wo, preferred_element_type=jnp.float32) + bo


def _self_attn(x2d, bias, wqkv, bqkv, wo, bo, b, t, nhead):
    # One lane-dense (B*T, E) x (E, 3E) projection for Q, K and V.
    e = x2d.shape[-1]
    qkv = jnp.dot(x2d.astype(jnp.bfloat16), wqkv, preferred_element_type=jnp.float32) + bqkv
    return _attn_core(qkv[:, :e], qkv[:, e:2 * e], qkv[:, 2 * e:], bias, wo, bo,
                      b, t, t, nhead)


def _cross_attn(q2d, kv2d, bias, wq, bq, wkv, bkv, wo, bo, b, tq, tk, nhead):
    e = q2d.shape[-1]
    q = jnp.dot(q2d.astype(jnp.bfloat16), wq, preferred_element_type=jnp.float32) + bq
    kv = jnp.dot(kv2d.astype(jnp.bfloat16), wkv, preferred_element_type=jnp.float32) + bkv
    return _attn_core(q, kv[:, :e], kv[:, e:], bias, wo, bo, b, tq, tk, nhead)


def _ffn(x, w1, b1, w2, b2):
    h = jnp.dot(x.astype(jnp.bfloat16), w1, preferred_element_type=jnp.float32) + b1
    h = jnp.maximum(h, 0.0)
    return jnp.dot(h.astype(jnp.bfloat16), w2, preferred_element_type=jnp.float32) + b2


# ----------------------------------------------------------------------------- kernels

def _enc_stack_kernel(x_ref, kp_ref,
                      wqkv_ref, bqkv_ref, wo_ref, bo_ref,
                      g1_ref, b1_ref,
                      w1_ref, fb1_ref, w2_ref, fb2_ref,
                      g2_ref, b2_ref,
                      gf_ref, bf_ref,
                      out_ref, *, nhead):
    # Whole encoder stack; grid axis = layer. Residual stream stays in out_ref (VMEM).
    l = pl.program_id(0)

    @pl.when(l == 0)
    def _():
        out_ref[...] = x_ref[...]                 # seed the VMEM-resident residual stream

    x = out_ref[...]                              # (B, Ts, E) f32
    b, t, e = x.shape
    x2 = x.reshape(b * t, e)

    sa = _self_attn(x2, kp_ref[...], wqkv_ref[0], bqkv_ref[0], wo_ref[0], bo_ref[0],
                    b, t, nhead)
    h = _ln(x2 + sa, g1_ref[0], b1_ref[0])
    ff = _ffn(h, w1_ref[0], fb1_ref[0], w2_ref[0], fb2_ref[0])
    y = _ln(h + ff, g2_ref[0], b2_ref[0])
    out_ref[...] = y.reshape(b, t, e)

    @pl.when(l == pl.num_programs(0) - 1)
    def _():                                       # final encoder norm fused in
        out_ref[...] = _ln(y, gf_ref[...], bf_ref[...]).reshape(b, t, e)


def _dec_stack_kernel(x_ref, mem_ref, tkp_ref, skp_ref,
                      s_wqkv_ref, s_bqkv_ref, s_wo_ref, s_bo_ref,
                      g1_ref, b1_ref,
                      c_wq_ref, c_bq_ref, c_wkv_ref, c_bkv_ref, c_wo_ref, c_bo_ref,
                      g2_ref, b2_ref,
                      w1_ref, fb1_ref, w2_ref, fb2_ref,
                      g3_ref, b3_ref,
                      gf_ref, bf_ref,
                      out_ref, *, nhead):
    # Whole decoder stack; grid axis = layer.
    l = pl.program_id(0)

    @pl.when(l == 0)
    def _():
        out_ref[...] = x_ref[...]

    x = out_ref[...]                              # (B, Tt, E)
    b, tt, e = x.shape
    mem = mem_ref[...]                            # (B, Ts, E)
    ts = mem.shape[1]
    x2 = x.reshape(b * tt, e)
    mem2 = mem.reshape(b * ts, e)

    # Causal mask built in-kernel (no (B, Tt, Tt) HBM tensor).
    # TODO(synk): generate per-KV-tile masks inside a flash loop for long sequences.
    row = jax.lax.broadcasted_iota(jnp.int32, (tt, tt), 0)
    col = jax.lax.broadcasted_iota(jnp.int32, (tt, tt), 1)
    causal = jnp.where(col > row, NEG_INF, 0.0).astype(jnp.float32)
    self_bias = causal[None] + tkp_ref[...]       # (B, Tt, Tt)

    sa = _self_attn(x2, self_bias, s_wqkv_ref[0], s_bqkv_ref[0], s_wo_ref[0], s_bo_ref[0],
                    b, tt, nhead)
    h = _ln(x2 + sa, g1_ref[0], b1_ref[0])

    ca = _cross_attn(h, mem2, skp_ref[...], c_wq_ref[0], c_bq_ref[0],
                     c_wkv_ref[0], c_bkv_ref[0], c_wo_ref[0], c_bo_ref[0],
                     b, tt, ts, nhead)
    h = _ln(h + ca, g2_ref[0], b2_ref[0])

    ff = _ffn(h, w1_ref[0], fb1_ref[0], w2_ref[0], fb2_ref[0])
    y = _ln(h + ff, g3_ref[0], b3_ref[0])
    out_ref[...] = y.reshape(b, tt, e)

    @pl.when(l == pl.num_programs(0) - 1)
    def _():                                       # final decoder norm fused in
        out_ref[...] = _ln(y, gf_ref[...], bf_ref[...]).reshape(b, tt, e)


def _generator_kernel(x_ref, w_ref, b_ref, out_ref):
    # Matmul-only (decoder output is already LayerNormed inside the decoder stack).
    out_ref[...] = jnp.dot(x_ref[...].astype(jnp.bfloat16), w_ref[...],
                           preferred_element_type=jnp.float32) + b_ref[...]


# ----------------------------------------------------------------------------- wrappers

_ENC_KEYS = ('wqkv', 'bqkv', 'wo', 'bo', 'g1', 'b1',
             'w1', 'fb1', 'w2', 'fb2', 'g2', 'b2')
_DEC_KEYS = ('s_wqkv', 's_bqkv', 's_wo', 's_bo', 'g1', 'b1',
             'c_wq', 'c_bq', 'c_wkv', 'c_bkv', 'c_wo', 'c_bo', 'g2', 'b2',
             'w1', 'fb1', 'w2', 'fb2', 'g3', 'b3')


def _layer_spec(a):
    # Per-layer weight slab: grid step l selects layer l's block; the default
    # double-buffering prefetches layer l+1's weights during layer l's compute.
    tail = tuple(a.shape[1:])
    zeros = (0,) * len(tail)
    return pl.BlockSpec((1,) + tail, lambda l, z=zeros: (l,) + z)


def _const_spec(a):
    # Whole-array block, identical for every layer step (loaded once, stays in VMEM).
    # TODO(synk): pipeline_mode=pl.Buffered(1) here (constant index -> double-buffering
    # buys nothing) to trim the resident activation footprint on v7x.
    zeros = (0,) * a.ndim
    return pl.BlockSpec(tuple(a.shape), lambda l, z=zeros: z)


def encoder_stack(x, src_kp, ep, fin, nhead):
    weights = [ep[k] for k in _ENC_KEYS]
    n_layers = weights[0].shape[0]
    in_specs = ([_const_spec(x), _const_spec(src_kp)]
                + [_layer_spec(w) for w in weights]
                + [_const_spec(fin['g']), _const_spec(fin['b'])])
    return pl.pallas_call(
        partial(_enc_stack_kernel, nhead=nhead),
        grid=(n_layers,),
        in_specs=in_specs,
        out_specs=_const_spec(x),
        out_shape=jax.ShapeDtypeStruct(x.shape, jnp.float32),
        # layer axis revisits the same output block -> must be "arbitrary"
        compiler_params=pltpu.CompilerParams(dimension_semantics=("arbitrary",)),
    )(x, src_kp, *weights, fin['g'], fin['b'])


def decoder_stack(x, mem, tgt_kp, src_kp, dp, fin, nhead):
    weights = [dp[k] for k in _DEC_KEYS]
    n_layers = weights[0].shape[0]
    in_specs = ([_const_spec(x), _const_spec(mem), _const_spec(tgt_kp), _const_spec(src_kp)]
                + [_layer_spec(w) for w in weights]
                + [_const_spec(fin['g']), _const_spec(fin['b'])])
    return pl.pallas_call(
        partial(_dec_stack_kernel, nhead=nhead),
        grid=(n_layers,),
        in_specs=in_specs,
        out_specs=_const_spec(x),
        out_shape=jax.ShapeDtypeStruct(x.shape, jnp.float32),
        compiler_params=pltpu.CompilerParams(dimension_semantics=("arbitrary",)),
    )(x, mem, tgt_kp, src_kp, *weights, fin['g'], fin['b'])


def generator(x2d, w_pad, b_pad):
    m, e = x2d.shape
    vp = w_pad.shape[1]
    nv = vp // VOCAB_TILE
    return pl.pallas_call(
        _generator_kernel,
        grid=(nv,),
        in_specs=[pl.BlockSpec((m, e), lambda j: (0, 0)),
                  pl.BlockSpec((e, VOCAB_TILE), lambda j: (0, j)),
                  pl.BlockSpec((1, VOCAB_TILE), lambda j: (0, j))],
        out_specs=pl.BlockSpec((m, VOCAB_TILE), lambda j: (0, j)),
        out_shape=jax.ShapeDtypeStruct((m, vp), jnp.float32),
        compiler_params=pltpu.CompilerParams(dimension_semantics=("parallel",)),
    )(x2d, w_pad, b_pad)


# ----------------------------------------------------------------------------- model

def forward(params, src, tgt, src_padding_mask, tgt_padding_mask, *, nhead, tgt_vocab):
    e = params['pe'].shape[1]
    scale = math.sqrt(e)
    bsz, ts = src.shape
    _, tt = tgt.shape

    # token-embedding gather + sqrt(E) scale + positional encoding in XLA glue
    # (fuses with the gather; dropout is identity at eval).
    # TODO(synk): Pallas DMA-gather kernel for very large vocabularies.
    src_x = jnp.take(params['src_emb'], src, axis=0) * scale + params['pe'][:ts]
    tgt_x = jnp.take(params['tgt_emb'], tgt, axis=0) * scale + params['pe'][:tt]

    # thin additive key-padding rows; full (B, Tq, Tk) biases are built in-kernel
    src_kp = jnp.where(src_padding_mask, NEG_INF, 0.0).astype(jnp.float32)[:, None, :]
    tgt_kp = jnp.where(tgt_padding_mask, NEG_INF, 0.0).astype(jnp.float32)[:, None, :]

    mem = encoder_stack(src_x, src_kp, params['enc'], params['enc_norm'], nhead)
    out = decoder_stack(tgt_x, mem, tgt_kp, src_kp, params['dec'], params['dec_norm'], nhead)

    logits2d = generator(out.reshape(bsz * tt, e),
                         params['generator']['w'], params['generator']['b'])
    return logits2d[:, :tgt_vocab].reshape(bsz, tt, tgt_vocab)


# ----------------------------------------------------------------------------- params

def init_params(key, *, num_enc, num_dec, emb_size, nhead, dim_ff,
                src_vocab, tgt_vocab, max_pe_len):
    keys = iter(jax.random.split(key, 1024))
    dh = emb_size // nhead
    q_scale = 1.0 / math.sqrt(dh)          # softmax scale, folded into Wq at init

    def xav(shape):
        fan_in, fan_out = shape
        lim = math.sqrt(6.0 / (fan_in + fan_out))
        return jax.random.uniform(next(keys), shape, jnp.float32, -lim, lim)

    def ones(shape):
        return jnp.ones(shape, jnp.float32)

    def zeros(shape):
        return jnp.zeros(shape, jnp.float32)

    def enc_layer():
        wq = xav((emb_size, emb_size)) * q_scale
        wk = xav((emb_size, emb_size))
        wv = xav((emb_size, emb_size))
        return dict(
            wqkv=jnp.concatenate([wq, wk, wv], axis=1).astype(jnp.bfloat16),
            bqkv=zeros((1, 3 * emb_size)),
            wo=xav((emb_size, emb_size)).astype(jnp.bfloat16),
            bo=zeros((1, emb_size)),
            g1=ones((1, emb_size)), b1=zeros((1, emb_size)),
            w1=xav((emb_size, dim_ff)).astype(jnp.bfloat16),
            fb1=zeros((1, dim_ff)),
            w2=xav((dim_ff, emb_size)).astype(jnp.bfloat16),
            fb2=zeros((1, emb_size)),
            g2=ones((1, emb_size)), b2=zeros((1, emb_size)),
        )

    def dec_layer():
        s_wq = xav((emb_size, emb_size)) * q_scale
        s_wk = xav((emb_size, emb_size))
        s_wv = xav((emb_size, emb_size))
        c_wk = xav((emb_size, emb_size))
        c_wv = xav((emb_size, emb_size))
        return dict(
            s_wqkv=jnp.concatenate([s_wq, s_wk, s_wv], axis=1).astype(jnp.bfloat16),
            s_bqkv=zeros((1, 3 * emb_size)),
            s_wo=xav((emb_size, emb_size)).astype(jnp.bfloat16),
            s_bo=zeros((1, emb_size)),
            g1=ones((1, emb_size)), b1=zeros((1, emb_size)),
            c_wq=(xav((emb_size, emb_size)) * q_scale).astype(jnp.bfloat16),
            c_bq=zeros((1, emb_size)),
            c_wkv=jnp.concatenate([c_wk, c_wv], axis=1).astype(jnp.bfloat16),
            c_bkv=zeros((1, 2 * emb_size)),
            c_wo=xav((emb_size, emb_size)).astype(jnp.bfloat16),
            c_bo=zeros((1, emb_size)),
            g2=ones((1, emb_size)), b2=zeros((1, emb_size)),
            w1=xav((emb_size, dim_ff)).astype(jnp.bfloat16),
            fb1=zeros((1, dim_ff)),
            w2=xav((dim_ff, emb_size)).astype(jnp.bfloat16),
            fb2=zeros((1, emb_size)),
            g3=ones((1, emb_size)), b3=zeros((1, emb_size)),
        )

    def stack_layers(make, n):
        layers = [make() for _ in range(n)]
        return {k: jnp.stack([lyr[k] for lyr in layers], axis=0) for k in layers[0]}

    # sinusoidal positional-encoding buffer
    position = jnp.arange(max_pe_len, dtype=jnp.float32)[:, None]
    div_term = jnp.exp(jnp.arange(0, emb_size, 2, dtype=jnp.float32)
                       * (-math.log(10000.0) / emb_size))
    pe = jnp.zeros((max_pe_len, emb_size), jnp.float32)
    pe = pe.at[:, 0::2].set(jnp.sin(position * div_term))
    pe = pe.at[:, 1::2].set(jnp.cos(position * div_term))

    # generator weight/bias padded ONCE to a lane-dense multiple of VOCAB_TILE
    vp = ((tgt_vocab + VOCAB_TILE - 1) // VOCAB_TILE) * VOCAB_TILE
    gen_w = jnp.pad(xav((emb_size, tgt_vocab)),
                    ((0, 0), (0, vp - tgt_vocab))).astype(jnp.bfloat16)
    gen_b = jnp.pad(zeros((1, tgt_vocab)), ((0, 0), (0, vp - tgt_vocab)))

    return dict(
        src_emb=xav((src_vocab, emb_size)),
        tgt_emb=xav((tgt_vocab, emb_size)),
        pe=pe,
        enc=stack_layers(enc_layer, num_enc),
        enc_norm=dict(g=ones((1, emb_size)), b=zeros((1, emb_size))),
        dec=stack_layers(dec_layer, num_dec),
        dec_norm=dict(g=ones((1, emb_size)), b=zeros((1, emb_size))),
        generator=dict(w=gen_w, b=gen_b),
    )


# ----------------------------------------------------------------------------- main

if __name__ == "__main__":
    key = jax.random.PRNGKey(0)
    B, T_SRC, T_TGT = 2, 8, 8
    EMB, NHEAD, DIM_FF = 128, 4, 256          # E multiple of 128 -> lane-dense activations
    SRC_VOCAB, TGT_VOCAB = 48, 40
    NUM_ENC, NUM_DEC = 2, 2
    MAX_PE_LEN = 64

    pk, sk, tk = jax.random.split(key, 3)
    params = init_params(pk, num_enc=NUM_ENC, num_dec=NUM_DEC, emb_size=EMB, nhead=NHEAD,
                         dim_ff=DIM_FF, src_vocab=SRC_VOCAB, tgt_vocab=TGT_VOCAB,
                         max_pe_len=MAX_PE_LEN)

    src = jax.random.randint(sk, (B, T_SRC), 0, SRC_VOCAB, dtype=jnp.int32)
    tgt = jax.random.randint(tk, (B, T_TGT), 0, TGT_VOCAB, dtype=jnp.int32)
    # True = padding position (ignored), PyTorch key_padding_mask convention.
    src_padding_mask = jnp.zeros((B, T_SRC), jnp.bool_).at[1, -2:].set(True)
    tgt_padding_mask = jnp.zeros((B, T_TGT), jnp.bool_).at[1, -1:].set(True)

    fwd = jax.jit(partial(forward, nhead=NHEAD, tgt_vocab=TGT_VOCAB))
    logits = fwd(params, src, tgt, src_padding_mask, tgt_padding_mask)
    jax.block_until_ready(logits)

    assert logits.shape == (B, T_TGT, TGT_VOCAB), logits.shape
    assert bool(jnp.all(jnp.isfinite(logits)))
    print("KERNEL_OK")
</pallas_src>

<mosaic_0001>
module attributes {stable_mosaic.version = 11 : i64} {
  func.func @_generator_kernel(%arg0: i32, %arg1: memref<16x128xf32, #tpu.memory_space<vmem>>, %arg2: memref<128x256xbf16, #tpu.memory_space<vmem>>, %arg3: memref<1x256xf32, #tpu.memory_space<vmem>>, %arg4: memref<16x256xf32, #tpu.memory_space<vmem>>) attributes {dimension_semantics = [#tpu.dimension_semantics<parallel>], iteration_bounds = array<i64: 1>, scalar_prefetch = 0 : i64, scratch_operands = 0 : i64, tpu.core_type = #tpu.core_type<tc>, window_params = [{pipeline_mode = #tpu.pipeline_mode<synchronous>, transform_indices = @transform_0, window_bounds = array<i64: 16, 128>}, {transform_indices = @transform_1, window_bounds = array<i64: 128, 256>}, {transform_indices = @transform_2, window_bounds = array<i64: 1, 256>}, {transform_indices = @transform_3, window_bounds = array<i64: 16, 256>}]} {
    %c0 = arith.constant 0 : index
    %c0_0 = arith.constant 0 : index
    %0 = vector.load %arg1[%c0, %c0_0] : memref<16x128xf32, #tpu.memory_space<vmem>>, vector<16x128xf32>
    %1 = arith.truncf %0 : vector<16x128xf32> to vector<16x128xbf16>
    %c0_1 = arith.constant 0 : index
    %c0_2 = arith.constant 0 : index
    %2 = vector.load %arg2[%c0_1, %c0_2] : memref<128x256xbf16, #tpu.memory_space<vmem>>, vector<128x256xbf16>
    %cst = arith.constant dense<0.000000e+00> : vector<16x256xf32>
    %3 = tpu.matmul %1, %2, %cst {dimension_numbers = #tpu.dot_dimension_numbers<[1], [0], [0], [1], [0, 0, 1, 1], [], []>} : vector<16x128xbf16>, vector<128x256xbf16>, vector<16x256xf32> -> vector<16x256xf32>
    %c0_3 = arith.constant 0 : index
    %c0_4 = arith.constant 0 : index
    %4 = vector.load %arg3[%c0_3, %c0_4] : memref<1x256xf32, #tpu.memory_space<vmem>>, vector<1x256xf32>
    %5 = vector.broadcast %4 : vector<1x256xf32> to vector<16x256xf32>
    %6 = arith.addf %3, %5 : vector<16x256xf32>
    %c0_5 = arith.constant 0 : index
    %c0_6 = arith.constant 0 : index
    %7 = vector.load %arg4[%c0_5, %c0_6] : memref<16x256xf32, #tpu.memory_space<vmem>>, vector<16x256xf32>
    tpu.vector_store %arg4[%c0_5, %c0_6], %6 {strides = array<i32>} : memref<16x256xf32, #tpu.memory_space<vmem>>, vector<16x256xf32>,
    return
  }
  func.func @transform_0(%arg0: i32) -> (i32, i32) {
    %c0_i32 = arith.constant 0 : i32
    %c0_i32_0 = arith.constant 0 : i32
    %c0_i32_1 = arith.constant 0 : i32
    return %c0_i32, %c0_i32_0 : i32, i32
  }
  func.func @transform_1(%arg0: i32) -> (i32, i32) {
    %c0_i32 = arith.constant 0 : i32
    %c0_i32_0 = arith.constant 0 : i32
    return %c0_i32, %arg0 : i32, i32
  }
  func.func @transform_2(%arg0: i32) -> (i32, i32) {
    %c0_i32 = arith.constant 0 : i32
    %c0_i32_0 = arith.constant 0 : i32
    return %c0_i32, %arg0 : i32, i32
  }
  func.func @transform_3(%arg0: i32) -> (i32, i32) {
    %c0_i32 = arith.constant 0 : i32
    %c0_i32_0 = arith.constant 0 : i32
    return %c0_i32, %arg0 : i32, i32
  }
}

module attributes {stable_mosaic.version = 11 : i64} {
  func.func @_enc_stack_kernel(%arg0: i32, %arg1: memref<2x8x128xf32, #tpu.memory_space<vmem>>, %arg2: memref<2x1x8xf32, #tpu.memory_space<vmem>>, %arg3: memref<1x128x384xbf16, #tpu.memory_space<vmem>>, %arg4: memref<1x1x384xf32, #tpu.memory_space<vmem>>, %arg5: memref<1x128x128xbf16, #tpu.memory_space<vmem>>, %arg6: memref<1x1x128xf32, #tpu.memory_space<vmem>>, %arg7: memref<1x1x128xf32, #tpu.memory_space<vmem>>, %arg8: memref<1x1x128xf32, #tpu.memory_space<vmem>>, %arg9: memref<1x128x256xbf16, #tpu.memory_space<vmem>>, %arg10: memref<1x1x256xf32, #tpu.memory_space<vmem>>, %arg11: memref<1x256x128xbf16, #tpu.memory_space<vmem>>, %arg12: memref<1x1x128xf32, #tpu.memory_space<vmem>>, %arg13: memref<1x1x128xf32, #tpu.memory_space<vmem>>, %arg14: memref<1x1x128xf32, #tpu.memory_space<vmem>>, %arg15: memref<1x128xf32, #tpu.memory_space<vmem>>, %arg16: memref<1x128xf32, #tpu.memory_space<vmem>>, %arg17: memref<2x8x128xf32, #tpu.memory_space<vmem>>) attributes {dimension_semantics = [#tpu.dimension_semantics<arbitrary>], iteration_bounds = array<i64: 2>, scalar_prefetch = 0 : i64, scratch_operands = 0 : i64, tpu.core_type = #tpu.core_type<tc>, window_params = [{pipeline_mode = #tpu.pipeline_mode<synchronous>, transform_indices = @transform_0, window_bounds = array<i64: 2, 8, 128>}, {pipeline_mode = #tpu.pipeline_mode<synchronous>, transform_indices = @transform_1, window_bounds = array<i64: 2, 1, 8>}, {transform_indices = @transform_2, window_bounds = array<i64: 1, 128, 384>}, {transform_indices = @transform_3, window_bounds = array<i64: 1, 1, 384>}, {transform_indices = @transform_4, window_bounds = array<i64: 1, 128, 128>}, {transform_indices = @transform_5, window_bounds = array<i64: 1, 1, 128>}, {transform_indices = @transform_6, window_bounds = array<i64: 1, 1, 128>}, {transform_indices = @transform_7, window_bounds = array<i64: 1, 1, 128>}, {transform_indices = @transform_8, window_bounds = array<i64: 1, 128, 256>}, {transform_indices = @transform_9, window_bounds = array<i64: 1, 1, 256>}, {transform_indices = @transform_10, window_bounds = array<i64: 1, 256, 128>}, {transform_indices = @transform_11, window_bounds = array<i64: 1, 1, 128>}, {transform_indices = @transform_12, window_bounds = array<i64: 1, 1, 128>}, {transform_indices = @transform_13, window_bounds = array<i64: 1, 1, 128>}, {pipeline_mode = #tpu.pipeline_mode<synchronous>, transform_indices = @transform_14, window_bounds = array<i64: 1, 128>}, {pipeline_mode = #tpu.pipeline_mode<synchronous>, transform_indices = @transform_15, window_bounds = array<i64: 1, 128>}, {pipeline_mode = #tpu.pipeline_mode<synchronous>, transform_indices = @transform_16, window_bounds = array<i64: 2, 8, 128>}]} {
    %c0_i32 = arith.constant 0 : i32
    %0 = arith.cmpi eq, %arg0, %c0_i32 : i32
    %1 = arith.extui %0 : i1 to i32
    %c0_i32_0 = arith.constant 0 : i32
    %2 = arith.cmpi ne, %1, %c0_i32_0 : i32
    scf.if %2 {
      %c0_64 = arith.constant 0 : index
      %c0_65 = arith.constant 0 : index
      %c0_66 = arith.constant 0 : index
      %135 = vector.load %arg1[%c0_64, %c0_65, %c0_66] : memref<2x8x128xf32, #tpu.memory_space<vmem>>, vector<2x8x128xf32>
      %c0_67 = arith.constant 0 : index
      %c0_68 = arith.constant 0 : index
      %c0_69 = arith.constant 0 : index
      %136 = vector.load %arg17[%c0_67, %c0_68, %c0_69] : memref<2x8x128xf32, #tpu.memory_space<vmem>>, vector<2x8x128xf32>
      tpu.vector_store %arg17[%c0_67, %c0_68, %c0_69], %135 {strides = array<i32>} : memref<2x8x128xf32, #tpu.memory_space<vmem>>, vector<2x8x128xf32>,
    } else {
    }
    %c0 = arith.constant 0 : index
    %c0_1 = arith.constant 0 : index
    %c0_2 = arith.constant 0 : index
    %3 = vector.load %arg17[%c0, %c0_1, %c0_2] : memref<2x8x128xf32, #tpu.memory_space<vmem>>, vector<2x8x128xf32>
    %4 = vector.shape_cast %3 : vector<2x8x128xf32> to vector<16x128xf32>
    %c0_3 = arith.constant 0 : index
    %c0_4 = arith.constant 0 : index
    %c0_5 = arith.constant 0 : index
    %5 = vector.load %arg2[%c0_3, %c0_4, %c0_5] : memref<2x1x8xf32, #tpu.memory_space<vmem>>, vector<2x1x8xf32>
    %c0_6 = arith.constant 0 : index
    %c0_7 = arith.constant 0 : index
    %c0_8 = arith.constant 0 : index
    %6 = vector.load %arg3[%c0_6, %c0_7, %c0_8] : memref<1x128x384xbf16, #tpu.memory_space<vmem>>, vector<1x128x384xbf16>
    %7 = vector.shape_cast %6 : vector<1x128x384xbf16> to vector<128x384xbf16>
    %c0_9 = arith.constant 0 : index
    %c0_10 = arith.constant 0 : index
    %c0_11 = arith.constant 0 : index
    %8 = vector.load %arg4[%c0_9, %c0_10, %c0_11] : memref<1x1x384xf32, #tpu.memory_space<vmem>>, vector<1x1x384xf32>
    %9 = vector.shape_cast %8 : vector<1x1x384xf32> to vector<1x384xf32>
    %c0_12 = arith.constant 0 : index
    %c0_13 = arith.constant 0 : index
    %c0_14 = arith.constant 0 : index
    %10 = vector.load %arg5[%c0_12, %c0_13, %c0_14] : memref<1x128x128xbf16, #tpu.memory_space<vmem>>, vector<1x128x128xbf16>
    %11 = vector.shape_cast %10 : vector<1x128x128xbf16> to vector<128x128xbf16>
    %c0_15 = arith.constant 0 : index
    %c0_16 = arith.constant 0 : index
    %c0_17 = arith.constant 0 : index
    %12 = vector.load %arg6[%c0_15, %c0_16, %c0_17] : memref<1x1x128xf32, #tpu.memory_space<vmem>>, vector<1x1x128xf32>
    %13 = vector.shape_cast %12 : vector<1x1x128xf32> to vector<1x128xf32>
    %14 = arith.truncf %4 : vector<16x128xf32> to vector<16x128xbf16>
    %cst = arith.constant dense<0.000000e+00> : vector<16x384xf32>
    %15 = tpu.matmul %14, %7, %cst {dimension_numbers = #tpu.dot_dimension_numbers<[1], [0], [0], [1], [0, 0, 1, 1], [], []>} : vector<16x128xbf16>, vector<128x384xbf16>, vector<16x384xf32> -> vector<16x384xf32>
    %16 = vector.broadcast %9 : vector<1x384xf32> to vector<16x384xf32>
    %17 = arith.addf %15, %16 : vector<16x384xf32>
    %18 = vector.extract_strided_slice %17 {offsets = [0, 0], sizes = [16, 128], strides = [1, 1]} : vector<16x384xf32> to vector<16x128xf32>
    %19 = vector.extract_strided_slice %17 {offsets = [0, 128], sizes = [16, 128], strides = [1, 1]} : vector<16x384xf32> to vector<16x128xf32>
    %20 = vector.extract_strided_slice %17 {offsets = [0, 256], sizes = [16, 128], strides = [1, 1]} : vector<16x384xf32> to vector<16x128xf32>
    %21 = vector.shape_cast %18 : vector<16x128xf32> to vector<2x8x4x32xf32>
    %22 = tpu.transpose %21, [0, 2, 1, 3] : vector<2x8x4x32xf32> -> vector<2x4x8x32xf32>
    %23 = vector.shape_cast %22 : vector<2x4x8x32xf32> to vector<8x8x32xf32>
    %24 = arith.truncf %23 : vector<8x8x32xf32> to vector<8x8x32xbf16>
    %25 = vector.shape_cast %19 : vector<16x128xf32> to vector<2x8x4x32xf32>
    %26 = tpu.transpose %25, [0, 2, 1, 3] : vector<2x8x4x32xf32> -> vector<2x4x8x32xf32>
    %27 = vector.shape_cast %26 : vector<2x4x8x32xf32> to vector<8x8x32xf32>
    %28 = arith.truncf %27 : vector<8x8x32xf32> to vector<8x8x32xbf16>
    %29 = vector.shape_cast %20 : vector<16x128xf32> to vector<2x8x4x32xf32>
    %30 = tpu.transpose %29, [0, 2, 1, 3] : vector<2x8x4x32xf32> -> vector<2x4x8x32xf32>
    %31 = vector.shape_cast %30 : vector<2x4x8x32xf32> to vector<8x8x32xf32>
    %32 = arith.truncf %31 : vector<8x8x32xf32> to vector<8x8x32xbf16>
    "tpu.trace_start"() <{level = 10 : i32, message = "gqd,gkd->gqk"}> : () -> ()
    %cst_18 = arith.constant dense<0.000000e+00> : vector<8x8x8xf32>
    %33 = tpu.matmul %24, %28, %cst_18 {dimension_numbers = #tpu.dot_dimension_numbers<[2], [2], [1], [1], [0, 0, 0, 1, 1, 1], [0], [0]>} : vector<8x8x32xbf16>, vector<8x8x32xbf16>, vector<8x8x8xf32> -> vector<8x8x8xf32>
    "tpu.trace_stop"() : () -> ()
    %34 = vector.shape_cast %33 : vector<8x8x8xf32> to vector<2x4x8x8xf32>
    %35 = vector.shape_cast %5 : vector<2x1x8xf32> to vector<2x1x1x8xf32>
    %36 = vector.broadcast %35 : vector<2x1x1x8xf32> to vector<2x4x8x8xf32>
    %37 = arith.addf %34, %36 : vector<2x4x8x8xf32>
    %cst_19 = arith.constant dense<0xFF800000> : vector<2x4x8xf32>
    %38 = vector.multi_reduction <maximumf>, %37, %cst_19 [3] : vector<2x4x8x8xf32> to vector<2x4x8xf32>
    %39 = vector.shape_cast %38 : vector<2x4x8xf32> to vector<2x4x8x1xf32>
    %40 = vector.broadcast %39 : vector<2x4x8x1xf32> to vector<2x4x8x8xf32>
    %41 = arith.subf %37, %40 : vector<2x4x8x8xf32>
    %42 = math.exp %41 : vector<2x4x8x8xf32>
    %cst_20 = arith.constant dense<0.000000e+00> : vector<2x4x8xf32>
    %43 = vector.multi_reduction <add>, %42, %cst_20 [3] : vector<2x4x8x8xf32> to vector<2x4x8xf32>
    %44 = vector.shape_cast %43 : vector<2x4x8xf32> to vector<2x4x8x1xf32>
    %45 = tpu.reciprocal %44 {approx = true} : vector<2x4x8x1xf32> -> vector<2x4x8x1xf32>
    %46 = vector.broadcast %45 : vector<2x4x8x1xf32> to vector<2x4x8x8xf32>
    %47 = arith.mulf %42, %46 : vector<2x4x8x8xf32>
    %48 = vector.shape_cast %47 : vector<2x4x8x8xf32> to vector<8x8x8xf32>
    %49 = arith.truncf %48 : vector<8x8x8xf32> to vector<8x8x8xbf16>
    "tpu.trace_start"() <{level = 10 : i32, message = "gqk,gkd->gqd"}> : () -> ()
    %cst_21 = arith.constant dense<0.000000e+00> : vector<8x8x32xf32>
    %50 = tpu.matmul %49, %32, %cst_21 {dimension_numbers = #tpu.dot_dimension_numbers<[2], [1], [1], [2], [0, 0, 0, 1, 1, 2], [0], [0]>} : vector<8x8x8xbf16>, vector<8x8x32xbf16>, vector<8x8x32xf32> -> vector<8x8x32xf32>
    "tpu.trace_stop"() : () -> ()
    %51 = vector.shape_cast %50 : vector<8x8x32xf32> to vector<2x4x8x32xf32>
    %52 = tpu.transpose %51, [0, 2, 1, 3] : vector<2x4x8x32xf32> -> vector<2x8x4x32xf32>
    %53 = vector.shape_cast %52 : vector<2x8x4x32xf32> to vector<16x128xf32>
    %54 = arith.truncf %53 : vector<16x128xf32> to vector<16x128xbf16>
    %cst_22 = arith.constant dense<0.000000e+00> : vector<16x128xf32>
    %55 = tpu.matmul %54, %11, %cst_22 {dimension_numbers = #tpu.dot_dimension_numbers<[1], [0], [0], [1], [0, 0, 1, 1], [], []>} : vector<16x128xbf16>, vector<128x128xbf16>, vector<16x128xf32> -> vector<16x128xf32>
    %56 = vector.broadcast %13 : vector<1x128xf32> to vector<16x128xf32>
    %57 = arith.addf %55, %56 : vector<16x128xf32>
    %58 = arith.addf %4, %57 : vector<16x128xf32>
    %c0_23 = arith.constant 0 : index
    %c0_24 = arith.constant 0 : index
    %c0_25 = arith.constant 0 : index
    %59 = vector.load %arg7[%c0_23, %c0_24, %c0_25] : memref<1x1x128xf32, #tpu.memory_space<vmem>>, vector<1x1x128xf32>
    %60 = vector.shape_cast %59 : vector<1x1x128xf32> to vector<1x128xf32>
    %c0_26 = arith.constant 0 : index
    %c0_27 = arith.constant 0 : index
    %c0_28 = arith.constant 0 : index
    %61 = vector.load %arg8[%c0_26, %c0_27, %c0_28] : memref<1x1x128xf32, #tpu.memory_space<vmem>>, vector<1x1x128xf32>
    %62 = vector.shape_cast %61 : vector<1x1x128xf32> to vector<1x128xf32>
    %cst_29 = arith.constant dense<0.000000e+00> : vector<16xf32>
    %63 = vector.multi_reduction <add>, %58, %cst_29 [1] : vector<16x128xf32> to vector<16xf32>
    %64 = vector.shape_cast %63 : vector<16xf32> to vector<16x1xf32>
    %cst_30 = arith.constant 1.280000e+02 : f32
    %65 = vector.broadcast %cst_30 : f32 to vector<16x1xf32>
    %66 = arith.divf %64, %65 : vector<16x1xf32>
    %67 = vector.broadcast %66 : vector<16x1xf32> to vector<16x128xf32>
    %68 = arith.subf %58, %67 : vector<16x128xf32>
    %69 = arith.mulf %68, %68 : vector<16x128xf32>
    %cst_31 = arith.constant dense<0.000000e+00> : vector<16xf32>
    %70 = vector.multi_reduction <add>, %69, %cst_31 [1] : vector<16x128xf32> to vector<16xf32>
    %71 = vector.shape_cast %70 : vector<16xf32> to vector<16x1xf32>
    %cst_32 = arith.constant 1.280000e+02 : f32
    %72 = vector.broadcast %cst_32 : f32 to vector<16x1xf32>
    %73 = arith.divf %71, %72 : vector<16x1xf32>
    %74 = vector.broadcast %66 : vector<16x1xf32> to vector<16x128xf32>
    %75 = arith.subf %58, %74 : vector<16x128xf32>
    %cst_33 = arith.constant 9.99999974E-6 : f32
    %76 = vector.broadcast %cst_33 : f32 to vector<16x1xf32>
    %77 = arith.addf %73, %76 : vector<16x1xf32>
    %78 = math.rsqrt %77 : vector<16x1xf32>
    %79 = vector.broadcast %78 : vector<16x1xf32> to vector<16x128xf32>
    %80 = arith.mulf %75, %79 : vector<16x128xf32>
    %81 = vector.broadcast %60 : vector<1x128xf32> to vector<16x128xf32>
    %82 = arith.mulf %80, %81 : vector<16x128xf32>
    %83 = vector.broadcast %62 : vector<1x128xf32> to vector<16x128xf32>
    %84 = arith.addf %82, %83 : vector<16x128xf32>
    %c0_34 = arith.constant 0 : index
    %c0_35 = arith.constant 0 : index
    %c0_36 = arith.constant 0 : index
    %85 = vector.load %arg9[%c0_34, %c0_35, %c0_36] : memref<1x128x256xbf16, #tpu.memory_space<vmem>>, vector<1x128x256xbf16>
    %86 = vector.shape_cast %85 : vector<1x128x256xbf16> to vector<128x256xbf16>
    %c0_37 = arith.constant 0 : index
    %c0_38 = arith.constant 0 : index
    %c0_39 = arith.constant 0 : index
    %87 = vector.load %arg10[%c0_37, %c0_38, %c0_39] : memref<1x1x256xf32, #tpu.memory_space<vmem>>, vector<1x1x256xf32>
    %88 = vector.shape_cast %87 : vector<1x1x256xf32> to vector<1x256xf32>
    %c0_40 = arith.constant 0 : index
    %c0_41 = arith.constant 0 : index
    %c0_42 = arith.constant 0 : index
    %89 = vector.load %arg11[%c0_40, %c0_41, %c0_42] : memref<1x256x128xbf16, #tpu.memory_space<vmem>>, vector<1x256x128xbf16>
    %90 = vector.shape_cast %89 : vector<1x256x128xbf16> to vector<256x128xbf16>
    %c0_43 = arith.constant 0 : index
    %c0_44 = arith.constant 0 : index
    %c0_45 = arith.constant 0 : index
    %91 = vector.load %arg12[%c0_43, %c0_44, %c0_45] : memref<1x1x128xf32, #tpu.memory_space<vmem>>, vector<1x1x128xf32>
    %92 = vector.shape_cast %91 : vector<1x1x128xf32> to vector<1x128xf32>
    %93 = arith.truncf %84 : vector<16x128xf32> to vector<16x128xbf16>
    %cst_46 = arith.constant dense<0.000000e+00> : vector<16x256xf32>
    %94 = tpu.matmul %93, %86, %cst_46 {dimension_numbers = #tpu.dot_dimension_numbers<[1], [0], [0], [1], [0, 0, 1, 1], [], []>} : vector<16x128xbf16>, vector<128x256xbf16>, vector<16x256xf32> -> vector<16x256xf32>
    %95 = vector.broadcast %88 : vector<1x256xf32> to vector<16x256xf32>
    %96 = arith.addf %94, %95 : vector<16x256xf32>
    %cst_47 = arith.constant 0.000000e+00 : f32
    %97 = vector.broadcast %cst_47 : f32 to vector<16x256xf32>
    %98 = arith.maximumf %96, %97 : vector<16x256xf32>
    %99 = arith.truncf %98 : vector<16x256xf32> to vector<16x256xbf16>
    %cst_48 = arith.constant dense<0.000000e+00> : vector<16x128xf32>
    %100 = tpu.matmul %99, %90, %cst_48 {dimension_numbers = #tpu.dot_dimension_numbers<[1], [0], [0], [1], [0, 0, 1, 1], [], []>} : vector<16x256xbf16>, vector<256x128xbf16>, vector<16x128xf32> -> vector<16x128xf32>
    %101 = vector.broadcast %92 : vector<1x128xf32> to vector<16x128xf32>
    %102 = arith.addf %100, %101 : vector<16x128xf32>
    %103 = arith.addf %84, %102 : vector<16x128xf32>
    %c0_49 = arith.constant 0 : index
    %c0_50 = arith.constant 0 : index
    %c0_51 = arith.constant 0 : index
    %104 = vector.load %arg13[%c0_49, %c0_50, %c0_51] : memref<1x1x128xf32, #tpu.memory_space<vmem>>, vector<1x1x128xf32>
    %105 = vector.shape_cast %104 : vector<1x1x128xf32> to vector<1x128xf32>
    %c0_52 = arith.constant 0 : index
    %c0_53 = arith.constant 0 : index
    %c0_54 = arith.constant 0 : index
    %106 = vector.load %arg14[%c0_52, %c0_53, %c0_54] : memref<1x1x128xf32, #tpu.memory_space<vmem>>, vector<1x1x128xf32>
    %107 = vector.shape_cast %106 : vector<1x1x128xf32> to vector<1x128xf32>
    %cst_55 = arith.constant dense<0.000000e+00> : vector<16xf32>
    %108 = vector.multi_reduction <add>, %103, %cst_55 [1] : vector<16x128xf32> to vector<16xf32>
    %109 = vector.shape_cast %108 : vector<16xf32> to vector<16x1xf32>
    %cst_56 = arith.constant 1.280000e+02 : f32
    %110 = vector.broadcast %cst_56 : f32 to vector<16x1xf32>
    %111 = arith.divf %109, %110 : vector<16x1xf32>
    %112 = vector.broadcast %111 : vector<16x1xf32> to vector<16x128xf32>
    %113 = arith.subf %103, %112 : vector<16x128xf32>
    %114 = arith.mulf %113, %113 : vector<16x128xf32>
    %cst_57 = arith.constant dense<0.000000e+00> : vector<16xf32>
    %115 = vector.multi_reduction <add>, %114, %cst_57 [1] : vector<16x128xf32> to vector<16xf32>
    %116 = vector.shape_cast %115 : vector<16xf32> to vector<16x1xf32>
    %cst_58 = arith.constant 1.280000e+02 : f32
    %117 = vector.broadcast %cst_58 : f32 to vector<16x1xf32>
    %118 = arith.divf %116, %117 : vector<16x1xf32>
    %119 = vector.broadcast %111 : vector<16x1xf32> to vector<16x128xf32>
    %120 = arith.subf %103, %119 : vector<16x128xf32>
    %cst_59 = arith.constant 9.99999974E-6 : f32
    %121 = vector.broadcast %cst_59 : f32 to vector<16x1xf32>
    %122 = arith.addf %118, %121 : vector<16x1xf32>
    %123 = math.rsqrt %122 : vector<16x1xf32>
    %124 = vector.broadcast %123 : vector<16x1xf32> to vector<16x128xf32>
    %125 = arith.mulf %120, %124 : vector<16x128xf32>
    %126 = vector.broadcast %105 : vector<1x128xf32> to vector<16x128xf32>
    %127 = arith.mulf %125, %126 : vector<16x128xf32>
    %128 = vector.broadcast %107 : vector<1x128xf32> to vector<16x128xf32>
    %129 = arith.addf %127, %128 : vector<16x128xf32>
    %130 = vector.shape_cast %129 : vector<16x128xf32> to vector<2x8x128xf32>
    %c0_60 = arith.constant 0 : index
    %c0_61 = arith.constant 0 : index
    %c0_62 = arith.constant 0 : index
    %131 = vector.load %arg17[%c0_60, %c0_61, %c0_62] : memref<2x8x128xf32, #tpu.memory_space<vmem>>, vector<2x8x128xf32>
    tpu.vector_store %arg17[%c0_60, %c0_61, %c0_62], %130 {strides = array<i32>} : memref<2x8x128xf32, #tpu.memory_space<vmem>>, vector<2x8x128xf32>,
    %c1_i32 = arith.constant 1 : i32
    %132 = arith.cmpi eq, %arg0, %c1_i32 : i32
    %133 = arith.extui %132 : i1 to i32
    %c0_i32_63 = arith.constant 0 : i32
    %134 = arith.cmpi ne, %133, %c0_i32_63 : i32
    scf.if %134 {
      %c0_64 = arith.constant 0 : index
      %c0_65 = arith.constant 0 : index
      %135 = vector.load %arg15[%c0_64, %c0_65] : memref<1x128xf32, #tpu.memory_space<vmem>>, vector<1x128xf32>
      %c0_66 = arith.constant 0 : index
      %c0_67 = arith.constant 0 : index
      %136 = vector.load %arg16[%c0_66, %c0_67] : memref<1x128xf32, #tpu.memory_space<vmem>>, vector<1x128xf32>
      %cst_68 = arith.constant dense<0.000000e+00> : vector<16xf32>
      %137 = vector.multi_reduction <add>, %129, %cst_68 [1] : vector<16x128xf32> to vector<16xf32>
      %138 = vector.shape_cast %137 : vector<16xf32> to vector<16x1xf32>
      %cst_69 = arith.constant 1.280000e+02 : f32
      %139 = vector.broadcast %cst_69 : f32 to vector<16x1xf32>
      %140 = arith.divf %138, %139 : vector<16x1xf32>
      %141 = vector.broadcast %140 : vector<16x1xf32> to vector<16x128xf32>
      %142 = arith.subf %129, %141 : vector<16x128xf32>
      %143 = arith.mulf %142, %142 : vector<16x128xf32>
      %cst_70 = arith.constant dense<0.000000e+00> : vector<16xf32>
      %144 = vector.multi_reduction <add>, %143, %cst_70 [1] : vector<16x128xf32> to vector<16xf32>
      %145 = vector.shape_cast %144 : vector<16xf32> to vector<16x1xf32>
      %cst_71 = arith.constant 1.280000e+02 : f32
      %146 = vector.broadcast %cst_71 : f32 to vector<16x1xf32>
      %147 = arith.divf %145, %146 : vector<16x1xf32>
      %148 = vector.broadcast %140 : vector<16x1xf32> to vector<16x128xf32>
      %149 = arith.subf %129, %148 : vector<16x128xf32>
      %cst_72 = arith.constant 9.99999974E-6 : f32
      %150 = vector.broadcast %cst_72 : f32 to vector<16x1xf32>
      %151 = arith.addf %147, %150 : vector<16x1xf32>
      %152 = math.rsqrt %151 : vector<16x1xf32>
      %153 = vector.broadcast %152 : vector<16x1xf32> to vector<16x128xf32>
      %154 = arith.mulf %149, %153 : vector<16x128xf32>
      %155 = vector.broadcast %135 : vector<1x128xf32> to vector<16x128xf32>
      %156 = arith.mulf %154, %155 : vector<16x128xf32>
      %157 = vector.broadcast %136 : vector<1x128xf32> to vector<16x128xf32>
      %158 = arith.addf %156, %157 : vector<16x128xf32>
      %159 = vector.shape_cast %158 : vector<16x128xf32> to vector<2x8x128xf32>
      %c0_73 = arith.constant 0 : index
      %c0_74 = arith.constant 0 : index
      %c0_75 = arith.constant 0 : index
      %160 = vector.load %arg17[%c0_73, %c0_74, %c0_75] : memref<2x8x128xf32, #tpu.memory_space<vmem>>, vector<2x8x128xf32>
      tpu.vector_store %arg17[%c0_73, %c0_74, %c0_75], %159 {strides = array<i32>} : memref<2x8x128xf32, #tpu.memory_space<vmem>>, vector<2x8x128xf32>,
    } else {
    }
    return
  }
  func.func @transform_0(%arg0: i32) -> (i32, i32, i32) {
    %c0_i32 = arith.constant 0 : i32
    %c0_i32_0 = arith.constant 0 : i32
    %c0_i32_1 = arith.constant 0 : i32
    %c0_i32_2 = arith.constant 0 : i32
    return %c0_i32, %c0_i32_0, %c0_i32_1 : i32, i32, i32
  }
  func.func @transform_1(%arg0: i32) -> (i32, i32, i32) {
    %c0_i32 = arith.constant 0 : i32
    %c0_i32_0 = arith.constant 0 : i32
    %c0_i32_1 = arith.constant 0 : i32
    %c0_i32_2 = arith.constant 0 : i32
    return %c0_i32, %c0_i32_0, %c0_i32_1 : i32, i32, i32
  }
  func.func @transform_2(%arg0: i32) -> (i32, i32, i32) {
    %c0_i32 = arith.constant 0 : i32
    %c0_i32_0 = arith.constant 0 : i32
    %c0_i32_1 = arith.constant 0 : i32
    return %arg0, %c0_i32, %c0_i32_0 : i32, i32, i32
  }
  func.func @transform_3(%arg0: i32) -> (i32, i32, i32) {
    %c0_i32 = arith.constant 0 : i32
    %c0_i32_0 = arith.constant 0 : i32
    %c0_i32_1 = arith.constant 0 : i32
    return %arg0, %c0_i32, %c0_i32_0 : i32, i32, i32
  }
  func.func @transform_4(%arg0: i32) -> (i32, i32, i32) {
    %c0_i32 = arith.constant 0 : i32
    %c0_i32_0 = arith.constant 0 : i32
    %c0_i32_1 = arith.constant 0 : i32
    return %arg0, %c0_i32, %c0_i32_0 : i32, i32, i32
  }
  func.func @transform_5(%arg0: i32) -> (i32, i32, i32) {
    %c0_i32 = arith.constant 0 : i32
    %c0_i32_0 = arith.constant 0 : i32
    %c0_i32_1 = arith.constant 0 : i32
    return %arg0, %c0_i32, %c0_i32_0 : i32, i32, i32
  }
  func.func @transform_6(%arg0: i32) -> (i32, i32, i32) {
    %c0_i32 = arith.constant 0 : i32
    %c0_i32_0 = arith.constant 0 : i32
    %c0_i32_1 = arith.constant 0 : i32
    return %arg0, %c0_i32, %c0_i32_0 : i32, i32, i32
  }
  func.func @transform_7(%arg0: i32) -> (i32, i32, i32) {
    %c0_i32 = arith.constant 0 : i32
    %c0_i32_0 = arith.constant 0 : i32
    %c0_i32_1 = arith.constant 0 : i32
    return %arg0, %c0_i32, %c0_i32_0 : i32, i32, i32
  }
  func.func @transform_8(%arg0: i32) -> (i32, i32, i32) {
    %c0_i32 = arith.constant 0 : i32
    %c0_i32_0 = arith.constant 0 : i32
    %c0_i32_1 = arith.constant 0 : i32
    return %arg0, %c0_i32, %c0_i32_0 : i32, i32, i32
  }
  func.func @transform_9(%arg0: i32) -> (i32, i32, i32) {
    %c0_i32 = arith.constant 0 : i32
    %c0_i32_0 = arith.constant 0 : i32
    %c0_i32_1 = arith.constant 0 : i32
    return %arg0, %c0_i32, %c0_i32_0 : i32, i32, i32
  }
  func.func @transform_10(%arg0: i32) -> (i32, i32, i32) {
    %c0_i32 = arith.constant 0 : i32
    %c0_i32_0 = arith.constant 0 : i32
    %c0_i32_1 = arith.constant 0 : i32
    return %arg0, %c0_i32, %c0_i32_0 : i32, i32, i32
  }
  func.func @transform_11(%arg0: i32) -> (i32, i32, i32) {
    %c0_i32 = arith.constant 0 : i32
    %c0_i32_0 = arith.constant 0 : i32
    %c0_i32_1 = arith.constant 0 : i32
    return %arg0, %c0_i32, %c0_i32_0 : i32, i32, i32
  }
  func.func @transform_12(%arg0: i32) -> (i32, i32, i32) {
    %c0_i32 = arith.constant 0 : i32
    %c0_i32_0 = arith.constant 0 : i32
    %c0_i32_1 = arith.constant 0 : i32
    return %arg0, %c0_i32, %c0_i32_0 : i32, i32, i32
  }
  func.func @transform_13(%arg0: i32) -> (i32, i32, i32) {
    %c0_i32 = arith.constant 0 : i32
    %c0_i32_0 = arith.constant 0 : i32
    %c0_i32_1 = arith.constant 0 : i32
    return %arg0, %c0_i32, %c0_i32_0 : i32, i32, i32
  }
  func.func @transform_14(%arg0: i32) -> (i32, i32) {
    %c0_i32 = arith.constant 0 : i32
    %c0_i32_0 = arith.constant 0 : i32
    %c0_i32_1 = arith.constant 0 : i32
    return %c0_i32, %c0_i32_0 : i32, i32
  }
  func.func @transform_15(%arg0: i32) -> (i32, i32) {
    %c0_i32 = arith.constant 0 : i32
    %c0_i32_0 = arith.constant 0 : i32
    %c0_i32_1 = arith.constant 0 : i32
    return %c0_i32, %c0_i32_0 : i32, i32
  }
  func.func @transform_16(%arg0: i32) -> (i32, i32, i32) {
    %c0_i32 = arith.constant 0 : i32
    %c0_i32_0 = arith.constant 0 : i32
    %c0_i32_1 = arith.constant 0 : i32
    %c0_i32_2 = arith.constant 0 : i32
    return %c0_i32, %c0_i32_0, %c0_i32_1 : i32, i32, i32
  }
}

module attributes {stable_mosaic.version = 11 : i64} {
  func.func @_dec_stack_kernel(%arg0: i32, %arg1: memref<2x8x128xf32, #tpu.memory_space<vmem>>, %arg2: memref<2x8x128xf32, #tpu.memory_space<vmem>>, %arg3: memref<2x1x8xf32, #tpu.memory_space<vmem>>, %arg4: memref<2x1x8xf32, #tpu.memory_space<vmem>>, %arg5: memref<1x128x384xbf16, #tpu.memory_space<vmem>>, %arg6: memref<1x1x384xf32, #tpu.memory_space<vmem>>, %arg7: memref<1x128x128xbf16, #tpu.memory_space<vmem>>, %arg8: memref<1x1x128xf32, #tpu.memory_space<vmem>>, %arg9: memref<1x1x128xf32, #tpu.memory_space<vmem>>, %arg10: memref<1x1x128xf32, #tpu.memory_space<vmem>>, %arg11: memref<1x128x128xbf16, #tpu.memory_space<vmem>>, %arg12: memref<1x1x128xf32, #tpu.memory_space<vmem>>, %arg13: memref<1x128x256xbf16, #tpu.memory_space<vmem>>, %arg14: memref<1x1x256xf32, #tpu.memory_space<vmem>>, %arg15: memref<1x128x128xbf16, #tpu.memory_space<vmem>>, %arg16: memref<1x1x128xf32, #tpu.memory_space<vmem>>, %arg17: memref<1x1x128xf32, #tpu.memory_space<vmem>>, %arg18: memref<1x1x128xf32, #tpu.memory_space<vmem>>, %arg19: memref<1x128x256xbf16, #tpu.memory_space<vmem>>, %arg20: memref<1x1x256xf32, #tpu.memory_space<vmem>>, %arg21: memref<1x256x128xbf16, #tpu.memory_space<vmem>>, %arg22: memref<1x1x128xf32, #tpu.memory_space<vmem>>, %arg23: memref<1x1x128xf32, #tpu.memory_space<vmem>>, %arg24: memref<1x1x128xf32, #tpu.memory_space<vmem>>, %arg25: memref<1x128xf32, #tpu.memory_space<vmem>>, %arg26: memref<1x128xf32, #tpu.memory_space<vmem>>, %arg27: memref<2x8x128xf32, #tpu.memory_space<vmem>>) attributes {dimension_semantics = [#tpu.dimension_semantics<arbitrary>], iteration_bounds = array<i64: 2>, scalar_prefetch = 0 : i64, scratch_operands = 0 : i64, tpu.core_type = #tpu.core_type<tc>, window_params = [{pipeline_mode = #tpu.pipeline_mode<synchronous>, transform_indices = @transform_0, window_bounds = array<i64: 2, 8, 128>}, {pipeline_mode = #tpu.pipeline_mode<synchronous>, transform_indices = @transform_1, window_bounds = array<i64: 2, 8, 128>}, {pipeline_mode = #tpu.pipeline_mode<synchronous>, transform_indices = @transform_2, window_bounds = array<i64: 2, 1, 8>}, {pipeline_mode = #tpu.pipeline_mode<synchronous>, transform_indices = @transform_3, window_bounds = array<i64: 2, 1, 8>}, {transform_indices = @transform_4, window_bounds = array<i64: 1, 128, 384>}, {transform_indices = @transform_5, window_bounds = array<i64: 1, 1, 384>}, {transform_indices = @transform_6, window_bounds = array<i64: 1, 128, 128>}, {transform_indices = @transform_7, window_bounds = array<i64: 1, 1, 128>}, {transform_indices = @transform_8, window_bounds = array<i64: 1, 1, 128>}, {transform_indices = @transform_9, window_bounds = array<i64: 1, 1, 128>}, {transform_indices = @transform_10, window_bounds = array<i64: 1, 128, 128>}, {transform_indices = @transform_11, window_bounds = array<i64: 1, 1, 128>}, {transform_indices = @transform_12, window_bounds = array<i64: 1, 128, 256>}, {transform_indices = @transform_13, window_bounds = array<i64: 1, 1, 256>}, {transform_indices = @transform_14, window_bounds = array<i64: 1, 128, 128>}, {transform_indices = @transform_15, window_bounds = array<i64: 1, 1, 128>}, {transform_indices = @transform_16, window_bounds = array<i64: 1, 1, 128>}, {transform_indices = @transform_17, window_bounds = array<i64: 1, 1, 128>}, {transform_indices = @transform_18, window_bounds = array<i64: 1, 128, 256>}, {transform_indices = @transform_19, window_bounds = array<i64: 1, 1, 256>}, {transform_indices = @transform_20, window_bounds = array<i64: 1, 256, 128>}, {transform_indices = @transform_21, window_bounds = array<i64: 1, 1, 128>}, {transform_indices = @transform_22, window_bounds = array<i64: 1, 1, 128>}, {transform_indices = @transform_23, window_bounds = array<i64: 1, 1, 128>}, {pipeline_mode = #tpu.pipeline_mode<synchronous>, transform_indices = @transform_24, window_bounds = array<i64: 1, 128>}, {pipeline_mode = #tpu.pipeline_mode<synchronous>, transform_indices = @transform_25, window_bounds = array<i64: 1, 128>}, {pipeline_mode = #tpu.pipeline_mode<synchronous>, transform_indices = @transform_26, window_bounds = array<i64: 2, 8, 128>}]} {
    %c0_i32 = arith.constant 0 : i32
    %0 = arith.cmpi eq, %arg0, %c0_i32 : i32
    %1 = arith.extui %0 : i1 to i32
    %c0_i32_0 = arith.constant 0 : i32
    %2 = arith.cmpi ne, %1, %c0_i32_0 : i32
    scf.if %2 {
      %c0_108 = arith.constant 0 : index
      %c0_109 = arith.constant 0 : index
      %c0_110 = arith.constant 0 : index
      %234 = vector.load %arg1[%c0_108, %c0_109, %c0_110] : memref<2x8x128xf32, #tpu.memory_space<vmem>>, vector<2x8x128xf32>
      %c0_111 = arith.constant 0 : index
      %c0_112 = arith.constant 0 : index
      %c0_113 = arith.constant 0 : index
      %235 = vector.load %arg27[%c0_111, %c0_112, %c0_113] : memref<2x8x128xf32, #tpu.memory_space<vmem>>, vector<2x8x128xf32>
      tpu.vector_store %arg27[%c0_111, %c0_112, %c0_113], %234 {strides = array<i32>} : memref<2x8x128xf32, #tpu.memory_space<vmem>>, vector<2x8x128xf32>,
    } else {
    }
    %c0 = arith.constant 0 : index
    %c0_1 = arith.constant 0 : index
    %c0_2 = arith.constant 0 : index
    %3 = vector.load %arg27[%c0, %c0_1, %c0_2] : memref<2x8x128xf32, #tpu.memory_space<vmem>>, vector<2x8x128xf32>
    %c0_3 = arith.constant 0 : index
    %c0_4 = arith.constant 0 : index
    %c0_5 = arith.constant 0 : index
    %4 = vector.load %arg2[%c0_3, %c0_4, %c0_5] : memref<2x8x128xf32, #tpu.memory_space<vmem>>, vector<2x8x128xf32>
    %5 = vector.shape_cast %3 : vector<2x8x128xf32> to vector<16x128xf32>
    %6 = vector.shape_cast %4 : vector<2x8x128xf32> to vector<16x128xf32>
    %7 = tpu.iota {dimensions = array<i32: 0>} : vector<8x8xi32>
    %8 = tpu.iota {dimensions = array<i32: 1>} : vector<8x8xi32>
    %9 = arith.cmpi sgt, %8, %7 : vector<8x8xi32>
    %cst = arith.constant -1.000000e+09 : f32
    %cst_6 = arith.constant 0.000000e+00 : f32
    %10 = vector.broadcast %cst : f32 to vector<8x8xf32>
    %11 = vector.broadcast %cst_6 : f32 to vector<8x8xf32>
    %12 = arith.select %9, %10, %11 : vector<8x8xi1>, vector<8x8xf32>
    %13 = vector.shape_cast %12 : vector<8x8xf32> to vector<1x8x8xf32>
    %c0_7 = arith.constant 0 : index
    %c0_8 = arith.constant 0 : index
    %c0_9 = arith.constant 0 : index
    %14 = vector.load %arg3[%c0_7, %c0_8, %c0_9] : memref<2x1x8xf32, #tpu.memory_space<vmem>>, vector<2x1x8xf32>
    %15 = vector.broadcast %13 : vector<1x8x8xf32> to vector<2x8x8xf32>
    %16 = vector.broadcast %14 : vector<2x1x8xf32> to vector<2x8x8xf32>
    %17 = arith.addf %15, %16 : vector<2x8x8xf32>
    %c0_10 = arith.constant 0 : index
    %c0_11 = arith.constant 0 : index
    %c0_12 = arith.constant 0 : index
    %18 = vector.load %arg5[%c0_10, %c0_11, %c0_12] : memref<1x128x384xbf16, #tpu.memory_space<vmem>>, vector<1x128x384xbf16>
    %19 = vector.shape_cast %18 : vector<1x128x384xbf16> to vector<128x384xbf16>
    %c0_13 = arith.constant 0 : index
    %c0_14 = arith.constant 0 : index
    %c0_15 = arith.constant 0 : index
    %20 = vector.load %arg6[%c0_13, %c0_14, %c0_15] : memref<1x1x384xf32, #tpu.memory_space<vmem>>, vector<1x1x384xf32>
    %21 = vector.shape_cast %20 : vector<1x1x384xf32> to vector<1x384xf32>
    %c0_16 = arith.constant 0 : index
    %c0_17 = arith.constant 0 : index
    %c0_18 = arith.constant 0 : index
    %22 = vector.load %arg7[%c0_16, %c0_17, %c0_18] : memref<1x128x128xbf16, #tpu.memory_space<vmem>>, vector<1x128x128xbf16>
    %23 = vector.shape_cast %22 : vector<1x128x128xbf16> to vector<128x128xbf16>
    %c0_19 = arith.constant 0 : index
    %c0_20 = arith.constant 0 : index
    %c0_21 = arith.constant 0 : index
    %24 = vector.load %arg8[%c0_19, %c0_20, %c0_21] : memref<1x1x128xf32, #tpu.memory_space<vmem>>, vector<1x1x128xf32>
    %25 = vector.shape_cast %24 : vector<1x1x128xf32> to vector<1x128xf32>
    %26 = arith.truncf %5 : vector<16x128xf32> to vector<16x128xbf16>
    %cst_22 = arith.constant dense<0.000000e+00> : vector<16x384xf32>
    %27 = tpu.matmul %26, %19, %cst_22 {dimension_numbers = #tpu.dot_dimension_numbers<[1], [0], [0], [1], [0, 0, 1, 1], [], []>} : vector<16x128xbf16>, vector<128x384xbf16>, vector<16x384xf32> -> vector<16x384xf32>
    %28 = vector.broadcast %21 : vector<1x384xf32> to vector<16x384xf32>
    %29 = arith.addf %27, %28 : vector<16x384xf32>
    %30 = vector.extract_strided_slice %29 {offsets = [0, 0], sizes = [16, 128], strides = [1, 1]} : vector<16x384xf32> to vector<16x128xf32>
    %31 = vector.extract_strided_slice %29 {offsets = [0, 128], sizes = [16, 128], strides = [1, 1]} : vector<16x384xf32> to vector<16x128xf32>
    %32 = vector.extract_strided_slice %29 {offsets = [0, 256], sizes = [16, 128], strides = [1, 1]} : vector<16x384xf32> to vector<16x128xf32>
    %33 = vector.shape_cast %30 : vector<16x128xf32> to vector<2x8x4x32xf32>
    %34 = tpu.transpose %33, [0, 2, 1, 3] : vector<2x8x4x32xf32> -> vector<2x4x8x32xf32>
    %35 = vector.shape_cast %34 : vector<2x4x8x32xf32> to vector<8x8x32xf32>
    %36 = arith.truncf %35 : vector<8x8x32xf32> to vector<8x8x32xbf16>
    %37 = vector.shape_cast %31 : vector<16x128xf32> to vector<2x8x4x32xf32>
    %38 = tpu.transpose %37, [0, 2, 1, 3] : vector<2x8x4x32xf32> -> vector<2x4x8x32xf32>
    %39 = vector.shape_cast %38 : vector<2x4x8x32xf32> to vector<8x8x32xf32>
    %40 = arith.truncf %39 : vector<8x8x32xf32> to vector<8x8x32xbf16>
    %41 = vector.shape_cast %32 : vector<16x128xf32> to vector<2x8x4x32xf32>
    %42 = tpu.transpose %41, [0, 2, 1, 3] : vector<2x8x4x32xf32> -> vector<2x4x8x32xf32>
    %43 = vector.shape_cast %42 : vector<2x4x8x32xf32> to vector<8x8x32xf32>
    %44 = arith.truncf %43 : vector<8x8x32xf32> to vector<8x8x32xbf16>
    "tpu.trace_start"() <{level = 10 : i32, message = "gqd,gkd->gqk"}> : () -> ()
    %cst_23 = arith.constant dense<0.000000e+00> : vector<8x8x8xf32>
    %45 = tpu.matmul %36, %40, %cst_23 {dimension_numbers = #tpu.dot_dimension_numbers<[2], [2], [1], [1], [0, 0, 0, 1, 1, 1], [0], [0]>} : vector<8x8x32xbf16>, vector<8x8x32xbf16>, vector<8x8x8xf32> -> vector<8x8x8xf32>
    "tpu.trace_stop"() : () -> ()
    %46 = vector.shape_cast %45 : vector<8x8x8xf32> to vector<2x4x8x8xf32>
    %47 = vector.shape_cast %17 : vector<2x8x8xf32> to vector<2x1x8x8xf32>
    %48 = vector.broadcast %47 : vector<2x1x8x8xf32> to vector<2x4x8x8xf32>
    %49 = arith.addf %46, %48 : vector<2x4x8x8xf32>
    %cst_24 = arith.constant dense<0xFF800000> : vector<2x4x8xf32>
    %50 = vector.multi_reduction <maximumf>, %49, %cst_24 [3] : vector<2x4x8x8xf32> to vector<2x4x8xf32>
    %51 = vector.shape_cast %50 : vector<2x4x8xf32> to vector<2x4x8x1xf32>
    %52 = vector.broadcast %51 : vector<2x4x8x1xf32> to vector<2x4x8x8xf32>
    %53 = arith.subf %49, %52 : vector<2x4x8x8xf32>
    %54 = math.exp %53 : vector<2x4x8x8xf32>
    %cst_25 = arith.constant dense<0.000000e+00> : vector<2x4x8xf32>
    %55 = vector.multi_reduction <add>, %54, %cst_25 [3] : vector<2x4x8x8xf32> to vector<2x4x8xf32>
    %56 = vector.shape_cast %55 : vector<2x4x8xf32> to vector<2x4x8x1xf32>
    %57 = tpu.reciprocal %56 {approx = true} : vector<2x4x8x1xf32> -> vector<2x4x8x1xf32>
    %58 = vector.broadcast %57 : vector<2x4x8x1xf32> to vector<2x4x8x8xf32>
    %59 = arith.mulf %54, %58 : vector<2x4x8x8xf32>
    %60 = vector.shape_cast %59 : vector<2x4x8x8xf32> to vector<8x8x8xf32>
    %61 = arith.truncf %60 : vector<8x8x8xf32> to vector<8x8x8xbf16>
    "tpu.trace_start"() <{level = 10 : i32, message = "gqk,gkd->gqd"}> : () -> ()
    %cst_26 = arith.constant dense<0.000000e+00> : vector<8x8x32xf32>
    %62 = tpu.matmul %61, %44, %cst_26 {dimension_numbers = #tpu.dot_dimension_numbers<[2], [1], [1], [2], [0, 0, 0, 1, 1, 2], [0], [0]>} : vector<8x8x8xbf16>, vector<8x8x32xbf16>, vector<8x8x32xf32> -> vector<8x8x32xf32>
    "tpu.trace_stop"() : () -> ()
    %63 = vector.shape_cast %62 : vector<8x8x32xf32> to vector<2x4x8x32xf32>
    %64 = tpu.transpose %63, [0, 2, 1, 3] : vector<2x4x8x32xf32> -> vector<2x8x4x32xf32>
    %65 = vector.shape_cast %64 : vector<2x8x4x32xf32> to vector<16x128xf32>
    %66 = arith.truncf %65 : vector<16x128xf32> to vector<16x128xbf16>
    %cst_27 = arith.constant dense<0.000000e+00> : vector<16x128xf32>
    %67 = tpu.matmul %66, %23, %cst_27 {dimension_numbers = #tpu.dot_dimension_numbers<[1], [0], [0], [1], [0, 0, 1, 1], [], []>} : vector<16x128xbf16>, vector<128x128xbf16>, vector<16x128xf32> -> vector<16x128xf32>
    %68 = vector.broadcast %25 : vector<1x128xf32> to vector<16x128xf32>
    %69 = arith.addf %67, %68 : vector<16x128xf32>
    %70 = arith.addf %5, %69 : vector<16x128xf32>
    %c0_28 = arith.constant 0 : index
    %c0_29 = arith.constant 0 : index
    %c0_30 = arith.constant 0 : index
    %71 = vector.load %arg9[%c0_28, %c0_29, %c0_30] : memref<1x1x128xf32, #tpu.memory_space<vmem>>, vector<1x1x128xf32>
    %72 = vector.shape_cast %71 : vector<1x1x128xf32> to vector<1x128xf32>
    %c0_31 = arith.constant 0 : index
    %c0_32 = arith.constant 0 : index
    %c0_33 = arith.constant 0 : index
    %73 = vector.load %arg10[%c0_31, %c0_32, %c0_33] : memref<1x1x128xf32, #tpu.memory_space<vmem>>, vector<1x1x128xf32>
    %74 = vector.shape_cast %73 : vector<1x1x128xf32> to vector<1x128xf32>
    %cst_34 = arith.constant dense<0.000000e+00> : vector<16xf32>
    %75 = vector.multi_reduction <add>, %70, %cst_34 [1] : vector<16x128xf32> to vector<16xf32>
    %76 = vector.shape_cast %75 : vector<16xf32> to vector<16x1xf32>
    %cst_35 = arith.constant 1.280000e+02 : f32
    %77 = vector.broadcast %cst_35 : f32 to vector<16x1xf32>
    %78 = arith.divf %76, %77 : vector<16x1xf32>
    %79 = vector.broadcast %78 : vector<16x1xf32> to vector<16x128xf32>
    %80 = arith.subf %70, %79 : vector<16x128xf32>
    %81 = arith.mulf %80, %80 : vector<16x128xf32>
    %cst_36 = arith.constant dense<0.000000e+00> : vector<16xf32>
    %82 = vector.multi_reduction <add>, %81, %cst_36 [1] : vector<16x128xf32> to vector<16xf32>
    %83 = vector.shape_cast %82 : vector<16xf32> to vector<16x1xf32>
    %cst_37 = arith.constant 1.280000e+02 : f32
    %84 = vector.broadcast %cst_37 : f32 to vector<16x1xf32>
    %85 = arith.divf %83, %84 : vector<16x1xf32>
    %86 = vector.broadcast %78 : vector<16x1xf32> to vector<16x128xf32>
    %87 = arith.subf %70, %86 : vector<16x128xf32>
    %cst_38 = arith.constant 9.99999974E-6 : f32
    %88 = vector.broadcast %cst_38 : f32 to vector<16x1xf32>
    %89 = arith.addf %85, %88 : vector<16x1xf32>
    %90 = math.rsqrt %89 : vector<16x1xf32>
    %91 = vector.broadcast %90 : vector<16x1xf32> to vector<16x128xf32>
    %92 = arith.mulf %87, %91 : vector<16x128xf32>
    %93 = vector.broadcast %72 : vector<1x128xf32> to vector<16x128xf32>
    %94 = arith.mulf %92, %93 : vector<16x128xf32>
    %95 = vector.broadcast %74 : vector<1x128xf32> to vector<16x128xf32>
    %96 = arith.addf %94, %95 : vector<16x128xf32>
    %c0_39 = arith.constant 0 : index
    %c0_40 = arith.constant 0 : index
    %c0_41 = arith.constant 0 : index
    %97 = vector.load %arg4[%c0_39, %c0_40, %c0_41] : memref<2x1x8xf32, #tpu.memory_space<vmem>>, vector<2x1x8xf32>
    %c0_42 = arith.constant 0 : index
    %c0_43 = arith.constant 0 : index
    %c0_44 = arith.constant 0 : index
    %98 = vector.load %arg11[%c0_42, %c0_43, %c0_44] : memref<1x128x128xbf16, #tpu.memory_space<vmem>>, vector<1x128x128xbf16>
    %99 = vector.shape_cast %98 : vector<1x128x128xbf16> to vector<128x128xbf16>
    %c0_45 = arith.constant 0 : index
    %c0_46 = arith.constant 0 : index
    %c0_47 = arith.constant 0 : index
    %100 = vector.load %arg12[%c0_45, %c0_46, %c0_47] : memref<1x1x128xf32, #tpu.memory_space<vmem>>, vector<1x1x128xf32>
    %101 = vector.shape_cast %100 : vector<1x1x128xf32> to vector<1x128xf32>
    %c0_48 = arith.constant 0 : index
    %c0_49 = arith.constant 0 : index
    %c0_50 = arith.constant 0 : index
    %102 = vector.load %arg13[%c0_48, %c0_49, %c0_50] : memref<1x128x256xbf16, #tpu.memory_space<vmem>>, vector<1x128x256xbf16>
    %103 = vector.shape_cast %102 : vector<1x128x256xbf16> to vector<128x256xbf16>
    %c0_51 = arith.constant 0 : index
    %c0_52 = arith.constant 0 : index
    %c0_53 = arith.constant 0 : index
    %104 = vector.load %arg14[%c0_51, %c0_52, %c0_53] : memref<1x1x256xf32, #tpu.memory_space<vmem>>, vector<1x1x256xf32>
    %105 = vector.shape_cast %104 : vector<1x1x256xf32> to vector<1x256xf32>
    %c0_54 = arith.constant 0 : index
    %c0_55 = arith.constant 0 : index
    %c0_56 = arith.constant 0 : index
    %106 = vector.load %arg15[%c0_54, %c0_55, %c0_56] : memref<1x128x128xbf16, #tpu.memory_space<vmem>>, vector<1x128x128xbf16>
    %107 = vector.shape_cast %106 : vector<1x128x128xbf16> to vector<128x128xbf16>
    %c0_57 = arith.constant 0 : index
    %c0_58 = arith.constant 0 : index
    %c0_59 = arith.constant 0 : index
    %108 = vector.load %arg16[%c0_57, %c0_58, %c0_59] : memref<1x1x128xf32, #tpu.memory_space<vmem>>, vector<1x1x128xf32>
    %109 = vector.shape_cast %108 : vector<1x1x128xf32> to vector<1x128xf32>
    %110 = arith.truncf %96 : vector<16x128xf32> to vector<16x128xbf16>
    %cst_60 = arith.constant dense<0.000000e+00> : vector<16x128xf32>
    %111 = tpu.matmul %110, %99, %cst_60 {dimension_numbers = #tpu.dot_dimension_numbers<[1], [0], [0], [1], [0, 0, 1, 1], [], []>} : vector<16x128xbf16>, vector<128x128xbf16>, vector<16x128xf32> -> vector<16x128xf32>
    %112 = vector.broadcast %101 : vector<1x128xf32> to vector<16x128xf32>
    %113 = arith.addf %111, %112 : vector<16x128xf32>
    %114 = arith.truncf %6 : vector<16x128xf32> to vector<16x128xbf16>
    %cst_61 = arith.constant dense<0.000000e+00> : vector<16x256xf32>
    %115 = tpu.matmul %114, %103, %cst_61 {dimension_numbers = #tpu.dot_dimension_numbers<[1], [0], [0], [1], [0, 0, 1, 1], [], []>} : vector<16x128xbf16>, vector<128x256xbf16>, vector<16x256xf32> -> vector<16x256xf32>
    %116 = vector.broadcast %105 : vector<1x256xf32> to vector<16x256xf32>
    %117 = arith.addf %115, %116 : vector<16x256xf32>
    %118 = vector.extract_strided_slice %117 {offsets = [0, 0], sizes = [16, 128], strides = [1, 1]} : vector<16x256xf32> to vector<16x128xf32>
    %119 = vector.extract_strided_slice %117 {offsets = [0, 128], sizes = [16, 128], strides = [1, 1]} : vector<16x256xf32> to vector<16x128xf32>
    %120 = vector.shape_cast %113 : vector<16x128xf32> to vector<2x8x4x32xf32>
    %121 = tpu.transpose %120, [0, 2, 1, 3] : vector<2x8x4x32xf32> -> vector<2x4x8x32xf32>
    %122 = vector.shape_cast %121 : vector<2x4x8x32xf32> to vector<8x8x32xf32>
    %123 = arith.truncf %122 : vector<8x8x32xf32> to vector<8x8x32xbf16>
    %124 = vector.shape_cast %118 : vector<16x128xf32> to vector<2x8x4x32xf32>
    %125 = tpu.transpose %124, [0, 2, 1, 3] : vector<2x8x4x32xf32> -> vector<2x4x8x32xf32>
    %126 = vector.shape_cast %125 : vector<2x4x8x32xf32> to vector<8x8x32xf32>
    %127 = arith.truncf %126 : vector<8x8x32xf32> to vector<8x8x32xbf16>
    %128 = vector.shape_cast %119 : vector<16x128xf32> to vector<2x8x4x32xf32>
    %129 = tpu.transpose %128, [0, 2, 1, 3] : vector<2x8x4x32xf32> -> vector<2x4x8x32xf32>
    %130 = vector.shape_cast %129 : vector<2x4x8x32xf32> to vector<8x8x32xf32>
    %131 = arith.truncf %130 : vector<8x8x32xf32> to vector<8x8x32xbf16>
    "tpu.trace_start"() <{level = 10 : i32, message = "gqd,gkd->gqk"}> : () -> ()
    %cst_62 = arith.constant dense<0.000000e+00> : vector<8x8x8xf32>
    %132 = tpu.matmul %123, %127, %cst_62 {dimension_numbers = #tpu.dot_dimension_numbers<[2], [2], [1], [1], [0, 0, 0, 1, 1, 1], [0], [0]>} : vector<8x8x32xbf16>, vector<8x8x32xbf16>, vector<8x8x8xf32> -> vector<8x8x8xf32>
    "tpu.trace_stop"() : () -> ()
    %133 = vector.shape_cast %132 : vector<8x8x8xf32> to vector<2x4x8x8xf32>
    %134 = vector.shape_cast %97 : vector<2x1x8xf32> to vector<2x1x1x8xf32>
    %135 = vector.broadcast %134 : vector<2x1x1x8xf32> to vector<2x4x8x8xf32>
    %136 = arith.addf %133, %135 : vector<2x4x8x8xf32>
    %cst_63 = arith.constant dense<0xFF800000> : vector<2x4x8xf32>
    %137 = vector.multi_reduction <maximumf>, %136, %cst_63 [3] : vector<2x4x8x8xf32> to vector<2x4x8xf32>
    %138 = vector.shape_cast %137 : vector<2x4x8xf32> to vector<2x4x8x1xf32>
    %139 = vector.broadcast %138 : vector<2x4x8x1xf32> to vector<2x4x8x8xf32>
    %140 = arith.subf %136, %139 : vector<2x4x8x8xf32>
    %141 = math.exp %140 : vector<2x4x8x8xf32>
    %cst_64 = arith.constant dense<0.000000e+00> : vector<2x4x8xf32>
    %142 = vector.multi_reduction <add>, %141, %cst_64 [3] : vector<2x4x8x8xf32> to vector<2x4x8xf32>
    %143 = vector.shape_cast %142 : vector<2x4x8xf32> to vector<2x4x8x1xf32>
    %144 = tpu.reciprocal %143 {approx = true} : vector<2x4x8x1xf32> -> vector<2x4x8x1xf32>
    %145 = vector.broadcast %144 : vector<2x4x8x1xf32> to vector<2x4x8x8xf32>
    %146 = arith.mulf %141, %145 : vector<2x4x8x8xf32>
    %147 = vector.shape_cast %146 : vector<2x4x8x8xf32> to vector<8x8x8xf32>
    %148 = arith.truncf %147 : vector<8x8x8xf32> to vector<8x8x8xbf16>
    "tpu.trace_start"() <{level = 10 : i32, message = "gqk,gkd->gqd"}> : () -> ()
    %cst_65 = arith.constant dense<0.000000e+00> : vector<8x8x32xf32>
    %149 = tpu.matmul %148, %131, %cst_65 {dimension_numbers = #tpu.dot_dimension_numbers<[2], [1], [1], [2], [0, 0, 0, 1, 1, 2], [0], [0]>} : vector<8x8x8xbf16>, vector<8x8x32xbf16>, vector<8x8x32xf32> -> vector<8x8x32xf32>
    "tpu.trace_stop"() : () -> ()
    %150 = vector.shape_cast %149 : vector<8x8x32xf32> to vector<2x4x8x32xf32>
    %151 = tpu.transpose %150, [0, 2, 1, 3] : vector<2x4x8x32xf32> -> vector<2x8x4x32xf32>
    %152 = vector.shape_cast %151 : vector<2x8x4x32xf32> to vector<16x128xf32>
    %153 = arith.truncf %152 : vector<16x128xf32> to vector<16x128xbf16>
    %cst_66 = arith.constant dense<0.000000e+00> : vector<16x128xf32>
    %154 = tpu.matmul %153, %107, %cst_66 {dimension_numbers = #tpu.dot_dimension_numbers<[1], [0], [0], [1], [0, 0, 1, 1], [], []>} : vector<16x128xbf16>, vector<128x128xbf16>, vector<16x128xf32> -> vector<16x128xf32>
    %155 = vector.broadcast %109 : vector<1x128xf32> to vector<16x128xf32>
    %156 = arith.addf %154, %155 : vector<16x128xf32>
    %157 = arith.addf %96, %156 : vector<16x128xf32>
    %c0_67 = arith.constant 0 : index
    %c0_68 = arith.constant 0 : index
    %c0_69 = arith.constant 0 : index
    %158 = vector.load %arg17[%c0_67, %c0_68, %c0_69] : memref<1x1x128xf32, #tpu.memory_space<vmem>>, vector<1x1x128xf32>
    %159 = vector.shape_cast %158 : vector<1x1x128xf32> to vector<1x128xf32>
    %c0_70 = arith.constant 0 : index
    %c0_71 = arith.constant 0 : index
    %c0_72 = arith.constant 0 : index
    %160 = vector.load %arg18[%c0_70, %c0_71, %c0_72] : memref<1x1x128xf32, #tpu.memory_space<vmem>>, vector<1x1x128xf32>
    %161 = vector.shape_cast %160 : vector<1x1x128xf32> to vector<1x128xf32>
    %cst_73 = arith.constant dense<0.000000e+00> : vector<16xf32>
    %162 = vector.multi_reduction <add>, %157, %cst_73 [1] : vector<16x128xf32> to vector<16xf32>
    %163 = vector.shape_cast %162 : vector<16xf32> to vector<16x1xf32>
    %cst_74 = arith.constant 1.280000e+02 : f32
    %164 = vector.broadcast %cst_74 : f32 to vector<16x1xf32>
    %165 = arith.divf %163, %164 : vector<16x1xf32>
    %166 = vector.broadcast %165 : vector<16x1xf32> to vector<16x128xf32>
    %167 = arith.subf %157, %166 : vector<16x128xf32>
    %168 = arith.mulf %167, %167 : vector<16x128xf32>
    %cst_75 = arith.constant dense<0.000000e+00> : vector<16xf32>
    %169 = vector.multi_reduction <add>, %168, %cst_75 [1] : vector<16x128xf32> to vector<16xf32>
    %170 = vector.shape_cast %169 : vector<16xf32> to vector<16x1xf32>
    %cst_76 = arith.constant 1.280000e+02 : f32
    %171 = vector.broadcast %cst_76 : f32 to vector<16x1xf32>
    %172 = arith.divf %170, %171 : vector<16x1xf32>
    %173 = vector.broadcast %165 : vector<16x1xf32> to vector<16x128xf32>
    %174 = arith.subf %157, %173 : vector<16x128xf32>
    %cst_77 = arith.constant 9.99999974E-6 : f32
    %175 = vector.broadcast %cst_77 : f32 to vector<16x1xf32>
    %176 = arith.addf %172, %175 : vector<16x1xf32>
    %177 = math.rsqrt %176 : vector<16x1xf32>
    %178 = vector.broadcast %177 : vector<16x1xf32> to vector<16x128xf32>
    %179 = arith.mulf %174, %178 : vector<16x128xf32>
    %180 = vector.broadcast %159 : vector<1x128xf32> to vector<16x128xf32>
    %181 = arith.mulf %179, %180 : vector<16x128xf32>
    %182 = vector.broadcast %161 : vector<1x128xf32> to vector<16x128xf32>
    %183 = arith.addf %181, %182 : vector<16x128xf32>
    %c0_78 = arith.constant 0 : index
    %c0_79 = arith.constant 0 : index
    %c0_80 = arith.constant 0 : index
    %184 = vector.load %arg19[%c0_78, %c0_79, %c0_80] : memref<1x128x256xbf16, #tpu.memory_space<vmem>>, vector<1x128x256xbf16>
    %185 = vector.shape_cast %184 : vector<1x128x256xbf16> to vector<128x256xbf16>
    %c0_81 = arith.constant 0 : index
    %c0_82 = arith.constant 0 : index
    %c0_83 = arith.constant 0 : index
    %186 = vector.load %arg20[%c0_81, %c0_82, %c0_83] : memref<1x1x256xf32, #tpu.memory_space<vmem>>, vector<1x1x256xf32>
    %187 = vector.shape_cast %186 : vector<1x1x256xf32> to vector<1x256xf32>
    %c0_84 = arith.constant 0 : index
    %c0_85 = arith.constant 0 : index
    %c0_86 = arith.constant 0 : index
    %188 = vector.load %arg21[%c0_84, %c0_85, %c0_86] : memref<1x256x128xbf16, #tpu.memory_space<vmem>>, vector<1x256x128xbf16>
    %189 = vector.shape_cast %188 : vector<1x256x128xbf16> to vector<256x128xbf16>
    %c0_87 = arith.constant 0 : index
    %c0_88 = arith.constant 0 : index
    %c0_89 = arith.constant 0 : index
    %190 = vector.load %arg22[%c0_87, %c0_88, %c0_89] : memref<1x1x128xf32, #tpu.memory_space<vmem>>, vector<1x1x128xf32>
    %191 = vector.shape_cast %190 : vector<1x1x128xf32> to vector<1x128xf32>
    %192 = arith.truncf %183 : vector<16x128xf32> to vector<16x128xbf16>
    %cst_90 = arith.constant dense<0.000000e+00> : vector<16x256xf32>
    %193 = tpu.matmul %192, %185, %cst_90 {dimension_numbers = #tpu.dot_dimension_numbers<[1], [0], [0], [1], [0, 0, 1, 1], [], []>} : vector<16x128xbf16>, vector<128x256xbf16>, vector<16x256xf32> -> vector<16x256xf32>
    %194 = vector.broadcast %187 : vector<1x256xf32> to vector<16x256xf32>
    %195 = arith.addf %193, %194 : vector<16x256xf32>
    %cst_91 = arith.constant 0.000000e+00 : f32
    %196 = vector.broadcast %cst_91 : f32 to vector<16x256xf32>
    %197 = arith.maximumf %195, %196 : vector<16x256xf32>
    %198 = arith.truncf %197 : vector<16x256xf32> to vector<16x256xbf16>
    %cst_92 = arith.constant dense<0.000000e+00> : vector<16x128xf32>
    %199 = tpu.matmul %198, %189, %cst_92 {dimension_numbers = #tpu.dot_dimension_numbers<[1], [0], [0], [1], [0, 0, 1, 1], [], []>} : vector<16x256xbf16>, vector<256x128xbf16>, vector<16x128xf32> -> vector<16x128xf32>
    %200 = vector.broadcast %191 : vector<1x128xf32> to vector<16x128xf32>
    %201 = arith.addf %199, %200 : vector<16x128xf32>
    %202 = arith.addf %183, %201 : vector<16x128xf32>
    %c0_93 = arith.constant 0 : index
    %c0_94 = arith.constant 0 : index
    %c0_95 = arith.constant 0 : index
    %203 = vector.load %arg23[%c0_93, %c0_94, %c0_95] : memref<1x1x128xf32, #tpu.memory_space<vmem>>, vector<1x1x128xf32>
    %204 = vector.shape_cast %203 : vector<1x1x128xf32> to vector<1x128xf32>
    %c0_96 = arith.constant 0 : index
    %c0_97 = arith.constant 0 : index
    %c0_98 = arith.constant 0 : index
    %205 = vector.load %arg24[%c0_96, %c0_97, %c0_98] : memref<1x1x128xf32, #tpu.memory_space<vmem>>, vector<1x1x128xf32>
    %206 = vector.shape_cast %205 : vector<1x1x128xf32> to vector<1x128xf32>
    %cst_99 = arith.constant dense<0.000000e+00> : vector<16xf32>
    %207 = vector.multi_reduction <add>, %202, %cst_99 [1] : vector<16x128xf32> to vector<16xf32>
    %208 = vector.shape_cast %207 : vector<16xf32> to vector<16x1xf32>
    %cst_100 = arith.constant 1.280000e+02 : f32
    %209 = vector.broadcast %cst_100 : f32 to vector<16x1xf32>
    %210 = arith.divf %208, %209 : vector<16x1xf32>
    %211 = vector.broadcast %210 : vector<16x1xf32> to vector<16x128xf32>
    %212 = arith.subf %202, %211 : vector<16x128xf32>
    %213 = arith.mulf %212, %212 : vector<16x128xf32>
    %cst_101 = arith.constant dense<0.000000e+00> : vector<16xf32>
    %214 = vector.multi_reduction <add>, %213, %cst_101 [1] : vector<16x128xf32> to vector<16xf32>
    %215 = vector.shape_cast %214 : vector<16xf32> to vector<16x1xf32>
    %cst_102 = arith.constant 1.280000e+02 : f32
    %216 = vector.broadcast %cst_102 : f32 to vector<16x1xf32>
    %217 = arith.divf %215, %216 : vector<16x1xf32>
    %218 = vector.broadcast %210 : vector<16x1xf32> to vector<16x128xf32>
    %219 = arith.subf %202, %218 : vector<16x128xf32>
    %cst_103 = arith.constant 9.99999974E-6 : f32
    %220 = vector.broadcast %cst_103 : f32 to vector<16x1xf32>
    %221 = arith.addf %217, %220 : vector<16x1xf32>
    %222 = math.rsqrt %221 : vector<16x1xf32>
    %223 = vector.broadcast %222 : vector<16x1xf32> to vector<16x128xf32>
    %224 = arith.mulf %219, %223 : vector<16x128xf32>
    %225 = vector.broadcast %204 : vector<1x128xf32> to vector<16x128xf32>
    %226 = arith.mulf %224, %225 : vector<16x128xf32>
    %227 = vector.broadcast %206 : vector<1x128xf32> to vector<16x128xf32>
    %228 = arith.addf %226, %227 : vector<16x128xf32>
    %229 = vector.shape_cast %228 : vector<16x128xf32> to vector<2x8x128xf32>
    %c0_104 = arith.constant 0 : index
    %c0_105 = arith.constant 0 : index
    %c0_106 = arith.constant 0 : index
    %230 = vector.load %arg27[%c0_104, %c0_105, %c0_106] : memref<2x8x128xf32, #tpu.memory_space<vmem>>, vector<2x8x128xf32>
    tpu.vector_store %arg27[%c0_104, %c0_105, %c0_106], %229 {strides = array<i32>} : memref<2x8x128xf32, #tpu.memory_space<vmem>>, vector<2x8x128xf32>,
    %c1_i32 = arith.constant 1 : i32
    %231 = arith.cmpi eq, %arg0, %c1_i32 : i32
    %232 = arith.extui %231 : i1 to i32
    %c0_i32_107 = arith.constant 0 : i32
    %233 = arith.cmpi ne, %232, %c0_i32_107 : i32
    scf.if %233 {
      %c0_108 = arith.constant 0 : index
      %c0_109 = arith.constant 0 : index
      %234 = vector.load %arg25[%c0_108, %c0_109] : memref<1x128xf32, #tpu.memory_space<vmem>>, vector<1x128xf32>
      %c0_110 = arith.constant 0 : index
      %c0_111 = arith.constant 0 : index
      %235 = vector.load %arg26[%c0_110, %c0_111] : memref<1x128xf32, #tpu.memory_space<vmem>>, vector<1x128xf32>
      %cst_112 = arith.constant dense<0.000000e+00> : vector<16xf32>
      %236 = vector.multi_reduction <add>, %228, %cst_112 [1] : vector<16x128xf32> to vector<16xf32>
      %237 = vector.shape_cast %236 : vector<16xf32> to vector<16x1xf32>
      %cst_113 = arith.constant 1.280000e+02 : f32
      %238 = vector.broadcast %cst_113 : f32 to vector<16x1xf32>
      %239 = arith.divf %237, %238 : vector<16x1xf32>
      %240 = vector.broadcast %239 : vector<16x1xf32> to vector<16x128xf32>
      %241 = arith.subf %228, %240 : vector<16x128xf32>
      %242 = arith.mulf %241, %241 : vector<16x128xf32>
      %cst_114 = arith.constant dense<0.000000e+00> : vector<16xf32>
      %243 = vector.multi_reduction <add>, %242, %cst_114 [1] : vector<16x128xf32> to vector<16xf32>
      %244 = vector.shape_cast %243 : vector<16xf32> to vector<16x1xf32>
      %cst_115 = arith.constant 1.280000e+02 : f32
      %245 = vector.broadcast %cst_115 : f32 to vector<16x1xf32>
      %246 = arith.divf %244, %245 : vector<16x1xf32>
      %247 = vector.broadcast %239 : vector<16x1xf32> to vector<16x128xf32>
      %248 = arith.subf %228, %247 : vector<16x128xf32>
      %cst_116 = arith.constant 9.99999974E-6 : f32
      %249 = vector.broadcast %cst_116 : f32 to vector<16x1xf32>
      %250 = arith.addf %246, %249 : vector<16x1xf32>
      %251 = math.rsqrt %250 : vector<16x1xf32>
      %252 = vector.broadcast %251 : vector<16x1xf32> to vector<16x128xf32>
      %253 = arith.mulf %248, %252 : vector<16x128xf32>
      %254 = vector.broadcast %234 : vector<1x128xf32> to vector<16x128xf32>
      %255 = arith.mulf %253, %254 : vector<16x128xf32>
      %256 = vector.broadcast %235 : vector<1x128xf32> to vector<16x128xf32>
      %257 = arith.addf %255, %256 : vector<16x128xf32>
      %258 = vector.shape_cast %257 : vector<16x128xf32> to vector<2x8x128xf32>
      %c0_117 = arith.constant 0 : index
      %c0_118 = arith.constant 0 : index
      %c0_119 = arith.constant 0 : index
      %259 = vector.load %arg27[%c0_117, %c0_118, %c0_119] : memref<2x8x128xf32, #tpu.memory_space<vmem>>, vector<2x8x128xf32>
      tpu.vector_store %arg27[%c0_117, %c0_118, %c0_119], %258 {strides = array<i32>} : memref<2x8x128xf32, #tpu.memory_space<vmem>>, vector<2x8x128xf32>,
    } else {
    }
    return
  }
  func.func @transform_0(%arg0: i32) -> (i32, i32, i32) {
    %c0_i32 = arith.constant 0 : i32
    %c0_i32_0 = arith.constant 0 : i32
    %c0_i32_1 = arith.constant 0 : i32
    %c0_i32_2 = arith.constant 0 : i32
    return %c0_i32, %c0_i32_0, %c0_i32_1 : i32, i32, i32
  }
  func.func @transform_1(%arg0: i32) -> (i32, i32, i32) {
    %c0_i32 = arith.constant 0 : i32
    %c0_i32_0 = arith.constant 0 : i32
    %c0_i32_1 = arith.constant 0 : i32
    %c0_i32_2 = arith.constant 0 : i32
    return %c0_i32, %c0_i32_0, %c0_i32_1 : i32, i32, i32
  }
  func.func @transform_2(%arg0: i32) -> (i32, i32, i32) {
    %c0_i32 = arith.constant 0 : i32
    %c0_i32_0 = arith.constant 0 : i32
    %c0_i32_1 = arith.constant 0 : i32
    %c0_i32_2 = arith.constant 0 : i32
    return %c0_i32, %c0_i32_0, %c0_i32_1 : i32, i32, i32
  }
  func.func @transform_3(%arg0: i32) -> (i32, i32, i32) {
    %c0_i32 = arith.constant 0 : i32
    %c0_i32_0 = arith.constant 0 : i32
    %c0_i32_1 = arith.constant 0 : i32
    %c0_i32_2 = arith.constant 0 : i32
    return %c0_i32, %c0_i32_0, %c0_i32_1 : i32, i32, i32
  }
  func.func @transform_4(%arg0: i32) -> (i32, i32, i32) {
    %c0_i32 = arith.constant 0 : i32
    %c0_i32_0 = arith.constant 0 : i32
    %c0_i32_1 = arith.constant 0 : i32
    return %arg0, %c0_i32, %c0_i32_0 : i32, i32, i32
  }
  func.func @transform_5(%arg0: i32) -> (i32, i32, i32) {
    %c0_i32 = arith.constant 0 : i32
    %c0_i32_0 = arith.constant 0 : i32
    %c0_i32_1 = arith.constant 0 : i32
    return %arg0, %c0_i32, %c0_i32_0 : i32, i32, i32
  }
  func.func @transform_6(%arg0: i32) -> (i32, i32, i32) {
    %c0_i32 = arith.constant 0 : i32
    %c0_i32_0 = arith.constant 0 : i32
    %c0_i32_1 = arith.constant 0 : i32
    return %arg0, %c0_i32, %c0_i32_0 : i32, i32, i32
  }
  func.func @transform_7(%arg0: i32) -> (i32, i32, i32) {
    %c0_i32 = arith.constant 0 : i32
    %c0_i32_0 = arith.constant 0 : i32
    %c0_i32_1 = arith.constant 0 : i32
    return %arg0, %c0_i32, %c0_i32_0 : i32, i32, i32
  }
  func.func @transform_8(%arg0: i32) -> (i32, i32, i32) {
    %c0_i32 = arith.constant 0 : i32
    %c0_i32_0 = arith.constant 0 : i32
    %c0_i32_1 = arith.constant 0 : i32
    return %arg0, %c0_i32, %c0_i32_0 : i32, i32, i32
  }
  func.func @transform_9(%arg0: i32) -> (i32, i32, i32) {
    %c0_i32 = arith.constant 0 : i32
    %c0_i32_0 = arith.constant 0 : i32
    %c0_i32_1 = arith.constant 0 : i32
    return %arg0, %c0_i32, %c0_i32_0 : i32, i32, i32
  }
  func.func @transform_10(%arg0: i32) -> (i32, i32, i32) {
    %c0_i32 = arith.constant 0 : i32
    %c0_i32_0 = arith.constant 0 : i32
    %c0_i32_1 = arith.constant 0 : i32
    return %arg0, %c0_i32, %c0_i32_0 : i32, i32, i32
  }
  func.func @transform_11(%arg0: i32) -> (i32, i32, i32) {
    %c0_i32 = arith.constant 0 : i32
    %c0_i32_0 = arith.constant 0 : i32
    %c0_i32_1 = arith.constant 0 : i32
    return %arg0, %c0_i32, %c0_i32_0 : i32, i32, i32
  }
  func.func @transform_12(%arg0: i32) -> (i32, i32, i32) {
    %c0_i32 = arith.constant 0 : i32
    %c0_i32_0 = arith.constant 0 : i32
    %c0_i32_1 = arith.constant 0 : i32
    return %arg0, %c0_i32, %c0_i32_0 : i32, i32, i32
  }
  func.func @transform_13(%arg0: i32) -> (i32, i32, i32) {
    %c0_i32 = arith.constant 0 : i32
    %c0_i32_0 = arith.constant 0 : i32
    %c0_i32_1 = arith.constant 0 : i32
    return %arg0, %c0_i32, %c0_i32_0 : i32, i32, i32
  }
  func.func @transform_14(%arg0: i32) -> (i32, i32, i32) {
    %c0_i32 = arith.constant 0 : i32
    %c0_i32_0 = arith.constant 0 : i32
    %c0_i32_1 = arith.constant 0 : i32
    return %arg0, %c0_i32, %c0_i32_0 : i32, i32, i32
  }
  func.func @transform_15(%arg0: i32) -> (i32, i32, i32) {
    %c0_i32 = arith.constant 0 : i32
    %c0_i32_0 = arith.constant 0 : i32
    %c0_i32_1 = arith.constant 0 : i32
    return %arg0, %c0_i32, %c0_i32_0 : i32, i32, i32
  }
  func.func @transform_16(%arg0: i32) -> (i32, i32, i32) {
    %c0_i32 = arith.constant 0 : i32
    %c0_i32_0 = arith.constant 0 : i32
    %c0_i32_1 = arith.constant 0 : i32
    return %arg0, %c0_i32, %c0_i32_0 : i32, i32, i32
  }
  func.func @transform_17(%arg0: i32) -> (i32, i32, i32) {
    %c0_i32 = arith.constant 0 : i32
    %c0_i32_0 = arith.constant 0 : i32
    %c0_i32_1 = arith.constant 0 : i32
    return %arg0, %c0_i32, %c0_i32_0 : i32, i32, i32
  }
  func.func @transform_18(%arg0: i32) -> (i32, i32, i32) {
    %c0_i32 = arith.constant 0 : i32
    %c0_i32_0 = arith.constant 0 : i32
    %c0_i32_1 = arith.constant 0 : i32
    return %arg0, %c0_i32, %c0_i32_0 : i32, i32, i32
  }
  func.func @transform_19(%arg0: i32) -> (i32, i32, i32) {
    %c0_i32 = arith.constant 0 : i32
    %c0_i32_0 = arith.constant 0 : i32
    %c0_i32_1 = arith.constant 0 : i32
    return %arg0, %c0_i32, %c0_i32_0 : i32, i32, i32
  }
  func.func @transform_20(%arg0: i32) -> (i32, i32, i32) {
    %c0_i32 = arith.constant 0 : i32
    %c0_i32_0 = arith.constant 0 : i32
    %c0_i32_1 = arith.constant 0 : i32
    return %arg0, %c0_i32, %c0_i32_0 : i32, i32, i32
  }
  func.func @transform_21(%arg0: i32) -> (i32, i32, i32) {
    %c0_i32 = arith.constant 0 : i32
    %c0_i32_0 = arith.constant 0 : i32
    %c0_i32_1 = arith.constant 0 : i32
    return %arg0, %c0_i32, %c0_i32_0 : i32, i32, i32
  }
  func.func @transform_22(%arg0: i32) -> (i32, i32, i32) {
    %c0_i32 = arith.constant 0 : i32
    %c0_i32_0 = arith.constant 0 : i32
    %c0_i32_1 = arith.constant 0 : i32
    return %arg0, %c0_i32, %c0_i32_0 : i32, i32, i32
  }
  func.func @transform_23(%arg0: i32) -> (i32, i32, i32) {
    %c0_i32 = arith.constant 0 : i32
    %c0_i32_0 = arith.constant 0 : i32
    %c0_i32_1 = arith.constant 0 : i32
    return %arg0, %c0_i32, %c0_i32_0 : i32, i32, i32
  }
  func.func @transform_24(%arg0: i32) -> (i32, i32) {
    %c0_i32 = arith.constant 0 : i32
    %c0_i32_0 = arith.constant 0 : i32
    %c0_i32_1 = arith.constant 0 : i32
    return %c0_i32, %c0_i32_0 : i32, i32
  }
  func.func @transform_25(%arg0: i32) -> (i32, i32) {
    %c0_i32 = arith.constant 0 : i32
    %c0_i32_0 = arith.constant 0 : i32
    %c0_i32_1 = arith.constant 0 : i32
    return %c0_i32, %c0_i32_0 : i32, i32
  }
  func.func @transform_26(%arg0: i32) -> (i32, i32, i32) {
    %c0_i32 = arith.constant 0 : i32
    %c0_i32_0 = arith.constant 0 : i32
    %c0_i32_1 = arith.constant 0 : i32
    %c0_i32_2 = arith.constant 0 : i32
    return %c0_i32, %c0_i32_0, %c0_i32_1 : i32, i32, i32
  }
}

</mosaic_0001>

<llo_original>
// kernel: forward.5
$region0: #{forward.5}
  #allocation0 [shape = 'u32[]', space=smem, size = 0x4, offset = 0x4, fixed_abs, tag = 'smem constant byte address 0x4 - core index']
  #allocation1 [shape = 'u32[144,128]{1,0:T(1,128)}', space=vmem, size = 0x12000, scoped, tag = 'internal scratch']
  %s0 = inlined_call_operand.vmem [shape: f32[16,128], index: 0, kind: input, shape index: {}]
  %s1 = inlined_call_operand.vmem [shape: bf16[128,256], index: 1, kind: input, shape index: {}]
  %s2 = inlined_call_operand.vmem [shape: f32[1,256], index: 2, kind: input, shape index: {}]
  %s3 = inlined_call_operand.vmem [shape: f32[16,256], index: 3, kind: output, shape index: {}]
  %s4 = sld [smem:[#allocation0]]
  $region22: #{forward.5} parent=0
    _
  %s6 = ssub.s32 1, %s4
  %s7 = scalar_select 0, %s6, %s4
  // Predicated region
  $region2: #{forward.5} parent=0 // pred_check
    _
  $region3: #{forward.5} parent=0 // pred_check_branch
    %9 = sbr.rel (0) target = $region5
  $region4: #{forward.5} parent=0 // pred_region
    _
  $region5: #{forward.5} parent=0 // pred_fallthru
    _
  // Predicated region
  $region6: #{forward.5} parent=0 // pred_check
    _
  $region7: #{forward.5} parent=0 // pred_check_branch
    %11 = sbr.rel (0) target = $region9
  $region8: #{forward.5} parent=0 // pred_region
    _
  $region9: #{forward.5} parent=0 // pred_fallthru
    _
  // Predicated region
  $region10: #{forward.5} parent=0 // pred_check
    _
  $region11: #{forward.5} parent=0 // pred_check_branch
    %13 = sbr.rel (0) target = $region13
  $region12: #{forward.5} parent=0 // pred_region
    _
  $region13: #{forward.5} parent=0 // pred_fallthru
    _
  %v15 = vld [vmem:[%s0] sm:$0xff]
  %v16 = vld [vmem:[%s0 + $0x8] sm:$0xff]
  %v17 = vpack.c.bf16 %v16, %v15
  %v18 = vld [vmem:[%s1] sm:$0xff]
  %v19 = vld [vmem:[%s1 + $0x8] sm:$0xff]
  %v20 = vld [vmem:[%s1 + $0x10] sm:$0xff]
  %v21 = vld [vmem:[%s1 + $0x18] sm:$0xff]
  %v22 = vld [vmem:[%s1 + $0x20] sm:$0xff]
  %v23 = vld [vmem:[%s1 + $0x28] sm:$0xff]
  %v24 = vld [vmem:[%s1 + $0x30] sm:$0xff]
  %v25 = vld [vmem:[%s1 + $0x38] sm:$0xff]
  %v26 = vld [vmem:[%s1 + $0x40] sm:$0xff]
  %v27 = vld [vmem:[%s1 + $0x48] sm:$0xff]
  %v28 = vld [vmem:[%s1 + $0x50] sm:$0xff]
  %v29 = vld [vmem:[%s1 + $0x58] sm:$0xff]
  %v30 = vld [vmem:[%s1 + $0x60] sm:$0xff]
  %v31 = vld [vmem:[%s1 + $0x68] sm:$0xff]
  %v32 = vld [vmem:[%s1 + $0x70] sm:$0xff]
  %v33 = vld [vmem:[%s1 + $0x78] sm:$0xff]
  %v34 = vld [vmem:[%s2] sm:$0x3]
  %v36 = vlaneseq
  %v37 = vshrl.u32 %v36, 7
  %v38 = vsub.s32 0, %v37
  %v39 = vrot.slane %v34, %v38
  %v40 = vlaneseq
  %v41 = vshrl.u32 %v40, 7
  %v42 = vsub.s32 1, %v41
  %v43 = vrot.slane %v34, %v42
  %v62 = vunpack.c.l.b16 %v18
  %v63 = vunpack.c.h.b16 %v18
  %v64 = vunpack.c.l.b16 %v19
  %v65 = vunpack.c.h.b16 %v19
  %v66 = vunpack.c.l.b16 %v20
  %v67 = vunpack.c.h.b16 %v20
  %v68 = vunpack.c.l.b16 %v21
  %v69 = vunpack.c.h.b16 %v21
  %v70 = vunpack.c.l.b16 %v22
  %v71 = vunpack.c.h.b16 %v22
  %v72 = vunpack.c.l.b16 %v23
  %v73 = vunpack.c.h.b16 %v23
  %v74 = vunpack.c.l.b16 %v24
  %v75 = vunpack.c.h.b16 %v24
  %v76 = vunpack.c.l.b16 %v25
  %v77 = vunpack.c.h.b16 %v25
  %v78 = vunpack.c.l.b16 %v26
  %v79 = vunpack.c.h.b16 %v26
  %v80 = vunpack.c.l.b16 %v27
  %v81 = vunpack.c.h.b16 %v27
  %v82 = vunpack.c.l.b16 %v28
  %v83 = vunpack.c.h.b16 %v28
  %v84 = vunpack.c.l.b16 %v29
  %v85 = vunpack.c.h.b16 %v29
  %v86 = vunpack.c.l.b16 %v30
  %v87 = vunpack.c.h.b16 %v30
  %v88 = vunpack.c.l.b16 %v31
  %v89 = vunpack.c.h.b16 %v31
  %v90 = vunpack.c.l.b16 %v32
  %v91 = vunpack.c.h.b16 %v32
  %v92 = vunpack.c.l.b16 %v33
  %v93 = vunpack.c.h.b16 %v33
  %v94 = vpack.c.b16 %v64, %v62
  %v95 = vpack.c.b16 %v65, %v63
  %v96 = vpack.c.b16 %v68, %v66
  %v97 = vpack.c.b16 %v69, %v67
  %v98 = vpack.c.b16 %v72, %v70
  %v99 = vpack.c.b16 %v73, %v71
  %v100 = vpack.c.b16 %v76, %v74
  %v101 = vpack.c.b16 %v77, %v75
  %v102 = vpack.c.b16 %v80, %v78
  %v103 = vpack.c.b16 %v81, %v79
  %v104 = vpack.c.b16 %v84, %v82
  %v105 = vpack.c.b16 %v85, %v83
  %v106 = vpack.c.b16 %v88, %v86
  %v107 = vpack.c.b16 %v89, %v87
  %v108 = vpack.c.b16 %v92, %v90
  %v109 = vpack.c.b16 %v93, %v91
  %126 = vmatprep.subr.bf16.mxu0 %v109
  %127 = vmatpush1.bf16.msra.mxu0 %v108
  %128 = vmatprep.subr.bf16.mxu0 %v107
  %129 = vmatpush1.bf16.msra.mxu0 %v106
  %130 = vmatprep.subr.bf16.mxu0 %v105
  %131 = vmatpush1.bf16.msra.mxu0 %v104
  %132 = vmatprep.subr.bf16.mxu0 %v103
  %133 = vmatpush1.bf16.msra.mxu0 %v102
  %134 = vmatprep.subr.bf16.mxu0 %v101
  %135 = vmatpush1.bf16.msra.mxu0 %v100
  %136 = vmatprep.subr.bf16.mxu0 %v99
  %137 = vmatpush1.bf16.msra.mxu0 %v98
  %138 = vmatprep.subr.bf16.mxu0 %v97
  %139 = vmatpush1.bf16.msra.mxu0 %v96
  %140 = vmatprep.subr.bf16.mxu0 %v95
  %141 = vmatpush1.bf16.msra.mxu0 %v94
  %142 = vmatprep.subr.bf16.mxu0 0
  %143 = vmatpush2.bf16.msra.mxu0 0
  %144 = vmatprep.subr.bf16.mxu0 0
  %145 = vmatpush2.bf16.msra.mxu0 0
  %146 = vmatprep.subr.bf16.mxu0 0
  %147 = vmatpush2.bf16.msra.mxu0 0
  %148 = vmatprep.subr.bf16.mxu0 0
  %149 = vmatpush2.bf16.msra.mxu0 0
  %150 = vmatprep.subr.bf16.mxu0 0
  %151 = vmatpush2.bf16.msra.mxu0 0
  %152 = vmatprep.subr.bf16.mxu0 0
  %153 = vmatpush2.bf16.msra.mxu0 0
  %154 = vmatprep.subr.bf16.mxu0 0
  %155 = vmatpush2.bf16.msra.mxu0 0
  %156 = vmatprep.subr.bf16.mxu0 0
  %157 = vmatpush2.bf16.msra.mxu0 0
  %158 = vmatprep.mubr.bf16.mxu0 0
  %159 = vmatmul.mubr.bf16.gmra.mxu0 %v17
  %v160 = vpop.f32.mrf.mxu0
  %v161 = vadd.f32 %v39, %v160
  %v162 = vpop.f32.mrf.mxu0
  %v163 = vadd.f32 %v43, %v162
  %v164 = vpop.f32.mrf.mxu0
  %v165 = vadd.f32 %v39, %v164
  %v166 = vpop.f32.mrf.mxu0
  %v167 = vadd.f32 %v43, %v166
  %168 = vdwg.mxu0
  %169 = vst [vmem:[%s3] sm:$0xff] %v161
  %170 = vst [vmem:[%s3 + $0x8] sm:$0xff] %v163
  %171 = vst [vmem:[%s3 + $0x10] sm:$0xff] %v165
  %172 = vst [vmem:[%s3 + $0x18] sm:$0xff] %v167
  // Predicated region
  $region14: #{forward.5} parent=0 // pred_check
    _
  $region15: #{forward.5} parent=0 // pred_check_branch
    %174 = sbr.rel (0) target = $region17
  $region16: #{forward.5} parent=0 // pred_region
    _
  $region17: #{forward.5} parent=0 // pred_fallthru
    _
  // Predicated region
  $region18: #{forward.5} parent=0 // pred_check
    _
  $region19: #{forward.5} parent=0 // pred_check_branch
    %176 = sbr.rel (0) target = $region21
  $region20: #{forward.5} parent=0 // pred_region
    _
  $region21: #{forward.5} parent=0 // pred_fallthru
    _

// kernel: forward.3
$region0: #{forward.3}
  #allocation0 [shape = 'u32[]', space=smem, size = 0x4, offset = 0x4, fixed_abs, tag = 'smem constant byte address 0x4 - core index']
  #allocation1 [shape = 'u32[144,128]{1,0:T(1,128)}', space=vmem, size = 0x12000, scoped, tag = 'internal scratch']
  %s0 = inlined_call_operand.vmem [shape: f32[2,8,128], index: 0, kind: input, shape index: {}]
  %s1 = inlined_call_operand.vmem [shape: f32[2,1,8], index: 1, kind: input, shape index: {}]
  %s2 = inlined_call_operand.vmem [shape: bf16[2,128,384], index: 2, kind: input, shape index: {}]
  %s3 = inlined_call_operand.vmem [shape: f32[2,1,384], index: 3, kind: input, shape index: {}]
  %s4 = inlined_call_operand.hbm [shape: bf16[2,128,128], index: 4, kind: input, shape index: {}]
  %s5 = inlined_call_operand.vmem [shape: f32[2,1,128], index: 5, kind: input, shape index: {}]
  %s6 = inlined_call_operand.vmem [shape: f32[2,1,128], index: 6, kind: input, shape index: {}]
  %s7 = inlined_call_operand.vmem [shape: f32[2,1,128], index: 7, kind: input, shape index: {}]
  %s8 = inlined_call_operand.hbm [shape: bf16[2,128,256], index: 8, kind: input, shape index: {}]
  %s9 = inlined_call_operand.vmem [shape: f32[2,1,256], index: 9, kind: input, shape index: {}]
  %s10 = inlined_call_operand.hbm [shape: bf16[2,256,128], index: 10, kind: input, shape index: {}]
  %s11 = inlined_call_operand.vmem [shape: f32[2,1,128], index: 11, kind: input, shape index: {}]
  %s12 = inlined_call_operand.vmem [shape: f32[2,1,128], index: 12, kind: input, shape index: {}]
  %s13 = inlined_call_operand.vmem [shape: f32[2,1,128], index: 13, kind: input, shape index: {}]
  %s14 = inlined_call_operand.vmem [shape: f32[1,128], index: 14, kind: input, shape index: {}]
  %s15 = inlined_call_operand.vmem [shape: f32[1,128], index: 15, kind: input, shape index: {}]
  %s16 = inlined_call_operand.vmem [shape: f32[2,8,128], index: 16, kind: output, shape index: {}]
  %s17 = sld [smem:[#allocation0]]
  $region117: #{forward.3} parent=0
    _
  %s19 = ssub.s32 1, %s17
  %s20 = scalar_select 0, %s19, %s17
  $region1: #{forward.3} parent=0
    #allocation2 [shape = 'u8[65536]{0}', space=vmem, size = 0x10000, scoped, tag = 'input window, operand 4']
    #allocation3 [shape = 's32[2]{0}', space=sflag, size = 0x8, scoped, tag = 'scoped memory for forward.3']
    #allocation4 [shape = 'u8[131072]{0}', space=vmem, size = 0x20000, scoped, tag = 'input window, operand 8']
    #allocation5 [shape = 's32[2]{0}', space=sflag, size = 0x8, scoped, tag = 'scoped memory for forward.3']
    #allocation6 [shape = 'u8[131072]{0}', space=vmem, size = 0x20000, scoped, tag = 'input window, operand 10']
    %21 = vsyncpa [#allocation3], 0
    %s22 = scalar_lea.sflag [#allocation3], 1
    %23 = vsyncpa %s22, 0
    %24 = vsyncpa [#allocation5], 0
    %s25 = scalar_lea.sflag [#allocation5], 1
    %26 = vsyncpa %s25, 0
    loop: start=0, step=1, limit=4
    $region2: #{forward.3} parent=1 // loop_pre_header
      _
    $region3: #{forward.3} parent=1 // loop_header
      %s28 = sphi 0, %s32
      %p29 = scmp.ge.s32.totalorder %s28, 4
      %s36 = sphi 0, %s36
      %s38 = sphi 0, %s36
      %s39 = sphi 0, %s38
      %s53 = sphi 0, %s39
      %s57 = sphi 0, %s57
      %s59 = sphi 0, %s57
      %s60 = sphi 0, %s59
      %s74 = sphi 0, %s60
      %s80 = sphi 0, %s82
      %s83 = sphi 0, %s80
      %s84 = sphi 0, %s83
      %s100 = sphi 0, %s84
      %s106 = sphi 0, %s108
      %s109 = sphi 0, %s106
      %s110 = sphi 0, %s109
      %s126 = sphi 0, %s110
      %s132 = sphi 0, %s134
      %s135 = sphi 0, %s132
      %s136 = sphi 0, %s135
      %s152 = sphi 0, %s136
      %s158 = sphi 0, %s160
      %s161 = sphi 0, %s158
      %s162 = sphi 0, %s161
      %s178 = sphi 0, %s162
      %s184 = sphi 0, %s186
      %s187 = sphi 0, %s184
      %s188 = sphi 0, %s187
      %s204 = sphi 0, %s188
      %s210 = sphi 0, %s212
      %s213 = sphi 0, %s210
      %s214 = sphi 0, %s213
      %s230 = sphi 0, %s214
      %s236 = sphi 0, %s238
      %s239 = sphi 0, %s236
      %s240 = sphi 0, %s239
      %s256 = sphi 0, %s240
      %s262 = sphi 0, %s264
      %s265 = sphi 0, %s262
      %s266 = sphi 0, %s265
      %s282 = sphi 0, %s266
      %s288 = sphi 0, %s290
      %s291 = sphi 0, %s288
      %s292 = sphi 0, %s291
      %s308 = sphi 0, %s292
      %s314 = sphi 0, %s316
      %s317 = sphi 0, %s314
      %s318 = sphi 0, %s317
      %s334 = sphi 0, %s318
      %s340 = sphi 0, %s342
      %s343 = sphi 0, %s340
      %s344 = sphi 0, %s343
      %s360 = sphi 0, %s344
      %s366 = sphi 0, %s368
      %s369 = sphi 0, %s366
      %s370 = sphi 0, %s369
      %s386 = sphi 0, %s370
      %s390 = sphi 0, %s390
      %s392 = sphi 0, %s390
      %s393 = sphi 0, %s392
      %s407 = sphi 0, %s393
      %s411 = sphi 0, %s411
      %s413 = sphi 0, %s411
      %s414 = sphi 0, %s413
      %s428 = sphi 0, %s414
      %s432 = sphi 0, %s432
      %s434 = sphi 0, %s432
      %s435 = sphi 0, %s434
      %s449 = sphi 0, %s435
    $region4: #{forward.3} parent=1 // loop_header_branch
      %31 = sbr.rel (%p29) target = $region8
    $region5: #{forward.3} parent=1 // loop_body
      %s33 = ssub.s32 %s28, 1
      %s34 = ssub.s32 %s28, 2
      %s35 = sadd.s32 %s28, 1
      %s37 = sadd.s32 %s36, 1
      %p40 = scmp.eq.s32.totalorder %s28, 1
      %p41 = scmp.ne.s32.totalorder %s36, %s38
      %p42 = scmp.eq.s32.totalorder %s28, 0
      %p43 = por %p41, %p42
      %p44 = scmp.ne.s32.totalorder %s36, %s38
      %p45 = scmp.eq.s32.totalorder %s33, 1
      %p46 = por %p44, %p45
      %p47 = scmp.ne.s32.totalorder %s38, %s39
      %p48 = scmp.eq.s32.totalorder %s33, 0
      %p49 = por %p47, %p48
      %p50 = scmp.ne.s32.totalorder %s38, %s39
      %p51 = scmp.eq.s32.totalorder %s34, 1
      %p52 = por %p50, %p51
      %p54 = scmp.ne.s32.totalorder %s39, %s53
      %p55 = scmp.eq.s32.totalorder %s34, 0
      %p56 = por %p54, %p55
      %s58 = sadd.s32 %s57, 1
      %p61 = scmp.eq.s32.totalorder %s28, 1
      %p62 = scmp.ne.s32.totalorder %s57, %s59
      %p63 = scmp.eq.s32.totalorder %s28, 0
      %p64 = por %p62, %p63
      %p65 = scmp.ne.s32.totalorder %s57, %s59
      %p66 = scmp.eq.s32.totalorder %s33, 1
      %p67 = por %p65, %p66
      %p68 = scmp.ne.s32.totalorder %s59, %s60
      %p69 = scmp.eq.s32.totalorder %s33, 0
      %p70 = por %p68, %p69
      %p71 = scmp.ne.s32.totalorder %s59, %s60
      %p72 = scmp.eq.s32.totalorder %s34, 1
      %p73 = por %p71, %p72
      %p75 = scmp.ne.s32.totalorder %s60, %s74
      %p76 = scmp.eq.s32.totalorder %s34, 0
      %p77 = por %p75, %p76
      %s78 = ssub.s32 %s28, %s35
      %p79 = scmp.eq.s32.totalorder %s78, 0
      %s81 = sadd.s32 %s80, 1
      %s82 = scalar_select %p79, %s80, %s81
      %p85 = pneg %p79
      %p86 = scmp.eq.s32.totalorder %s28, 1
      %p87 = por %p85, %p86
      %p88 = scmp.ne.s32.totalorder %s80, %s83
      %p89 = scmp.eq.s32.totalorder %s28, 0
      %p90 = por %p88, %p89
      %p91 = scmp.ne.s32.totalorder %s80, %s83
      %p92 = scmp.eq.s32.totalorder %s33, 1
      %p93 = por %p91, %p92
      %p94 = scmp.ne.s32.totalorder %s83, %s84
      %p95 = scmp.eq.s32.totalorder %s33, 0
      %p96 = por %p94, %p95
      %p97 = scmp.ne.s32.totalorder %s83, %s84
      %p98 = scmp.eq.s32.totalorder %s34, 1
      %p99 = por %p97, %p98
      %p101 = scmp.ne.s32.totalorder %s84, %s100
      %p102 = scmp.eq.s32.totalorder %s34, 0
      %p103 = por %p101, %p102
      %s104 = ssub.s32 %s28, %s35
      %p105 = scmp.eq.s32.totalorder %s104, 0
      %s107 = sadd.s32 %s106, 1
      %s108 = scalar_select %p105, %s106, %s107
      %p111 = pneg %p105
      %p112 = scmp.eq.s32.totalorder %s28, 1
      %p113 = por %p111, %p112
      %p114 = scmp.ne.s32.totalorder %s106, %s109
      %p115 = scmp.eq.s32.totalorder %s28, 0
      %p116 = por %p114, %p115
      %p117 = scmp.ne.s32.totalorder %s106, %s109
      %p118 = scmp.eq.s32.totalorder %s33, 1
      %p119 = por %p117, %p118
      %p120 = scmp.ne.s32.totalorder %s109, %s110
      %p121 = scmp.eq.s32.totalorder %s33, 0
      %p122 = por %p120, %p121
      %p123 = scmp.ne.s32.totalorder %s109, %s110
      %p124 = scmp.eq.s32.totalorder %s34, 1
      %p125 = por %p123, %p124
      %p127 = scmp.ne.s32.totalorder %s110, %s126
      %p128 = scmp.eq.s32.totalorder %s34, 0
      %p129 = por %p127, %p128
      %s130 = ssub.s32 %s28, %s35
      %p131 = scmp.eq.s32.totalorder %s130, 0
      %s133 = sadd.s32 %s132, 1
      %s134 = scalar_select %p131, %s132, %s133
      %p137 = pneg %p131
      %p138 = scmp.eq.s32.totalorder %s28, 1
      %p139 = por %p137, %p138
      %p140 = scmp.ne.s32.totalorder %s132, %s135
      %p141 = scmp.eq.s32.totalorder %s28, 0
      %p142 = por %p140, %p141
      %p143 = scmp.ne.s32.totalorder %s132, %s135
      %p144 = scmp.eq.s32.totalorder %s33, 1
      %p145 = por %p143, %p144
      %p146 = scmp.ne.s32.totalorder %s135, %s136
      %p147 = scmp.eq.s32.totalorder %s33, 0
      %p148 = por %p146, %p147
      %p149 = scmp.ne.s32.totalorder %s135, %s136
      %p150 = scmp.eq.s32.totalorder %s34, 1
      %p151 = por %p149, %p150
      %p153 = scmp.ne.s32.totalorder %s136, %s152
      %p154 = scmp.eq.s32.totalorder %s34, 0
      %p155 = por %p153, %p154
      %s156 = ssub.s32 %s28, %s35
      %p157 = scmp.eq.s32.totalorder %s156, 0
      %s159 = sadd.s32 %s158, 1
      %s160 = scalar_select %p157, %s158, %s159
      %p163 = pneg %p157
      %p164 = scmp.eq.s32.totalorder %s28, 1
      %p165 = por %p163, %p164
      %p166 = scmp.ne.s32.totalorder %s158, %s161
      %p167 = scmp.eq.s32.totalorder %s28, 0
      %p168 = por %p166, %p167
      %p169 = scmp.ne.s32.totalorder %s158, %s161
      %p170 = scmp.eq.s32.totalorder %s33, 1
      %p171 = por %p169, %p170
      %p172 = scmp.ne.s32.totalorder %s161, %s162
      %p173 = scmp.eq.s32.totalorder %s33, 0
      %p174 = por %p172, %p173
      %p175 = scmp.ne.s32.totalorder %s161, %s162
      %p176 = scmp.eq.s32.totalorder %s34, 1
      %p177 = por %p175, %p176
      %p179 = scmp.ne.s32.totalorder %s162, %s178
      %p180 = scmp.eq.s32.totalorder %s34, 0
      %p181 = por %p179, %p180
      %s182 = ssub.s32 %s28, %s35
      %p183 = scmp.eq.s32.totalorder %s182, 0
      %s185 = sadd.s32 %s184, 1
      %s186 = scalar_select %p183, %s184, %s185
      %p189 = pneg %p183
      %p190 = scmp.eq.s32.totalorder %s28, 1
      %p191 = por %p189, %p190
      %p192 = scmp.ne.s32.totalorder %s184, %s187
      %p193 = scmp.eq.s32.totalorder %s28, 0
      %p194 = por %p192, %p193
      %p195 = scmp.ne.s32.totalorder %s184, %s187
      %p196 = scmp.eq.s32.totalorder %s33, 1
      %p197 = por %p195, %p196
      %p198 = scmp.ne.s32.totalorder %s187, %s188
      %p199 = scmp.eq.s32.totalorder %s33, 0
      %p200 = por %p198, %p199
      %p201 = scmp.ne.s32.totalorder %s187, %s188
      %p202 = scmp.eq.s32.totalorder %s34, 1
      %p203 = por %p201, %p202
      %p205 = scmp.ne.s32.totalorder %s188, %s204
      %p206 = scmp.eq.s32.totalorder %s34, 0
      %p207 = por %p205, %p206
      %s208 = ssub.s32 %s28, %s35
      %p209 = scmp.eq.s32.totalorder %s208, 0
      %s211 = sadd.s32 %s210, 1
      %s212 = scalar_select %p209, %s210, %s211
      %p215 = pneg %p209
      %p216 = scmp.eq.s32.totalorder %s28, 1
      %p217 = por %p215, %p216
      %p218 = scmp.ne.s32.totalorder %s210, %s213
      %p219 = scmp.eq.s32.totalorder %s28, 0
      %p220 = por %p218, %p219
      %p221 = scmp.ne.s32.totalorder %s210, %s213
      %p222 = scmp.eq.s32.totalorder %s33, 1
      %p223 = por %p221, %p222
      %p224 = scmp.ne.s32.totalorder %s213, %s214
      %p225 = scmp.eq.s32.totalorder %s33, 0
      %p226 = por %p224, %p225
      %p227 = scmp.ne.s32.totalorder %s213, %s214
      %p228 = scmp.eq.s32.totalorder %s34, 1
      %p229 = por %p227, %p228
      %p231 = scmp.ne.s32.totalorder %s214, %s230
      %p232 = scmp.eq.s32.totalorder %s34, 0
      %p233 = por %p231, %p232
      %s234 = ssub.s32 %s28, %s35
      %p235 = scmp.eq.s32.totalorder %s234, 0
      %s237 = sadd.s32 %s236, 1
      %s238 = scalar_select %p235, %s236, %s237
      %p241 = pneg %p235
      %p242 = scmp.eq.s32.totalorder %s28, 1
      %p243 = por %p241, %p242
      %p244 = scmp.ne.s32.totalorder %s236, %s239
      %p245 = scmp.eq.s32.totalorder %s28, 0
      %p246 = por %p244, %p245
      %p247 = scmp.ne.s32.totalorder %s236, %s239
      %p248 = scmp.eq.s32.totalorder %s33, 1
      %p249 = por %p247, %p248
      %p250 = scmp.ne.s32.totalorder %s239, %s240
      %p251 = scmp.eq.s32.totalorder %s33, 0
      %p252 = por %p250, %p251
      %p253 = scmp.ne.s32.totalorder %s239, %s240
      %p254 = scmp.eq.s32.totalorder %s34, 1
      %p255 = por %p253, %p254
      %p257 = scmp.ne.s32.totalorder %s240, %s256
      %p258 = scmp.eq.s32.totalorder %s34, 0
      %p259 = por %p257, %p258
      %s260 = ssub.s32 %s28, %s35
      %p261 = scmp.eq.s32.totalorder %s260, 0
      %s263 = sadd.s32 %s262, 1
      %s264 = scalar_select %p261, %s262, %s263
      %p267 = pneg %p261
      %p268 = scmp.eq.s32.totalorder %s28, 1
      %p269 = por %p267, %p268
      %p270 = scmp.ne.s32.totalorder %s262, %s265
      %p271 = scmp.eq.s32.totalorder %s28, 0
      %p272 = por %p270, %p271
      %p273 = scmp.ne.s32.totalorder %s262, %s265
      %p274 = scmp.eq.s32.totalorder %s33, 1
      %p275 = por %p273, %p274
      %p276 = scmp.ne.s32.totalorder %s265, %s266
      %p277 = scmp.eq.s32.totalorder %s33, 0
      %p278 = por %p276, %p277
      %p279 = scmp.ne.s32.totalorder %s265, %s266
      %p280 = scmp.eq.s32.totalorder %s34, 1
      %p281 = por %p279, %p280
      %p283 = scmp.ne.s32.totalorder %s266, %s282
      %p284 = scmp.eq.s32.totalorder %s34, 0
      %p285 = por %p283, %p284
      %s286 = ssub.s32 %s28, %s35
      %p287 = scmp.eq.s32.totalorder %s286, 0
      %s289 = sadd.s32 %s288, 1
      %s290 = scalar_select %p287, %s288, %s289
      %p293 = pneg %p287
      %p294 = scmp.eq.s32.totalorder %s28, 1
      %p295 = por %p293, %p294
      %p296 = scmp.ne.s32.totalorder %s288, %s291
      %p297 = scmp.eq.s32.totalorder %s28, 0
      %p298 = por %p296, %p297
      %p299 = scmp.ne.s32.totalorder %s288, %s291
      %p300 = scmp.eq.s32.totalorder %s33, 1
      %p301 = por %p299, %p300
      %p302 = scmp.ne.s32.totalorder %s291, %s292
      %p303 = scmp.eq.s32.totalorder %s33, 0
      %p304 = por %p302, %p303
      %p305 = scmp.ne.s32.totalorder %s291, %s292
      %p306 = scmp.eq.s32.totalorder %s34, 1
      %p307 = por %p305, %p306
      %p309 = scmp.ne.s32.totalorder %s292, %s308
      %p310 = scmp.eq.s32.totalorder %s34, 0
      %p311 = por %p309, %p310
      %s312 = ssub.s32 %s28, %s35
      %p313 = scmp.eq.s32.totalorder %s312, 0
      %s315 = sadd.s32 %s314, 1
      %s316 = scalar_select %p313, %s314, %s315
      %p319 = pneg %p313
      %p320 = scmp.eq.s32.totalorder %s28, 1
      %p321 = por %p319, %p320
      %p322 = scmp.ne.s32.totalorder %s314, %s317
      %p323 = scmp.eq.s32.totalorder %s28, 0
      %p324 = por %p322, %p323
      %p325 = scmp.ne.s32.totalorder %s314, %s317
      %p326 = scmp.eq.s32.totalorder %s33, 1
      %p327 = por %p325, %p326
      %p328 = scmp.ne.s32.totalorder %s317, %s318
      %p329 = scmp.eq.s32.totalorder %s33, 0
      %p330 = por %p328, %p329
      %p331 = scmp.ne.s32.totalorder %s317, %s318
      %p332 = scmp.eq.s32.totalorder %s34, 1
      %p333 = por %p331, %p332
      %p335 = scmp.ne.s32.totalorder %s318, %s334
      %p336 = scmp.eq.s32.totalorder %s34, 0
      %p337 = por %p335, %p336
      %s338 = ssub.s32 %s28, %s35
      %p339 = scmp.eq.s32.totalorder %s338, 0
      %s341 = sadd.s32 %s340, 1
      %s342 = scalar_select %p339, %s340, %s341
      %p345 = pneg %p339
      %p346 = scmp.eq.s32.totalorder %s28, 1
      %p347 = por %p345, %p346
      %p348 = scmp.ne.s32.totalorder %s340, %s343
      %p349 = scmp.eq.s32.totalorder %s28, 0
      %p350 = por %p348, %p349
      %p351 = scmp.ne.s32.totalorder %s340, %s343
      %p352 = scmp.eq.s32.totalorder %s33, 1
      %p353 = por %p351, %p352
      %p354 = scmp.ne.s32.totalorder %s343, %s344
      %p355 = scmp.eq.s32.totalorder %s33, 0
      %p356 = por %p354, %p355
      %p357 = scmp.ne.s32.totalorder %s343, %s344
      %p358 = scmp.eq.s32.totalorder %s34, 1
      %p359 = por %p357, %p358
      %p361 = scmp.ne.s32.totalorder %s344, %s360
      %p362 = scmp.eq.s32.totalorder %s34, 0
      %p363 = por %p361, %p362
      %s364 = ssub.s32 %s28, %s35
      %p365 = scmp.eq.s32.totalorder %s364, 0
      %s367 = sadd.s32 %s366, 1
      %s368 = scalar_select %p365, %s366, %s367
      %p371 = pneg %p365
      %p372 = scmp.eq.s32.totalorder %s28, 1
      %p373 = por %p371, %p372
      %p374 = scmp.ne.s32.totalorder %s366, %s369
      %p375 = scmp.eq.s32.totalorder %s28, 0
      %p376 = por %p374, %p375
      %p377 = scmp.ne.s32.totalorder %s366, %s369
      %p378 = scmp.eq.s32.totalorder %s33, 1
      %p379 = por %p377, %p378
      %p380 = scmp.ne.s32.totalorder %s369, %s370
      %p381 = scmp.eq.s32.totalorder %s33, 0
      %p382 = por %p380, %p381
      %p383 = scmp.ne.s32.totalorder %s369, %s370
      %p384 = scmp.eq.s32.totalorder %s34, 1
      %p385 = por %p383, %p384
      %p387 = scmp.ne.s32.totalorder %s370, %s386
      %p388 = scmp.eq.s32.totalorder %s34, 0
      %p389 = por %p387, %p388
      %s391 = sadd.s32 %s390, 1
      %p394 = scmp.eq.s32.totalorder %s28, 1
      %p395 = scmp.ne.s32.totalorder %s390, %s392
      %p396 = scmp.eq.s32.totalorder %s28, 0
      %p397 = por %p395, %p396
      %p398 = scmp.ne.s32.totalorder %s390, %s392
      %p399 = scmp.eq.s32.totalorder %s33, 1
      %p400 = por %p398, %p399
      %p401 = scmp.ne.s32.totalorder %s392, %s393
      %p402 = scmp.eq.s32.totalorder %s33, 0
      %p403 = por %p401, %p402
      %p404 = scmp.ne.s32.totalorder %s392, %s393
      %p405 = scmp.eq.s32.totalorder %s34, 1
      %p406 = por %p404, %p405
      %p408 = scmp.ne.s32.totalorder %s393, %s407
      %p409 = scmp.eq.s32.totalorder %s34, 0
      %p410 = por %p408, %p409
      %s412 = sadd.s32 %s411, 1
      %p415 = scmp.eq.s32.totalorder %s28, 1
      %p416 = scmp.ne.s32.totalorder %s411, %s413
      %p417 = scmp.eq.s32.totalorder %s28, 0
      %p418 = por %p416, %p417
      %p419 = scmp.ne.s32.totalorder %s411, %s413
      %p420 = scmp.eq.s32.totalorder %s33, 1
      %p421 = por %p419, %p420
      %p422 = scmp.ne.s32.totalorder %s413, %s414
      %p423 = scmp.eq.s32.totalorder %s33, 0
      %p424 = por %p422, %p423
      %p425 = scmp.ne.s32.totalorder %s413, %s414
      %p426 = scmp.eq.s32.totalorder %s34, 1
      %p427 = por %p425, %p426
      %p429 = scmp.ne.s32.totalorder %s414, %s428
      %p430 = scmp.eq.s32.totalorder %s34, 0
      %p431 = por %p429, %p430
      %s433 = sadd.s32 %s432, 1
      %p436 = scmp.eq.s32.totalorder %s28, 1
      %p437 = scmp.ne.s32.totalorder %s432, %s434
      %p438 = scmp.eq.s32.totalorder %s28, 0
      %p439 = por %p437, %p438
      %p440 = scmp.ne.s32.totalorder %s432, %s434
      %p441 = scmp.eq.s32.totalorder %s33, 1
      %p442 = por %p440, %p441
      %p443 = scmp.ne.s32.totalorder %s434, %s435
      %p444 = scmp.eq.s32.totalorder %s33, 0
      %p445 = por %p443, %p444
      %p446 = scmp.ne.s32.totalorder %s434, %s435
      %p447 = scmp.eq.s32.totalorder %s34, 1
      %p448 = por %p446, %p447
      %p450 = scmp.ne.s32.totalorder %s435, %s449
      %p451 = scmp.eq.s32.totalorder %s34, 0
      %p452 = por %p450, %p451
      %p453 = scmp.le.s32.totalorder 1, %s28
      %p454 = scmp.lt.s32.totalorder %s28, 3
      %p455 = pnand %p453, %p454
      %p456 = pneg %p455
      // Predicated region
      $region9: #{forward.3} parent=5 // pred_check
        _
      $region10: #{forward.3} parent=5 // pred_check_branch
        %458 = sbr.rel (%p455) target = $region12
      $region11: #{forward.3} parent=5 // pred_region
        %s459 = ssub.s32 %s28, 1
        // Predicated region
        $region13: #{forward.3} parent=11 // pred_check
          %p460 = pneg %p49
        $region14: #{forward.3} parent=11 // pred_check_branch
          %462 = sbr.rel (%p460) target = $region16
        $region15: #{forward.3} parent=11 // pred_region
          _
        $region16: #{forward.3} parent=11 // pred_fallthru
          _
        // Predicated region
        $region17: #{forward.3} parent=11 // pred_check
          %p463 = pneg %p70
        $region18: #{forward.3} parent=11 // pred_check_branch
          %465 = sbr.rel (%p463) target = $region20
        $region19: #{forward.3} parent=11 // pred_region
          _
        $region20: #{forward.3} parent=11 // pred_fallthru
          _
        // Predicated region
        $region21: #{forward.3} parent=11 // pred_check
          %p466 = pneg %p403
        $region22: #{forward.3} parent=11 // pred_check_branch
          %468 = sbr.rel (%p466) target = $region24
        $region23: #{forward.3} parent=11 // pred_region
          _
        $region24: #{forward.3} parent=11 // pred_fallthru
          _
        // Predicated region
        $region25: #{forward.3} parent=11 // pred_check
          %p469 = pneg %p424
        $region26: #{forward.3} parent=11 // pred_check_branch
          %471 = sbr.rel (%p469) target = $region28
        $region27: #{forward.3} parent=11 // pred_region
          _
        $region28: #{forward.3} parent=11 // pred_fallthru
          _
      $region12: #{forward.3} parent=5 // pred_fallthru
        _
      %p472 = scmp.lt.s32.totalorder %s28, 2
      // Predicated region
      $region29: #{forward.3} parent=5 // pred_check
        %p473 = pneg %p472
      $region30: #{forward.3} parent=5 // pred_check_branch
        %475 = sbr.rel (%p473) target = $region32
      $region31: #{forward.3} parent=5 // pred_region
        // Predicated region
        $region33: #{forward.3} parent=31 // pred_check
          %p476 = pneg %p90
        $region34: #{forward.3} parent=31 // pred_check_branch
          %478 = sbr.rel (%p476) target = $region36
        $region35: #{forward.3} parent=31 // pred_region
          %p479 = scmp.lt.s32.totalorder %s28, 1
          %s480 = scalar_select %p479, %s28, 1
          %s481 = smul.addr %s480, 48
          %s482 = smul.addr %s481, 4
          %s483 = scalar_lea.vmem %s2, %s482
        $region36: #{forward.3} parent=31 // pred_fallthru
          _
        // Predicated region
        $region37: #{forward.3} parent=31 // pred_check
          %p484 = pneg %p116
        $region38: #{forward.3} parent=31 // pred_check_branch
          %486 = sbr.rel (%p484) target = $region40
        $region39: #{forward.3} parent=31 // pred_region
          %p487 = scmp.lt.s32.totalorder %s28, 1
          %s488 = scalar_select %p487, %s28, 1
          %s489 = smul.addr %s488, 3
          %s490 = scalar_lea.vmem %s3, %s489
        $region40: #{forward.3} parent=31 // pred_fallthru
          _
        // Predicated region
        $region41: #{forward.3} parent=31 // pred_check
          %p491 = pneg %p142
        $region42: #{forward.3} parent=31 // pred_check_branch
          %493 = sbr.rel (%p491) target = $region44
        $region43: #{forward.3} parent=31 // pred_region
          %s494 = sand.u32 %s132, 1
          %s495 = scalar_lea.sflag [#allocation3], %s494
          %s496 = sand.u32 %s132, 1
          %s497 = smul.addr %s496, 64
          %s498 = scalar_lea.vmem [#allocation2], %s497
          %s500 = ssub.s32 1024, 1024
          %501 = vsyncadd %s495, %s500
          %s502 = smul.addr %s28, 16
          %s503 = smul.addr %s502, 64
          %s504 = scalar_lea.hbm %s4, %s503
          %s505 = sshll.u32 %s498, 4
          %s506 = int_to_ptr.vmem [resolvable:$true] %s505
          %511 = dma.hbm_to_vmem [thread:$0]  %s504, 1024, %s506, %s495, 64, 64, 4
        $region44: #{forward.3} parent=31 // pred_fallthru
          _
        // Predicated region
        $region45: #{forward.3} parent=31 // pred_check
          %p512 = pneg %p168
        $region46: #{forward.3} parent=31 // pred_check_branch
          %514 = sbr.rel (%p512) target = $region48
        $region47: #{forward.3} parent=31 // pred_region
          %p515 = scmp.lt.s32.totalorder %s28, 1
          %s516 = scalar_select %p515, %s28, 1
          %s517 = scalar_lea.vmem %s5, %s516
        $region48: #{forward.3} parent=31 // pred_fallthru
          _
        // Predicated region
        $region49: #{forward.3} parent=31 // pred_check
          %p518 = pneg %p194
        $region50: #{forward.3} parent=31 // pred_check_branch
          %520 = sbr.rel (%p518) target = $region52
        $region51: #{forward.3} parent=31 // pred_region
          %p521 = scmp.lt.s32.totalorder %s28, 1
          %s522 = scalar_select %p521, %s28, 1
          %s523 = scalar_lea.vmem %s6, %s522
        $region52: #{forward.3} parent=31 // pred_fallthru
          _
        // Predicated region
        $region53: #{forward.3} parent=31 // pred_check
          %p524 = pneg %p220
        $region54: #{forward.3} parent=31 // pred_check_branch
          %526 = sbr.rel (%p524) target = $region56
        $region55: #{forward.3} parent=31 // pred_region
          %p527 = scmp.lt.s32.totalorder %s28, 1
          %s528 = scalar_select %p527, %s28, 1
          %s529 = scalar_lea.vmem %s7, %s528
        $region56: #{forward.3} parent=31 // pred_fallthru
          _
        // Predicated region
        $region57: #{forward.3} parent=31 // pred_check
          %p530 = pneg %p246
        $region58: #{forward.3} parent=31 // pred_check_branch
          %532 = sbr.rel (%p530) target = $region60
        $region59: #{forward.3} parent=31 // pred_region
          %s533 = sand.u32 %s28, 1
          %s534 = scalar_lea.sflag [#allocation5], %s533
          %s535 = sand.u32 %s236, 1
          %s536 = smul.addr %s535, 128
          %s537 = scalar_lea.vmem [#allocation4], %s536
          %s539 = ssub.s32 2048, 2048
          %540 = vsyncadd %s534, %s539
          %s541 = smul.addr %s28, 32
          %s542 = smul.addr %s541, 64
          %s543 = scalar_lea.hbm %s8, %s542
          %s544 = sshll.u32 %s537, 4
          %s545 = int_to_ptr.vmem [resolvable:$true] %s544
          %550 = dma.hbm_to_vmem [thread:$0]  %s543, 2048, %s545, %s534, 128, 128, 8
        $region60: #{forward.3} parent=31 // pred_fallthru
          _
        // Predicated region
        $region61: #{forward.3} parent=31 // pred_check
          %p551 = pneg %p272
        $region62: #{forward.3} parent=31 // pred_check_branch
          %553 = sbr.rel (%p551) target = $region64
        $region63: #{forward.3} parent=31 // pred_region
          %p554 = scmp.lt.s32.totalorder %s28, 1
          %s555 = scalar_select %p554, %s28, 1
          %s556 = smul.addr %s555, 2
          %s557 = scalar_lea.vmem %s9, %s556
        $region64: #{forward.3} parent=31 // pred_fallthru
          _
        // Predicated region
        $region65: #{forward.3} parent=31 // pred_check
          %p558 = pneg %p298
        $region66: #{forward.3} parent=31 // pred_check_branch
          %560 = sbr.rel (%p558) target = $region68
        $region67: #{forward.3} parent=31 // pred_region
          %s561 = sand.u32 %s28, 1
          %s562 = scalar_lea.sflag [#allocation5], %s561
          %s563 = sand.u32 %s288, 1
          %s564 = smul.addr %s563, 128
          %s565 = scalar_lea.vmem [#allocation6], %s564
          %s567 = ssub.s32 2048, 2048
          %568 = vsyncadd %s562, %s567
          %s569 = smul.addr %s28, 32
          %s570 = smul.addr %s569, 64
          %s571 = scalar_lea.hbm %s10, %s570
          %s572 = sshll.u32 %s565, 4
          %s573 = int_to_ptr.vmem [resolvable:$true] %s572
          %578 = dma.hbm_to_vmem [thread:$0]  %s571, 2048, %s573, %s562, 64, 64, 4
        $region68: #{forward.3} parent=31 // pred_fallthru
          _
        // Predicated region
        $region69: #{forward.3} parent=31 // pred_check
          %p579 = pneg %p324
        $region70: #{forward.3} parent=31 // pred_check_branch
          %581 = sbr.rel (%p579) target = $region72
        $region71: #{forward.3} parent=31 // pred_region
          %p582 = scmp.lt.s32.totalorder %s28, 1
          %s583 = scalar_select %p582, %s28, 1
          %s584 = scalar_lea.vmem %s11, %s583
        $region72: #{forward.3} parent=31 // pred_fallthru
          _
        // Predicated region
        $region73: #{forward.3} parent=31 // pred_check
          %p585 = pneg %p350
        $region74: #{forward.3} parent=31 // pred_check_branch
          %587 = sbr.rel (%p585) target = $region76
        $region75: #{forward.3} parent=31 // pred_region
          %p588 = scmp.lt.s32.totalorder %s28, 1
          %s589 = scalar_select %p588, %s28, 1
          %s590 = scalar_lea.vmem %s12, %s589
        $region76: #{forward.3} parent=31 // pred_fallthru
          _
        // Predicated region
        $region77: #{forward.3} parent=31 // pred_check
          %p591 = pneg %p376
        $region78: #{forward.3} parent=31 // pred_check_branch
          %593 = sbr.rel (%p591) target = $region80
        $region79: #{forward.3} parent=31 // pred_region
          %p594 = scmp.lt.s32.totalorder %s28, 1
          %s595 = scalar_select %p594, %s28, 1
          %s596 = scalar_lea.vmem %s13, %s595
        $region80: #{forward.3} parent=31 // pred_fallthru
          _
      $region32: #{forward.3} parent=5 // pred_fallthru
        _
      %p597 = scmp.le.s32.totalorder 1, %s28
      %p598 = scmp.lt.s32.totalorder %s28, 3
      %p599 = pnand %p597, %p598
      %p600 = pneg %p599
      // Predicated region
      $region81: #{forward.3} parent=5 // pred_check
        _
      $region82: #{forward.3} parent=5 // pred_check_branch
        %602 = sbr.rel (%p599) target = $region84
      $region83: #{forward.3} parent=5 // pred_region
        %s603 = ssub.s32 %s28, 1
        %s604 = sand.u32 %s135, 1
        %s605 = scalar_lea.sflag [#allocation3], %s604
        %s606 = sand.u32 %s135, 1
        %s607 = smul.addr %s606, 64
        %s608 = scalar_lea.vmem [#allocation2], %s607
        // Predicated region
        $region85: #{forward.3} parent=83 // pred_check
          %p609 = pneg %p148
        $region86: #{forward.3} parent=83 // pred_check_branch
          %611 = sbr.rel (%p609) target = $region88
        $region87: #{forward.3} parent=83 // pred_region
          %612 = dma.done %s605, 1024
        $region88: #{forward.3} parent=83 // pred_fallthru
          _
        %s613 = sand.u32 %s33, 1
        %s614 = scalar_lea.sflag [#allocation5], %s613
        %s615 = sand.u32 %s239, 1
        %s616 = smul.addr %s615, 128
        %s617 = scalar_lea.vmem [#allocation4], %s616
        // Predicated region
        $region89: #{forward.3} parent=83 // pred_check
          %p618 = pneg %p252
        $region90: #{forward.3} parent=83 // pred_check_branch
          %620 = sbr.rel (%p618) target = $region92
        $region91: #{forward.3} parent=83 // pred_region
          %621 = dma.done %s614, 2048
        $region92: #{forward.3} parent=83 // pred_fallthru
          _
        %s622 = sand.u32 %s33, 1
        %s623 = scalar_lea.sflag [#allocation5], %s622
        %s624 = sand.u32 %s291, 1
        %s625 = smul.addr %s624, 128
        %s626 = scalar_lea.vmem [#allocation6], %s625
        // Predicated region
        $region93: #{forward.3} parent=83 // pred_check
          %p627 = pneg %p304
        $region94: #{forward.3} parent=83 // pred_check_branch
          %629 = sbr.rel (%p627) target = $region96
        $region95: #{forward.3} parent=83 // pred_region
          %630 = dma.done %s623, 2048
        $region96: #{forward.3} parent=83 // pred_fallthru
          _
        %p631 = pneg %p49
        %p632 = pneg %p46
        %p633 = pneg %p70
        %p634 = pneg %p67
        %p635 = scmp.lt.s32.totalorder %s33, 1
        %s636 = scalar_select %p635, %s33, 1
        %s637 = smul.addr %s636, 48
        %s638 = smul.addr %s637, 4
        %s639 = scalar_lea.vmem %s2, %s638
        %p640 = pneg %p96
        %p641 = pneg %p93
        %p642 = scmp.lt.s32.totalorder %s33, 1
        %s643 = scalar_select %p642, %s33, 1
        %s644 = smul.addr %s643, 3
        %s645 = scalar_lea.vmem %s3, %s644
        %p646 = pneg %p122
        %p647 = pneg %p119
        %s648 = sand.u32 %s135, 1
        %s649 = scalar_lea.sflag [#allocation3], %s648
        %s650 = sand.u32 %s135, 1
        %s651 = smul.addr %s650, 64
        %s652 = scalar_lea.vmem [#allocation2], %s651
        %p653 = pneg %p148
        %p654 = pneg %p145
        %p655 = scmp.lt.s32.totalorder %s33, 1
        %s656 = scalar_select %p655, %s33, 1
        %s657 = scalar_lea.vmem %s5, %s656
        %p658 = pneg %p174
        %p659 = pneg %p171
        %p660 = scmp.lt.s32.totalorder %s33, 1
        %s661 = scalar_select %p660, %s33, 1
        %s662 = scalar_lea.vmem %s6, %s661
        %p663 = pneg %p200
        %p664 = pneg %p197
        %p665 = scmp.lt.s32.totalorder %s33, 1
        %s666 = scalar_select %p665, %s33, 1
        %s667 = scalar_lea.vmem %s7, %s666
        %p668 = pneg %p226
        %p669 = pneg %p223
        %s670 = sand.u32 %s33, 1
        %s671 = scalar_lea.sflag [#allocation5], %s670
        %s672 = sand.u32 %s239, 1
        %s673 = smul.addr %s672, 128
        %s674 = scalar_lea.vmem [#allocation4], %s673
        %p675 = pneg %p252
        %p676 = pneg %p249
        %p677 = scmp.lt.s32.totalorder %s33, 1
        %s678 = scalar_select %p677, %s33, 1
        %s679 = smul.addr %s678, 2
        %s680 = scalar_lea.vmem %s9, %s679
        %p681 = pneg %p278
        %p682 = pneg %p275
        %s683 = sand.u32 %s33, 1
        %s684 = scalar_lea.sflag [#allocation5], %s683
        %s685 = sand.u32 %s291, 1
        %s686 = smul.addr %s685, 128
        %s687 = scalar_lea.vmem [#allocation6], %s686
        %p688 = pneg %p304
        %p689 = pneg %p301
        %p690 = scmp.lt.s32.totalorder %s33, 1
        %s691 = scalar_select %p690, %s33, 1
        %s692 = scalar_lea.vmem %s11, %s691
        %p693 = pneg %p330
        %p694 = pneg %p327
        %p695 = scmp.lt.s32.totalorder %s33, 1
        %s696 = scalar_select %p695, %s33, 1
        %s697 = scalar_lea.vmem %s12, %s696
        %p698 = pneg %p356
        %p699 = pneg %p353
        %p700 = scmp.lt.s32.totalorder %s33, 1
        %s701 = scalar_select %p700, %s33, 1
        %s702 = scalar_lea.vmem %s13, %s701
        %p703 = pneg %p382
        %p704 = pneg %p379
        %p705 = pneg %p403
        %p706 = pneg %p400
        %p707 = pneg %p424
        %p708 = pneg %p421
        %p709 = pneg %p445
        %p710 = pneg %p442
        %p711 = scmp.lt.s32.totalorder %s33, 1
        %s712 = scalar_select %p711, %s33, 1
        %s713 = smul.addr %s712, 48
        %s714 = smul.addr %s713, 4
        %s715 = scalar_lea.vmem %s2, %s714
        %p716 = scmp.lt.s32.totalorder %s33, 1
        %s717 = scalar_select %p716, %s33, 1
        %s718 = smul.addr %s717, 3
        %s719 = scalar_lea.vmem %s3, %s718
        %p720 = scmp.lt.s32.totalorder %s33, 1
        %s721 = scalar_select %p720, %s33, 1
        %s722 = scalar_lea.vmem %s5, %s721
        %p723 = scmp.lt.s32.totalorder %s33, 1
        %s724 = scalar_select %p723, %s33, 1
        %s725 = scalar_lea.vmem %s6, %s724
        %p726 = scmp.lt.s32.totalorder %s33, 1
        %s727 = scalar_select %p726, %s33, 1
        %s728 = scalar_lea.vmem %s7, %s727
        %p729 = scmp.lt.s32.totalorder %s33, 1
        %s730 = scalar_select %p729, %s33, 1
        %s731 = smul.addr %s730, 2
        %s732 = scalar_lea.vmem %s9, %s731
        %p733 = scmp.lt.s32.totalorder %s33, 1
        %s734 = scalar_select %p733, %s33, 1
        %s735 = scalar_lea.vmem %s11, %s734
        %p736 = scmp.lt.s32.totalorder %s33, 1
        %s737 = scalar_select %p736, %s33, 1
        %s738 = scalar_lea.vmem %s12, %s737
        %p739 = scmp.lt.s32.totalorder %s33, 1
        %s740 = scalar_select %p739, %s33, 1
        %s741 = scalar_lea.vmem %s13, %s740
        %p743 = scmp.eq.s32.totalorder %s33, 0
        // Predicated region
        $region97: #{forward.3} parent=83 // pred_check
          %p744 = pneg %p743
        $region98: #{forward.3} parent=83 // pred_check_branch
          %746 = sbr.rel (%p744) target = $region100
        $region99: #{forward.3} parent=83 // pred_region
          %v747 = vld [vmem:[%s0] sm:$0xff]
          %v748 = vld [vmem:[%s0 + $0x8] sm:$0xff]
          %749 = vst [vmem:[%s16] sm:$0xff] %v747
          %750 = vst [vmem:[%s16 + $0x8] sm:$0xff] %v748
        $region100: #{forward.3} parent=83 // pred_fallthru
          _
        %v751 = vld [vmem:[%s16] sm:$0xff]
        %v752 = vld [vmem:[%s16 + $0x8] sm:$0xff]
        %v753 = vld [vmem:[%s1] sm:$0x1]
        %v754 = vld [vmem:[%s1 + $0x1] sm:$0x1]
        %v755 = vld [vmem:[%s715] sm:$0xff]
        %v756 = vld [vmem:[%s715 + $0x8] sm:$0xf]
        %v757 = vld [vmem:[%s715 + $0xc] sm:$0xff]
        %v758 = vld [vmem:[%s715 + $0x14] sm:$0xf]
        %v759 = vld [vmem:[%s715 + $0x18] sm:$0xff]
        %v760 = vld [vmem:[%s715 + $0x20] sm:$0xf]
        %v761 = vld [vmem:[%s715 + $0x24] sm:$0xff]
        %v762 = vld [vmem:[%s715 + $0x2c] sm:$0xf]
        %v763 = vld [vmem:[%s715 + $0x30] sm:$0xff]
        %v764 = vld [vmem:[%s715 + $0x38] sm:$0xf]
        %v765 = vld [vmem:[%s715 + $0x3c] sm:$0xff]
        %v766 = vld [vmem:[%s715 + $0x44] sm:$0xf]
        %v767 = vld [vmem:[%s715 + $0x48] sm:$0xff]
        %v768 = vld [vmem:[%s715 + $0x50] sm:$0xf]
        %v769 = vld [vmem:[%s715 + $0x54] sm:$0xff]
        %v770 = vld [vmem:[%s715 + $0x5c] sm:$0xf]
        %v771 = vld [vmem:[%s715 + $0x60] sm:$0xff]
        %v772 = vld [vmem:[%s715 + $0x68] sm:$0xf]
        %v773 = vld [vmem:[%s715 + $0x6c] sm:$0xff]
        %v774 = vld [vmem:[%s715 + $0x74] sm:$0xf]
        %v775 = vld [vmem:[%s715 + $0x78] sm:$0xff]
        %v776 = vld [vmem:[%s715 + $0x80] sm:$0xf]
        %v777 = vld [vmem:[%s715 + $0x84] sm:$0xff]
        %v778 = vld [vmem:[%s715 + $0x8c] sm:$0xf]
        %v779 = vld [vmem:[%s715 + $0x90] sm:$0xff]
        %v780 = vld [vmem:[%s715 + $0x98] sm:$0xf]
        %v781 = vld [vmem:[%s715 + $0x9c] sm:$0xff]
        %v782 = vld [vmem:[%s715 + $0xa4] sm:$0xf]
        %v783 = vld [vmem:[%s715 + $0xa8] sm:$0xff]
        %v784 = vld [vmem:[%s715 + $0xb0] sm:$0xf]
        %v785 = vld [vmem:[%s715 + $0xb4] sm:$0xff]
        %v786 = vld [vmem:[%s715 + $0xbc] sm:$0xf]
        %v787 = vld [vmem:[%s719] sm:$0x7]
        %v788 = vld [vmem:[%s608] sm:$0xf]
        %v789 = vld [vmem:[%s608 + $0x4] sm:$0xf]
        %v790 = vld [vmem:[%s608 + $0x8] sm:$0xf]
        %v791 = vld [vmem:[%s608 + $0xc] sm:$0xf]
        %v792 = vld [vmem:[%s608 + $0x10] sm:$0xf]
        %v793 = vld [vmem:[%s608 + $0x14] sm:$0xf]
        %v794 = vld [vmem:[%s608 + $0x18] sm:$0xf]
        %v795 = vld [vmem:[%s608 + $0x1c] sm:$0xf]
        %v796 = vld [vmem:[%s608 + $0x20] sm:$0xf]
        %v797 = vld [vmem:[%s608 + $0x24] sm:$0xf]
        %v798 = vld [vmem:[%s608 + $0x28] sm:$0xf]
        %v799 = vld [vmem:[%s608 + $0x2c] sm:$0xf]
        %v800 = vld [vmem:[%s608 + $0x30] sm:$0xf]
        %v801 = vld [vmem:[%s608 + $0x34] sm:$0xf]
        %v802 = vld [vmem:[%s608 + $0x38] sm:$0xf]
        %v803 = vld [vmem:[%s608 + $0x3c] sm:$0xf]
        %v804 = vld [vmem:[%s722] sm:$0x1]
        %v805 = vpack.c.bf16 %v752, %v751
        %v807 = vlaneseq
        %v808 = vshrl.u32 %v807, 7
        %v809 = vsub.s32 0, %v808
        %v810 = vrot.slane %v787, %v809
        %v811 = vlaneseq
        %v812 = vshrl.u32 %v811, 7
        %v813 = vsub.s32 1, %v812
        %v814 = vrot.slane %v787, %v813
        %v815 = vlaneseq
        %v816 = vshrl.u32 %v815, 7
        %v817 = vsub.s32 2, %v816
        %v818 = vrot.slane %v787, %v817
        %v854 = vunpack.c.l.b16 %v755
        %v855 = vunpack.c.h.b16 %v755
        %v856 = vunpack.c.l.b16 %v756
        %v857 = vunpack.c.l.b16 %v757
        %v858 = vunpack.c.h.b16 %v757
        %v859 = vunpack.c.l.b16 %v758
        %v860 = vunpack.c.l.b16 %v759
        %v861 = vunpack.c.h.b16 %v759
        %v862 = vunpack.c.l.b16 %v760
        %v863 = vunpack.c.l.b16 %v761
        %v864 = vunpack.c.h.b16 %v761
        %v865 = vunpack.c.l.b16 %v762
        %v866 = vunpack.c.l.b16 %v763
        %v867 = vunpack.c.h.b16 %v763
        %v868 = vunpack.c.l.b16 %v764
        %v869 = vunpack.c.l.b16 %v765
        %v870 = vunpack.c.h.b16 %v765
        %v871 = vunpack.c.l.b16 %v766
        %v872 = vunpack.c.l.b16 %v767
        %v873 = vunpack.c.h.b16 %v767
        %v874 = vunpack.c.l.b16 %v768
        %v875 = vunpack.c.l.b16 %v769
        %v876 = vunpack.c.h.b16 %v769
        %v877 = vunpack.c.l.b16 %v770
        %v878 = vunpack.c.l.b16 %v771
        %v879 = vunpack.c.h.b16 %v771
        %v880 = vunpack.c.l.b16 %v772
        %v881 = vunpack.c.l.b16 %v773
        %v882 = vunpack.c.h.b16 %v773
        %v883 = vunpack.c.l.b16 %v774
        %v884 = vunpack.c.l.b16 %v775
        %v885 = vunpack.c.h.b16 %v775
        %v886 = vunpack.c.l.b16 %v776
        %v887 = vunpack.c.l.b16 %v777
        %v888 = vunpack.c.h.b16 %v777
        %v889 = vunpack.c.l.b16 %v778
        %v890 = vunpack.c.l.b16 %v779
        %v891 = vunpack.c.h.b16 %v779
        %v892 = vunpack.c.l.b16 %v780
        %v893 = vunpack.c.l.b16 %v781
        %v894 = vunpack.c.h.b16 %v781
        %v895 = vunpack.c.l.b16 %v782
        %v896 = vunpack.c.l.b16 %v783
        %v897 = vunpack.c.h.b16 %v783
        %v898 = vunpack.c.l.b16 %v784
        %v899 = vunpack.c.l.b16 %v785
        %v900 = vunpack.c.h.b16 %v785
        %v901 = vunpack.c.l.b16 %v786
        %v902 = vpack.c.b16 %v857, %v854
        %v903 = vpack.c.b16 %v858, %v855
        %v904 = vpack.c.b16 %v859, %v856
        %v905 = vpack.c.b16 %v863, %v860
        %v906 = vpack.c.b16 %v864, %v861
        %v907 = vpack.c.b16 %v865, %v862
        %v908 = vpack.c.b16 %v869, %v866
        %v909 = vpack.c.b16 %v870, %v867
        %v910 = vpack.c.b16 %v871, %v868
        %v911 = vpack.c.b16 %v875, %v872
        %v912 = vpack.c.b16 %v876, %v873
        %v913 = vpack.c.b16 %v877, %v874
        %v914 = vpack.c.b16 %v881, %v878
        %v915 = vpack.c.b16 %v882, %v879
        %v916 = vpack.c.b16 %v883, %v880
        %v917 = vpack.c.b16 %v887, %v884
        %v918 = vpack.c.b16 %v888, %v885
        %v919 = vpack.c.b16 %v889, %v886
        %v920 = vpack.c.b16 %v893, %v890
        %v921 = vpack.c.b16 %v894, %v891
        %v922 = vpack.c.b16 %v895, %v892
        %v923 = vpack.c.b16 %v899, %v896
        %v924 = vpack.c.b16 %v900, %v897
        %v925 = vpack.c.b16 %v901, %v898
        %950 = vmatprep.subr.bf16.mxu0 %v924
        %951 = vmatpush1.bf16.msra.mxu0 %v923
        %952 = vmatprep.subr.bf16.mxu0 %v921
        %953 = vmatpush1.bf16.msra.mxu0 %v920
        %954 = vmatprep.subr.bf16.mxu0 %v918
        %955 = vmatpush1.bf16.msra.mxu0 %v917
        %956 = vmatprep.subr.bf16.mxu0 %v915
        %957 = vmatpush1.bf16.msra.mxu0 %v914
        %958 = vmatprep.subr.bf16.mxu0 %v912
        %959 = vmatpush1.bf16.msra.mxu0 %v911
        %960 = vmatprep.subr.bf16.mxu0 %v909
        %961 = vmatpush1.bf16.msra.mxu0 %v908
        %962 = vmatprep.subr.bf16.mxu0 %v906
        %963 = vmatpush1.bf16.msra.mxu0 %v905
        %964 = vmatprep.subr.bf16.mxu0 %v903
        %965 = vmatpush1.bf16.msra.mxu0 %v902
        %966 = vmatprep.subr.bf16.mxu0 0
        %967 = vmatpush2.bf16.msra.mxu0 0
        %968 = vmatprep.subr.bf16.mxu0 0
        %969 = vmatpush2.bf16.msra.mxu0 0
        %970 = vmatprep.subr.bf16.mxu0 0
        %971 = vmatpush2.bf16.msra.mxu0 0
        %972 = vmatprep.subr.bf16.mxu0 0
        %973 = vmatpush2.bf16.msra.mxu0 0
        %974 = vmatprep.subr.bf16.mxu0 0
        %975 = vmatpush2.bf16.msra.mxu0 0
        %976 = vmatprep.subr.bf16.mxu0 0
        %977 = vmatpush2.bf16.msra.mxu0 0
        %978 = vmatprep.subr.bf16.mxu0 0
        %979 = vmatpush2.bf16.msra.mxu0 0
        %980 = vmatprep.subr.bf16.mxu0 0
        %981 = vmatpush2.bf16.msra.mxu0 0
        %982 = vmatprep.mubr.bf16.mxu0 0
        %983 = vmatmul.mubr.bf16.gmra.mxu0 %v805
        %v984 = vpop.f32.mrf.mxu0
        %v985 = vadd.f32 %v810, %v984
        %v986 = vpop.f32.mrf.mxu0
        %v987 = vadd.f32 %v814, %v986
        %v988 = vpop.f32.mrf.mxu0
        %v989 = vadd.f32 %v810, %v988
        %v990 = vpop.f32.mrf.mxu0
        %v991 = vadd.f32 %v814, %v990
        %992 = vdwg.mxu0
        %993 = vmatprep.subr.bf16.mxu0 0
        %994 = vmatpush1.bf16.msra.mxu0 %v925
        %995 = vmatprep.subr.bf16.mxu0 0
        %996 = vmatpush1.bf16.msra.mxu0 %v922
        %997 = vmatprep.subr.bf16.mxu0 0
        %998 = vmatpush1.bf16.msra.mxu0 %v919
        %999 = vmatprep.subr.bf16.mxu0 0
        %1000 = vmatpush1.bf16.msra.mxu0 %v916
        %1001 = vmatprep.subr.bf16.mxu0 0
        %1002 = vmatpush1.bf16.msra.mxu0 %v913
        %1003 = vmatprep.subr.bf16.mxu0 0
        %1004 = vmatpush1.bf16.msra.mxu0 %v910
        %1005 = vmatprep.subr.bf16.mxu0 0
        %1006 = vmatpush1.bf16.msra.mxu0 %v907
        %1007 = vmatprep.subr.bf16.mxu0 0
        %1008 = vmatpush1.bf16.msra.mxu0 %v904
        %1009 = vmatprep.subr.bf16.mxu0 0
        %1010 = vmatpush2.bf16.msra.mxu0 0
        %1011 = vmatprep.subr.bf16.mxu0 0
        %1012 = vmatpush2.bf16.msra.mxu0 0
        %1013 = vmatprep.subr.bf16.mxu0 0
        %1014 = vmatpush2.bf16.msra.mxu0 0
        %1015 = vmatprep.subr.bf16.mxu0 0
        %1016 = vmatpush2.bf16.msra.mxu0 0
        %1017 = vmatprep.subr.bf16.mxu0 0
        %1018 = vmatpush2.bf16.msra.mxu0 0
        %1019 = vmatprep.subr.bf16.mxu0 0
        %1020 = vmatpush2.bf16.msra.mxu0 0
        %1021 = vmatprep.subr.bf16.mxu0 0
        %1022 = vmatpush2.bf16.msra.mxu0 0
        %1023 = vmatprep.subr.bf16.mxu0 0
        %1024 = vmatpush2.bf16.msra.mxu0 0
        %1025 = vmatprep.mubr.bf16.mxu0 0
        %1026 = vmatmul.mubr.bf16.gmra.mxu0 %v805
        %v1027 = vpop.f32.mrf.mxu0
        %v1028 = vadd.f32 %v818, %v1027
        %v1029 = vpop.f32.mrf.mxu0
        %v1030 = vpop.f32.mrf.mxu0
        %v1031 = vadd.f32 %v818, %v1030
        %v1032 = vpop.f32.mrf.mxu0
        %1033 = vdwg.mxu0
        %1036 = vrot.lane.b32.xlu0 %v985, 96
        %v1037 = vpop.permute.xlu0 %1036
        %1038 = vrot.lane.b32.xlu0 %v989, 96
        %v1039 = vpop.permute.xlu0 %1038
        %1042 = vrot.lane.b32.xlu0 %v985, 64
        %v1043 = vpop.permute.xlu0 %1042
        %1044 = vrot.lane.b32.xlu0 %v989, 64
        %v1045 = vpop.permute.xlu0 %1044
        %1048 = vrot.lane.b32.xlu0 %v985, 32
        %v1049 = vpop.permute.xlu0 %1048
        %1050 = vrot.lane.b32.xlu0 %v989, 32
        %v1051 = vpop.permute.xlu0 %1050
        %v1054 = vcombine.low %v985, %v1043
        %v1055 = vcombine.high %v985, %v1043
        %v1057 = vunpack.c.l.s4 1983009808
        %v1058 = vunpack.c.0.s8 %v1057
        %v1059 = vlaneseq
        %v1060 = vshrl.u32 %v1059, 7
        %v1061 = vsub.s32 %v1058, %v1060
        %v1062 = vrot.slane %v1054, %v1061
        %v1064 = vunpack.c.l.s4 1983009808
        %v1065 = vunpack.c.0.s8 %v1064
        %v1066 = vlaneseq
        %v1067 = vshrl.u32 %v1066, 7
        %v1068 = vsub.s32 %v1065, %v1067
        %v1069 = vrot.slane %v1055, %v1068
        %v1070 = vcombine.low %v1037, %v1049
        %v1071 = vcombine.high %v1037, %v1049
        %v1073 = vunpack.c.l.s4 1983009808
        %v1074 = vunpack.c.0.s8 %v1073
        %v1075 = vlaneseq
        %v1076 = vshrl.u32 %v1075, 7
        %v1077 = vsub.s32 %v1074, %v1076
        %v1078 = vrot.slane %v1070, %v1077
        %v1080 = vunpack.c.l.s4 1983009808
        %v1081 = vunpack.c.0.s8 %v1080
        %v1082 = vlaneseq
        %v1083 = vshrl.u32 %v1082, 7
        %v1084 = vsub.s32 %v1081, %v1083
        %v1085 = vrot.slane %v1071, %v1084
        %v1086 = vcombine.low %v1062, %v1078
        %v1087 = vcombine.high %v1062, %v1078
        %v1089 = vunpack.c.l.s4 1934713408
        %v1090 = vunpack.c.0.s8 %v1089
        %v1091 = vlaneseq
        %v1092 = vshrl.u32 %v1091, 7
        %v1093 = vsub.s32 %v1090, %v1092
        %v1094 = vrot.slane %v1086, %v1093
        %v1096 = vunpack.c.l.s4 1934713408
        %v1097 = vunpack.c.0.s8 %v1096
        %v1098 = vlaneseq
        %v1099 = vshrl.u32 %v1098, 7
        %v1100 = vsub.s32 %v1097, %v1099
        %v1101 = vrot.slane %v1087, %v1100
        %v1102 = vcombine.low %v1069, %v1085
        %v1103 = vcombine.high %v1069, %v1085
        %v1105 = vunpack.c.l.s4 1934713408
        %v1106 = vunpack.c.0.s8 %v1105
        %v1107 = vlaneseq
        %v1108 = vshrl.u32 %v1107, 7
        %v1109 = vsub.s32 %v1106, %v1108
        %v1110 = vrot.slane %v1102, %v1109
        %v1112 = vunpack.c.l.s4 1934713408
        %v1113 = vunpack.c.0.s8 %v1112
        %v1114 = vlaneseq
        %v1115 = vshrl.u32 %v1114, 7
        %v1116 = vsub.s32 %v1113, %v1115
        %v1117 = vrot.slane %v1103, %v1116
        %v1118 = vcombine.high %v1094, 0.0
        %v1119 = vcombine.high %v1101, 0.0
        %v1120 = vcombine.high %v1110, 0.0
        %v1121 = vcombine.high %v1117, 0.0
        %v1122 = vcombine.low %v989, %v1045
        %v1123 = vcombine.high %v989, %v1045
        %v1125 = vunpack.c.l.s4 1983009808
        %v1126 = vunpack.c.0.s8 %v1125
        %v1127 = vlaneseq
        %v1128 = vshrl.u32 %v1127, 7
        %v1129 = vsub.s32 %v1126, %v1128
        %v1130 = vrot.slane %v1122, %v1129
        %v1132 = vunpack.c.l.s4 1983009808
        %v1133 = vunpack.c.0.s8 %v1132
        %v1134 = vlaneseq
        %v1135 = vshrl.u32 %v1134, 7
        %v1136 = vsub.s32 %v1133, %v1135
        %v1137 = vrot.slane %v1123, %v1136
        %v1138 = vcombine.low %v1039, %v1051
        %v1139 = vcombine.high %v1039, %v1051
        %v1141 = vunpack.c.l.s4 1983009808
        %v1142 = vunpack.c.0.s8 %v1141
        %v1143 = vlaneseq
        %v1144 = vshrl.u32 %v1143, 7
        %v1145 = vsub.s32 %v1142, %v1144
        %v1146 = vrot.slane %v1138, %v1145
        %v1148 = vunpack.c.l.s4 1983009808
        %v1149 = vunpack.c.0.s8 %v1148
        %v1150 = vlaneseq
        %v1151 = vshrl.u32 %v1150, 7
        %v1152 = vsub.s32 %v1149, %v1151
        %v1153 = vrot.slane %v1139, %v1152
        %v1154 = vcombine.low %v1130, %v1146
        %v1155 = vcombine.high %v1130, %v1146
        %v1157 = vunpack.c.l.s4 1934713408
        %v1158 = vunpack.c.0.s8 %v1157
        %v1159 = vlaneseq
        %v1160 = vshrl.u32 %v1159, 7
        %v1161 = vsub.s32 %v1158, %v1160
        %v1162 = vrot.slane %v1154, %v1161
        %v1164 = vunpack.c.l.s4 1934713408
        %v1165 = vunpack.c.0.s8 %v1164
        %v1166 = vlaneseq
        %v1167 = vshrl.u32 %v1166, 7
        %v1168 = vsub.s32 %v1165, %v1167
        %v1169 = vrot.slane %v1155, %v1168
        %v1170 = vcombine.low %v1137, %v1153
        %v1171 = vcombine.high %v1137, %v1153
        %v1173 = vunpack.c.l.s4 1934713408
        %v1174 = vunpack.c.0.s8 %v1173
        %v1175 = vlaneseq
        %v1176 = vshrl.u32 %v1175, 7
        %v1177 = vsub.s32 %v1174, %v1176
        %v1178 = vrot.slane %v1170, %v1177
        %v1180 = vunpack.c.l.s4 1934713408
        %v1181 = vunpack.c.0.s8 %v1180
        %v1182 = vlaneseq
        %v1183 = vshrl.u32 %v1182, 7
        %v1184 = vsub.s32 %v1181, %v1183
        %v1185 = vrot.slane %v1171, %v1184
        %v1186 = vcombine.high %v1162, 0.0
        %v1187 = vcombine.high %v1169, 0.0
        %v1188 = vcombine.high %v1178, 0.0
        %v1189 = vcombine.high %v1185, 0.0
        %v1190 = vcombine.low %v1094, %v1101
        %v1192 = vunpack.c.l.s4 1983009808
        %v1193 = vunpack.c.0.s8 %v1192
        %v1194 = vlaneseq
        %v1195 = vshrl.u32 %v1194, 7
        %v1196 = vsub.s32 %v1193, %v1195
        %v1197 = vrot.slane %v1190, %v1196
        %v1198 = vcombine.low %v1118, %v1119
        %v1200 = vunpack.c.l.s4 1983009808
        %v1201 = vunpack.c.0.s8 %v1200
        %v1202 = vlaneseq
        %v1203 = vshrl.u32 %v1202, 7
        %v1204 = vsub.s32 %v1201, %v1203
        %v1205 = vrot.slane %v1198, %v1204
        %v1206 = vcombine.low %v1110, %v1117
        %v1208 = vunpack.c.l.s4 1983009808
        %v1209 = vunpack.c.0.s8 %v1208
        %v1210 = vlaneseq
        %v1211 = vshrl.u32 %v1210, 7
        %v1212 = vsub.s32 %v1209, %v1211
        %v1213 = vrot.slane %v1206, %v1212
        %v1214 = vcombine.low %v1120, %v1121
        %v1216 = vunpack.c.l.s4 1983009808
        %v1217 = vunpack.c.0.s8 %v1216
        %v1218 = vlaneseq
        %v1219 = vshrl.u32 %v1218, 7
        %v1220 = vsub.s32 %v1217, %v1219
        %v1221 = vrot.slane %v1214, %v1220
        %v1222 = vcombine.low %v1197, %v1205
        %v1223 = vcombine.high %v1197, %v1205
        %v1225 = vunpack.c.l.s4 1934713408
        %v1226 = vunpack.c.0.s8 %v1225
        %v1227 = vlaneseq
        %v1228 = vshrl.u32 %v1227, 7
        %v1229 = vsub.s32 %v1226, %v1228
        %v1230 = vrot.slane %v1222, %v1229
        %v1232 = vunpack.c.l.s4 1934713408
        %v1233 = vunpack.c.0.s8 %v1232
        %v1234 = vlaneseq
        %v1235 = vshrl.u32 %v1234, 7
        %v1236 = vsub.s32 %v1233, %v1235
        %v1237 = vrot.slane %v1223, %v1236
        %v1238 = vcombine.low %v1213, %v1221
        %v1239 = vcombine.high %v1213, %v1221
        %v1241 = vunpack.c.l.s4 1934713408
        %v1242 = vunpack.c.0.s8 %v1241
        %v1243 = vlaneseq
        %v1244 = vshrl.u32 %v1243, 7
        %v1245 = vsub.s32 %v1242, %v1244
        %v1246 = vrot.slane %v1238, %v1245
        %v1248 = vunpack.c.l.s4 1934713408
        %v1249 = vunpack.c.0.s8 %v1248
        %v1250 = vlaneseq
        %v1251 = vshrl.u32 %v1250, 7
        %v1252 = vsub.s32 %v1249, %v1251
        %v1253 = vrot.slane %v1239, %v1252
        %v1254 = vcombine.low %v1230, %v1246
        %v1255 = vcombine.high %v1230, %v1246
        %v1256 = vcombine.low %v1237, %v1253
        %v1257 = vcombine.high %v1237, %v1253
        %v1258 = vcombine.low %v1162, %v1169
        %v1260 = vunpack.c.l.s4 1983009808
        %v1261 = vunpack.c.0.s8 %v1260
        %v1262 = vlaneseq
        %v1263 = vshrl.u32 %v1262, 7
        %v1264 = vsub.s32 %v1261, %v1263
        %v1265 = vrot.slane %v1258, %v1264
        %v1266 = vcombine.low %v1186, %v1187
        %v1268 = vunpack.c.l.s4 1983009808
        %v1269 = vunpack.c.0.s8 %v1268
        %v1270 = vlaneseq
        %v1271 = vshrl.u32 %v1270, 7
        %v1272 = vsub.s32 %v1269, %v1271
        %v1273 = vrot.slane %v1266, %v1272
        %v1274 = vcombine.low %v1178, %v1185
        %v1276 = vunpack.c.l.s4 1983009808
        %v1277 = vunpack.c.0.s8 %v1276
        %v1278 = vlaneseq
        %v1279 = vshrl.u32 %v1278, 7
        %v1280 = vsub.s32 %v1277, %v1279
        %v1281 = vrot.slane %v1274, %v1280
        %v1282 = vcombine.low %v1188, %v1189
        %v1284 = vunpack.c.l.s4 1983009808
        %v1285 = vunpack.c.0.s8 %v1284
        %v1286 = vlaneseq
        %v1287 = vshrl.u32 %v1286, 7
        %v1288 = vsub.s32 %v1285, %v1287
        %v1289 = vrot.slane %v1282, %v1288
        %v1290 = vcombine.low %v1265, %v1273
        %v1291 = vcombine.high %v1265, %v1273
        %v1293 = vunpack.c.l.s4 1934713408
        %v1294 = vunpack.c.0.s8 %v1293
        %v1295 = vlaneseq
        %v1296 = vshrl.u32 %v1295, 7
        %v1297 = vsub.s32 %v1294, %v1296
        %v1298 = vrot.slane %v1290, %v1297
        %v1300 = vunpack.c.l.s4 1934713408
        %v1301 = vunpack.c.0.s8 %v1300
        %v1302 = vlaneseq
        %v1303 = vshrl.u32 %v1302, 7
        %v1304 = vsub.s32 %v1301, %v1303
        %v1305 = vrot.slane %v1291, %v1304
        %v1306 = vcombine.low %v1281, %v1289
        %v1307 = vcombine.high %v1281, %v1289
        %v1309 = vunpack.c.l.s4 1934713408
        %v1310 = vunpack.c.0.s8 %v1309
        %v1311 = vlaneseq
        %v1312 = vshrl.u32 %v1311, 7
        %v1313 = vsub.s32 %v1310, %v1312
        %v1314 = vrot.slane %v1306, %v1313
        %v1316 = vunpack.c.l.s4 1934713408
        %v1317 = vunpack.c.0.s8 %v1316
        %v1318 = vlaneseq
        %v1319 = vshrl.u32 %v1318, 7
        %v1320 = vsub.s32 %v1317, %v1319
        %v1321 = vrot.slane %v1307, %v1320
        %v1322 = vcombine.low %v1298, %v1314
        %v1323 = vcombine.high %v1298, %v1314
        %v1324 = vcombine.low %v1305, %v1321
        %v1325 = vcombine.high %v1305, %v1321
        %v1326 = vpack.c.bf16 %v1254, %v1254
        %v1327 = vpack.c.bf16 %v1255, %v1255
        %v1328 = vpack.c.bf16 %v1256, %v1256
        %v1329 = vpack.c.bf16 %v1257, %v1257
        %v1330 = vpack.c.bf16 %v1322, %v1322
        %v1331 = vpack.c.bf16 %v1323, %v1323
        %v1332 = vpack.c.bf16 %v1324, %v1324
        %v1333 = vpack.c.bf16 %v1325, %v1325
        %1336 = vrot.lane.b32.xlu0 %v987, 96
        %v1337 = vpop.permute.xlu0 %1336
        %1338 = vrot.lane.b32.xlu0 %v991, 96
        %v1339 = vpop.permute.xlu0 %1338
        %1342 = vrot.lane.b32.xlu0 %v987, 64
        %v1343 = vpop.permute.xlu0 %1342
        %1344 = vrot.lane.b32.xlu0 %v991, 64
        %v1345 = vpop.permute.xlu0 %1344
        %1348 = vrot.lane.b32.xlu0 %v987, 32
        %v1349 = vpop.permute.xlu0 %1348
        %1350 = vrot.lane.b32.xlu0 %v991, 32
        %v1351 = vpop.permute.xlu0 %1350
        %v1354 = vcombine.low %v987, %v1343
        %v1355 = vcombine.high %v987, %v1343
        %v1357 = vunpack.c.l.s4 1983009808
        %v1358 = vunpack.c.0.s8 %v1357
        %v1359 = vlaneseq
        %v1360 = vshrl.u32 %v1359, 7
        %v1361 = vsub.s32 %v1358, %v1360
        %v1362 = vrot.slane %v1354, %v1361
        %v1364 = vunpack.c.l.s4 1983009808
        %v1365 = vunpack.c.0.s8 %v1364
        %v1366 = vlaneseq
        %v1367 = vshrl.u32 %v1366, 7
        %v1368 = vsub.s32 %v1365, %v1367
        %v1369 = vrot.slane %v1355, %v1368
        %v1370 = vcombine.low %v1337, %v1349
        %v1371 = vcombine.high %v1337, %v1349
        %v1373 = vunpack.c.l.s4 1983009808
        %v1374 = vunpack.c.0.s8 %v1373
        %v1375 = vlaneseq
        %v1376 = vshrl.u32 %v1375, 7
        %v1377 = vsub.s32 %v1374, %v1376
        %v1378 = vrot.slane %v1370, %v1377
        %v1380 = vunpack.c.l.s4 1983009808
        %v1381 = vunpack.c.0.s8 %v1380
        %v1382 = vlaneseq
        %v1383 = vshrl.u32 %v1382, 7
        %v1384 = vsub.s32 %v1381, %v1383
        %v1385 = vrot.slane %v1371, %v1384
        %v1386 = vcombine.low %v1362, %v1378
        %v1387 = vcombine.high %v1362, %v1378
        %v1389 = vunpack.c.l.s4 1934713408
        %v1390 = vunpack.c.0.s8 %v1389
        %v1391 = vlaneseq
        %v1392 = vshrl.u32 %v1391, 7
        %v1393 = vsub.s32 %v1390, %v1392
        %v1394 = vrot.slane %v1386, %v1393
        %v1396 = vunpack.c.l.s4 1934713408
        %v1397 = vunpack.c.0.s8 %v1396
        %v1398 = vlaneseq
        %v1399 = vshrl.u32 %v1398, 7
        %v1400 = vsub.s32 %v1397, %v1399
        %v1401 = vrot.slane %v1387, %v1400
        %v1402 = vcombine.low %v1369, %v1385
        %v1403 = vcombine.high %v1369, %v1385
        %v1405 = vunpack.c.l.s4 1934713408
        %v1406 = vunpack.c.0.s8 %v1405
        %v1407 = vlaneseq
        %v1408 = vshrl.u32 %v1407, 7
        %v1409 = vsub.s32 %v1406, %v1408
        %v1410 = vrot.slane %v1402, %v1409
        %v1412 = vunpack.c.l.s4 1934713408
        %v1413 = vunpack.c.0.s8 %v1412
        %v1414 = vlaneseq
        %v1415 = vshrl.u32 %v1414, 7
        %v1416 = vsub.s32 %v1413, %v1415
        %v1417 = vrot.slane %v1403, %v1416
        %v1418 = vcombine.high %v1394, 0.0
        %v1419 = vcombine.high %v1401, 0.0
        %v1420 = vcombine.high %v1410, 0.0
        %v1421 = vcombine.high %v1417, 0.0
        %v1422 = vcombine.low %v991, %v1345
        %v1423 = vcombine.high %v991, %v1345
        %v1425 = vunpack.c.l.s4 1983009808
        %v1426 = vunpack.c.0.s8 %v1425
        %v1427 = vlaneseq
        %v1428 = vshrl.u32 %v1427, 7
        %v1429 = vsub.s32 %v1426, %v1428
        %v1430 = vrot.slane %v1422, %v1429
        %v1432 = vunpack.c.l.s4 1983009808
        %v1433 = vunpack.c.0.s8 %v1432
        %v1434 = vlaneseq
        %v1435 = vshrl.u32 %v1434, 7
        %v1436 = vsub.s32 %v1433, %v1435
        %v1437 = vrot.slane %v1423, %v1436
        %v1438 = vcombine.low %v1339, %v1351
        %v1439 = vcombine.high %v1339, %v1351
        %v1441 = vunpack.c.l.s4 1983009808
        %v1442 = vunpack.c.0.s8 %v1441
        %v1443 = vlaneseq
        %v1444 = vshrl.u32 %v1443, 7
        %v1445 = vsub.s32 %v1442, %v1444
        %v1446 = vrot.slane %v1438, %v1445
        %v1448 = vunpack.c.l.s4 1983009808
        %v1449 = vunpack.c.0.s8 %v1448
        %v1450 = vlaneseq
        %v1451 = vshrl.u32 %v1450, 7
        %v1452 = vsub.s32 %v1449, %v1451
        %v1453 = vrot.slane %v1439, %v1452
        %v1454 = vcombine.low %v1430, %v1446
        %v1455 = vcombine.high %v1430, %v1446
        %v1457 = vunpack.c.l.s4 1934713408
        %v1458 = vunpack.c.0.s8 %v1457
        %v1459 = vlaneseq
        %v1460 = vshrl.u32 %v1459, 7
        %v1461 = vsub.s32 %v1458, %v1460
        %v1462 = vrot.slane %v1454, %v1461
        %v1464 = vunpack.c.l.s4 1934713408
        %v1465 = vunpack.c.0.s8 %v1464
        %v1466 = vlaneseq
        %v1467 = vshrl.u32 %v1466, 7
        %v1468 = vsub.s32 %v1465, %v1467
        %v1469 = vrot.slane %v1455, %v1468
        %v1470 = vcombine.low %v1437, %v1453
        %v1471 = vcombine.high %v1437, %v1453
        %v1473 = vunpack.c.l.s4 1934713408
        %v1474 = vunpack.c.0.s8 %v1473
        %v1475 = vlaneseq
        %v1476 = vshrl.u32 %v1475, 7
        %v1477 = vsub.s32 %v1474, %v1476
        %v1478 = vrot.slane %v1470, %v1477
        %v1480 = vunpack.c.l.s4 1934713408
        %v1481 = vunpack.c.0.s8 %v1480
        %v1482 = vlaneseq
        %v1483 = vshrl.u32 %v1482, 7
        %v1484 = vsub.s32 %v1481, %v1483
        %v1485 = vrot.slane %v1471, %v1484
        %v1486 = vcombine.high %v1462, 0.0
        %v1487 = vcombine.high %v1469, 0.0
        %v1488 = vcombine.high %v1478, 0.0
        %v1489 = vcombine.high %v1485, 0.0
        %v1490 = vcombine.low %v1394, %v1401
        %v1492 = vunpack.c.l.s4 1983009808
        %v1493 = vunpack.c.0.s8 %v1492
        %v1494 = vlaneseq
        %v1495 = vshrl.u32 %v1494, 7
        %v1496 = vsub.s32 %v1493, %v1495
        %v1497 = vrot.slane %v1490, %v1496
        %v1498 = vcombine.low %v1418, %v1419
        %v1500 = vunpack.c.l.s4 1983009808
        %v1501 = vunpack.c.0.s8 %v1500
        %v1502 = vlaneseq
        %v1503 = vshrl.u32 %v1502, 7
        %v1504 = vsub.s32 %v1501, %v1503
        %v1505 = vrot.slane %v1498, %v1504
        %v1506 = vcombine.low %v1410, %v1417
        %v1508 = vunpack.c.l.s4 1983009808
        %v1509 = vunpack.c.0.s8 %v1508
        %v1510 = vlaneseq
        %v1511 = vshrl.u32 %v1510, 7
        %v1512 = vsub.s32 %v1509, %v1511
        %v1513 = vrot.slane %v1506, %v1512
        %v1514 = vcombine.low %v1420, %v1421
        %v1516 = vunpack.c.l.s4 1983009808
        %v1517 = vunpack.c.0.s8 %v1516
        %v1518 = vlaneseq
        %v1519 = vshrl.u32 %v1518, 7
        %v1520 = vsub.s32 %v1517, %v1519
        %v1521 = vrot.slane %v1514, %v1520
        %v1522 = vcombine.low %v1497, %v1505
        %v1523 = vcombine.high %v1497, %v1505
        %v1525 = vunpack.c.l.s4 1934713408
        %v1526 = vunpack.c.0.s8 %v1525
        %v1527 = vlaneseq
        %v1528 = vshrl.u32 %v1527, 7
        %v1529 = vsub.s32 %v1526, %v1528
        %v1530 = vrot.slane %v1522, %v1529
        %v1532 = vunpack.c.l.s4 1934713408
        %v1533 = vunpack.c.0.s8 %v1532
        %v1534 = vlaneseq
        %v1535 = vshrl.u32 %v1534, 7
        %v1536 = vsub.s32 %v1533, %v1535
        %v1537 = vrot.slane %v1523, %v1536
        %v1538 = vcombine.low %v1513, %v1521
        %v1539 = vcombine.high %v1513, %v1521
        %v1541 = vunpack.c.l.s4 1934713408
        %v1542 = vunpack.c.0.s8 %v1541
        %v1543 = vlaneseq
        %v1544 = vshrl.u32 %v1543, 7
        %v1545 = vsub.s32 %v1542, %v1544
        %v1546 = vrot.slane %v1538, %v1545
        %v1548 = vunpack.c.l.s4 1934713408
        %v1549 = vunpack.c.0.s8 %v1548
        %v1550 = vlaneseq
        %v1551 = vshrl.u32 %v1550, 7
        %v1552 = vsub.s32 %v1549, %v1551
        %v1553 = vrot.slane %v1539, %v1552
        %v1554 = vcombine.low %v1530, %v1546
        %v1555 = vcombine.high %v1530, %v1546
        %v1556 = vcombine.low %v1537, %v1553
        %v1557 = vcombine.high %v1537, %v1553
        %v1558 = vcombine.low %v1462, %v1469
        %v1560 = vunpack.c.l.s4 1983009808
        %v1561 = vunpack.c.0.s8 %v1560
        %v1562 = vlaneseq
        %v1563 = vshrl.u32 %v1562, 7
        %v1564 = vsub.s32 %v1561, %v1563
        %v1565 = vrot.slane %v1558, %v1564
        %v1566 = vcombine.low %v1486, %v1487
        %v1568 = vunpack.c.l.s4 1983009808
        %v1569 = vunpack.c.0.s8 %v1568
        %v1570 = vlaneseq
        %v1571 = vshrl.u32 %v1570, 7
        %v1572 = vsub.s32 %v1569, %v1571
        %v1573 = vrot.slane %v1566, %v1572
        %v1574 = vcombine.low %v1478, %v1485
        %v1576 = vunpack.c.l.s4 1983009808
        %v1577 = vunpack.c.0.s8 %v1576
        %v1578 = vlaneseq
        %v1579 = vshrl.u32 %v1578, 7
        %v1580 = vsub.s32 %v1577, %v1579
        %v1581 = vrot.slane %v1574, %v1580
        %v1582 = vcombine.low %v1488, %v1489
        %v1584 = vunpack.c.l.s4 1983009808
        %v1585 = vunpack.c.0.s8 %v1584
        %v1586 = vlaneseq
        %v1587 = vshrl.u32 %v1586, 7
        %v1588 = vsub.s32 %v1585, %v1587
        %v1589 = vrot.slane %v1582, %v1588
        %v1590 = vcombine.low %v1565, %v1573
        %v1591 = vcombine.high %v1565, %v1573
        %v1593 = vunpack.c.l.s4 1934713408
        %v1594 = vunpack.c.0.s8 %v1593
        %v1595 = vlaneseq
        %v1596 = vshrl.u32 %v1595, 7
        %v1597 = vsub.s32 %v1594, %v1596
        %v1598 = vrot.slane %v1590, %v1597
        %v1600 = vunpack.c.l.s4 1934713408
        %v1601 = vunpack.c.0.s8 %v1600
        %v1602 = vlaneseq
        %v1603 = vshrl.u32 %v1602, 7
        %v1604 = vsub.s32 %v1601, %v1603
        %v1605 = vrot.slane %v1591, %v1604
        %v1606 = vcombine.low %v1581, %v1589
        %v1607 = vcombine.high %v1581, %v1589
        %v1609 = vunpack.c.l.s4 1934713408
        %v1610 = vunpack.c.0.s8 %v1609
        %v1611 = vlaneseq
        %v1612 = vshrl.u32 %v1611, 7
        %v1613 = vsub.s32 %v1610, %v1612
        %v1614 = vrot.slane %v1606, %v1613
        %v1616 = vunpack.c.l.s4 1934713408
        %v1617 = vunpack.c.0.s8 %v1616
        %v1618 = vlaneseq
        %v1619 = vshrl.u32 %v1618, 7
        %v1620 = vsub.s32 %v1617, %v1619
        %v1621 = vrot.slane %v1607, %v1620
        %v1622 = vcombine.low %v1598, %v1614
        %v1623 = vcombine.high %v1598, %v1614
        %v1624 = vcombine.low %v1605, %v1621
        %v1625 = vcombine.high %v1605, %v1621
        %v1626 = vpack.c.bf16 %v1554, %v1554
        %v1627 = vpack.c.bf16 %v1555, %v1555
        %v1628 = vpack.c.bf16 %v1556, %v1556
        %v1629 = vpack.c.bf16 %v1557, %v1557
        %v1630 = vpack.c.bf16 %v1622, %v1622
        %v1631 = vpack.c.bf16 %v1623, %v1623
        %v1632 = vpack.c.bf16 %v1624, %v1624
        %v1633 = vpack.c.bf16 %v1625, %v1625
        %1636 = vrot.lane.b32.xlu0 %v1028, 96
        %v1637 = vpop.permute.xlu0 %1636
        %1638 = vrot.lane.b32.xlu0 %v1031, 96
        %v1639 = vpop.permute.xlu0 %1638
        %1642 = vrot.lane.b32.xlu0 %v1028, 64
        %v1643 = vpop.permute.xlu0 %1642
        %1644 = vrot.lane.b32.xlu0 %v1031, 64
        %v1645 = vpop.permute.xlu0 %1644
        %1648 = vrot.lane.b32.xlu0 %v1028, 32
        %v1649 = vpop.permute.xlu0 %1648
        %1650 = vrot.lane.b32.xlu0 %v1031, 32
        %v1651 = vpop.permute.xlu0 %1650
        %v1654 = vcombine.low %v1028, %v1643
        %v1655 = vcombine.high %v1028, %v1643
        %v1657 = vunpack.c.l.s4 1983009808
        %v1658 = vunpack.c.0.s8 %v1657
        %v1659 = vlaneseq
        %v1660 = vshrl.u32 %v1659, 7
        %v1661 = vsub.s32 %v1658, %v1660
        %v1662 = vrot.slane %v1654, %v1661
        %v1664 = vunpack.c.l.s4 1983009808
        %v1665 = vunpack.c.0.s8 %v1664
        %v1666 = vlaneseq
        %v1667 = vshrl.u32 %v1666, 7
        %v1668 = vsub.s32 %v1665, %v1667
        %v1669 = vrot.slane %v1655, %v1668
        %v1670 = vcombine.low %v1637, %v1649
        %v1671 = vcombine.high %v1637, %v1649
        %v1673 = vunpack.c.l.s4 1983009808
        %v1674 = vunpack.c.0.s8 %v1673
        %v1675 = vlaneseq
        %v1676 = vshrl.u32 %v1675, 7
        %v1677 = vsub.s32 %v1674, %v1676
        %v1678 = vrot.slane %v1670, %v1677
        %v1680 = vunpack.c.l.s4 1983009808
        %v1681 = vunpack.c.0.s8 %v1680
        %v1682 = vlaneseq
        %v1683 = vshrl.u32 %v1682, 7
        %v1684 = vsub.s32 %v1681, %v1683
        %v1685 = vrot.slane %v1671, %v1684
        %v1686 = vcombine.low %v1662, %v1678
        %v1687 = vcombine.high %v1662, %v1678
        %v1689 = vunpack.c.l.s4 1934713408
        %v1690 = vunpack.c.0.s8 %v1689
        %v1691 = vlaneseq
        %v1692 = vshrl.u32 %v1691, 7
        %v1693 = vsub.s32 %v1690, %v1692
        %v1694 = vrot.slane %v1686, %v1693
        %v1696 = vunpack.c.l.s4 1934713408
        %v1697 = vunpack.c.0.s8 %v1696
        %v1698 = vlaneseq
        %v1699 = vshrl.u32 %v1698, 7
        %v1700 = vsub.s32 %v1697, %v1699
        %v1701 = vrot.slane %v1687, %v1700
        %v1702 = vcombine.low %v1669, %v1685
        %v1703 = vcombine.high %v1669, %v1685
        %v1705 = vunpack.c.l.s4 1934713408
        %v1706 = vunpack.c.0.s8 %v1705
        %v1707 = vlaneseq
        %v1708 = vshrl.u32 %v1707, 7
        %v1709 = vsub.s32 %v1706, %v1708
        %v1710 = vrot.slane %v1702, %v1709
        %v1712 = vunpack.c.l.s4 1934713408
        %v1713 = vunpack.c.0.s8 %v1712
        %v1714 = vlaneseq
        %v1715 = vshrl.u32 %v1714, 7
        %v1716 = vsub.s32 %v1713, %v1715
        %v1717 = vrot.slane %v1703, %v1716
        %v1718 = vcombine.high %v1694, 0.0
        %v1719 = vcombine.high %v1701, 0.0
        %v1720 = vcombine.high %v1710, 0.0
        %v1721 = vcombine.high %v1717, 0.0
        %v1722 = vcombine.low %v1031, %v1645
        %v1723 = vcombine.high %v1031, %v1645
        %v1725 = vunpack.c.l.s4 1983009808
        %v1726 = vunpack.c.0.s8 %v1725
        %v1727 = vlaneseq
        %v1728 = vshrl.u32 %v1727, 7
        %v1729 = vsub.s32 %v1726, %v1728
        %v1730 = vrot.slane %v1722, %v1729
        %v1732 = vunpack.c.l.s4 1983009808
        %v1733 = vunpack.c.0.s8 %v1732
        %v1734 = vlaneseq
        %v1735 = vshrl.u32 %v1734, 7
        %v1736 = vsub.s32 %v1733, %v1735
        %v1737 = vrot.slane %v1723, %v1736
        %v1738 = vcombine.low %v1639, %v1651
        %v1739 = vcombine.high %v1639, %v1651
        %v1741 = vunpack.c.l.s4 1983009808
        %v1742 = vunpack.c.0.s8 %v1741
        %v1743 = vlaneseq
        %v1744 = vshrl.u32 %v1743, 7
        %v1745 = vsub.s32 %v1742, %v1744
        %v1746 = vrot.slane %v1738, %v1745
        %v1748 = vunpack.c.l.s4 1983009808
        %v1749 = vunpack.c.0.s8 %v1748
        %v1750 = vlaneseq
        %v1751 = vshrl.u32 %v1750, 7
        %v1752 = vsub.s32 %v1749, %v1751
        %v1753 = vrot.slane %v1739, %v1752
        %v1754 = vcombine.low %v1730, %v1746
        %v1755 = vcombine.high %v1730, %v1746
        %v1757 = vunpack.c.l.s4 1934713408
        %v1758 = vunpack.c.0.s8 %v1757
        %v1759 = vlaneseq
        %v1760 = vshrl.u32 %v1759, 7
        %v1761 = vsub.s32 %v1758, %v1760
        %v1762 = vrot.slane %v1754, %v1761
        %v1764 = vunpack.c.l.s4 1934713408
        %v1765 = vunpack.c.0.s8 %v1764
        %v1766 = vlaneseq
        %v1767 = vshrl.u32 %v1766, 7
        %v1768 = vsub.s32 %v1765, %v1767
        %v1769 = vrot.slane %v1755, %v1768
        %v1770 = vcombine.low %v1737, %v1753
        %v1771 = vcombine.high %v1737, %v1753
        %v1773 = vunpack.c.l.s4 1934713408
        %v1774 = vunpack.c.0.s8 %v1773
        %v1775 = vlaneseq
        %v1776 = vshrl.u32 %v1775, 7
        %v1777 = vsub.s32 %v1774, %v1776
        %v1778 = vrot.slane %v1770, %v1777
        %v1780 = vunpack.c.l.s4 1934713408
        %v1781 = vunpack.c.0.s8 %v1780
        %v1782 = vlaneseq
        %v1783 = vshrl.u32 %v1782, 7
        %v1784 = vsub.s32 %v1781, %v1783
        %v1785 = vrot.slane %v1771, %v1784
        %v1786 = vcombine.high %v1762, 0.0
        %v1787 = vcombine.high %v1769, 0.0
        %v1788 = vcombine.high %v1778, 0.0
        %v1789 = vcombine.high %v1785, 0.0
        %v1790 = vcombine.low %v1694, %v1701
        %v1792 = vunpack.c.l.s4 1983009808
        %v1793 = vunpack.c.0.s8 %v1792
        %v1794 = vlaneseq
        %v1795 = vshrl.u32 %v1794, 7
        %v1796 = vsub.s32 %v1793, %v1795
        %v1797 = vrot.slane %v1790, %v1796
        %v1798 = vcombine.low %v1718, %v1719
        %v1800 = vunpack.c.l.s4 1983009808
        %v1801 = vunpack.c.0.s8 %v1800
        %v1802 = vlaneseq
        %v1803 = vshrl.u32 %v1802, 7
        %v1804 = vsub.s32 %v1801, %v1803
        %v1805 = vrot.slane %v1798, %v1804
        %v1806 = vcombine.low %v1710, %v1717
        %v1808 = vunpack.c.l.s4 1983009808
        %v1809 = vunpack.c.0.s8 %v1808
        %v1810 = vlaneseq
        %v1811 = vshrl.u32 %v1810, 7
        %v1812 = vsub.s32 %v1809, %v1811
        %v1813 = vrot.slane %v1806, %v1812
        %v1814 = vcombine.low %v1720, %v1721
        %v1816 = vunpack.c.l.s4 1983009808
        %v1817 = vunpack.c.0.s8 %v1816
        %v1818 = vlaneseq
        %v1819 = vshrl.u32 %v1818, 7
        %v1820 = vsub.s32 %v1817, %v1819
        %v1821 = vrot.slane %v1814, %v1820
        %v1822 = vcombine.low %v1797, %v1805
        %v1823 = vcombine.high %v1797, %v1805
        %v1825 = vunpack.c.l.s4 1934713408
        %v1826 = vunpack.c.0.s8 %v1825
        %v1827 = vlaneseq
        %v1828 = vshrl.u32 %v1827, 7
        %v1829 = vsub.s32 %v1826, %v1828
        %v1830 = vrot.slane %v1822, %v1829
        %v1832 = vunpack.c.l.s4 1934713408
        %v1833 = vunpack.c.0.s8 %v1832
        %v1834 = vlaneseq
        %v1835 = vshrl.u32 %v1834, 7
        %v1836 = vsub.s32 %v1833, %v1835
        %v1837 = vrot.slane %v1823, %v1836
        %v1838 = vcombine.low %v1813, %v1821
        %v1839 = vcombine.high %v1813, %v1821
        %v1841 = vunpack.c.l.s4 1934713408
        %v1842 = vunpack.c.0.s8 %v1841
        %v1843 = vlaneseq
        %v1844 = vshrl.u32 %v1843, 7
        %v1845 = vsub.s32 %v1842, %v1844
        %v1846 = vrot.slane %v1838, %v1845
        %v1848 = vunpack.c.l.s4 1934713408
        %v1849 = vunpack.c.0.s8 %v1848
        %v1850 = vlaneseq
        %v1851 = vshrl.u32 %v1850, 7
        %v1852 = vsub.s32 %v1849, %v1851
        %v1853 = vrot.slane %v1839, %v1852
        %v1854 = vcombine.low %v1830, %v1846
        %v1855 = vcombine.high %v1830, %v1846
        %v1856 = vcombine.low %v1837, %v1853
        %v1857 = vcombine.high %v1837, %v1853
        %v1858 = vcombine.low %v1762, %v1769
        %v1860 = vunpack.c.l.s4 1983009808
        %v1861 = vunpack.c.0.s8 %v1860
        %v1862 = vlaneseq
        %v1863 = vshrl.u32 %v1862, 7
        %v1864 = vsub.s32 %v1861, %v1863
        %v1865 = vrot.slane %v1858, %v1864
        %v1866 = vcombine.low %v1786, %v1787
        %v1868 = vunpack.c.l.s4 1983009808
        %v1869 = vunpack.c.0.s8 %v1868
        %v1870 = vlaneseq
        %v1871 = vshrl.u32 %v1870, 7
        %v1872 = vsub.s32 %v1869, %v1871
        %v1873 = vrot.slane %v1866, %v1872
        %v1874 = vcombine.low %v1778, %v1785
        %v1876 = vunpack.c.l.s4 1983009808
        %v1877 = vunpack.c.0.s8 %v1876
        %v1878 = vlaneseq
        %v1879 = vshrl.u32 %v1878, 7
        %v1880 = vsub.s32 %v1877, %v1879
        %v1881 = vrot.slane %v1874, %v1880
        %v1882 = vcombine.low %v1788, %v1789
        %v1884 = vunpack.c.l.s4 1983009808
        %v1885 = vunpack.c.0.s8 %v1884
        %v1886 = vlaneseq
        %v1887 = vshrl.u32 %v1886, 7
        %v1888 = vsub.s32 %v1885, %v1887
        %v1889 = vrot.slane %v1882, %v1888
        %v1890 = vcombine.low %v1865, %v1873
        %v1891 = vcombine.high %v1865, %v1873
        %v1893 = vunpack.c.l.s4 1934713408
        %v1894 = vunpack.c.0.s8 %v1893
        %v1895 = vlaneseq
        %v1896 = vshrl.u32 %v1895, 7
        %v1897 = vsub.s32 %v1894, %v1896
        %v1898 = vrot.slane %v1890, %v1897
        %v1900 = vunpack.c.l.s4 1934713408
        %v1901 = vunpack.c.0.s8 %v1900
        %v1902 = vlaneseq
        %v1903 = vshrl.u32 %v1902, 7
        %v1904 = vsub.s32 %v1901, %v1903
        %v1905 = vrot.slane %v1891, %v1904
        %v1906 = vcombine.low %v1881, %v1889
        %v1907 = vcombine.high %v1881, %v1889
        %v1909 = vunpack.c.l.s4 1934713408
        %v1910 = vunpack.c.0.s8 %v1909
        %v1911 = vlaneseq
        %v1912 = vshrl.u32 %v1911, 7
        %v1913 = vsub.s32 %v1910, %v1912
        %v1914 = vrot.slane %v1906, %v1913
        %v1916 = vunpack.c.l.s4 1934713408
        %v1917 = vunpack.c.0.s8 %v1916
        %v1918 = vlaneseq
        %v1919 = vshrl.u32 %v1918, 7
        %v1920 = vsub.s32 %v1917, %v1919
        %v1921 = vrot.slane %v1907, %v1920
        %v1922 = vcombine.low %v1898, %v1914
        %v1923 = vcombine.high %v1898, %v1914
        %v1924 = vcombine.low %v1905, %v1921
        %v1925 = vcombine.high %v1905, %v1921
        %v1926 = vpack.c.bf16 %v1854, %v1854
        %v1927 = vpack.c.bf16 %v1855, %v1855
        %v1928 = vpack.c.bf16 %v1856, %v1856
        %v1929 = vpack.c.bf16 %v1857, %v1857
        %v1930 = vpack.c.bf16 %v1922, %v1922
        %v1931 = vpack.c.bf16 %v1923, %v1923
        %v1932 = vpack.c.bf16 %v1924, %v1924
        %v1933 = vpack.c.bf16 %v1925, %v1925
        %vm1934 = vcmask 261120
        %v1936 = vsel %vm1934, %v1326, 0
        %v1939 = vsel %vm1934, %v1626, 0
        %1941 = vmatprep.subr.bf16.mxu0 0
        %1942 = vmatpush1.bf16.xpose.msra.mxu0 0
        %1943 = vmatprep.subr.bf16.mxu0 0
        %1944 = vmatpush1.bf16.xpose.msra.mxu0 0
        %1945 = vmatprep.subr.bf16.mxu0 0
        %1946 = vmatpush1.bf16.xpose.msra.mxu0 0
        %1947 = vmatprep.subr.bf16.mxu0 0
        %1948 = vmatpush1.bf16.xpose.msra.mxu0 0
        %1949 = vmatprep.subr.bf16.mxu0 0
        %1950 = vmatpush1.bf16.xpose.msra.mxu0 0
        %1951 = vmatprep.subr.bf16.mxu0 0
        %1952 = vmatpush1.bf16.xpose.msra.mxu0 0
        %1953 = vmatprep.subr.bf16.mxu0 0
        %1954 = vmatpush1.bf16.xpose.msra.mxu0 0
        %1955 = vmatprep.subr.bf16.mxu0 0
        %1956 = vmatpush1.bf16.xpose.msra.mxu0 %v1939
        %1957 = vmatprep.subr.bf16.mxu0 0
        %1958 = vmatpush2.bf16.xpose.msra.mxu0 0
        %1959 = vmatprep.subr.bf16.mxu0 0
        %1960 = vmatpush2.bf16.xpose.msra.mxu0 0
        %1961 = vmatprep.subr.bf16.mxu0 0
        %1962 = vmatpush2.bf16.xpose.msra.mxu0 0
        %1963 = vmatprep.subr.bf16.mxu0 0
        %1964 = vmatpush2.bf16.xpose.msra.mxu0 0
        %1965 = vmatprep.subr.bf16.mxu0 0
        %1966 = vmatpush2.bf16.xpose.msra.mxu0 0
        %1967 = vmatprep.subr.bf16.mxu0 0
        %1968 = vmatpush2.bf16.xpose.msra.mxu0 0
        %1969 = vmatprep.subr.bf16.mxu0 0
        %1970 = vmatpush2.bf16.xpose.msra.mxu0 0
        %1971 = vmatprep.subr.bf16.mxu0 0
        %1972 = vmatpush2.bf16.xpose.msra.mxu0 0
        %1973 = vmatprep.mubr.bf16.mxu0 0
        %1974 = vmatmul.mubr.bf16.gmra.mxu0 %v1936
        %v1975 = vpop.f32.mrf.mxu0
        %v1976 = vadd.f32 0.0, %v1975
        %v1977 = vpop.f32.mrf.mxu0
        %v1978 = vpop.f32.mrf.mxu0
        %v1979 = vpop.f32.mrf.mxu0
        %1980 = vdwg.mxu0
        %v1982 = vsel %vm1934, %v1327, 0
        %v1985 = vsel %vm1934, %v1627, 0
        %1987 = vmatprep.subr.bf16.mxu0 0
        %1988 = vmatpush1.bf16.xpose.msra.mxu0 0
        %1989 = vmatprep.subr.bf16.mxu0 0
        %1990 = vmatpush1.bf16.xpose.msra.mxu0 0
        %1991 = vmatprep.subr.bf16.mxu0 0
        %1992 = vmatpush1.bf16.xpose.msra.mxu0 0
        %1993 = vmatprep.subr.bf16.mxu0 0
        %1994 = vmatpush1.bf16.xpose.msra.mxu0 0
        %1995 = vmatprep.subr.bf16.mxu0 0
        %1996 = vmatpush1.bf16.xpose.msra.mxu0 0
        %1997 = vmatprep.subr.bf16.mxu0 0
        %1998 = vmatpush1.bf16.xpose.msra.mxu0 0
        %1999 = vmatprep.subr.bf16.mxu0 0
        %2000 = vmatpush1.bf16.xpose.msra.mxu0 0
        %2001 = vmatprep.subr.bf16.mxu0 0
        %2002 = vmatpush1.bf16.xpose.msra.mxu0 %v1985
        %2003 = vmatprep.subr.bf16.mxu0 0
        %2004 = vmatpush2.bf16.xpose.msra.mxu0 0
        %2005 = vmatprep.subr.bf16.mxu0 0
        %2006 = vmatpush2.bf16.xpose.msra.mxu0 0
        %2007 = vmatprep.subr.bf16.mxu0 0
        %2008 = vmatpush2.bf16.xpose.msra.mxu0 0
        %2009 = vmatprep.subr.bf16.mxu0 0
        %2010 = vmatpush2.bf16.xpose.msra.mxu0 0
        %2011 = vmatprep.subr.bf16.mxu0 0
        %2012 = vmatpush2.bf16.xpose.msra.mxu0 0
        %2013 = vmatprep.subr.bf16.mxu0 0
        %2014 = vmatpush2.bf16.xpose.msra.mxu0 0
        %2015 = vmatprep.subr.bf16.mxu0 0
        %2016 = vmatpush2.bf16.xpose.msra.mxu0 0
        %2017 = vmatprep.subr.bf16.mxu0 0
        %2018 = vmatpush2.bf16.xpose.msra.mxu0 0
        %2019 = vmatprep.mubr.bf16.mxu0 0
        %2020 = vmatmul.mubr.bf16.gmra.mxu0 %v1982
        %v2021 = vpop.f32.mrf.mxu0
        %v2022 = vadd.f32 0.0, %v2021
        %v2023 = vpop.f32.mrf.mxu0
        %v2024 = vpop.f32.mrf.mxu0
        %v2025 = vpop.f32.mrf.mxu0
        %2026 = vdwg.mxu0
        %v2028 = vsel %vm1934, %v1328, 0
        %v2031 = vsel %vm1934, %v1628, 0
        %2033 = vmatprep.subr.bf16.mxu0 0
        %2034 = vmatpush1.bf16.xpose.msra.mxu0 0
        %2035 = vmatprep.subr.bf16.mxu0 0
        %2036 = vmatpush1.bf16.xpose.msra.mxu0 0
        %2037 = vmatprep.subr.bf16.mxu0 0
        %2038 = vmatpush1.bf16.xpose.msra.mxu0 0
        %2039 = vmatprep.subr.bf16.mxu0 0
        %2040 = vmatpush1.bf16.xpose.msra.mxu0 0
        %2041 = vmatprep.subr.bf16.mxu0 0
        %2042 = vmatpush1.bf16.xpose.msra.mxu0 0
        %2043 = vmatprep.subr.bf16.mxu0 0
        %2044 = vmatpush1.bf16.xpose.msra.mxu0 0
        %2045 = vmatprep.subr.bf16.mxu0 0
        %2046 = vmatpush1.bf16.xpose.msra.mxu0 0
        %2047 = vmatprep.subr.bf16.mxu0 0
        %2048 = vmatpush1.bf16.xpose.msra.mxu0 %v2031
        %2049 = vmatprep.subr.bf16.mxu0 0
        %2050 = vmatpush2.bf16.xpose.msra.mxu0 0
        %2051 = vmatprep.subr.bf16.mxu0 0
        %2052 = vmatpush2.bf16.xpose.msra.mxu0 0
        %2053 = vmatprep.subr.bf16.mxu0 0
        %2054 = vmatpush2.bf16.xpose.msra.mxu0 0
        %2055 = vmatprep.subr.bf16.mxu0 0
        %2056 = vmatpush2.bf16.xpose.msra.mxu0 0
        %2057 = vmatprep.subr.bf16.mxu0 0
        %2058 = vmatpush2.bf16.xpose.msra.mxu0 0
        %2059 = vmatprep.subr.bf16.mxu0 0
        %2060 = vmatpush2.bf16.xpose.msra.mxu0 0
        %2061 = vmatprep.subr.bf16.mxu0 0
        %2062 = vmatpush2.bf16.xpose.msra.mxu0 0
        %2063 = vmatprep.subr.bf16.mxu0 0
        %2064 = vmatpush2.bf16.xpose.msra.mxu0 0
        %2065 = vmatprep.mubr.bf16.mxu0 0
        %2066 = vmatmul.mubr.bf16.gmra.mxu0 %v2028
        %v2067 = vpop.f32.mrf.mxu0
        %v2068 = vadd.f32 0.0, %v2067
        %v2069 = vpop.f32.mrf.mxu0
        %v2070 = vpop.f32.mrf.mxu0
        %v2071 = vpop.f32.mrf.mxu0
        %2072 = vdwg.mxu0
        %v2074 = vsel %vm1934, %v1329, 0
        %v2077 = vsel %vm1934, %v1629, 0
        %2079 = vmatprep.subr.bf16.mxu0 0
        %2080 = vmatpush1.bf16.xpose.msra.mxu0 0
        %2081 = vmatprep.subr.bf16.mxu0 0
        %2082 = vmatpush1.bf16.xpose.msra.mxu0 0
        %2083 = vmatprep.subr.bf16.mxu0 0
        %2084 = vmatpush1.bf16.xpose.msra.mxu0 0
        %2085 = vmatprep.subr.bf16.mxu0 0
        %2086 = vmatpush1.bf16.xpose.msra.mxu0 0
        %2087 = vmatprep.subr.bf16.mxu0 0
        %2088 = vmatpush1.bf16.xpose.msra.mxu0 0
        %2089 = vmatprep.subr.bf16.mxu0 0
        %2090 = vmatpush1.bf16.xpose.msra.mxu0 0
        %2091 = vmatprep.subr.bf16.mxu0 0
        %2092 = vmatpush1.bf16.xpose.msra.mxu0 0
        %2093 = vmatprep.subr.bf16.mxu0 0
        %2094 = vmatpush1.bf16.xpose.msra.mxu0 %v2077
        %2095 = vmatprep.subr.bf16.mxu0 0
        %2096 = vmatpush2.bf16.xpose.msra.mxu0 0
        %2097 = vmatprep.subr.bf16.mxu0 0
        %2098 = vmatpush2.bf16.xpose.msra.mxu0 0
        %2099 = vmatprep.subr.bf16.mxu0 0
        %2100 = vmatpush2.bf16.xpose.msra.mxu0 0
        %2101 = vmatprep.subr.bf16.mxu0 0
        %2102 = vmatpush2.bf16.xpose.msra.mxu0 0
        %2103 = vmatprep.subr.bf16.mxu0 0
        %2104 = vmatpush2.bf16.xpose.msra.mxu0 0
        %2105 = vmatprep.subr.bf16.mxu0 0
        %2106 = vmatpush2.bf16.xpose.msra.mxu0 0
        %2107 = vmatprep.subr.bf16.mxu0 0
        %2108 = vmatpush2.bf16.xpose.msra.mxu0 0
        %2109 = vmatprep.subr.bf16.mxu0 0
        %2110 = vmatpush2.bf16.xpose.msra.mxu0 0
        %2111 = vmatprep.mubr.bf16.mxu0 0
        %2112 = vmatmul.mubr.bf16.gmra.mxu0 %v2074
        %v2113 = vpop.f32.mrf.mxu0
        %v2114 = vadd.f32 0.0, %v2113
        %v2115 = vpop.f32.mrf.mxu0
        %v2116 = vpop.f32.mrf.mxu0
        %v2117 = vpop.f32.mrf.mxu0
        %2118 = vdwg.mxu0
        %v2120 = vsel %vm1934, %v1330, 0
        %v2123 = vsel %vm1934, %v1630, 0
        %2125 = vmatprep.subr.bf16.mxu0 0
        %2126 = vmatpush1.bf16.xpose.msra.mxu0 0
        %2127 = vmatprep.subr.bf16.mxu0 0
        %2128 = vmatpush1.bf16.xpose.msra.mxu0 0
        %2129 = vmatprep.subr.bf16.mxu0 0
        %2130 = vmatpush1.bf16.xpose.msra.mxu0 0
        %2131 = vmatprep.subr.bf16.mxu0 0
        %2132 = vmatpush1.bf16.xpose.msra.mxu0 0
        %2133 = vmatprep.subr.bf16.mxu0 0
        %2134 = vmatpush1.bf16.xpose.msra.mxu0 0
        %2135 = vmatprep.subr.bf16.mxu0 0
        %2136 = vmatpush1.bf16.xpose.msra.mxu0 0
        %2137 = vmatprep.subr.bf16.mxu0 0
        %2138 = vmatpush1.bf16.xpose.msra.mxu0 0
        %2139 = vmatprep.subr.bf16.mxu0 0
        %2140 = vmatpush1.bf16.xpose.msra.mxu0 %v2123
        %2141 = vmatprep.subr.bf16.mxu0 0
        %2142 = vmatpush2.bf16.xpose.msra.mxu0 0
        %2143 = vmatprep.subr.bf16.mxu0 0
        %2144 = vmatpush2.bf16.xpose.msra.mxu0 0
        %2145 = vmatprep.subr.bf16.mxu0 0
        %2146 = vmatpush2.bf16.xpose.msra.mxu0 0
        %2147 = vmatprep.subr.bf16.mxu0 0
        %2148 = vmatpush2.bf16.xpose.msra.mxu0 0
        %2149 = vmatprep.subr.bf16.mxu0 0
        %2150 = vmatpush2.bf16.xpose.msra.mxu0 0
        %2151 = vmatprep.subr.bf16.mxu0 0
        %2152 = vmatpush2.bf16.xpose.msra.mxu0 0
        %2153 = vmatprep.subr.bf16.mxu0 0
        %2154 = vmatpush2.bf16.xpose.msra.mxu0 0
        %2155 = vmatprep.subr.bf16.mxu0 0
        %2156 = vmatpush2.bf16.xpose.msra.mxu0 0
        %2157 = vmatprep.mubr.bf16.mxu0 0
        %2158 = vmatmul.mubr.bf16.gmra.mxu0 %v2120
        %v2159 = vpop.f32.mrf.mxu0
        %v2160 = vadd.f32 0.0, %v2159
        %v2161 = vpop.f32.mrf.mxu0
        %v2162 = vpop.f32.mrf.mxu0
        %v2163 = vpop.f32.mrf.mxu0
        %2164 = vdwg.mxu0
        %v2166 = vsel %vm1934, %v1331, 0
        %v2169 = vsel %vm1934, %v1631, 0
        %2171 = vmatprep.subr.bf16.mxu0 0
        %2172 = vmatpush1.bf16.xpose.msra.mxu0 0
        %2173 = vmatprep.subr.bf16.mxu0 0
        %2174 = vmatpush1.bf16.xpose.msra.mxu0 0
        %2175 = vmatprep.subr.bf16.mxu0 0
        %2176 = vmatpush1.bf16.xpose.msra.mxu0 0
        %2177 = vmatprep.subr.bf16.mxu0 0
        %2178 = vmatpush1.bf16.xpose.msra.mxu0 0
        %2179 = vmatprep.subr.bf16.mxu0 0
        %2180 = vmatpush1.bf16.xpose.msra.mxu0 0
        %2181 = vmatprep.subr.bf16.mxu0 0
        %2182 = vmatpush1.bf16.xpose.msra.mxu0 0
        %2183 = vmatprep.subr.bf16.mxu0 0
        %2184 = vmatpush1.bf16.xpose.msra.mxu0 0
        %2185 = vmatprep.subr.bf16.mxu0 0
        %2186 = vmatpush1.bf16.xpose.msra.mxu0 %v2169
        %2187 = vmatprep.subr.bf16.mxu0 0
        %2188 = vmatpush2.bf16.xpose.msra.mxu0 0
        %2189 = vmatprep.subr.bf16.mxu0 0
        %2190 = vmatpush2.bf16.xpose.msra.mxu0 0
        %2191 = vmatprep.subr.bf16.mxu0 0
        %2192 = vmatpush2.bf16.xpose.msra.mxu0 0
        %2193 = vmatprep.subr.bf16.mxu0 0
        %2194 = vmatpush2.bf16.xpose.msra.mxu0 0
        %2195 = vmatprep.subr.bf16.mxu0 0
        %2196 = vmatpush2.bf16.xpose.msra.mxu0 0
        %2197 = vmatprep.subr.bf16.mxu0 0
        %2198 = vmatpush2.bf16.xpose.msra.mxu0 0
        %2199 = vmatprep.subr.bf16.mxu0 0
        %2200 = vmatpush2.bf16.xpose.msra.mxu0 0
        %2201 = vmatprep.subr.bf16.mxu0 0
        %2202 = vmatpush2.bf16.xpose.msra.mxu0 0
        %2203 = vmatprep.mubr.bf16.mxu0 0
        %2204 = vmatmul.mubr.bf16.gmra.mxu0 %v2166
        %v2205 = vpop.f32.mrf.mxu0
        %v2206 = vadd.f32 0.0, %v2205
        %v2207 = vpop.f32.mrf.mxu0
        %v2208 = vpop.f32.mrf.mxu0
        %v2209 = vpop.f32.mrf.mxu0
        %2210 = vdwg.mxu0
        %v2212 = vsel %vm1934, %v1332, 0
        %v2215 = vsel %vm1934, %v1632, 0
        %2217 = vmatprep.subr.bf16.mxu0 0
        %2218 = vmatpush1.bf16.xpose.msra.mxu0 0
        %2219 = vmatprep.subr.bf16.mxu0 0
        %2220 = vmatpush1.bf16.xpose.msra.mxu0 0
        %2221 = vmatprep.subr.bf16.mxu0 0
        %2222 = vmatpush1.bf16.xpose.msra.mxu0 0
        %2223 = vmatprep.subr.bf16.mxu0 0
        %2224 = vmatpush1.bf16.xpose.msra.mxu0 0
        %2225 = vmatprep.subr.bf16.mxu0 0
        %2226 = vmatpush1.bf16.xpose.msra.mxu0 0
        %2227 = vmatprep.subr.bf16.mxu0 0
        %2228 = vmatpush1.bf16.xpose.msra.mxu0 0
        %2229 = vmatprep.subr.bf16.mxu0 0
        %2230 = vmatpush1.bf16.xpose.msra.mxu0 0
        %2231 = vmatprep.subr.bf16.mxu0 0
        %2232 = vmatpush1.bf16.xpose.msra.mxu0 %v2215
        %2233 = vmatprep.subr.bf16.mxu0 0
        %2234 = vmatpush2.bf16.xpose.msra.mxu0 0
        %2235 = vmatprep.subr.bf16.mxu0 0
        %2236 = vmatpush2.bf16.xpose.msra.mxu0 0
        %2237 = vmatprep.subr.bf16.mxu0 0
        %2238 = vmatpush2.bf16.xpose.msra.mxu0 0
        %2239 = vmatprep.subr.bf16.mxu0 0
        %2240 = vmatpush2.bf16.xpose.msra.mxu0 0
        %2241 = vmatprep.subr.bf16.mxu0 0
        %2242 = vmatpush2.bf16.xpose.msra.mxu0 0
        %2243 = vmatprep.subr.bf16.mxu0 0
        %2244 = vmatpush2.bf16.xpose.msra.mxu0 0
        %2245 = vmatprep.subr.bf16.mxu0 0
        %2246 = vmatpush2.bf16.xpose.msra.mxu0 0
        %2247 = vmatprep.subr.bf16.mxu0 0
        %2248 = vmatpush2.bf16.xpose.msra.mxu0 0
        %2249 = vmatprep.mubr.bf16.mxu0 0
        %2250 = vmatmul.mubr.bf16.gmra.mxu0 %v2212
        %v2251 = vpop.f32.mrf.mxu0
        %v2252 = vadd.f32 0.0, %v2251
        %v2253 = vpop.f32.mrf.mxu0
        %v2254 = vpop.f32.mrf.mxu0
        %v2255 = vpop.f32.mrf.mxu0
        %2256 = vdwg.mxu0
        %v2258 = vsel %vm1934, %v1333, 0
        %v2261 = vsel %vm1934, %v1633, 0
        %2263 = vmatprep.subr.bf16.mxu0 0
        %2264 = vmatpush1.bf16.xpose.msra.mxu0 0
        %2265 = vmatprep.subr.bf16.mxu0 0
        %2266 = vmatpush1.bf16.xpose.msra.mxu0 0
        %2267 = vmatprep.subr.bf16.mxu0 0
        %2268 = vmatpush1.bf16.xpose.msra.mxu0 0
        %2269 = vmatprep.subr.bf16.mxu0 0
        %2270 = vmatpush1.bf16.xpose.msra.mxu0 0
        %2271 = vmatprep.subr.bf16.mxu0 0
        %2272 = vmatpush1.bf16.xpose.msra.mxu0 0
        %2273 = vmatprep.subr.bf16.mxu0 0
        %2274 = vmatpush1.bf16.xpose.msra.mxu0 0
        %2275 = vmatprep.subr.bf16.mxu0 0
        %2276 = vmatpush1.bf16.xpose.msra.mxu0 0
        %2277 = vmatprep.subr.bf16.mxu0 0
        %2278 = vmatpush1.bf16.xpose.msra.mxu0 %v2261
        %2279 = vmatprep.subr.bf16.mxu0 0
        %2280 = vmatpush2.bf16.xpose.msra.mxu0 0
        %2281 = vmatprep.subr.bf16.mxu0 0
        %2282 = vmatpush2.bf16.xpose.msra.mxu0 0
        %2283 = vmatprep.subr.bf16.mxu0 0
        %2284 = vmatpush2.bf16.xpose.msra.mxu0 0
        %2285 = vmatprep.subr.bf16.mxu0 0
        %2286 = vmatpush2.bf16.xpose.msra.mxu0 0
        %2287 = vmatprep.subr.bf16.mxu0 0
        %2288 = vmatpush2.bf16.xpose.msra.mxu0 0
        %2289 = vmatprep.subr.bf16.mxu0 0
        %2290 = vmatpush2.bf16.xpose.msra.mxu0 0
        %2291 = vmatprep.subr.bf16.mxu0 0
        %2292 = vmatpush2.bf16.xpose.msra.mxu0 0
        %2293 = vmatprep.subr.bf16.mxu0 0
        %2294 = vmatpush2.bf16.xpose.msra.mxu0 0
        %2295 = vmatprep.mubr.bf16.mxu0 0
        %2296 = vmatmul.mubr.bf16.gmra.mxu0 %v2258
        %v2297 = vpop.f32.mrf.mxu0
        %v2298 = vadd.f32 0.0, %v2297
        %v2299 = vpop.f32.mrf.mxu0
        %v2300 = vpop.f32.mrf.mxu0
        %v2301 = vpop.f32.mrf.mxu0
        %2302 = vdwg.mxu0
        %v2305 = vlaneseq
        %v2306 = vshrl.u32 %v2305, 7
        %v2307 = vsub.s32 0, %v2306
        %v2308 = vrot.slane %v753, %v2307
        %v2309 = vlaneseq
        %v2310 = vshrl.u32 %v2309, 7
        %v2311 = vsub.s32 0, %v2310
        %v2312 = vrot.slane %v754, %v2311
        %v2315 = vadd.f32 %v1976, %v2308
        %v2316 = vadd.f32 %v2022, %v2308
        %v2317 = vadd.f32 %v2068, %v2308
        %v2318 = vadd.f32 %v2114, %v2308
        %v2319 = vadd.f32 %v2160, %v2312
        %v2320 = vadd.f32 %v2206, %v2312
        %v2321 = vadd.f32 %v2252, %v2312
        %v2322 = vadd.f32 %v2298, %v2312
        %vm2323 = vcmask 64512
        %v2324 = vsel %vm2323, %v2315, -inf
        %2325 = vmax.xlane.f32.xlu0 %v2324
        %v2326 = vpop.xlane.xlu0 %2325
        %v2327 = vsel %vm2323, %v2316, -inf
        %2328 = vmax.xlane.f32.xlu0 %v2327
        %v2329 = vpop.xlane.xlu0 %2328
        %v2330 = vsel %vm2323, %v2317, -inf
        %2331 = vmax.xlane.f32.xlu0 %v2330
        %v2332 = vpop.xlane.xlu0 %2331
        %v2333 = vsel %vm2323, %v2318, -inf
        %2334 = vmax.xlane.f32.xlu0 %v2333
        %v2335 = vpop.xlane.xlu0 %2334
        %v2336 = vsel %vm2323, %v2319, -inf
        %2337 = vmax.xlane.f32.xlu0 %v2336
        %v2338 = vpop.xlane.xlu0 %2337
        %v2339 = vsel %vm2323, %v2320, -inf
        %2340 = vmax.xlane.f32.xlu0 %v2339
        %v2341 = vpop.xlane.xlu0 %2340
        %v2342 = vsel %vm2323, %v2321, -inf
        %2343 = vmax.xlane.f32.xlu0 %v2342
        %v2344 = vpop.xlane.xlu0 %2343
        %v2345 = vsel %vm2323, %v2322, -inf
        %2346 = vmax.xlane.f32.xlu0 %v2345
        %v2347 = vpop.xlane.xlu0 %2346
        %v2348 = vsub.f32 %v2315, %v2326
        %v2349 = vsub.f32 %v2316, %v2329
        %v2350 = vsub.f32 %v2317, %v2332
        %v2351 = vsub.f32 %v2318, %v2335
        %v2352 = vsub.f32 %v2319, %v2338
        %v2353 = vsub.f32 %v2320, %v2341
        %v2354 = vsub.f32 %v2321, %v2344
        %v2355 = vsub.f32 %v2322, %v2347
        %v2356 = vmul.f32 %v2348, 1.442695
        %v2357 = vpow.pop %v2356
        %v2358 = vmul.f32 %v2349, 1.442695
        %v2359 = vpow.pop %v2358
        %v2360 = vmul.f32 %v2350, 1.442695
        %v2361 = vpow.pop %v2360
        %v2362 = vmul.f32 %v2351, 1.442695
        %v2363 = vpow.pop %v2362
        %v2364 = vmul.f32 %v2352, 1.442695
        %v2365 = vpow.pop %v2364
        %v2366 = vmul.f32 %v2353, 1.442695
        %v2367 = vpow.pop %v2366
        %v2368 = vmul.f32 %v2354, 1.442695
        %v2369 = vpow.pop %v2368
        %v2370 = vmul.f32 %v2355, 1.442695
        %v2371 = vpow.pop %v2370
        %v2372 = vsel %vm2323, %v2357, 0.0
        %2373 = vadd.xlane.f32.xlu0 %v2372
        %v2374 = vpop.xlane.xlu0 %2373
        %v2375 = vsel %vm2323, %v2359, 0.0
        %2376 = vadd.xlane.f32.xlu0 %v2375
        %v2377 = vpop.xlane.xlu0 %2376
        %v2378 = vsel %vm2323, %v2361, 0.0
        %2379 = vadd.xlane.f32.xlu0 %v2378
        %v2380 = vpop.xlane.xlu0 %2379
        %v2381 = vsel %vm2323, %v2363, 0.0
        %2382 = vadd.xlane.f32.xlu0 %v2381
        %v2383 = vpop.xlane.xlu0 %2382
        %v2384 = vsel %vm2323, %v2365, 0.0
        %2385 = vadd.xlane.f32.xlu0 %v2384
        %v2386 = vpop.xlane.xlu0 %2385
        %v2387 = vsel %vm2323, %v2367, 0.0
        %2388 = vadd.xlane.f32.xlu0 %v2387
        %v2389 = vpop.xlane.xlu0 %2388
        %v2390 = vsel %vm2323, %v2369, 0.0
        %2391 = vadd.xlane.f32.xlu0 %v2390
        %v2392 = vpop.xlane.xlu0 %2391
        %v2393 = vsel %vm2323, %v2371, 0.0
        %2394 = vadd.xlane.f32.xlu0 %v2393
        %v2395 = vpop.xlane.xlu0 %2394
        %v2396 = vrcp.pop %v2374
        %v2397 = vrcp.pop %v2377
        %v2398 = vrcp.pop %v2380
        %v2399 = vrcp.pop %v2383
        %v2400 = vrcp.pop %v2386
        %v2401 = vrcp.pop %v2389
        %v2402 = vrcp.pop %v2392
        %v2403 = vrcp.pop %v2395
        %v2404 = vmul.f32 %v2357, %v2396
        %v2405 = vmul.f32 %v2359, %v2397
        %v2406 = vmul.f32 %v2361, %v2398
        %v2407 = vmul.f32 %v2363, %v2399
        %v2408 = vmul.f32 %v2365, %v2400
        %v2409 = vmul.f32 %v2367, %v2401
        %v2410 = vmul.f32 %v2369, %v2402
        %v2411 = vmul.f32 %v2371, %v2403
        %v2412 = vpack.c.bf16 %v2404, %v2404
        %v2413 = vpack.c.bf16 %v2405, %v2405
        %v2414 = vpack.c.bf16 %v2406, %v2406
        %v2415 = vpack.c.bf16 %v2407, %v2407
        %v2416 = vpack.c.bf16 %v2408, %v2408
        %v2417 = vpack.c.bf16 %v2409, %v2409
        %v2418 = vpack.c.bf16 %v2410, %v2410
        %v2419 = vpack.c.bf16 %v2411, %v2411
        %v2421 = vsel %vm2323, %v2412, 0
        %vm2423 = vcmask 1043456
        %v2425 = vsel %vm2423, %v1926, 0
        %2427 = vmatprep.subr.bf16.mxu0 0
        %2428 = vmatpush1.bf16.msra.mxu0 0
        %2429 = vmatprep.subr.bf16.mxu0 0
        %2430 = vmatpush1.bf16.msra.mxu0 0
        %2431 = vmatprep.subr.bf16.mxu0 0
        %2432 = vmatpush1.bf16.msra.mxu0 0
        %2433 = vmatprep.subr.bf16.mxu0 0
        %2434 = vmatpush1.bf16.msra.mxu0 0
        %2435 = vmatprep.subr.bf16.mxu0 0
        %2436 = vmatpush1.bf16.msra.mxu0 0
        %2437 = vmatprep.subr.bf16.mxu0 0
        %2438 = vmatpush1.bf16.msra.mxu0 0
        %2439 = vmatprep.subr.bf16.mxu0 0
        %2440 = vmatpush1.bf16.msra.mxu0 0
        %2441 = vmatprep.subr.bf16.mxu0 0
        %2442 = vmatpush1.bf16.msra.mxu0 %v2425
        %2443 = vmatprep.subr.bf16.mxu0 0
        %2444 = vmatpush2.bf16.msra.mxu0 0
        %2445 = vmatprep.subr.bf16.mxu0 0
        %2446 = vmatpush2.bf16.msra.mxu0 0
        %2447 = vmatprep.subr.bf16.mxu0 0
        %2448 = vmatpush2.bf16.msra.mxu0 0
        %2449 = vmatprep.subr.bf16.mxu0 0
        %2450 = vmatpush2.bf16.msra.mxu0 0
        %2451 = vmatprep.subr.bf16.mxu0 0
        %2452 = vmatpush2.bf16.msra.mxu0 0
        %2453 = vmatprep.subr.bf16.mxu0 0
        %2454 = vmatpush2.bf16.msra.mxu0 0
        %2455 = vmatprep.subr.bf16.mxu0 0
        %2456 = vmatpush2.bf16.msra.mxu0 0
        %2457 = vmatprep.subr.bf16.mxu0 0
        %2458 = vmatpush2.bf16.msra.mxu0 0
        %2459 = vmatprep.mubr.bf16.mxu0 0
        %2460 = vmatmul.mubr.bf16.gmra.mxu0 %v2421
        %v2461 = vpop.f32.mrf.mxu0
        %v2462 = vadd.f32 0.0, %v2461
        %v2463 = vpop.f32.mrf.mxu0
        %v2464 = vpop.f32.mrf.mxu0
        %v2465 = vpop.f32.mrf.mxu0
        %2466 = vdwg.mxu0
        %v2468 = vsel %vm2323, %v2413, 0
        %v2471 = vsel %vm2423, %v1927, 0
        %2473 = vmatprep.subr.bf16.mxu0 0
        %2474 = vmatpush1.bf16.msra.mxu0 0
        %2475 = vmatprep.subr.bf16.mxu0 0
        %2476 = vmatpush1.bf16.msra.mxu0 0
        %2477 = vmatprep.subr.bf16.mxu0 0
        %2478 = vmatpush1.bf16.msra.mxu0 0
        %2479 = vmatprep.subr.bf16.mxu0 0
        %2480 = vmatpush1.bf16.msra.mxu0 0
        %2481 = vmatprep.subr.bf16.mxu0 0
        %2482 = vmatpush1.bf16.msra.mxu0 0
        %2483 = vmatprep.subr.bf16.mxu0 0
        %2484 = vmatpush1.bf16.msra.mxu0 0
        %2485 = vmatprep.subr.bf16.mxu0 0
        %2486 = vmatpush1.bf16.msra.mxu0 0
        %2487 = vmatprep.subr.bf16.mxu0 0
        %2488 = vmatpush1.bf16.msra.mxu0 %v2471
        %2489 = vmatprep.subr.bf16.mxu0 0
        %2490 = vmatpush2.bf16.msra.mxu0 0
        %2491 = vmatprep.subr.bf16.mxu0 0
        %2492 = vmatpush2.bf16.msra.mxu0 0
        %2493 = vmatprep.subr.bf16.mxu0 0
        %2494 = vmatpush2.bf16.msra.mxu0 0
        %2495 = vmatprep.subr.bf16.mxu0 0
        %2496 = vmatpush2.bf16.msra.mxu0 0
        %2497 = vmatprep.subr.bf16.mxu0 0
        %2498 = vmatpush2.bf16.msra.mxu0 0
        %2499 = vmatprep.subr.bf16.mxu0 0
        %2500 = vmatpush2.bf16.msra.mxu0 0
        %2501 = vmatprep.subr.bf16.mxu0 0
        %2502 = vmatpush2.bf16.msra.mxu0 0
        %2503 = vmatprep.subr.bf16.mxu0 0
        %2504 = vmatpush2.bf16.msra.mxu0 0
        %2505 = vmatprep.mubr.bf16.mxu0 0
        %2506 = vmatmul.mubr.bf16.gmra.mxu0 %v2468
        %v2507 = vpop.f32.mrf.mxu0
        %v2508 = vadd.f32 0.0, %v2507
        %v2509 = vpop.f32.mrf.mxu0
        %v2510 = vpop.f32.mrf.mxu0
        %v2511 = vpop.f32.mrf.mxu0
        %2512 = vdwg.mxu0
        %v2514 = vsel %vm2323, %v2414, 0
        %v2517 = vsel %vm2423, %v1928, 0
        %2519 = vmatprep.subr.bf16.mxu0 0
        %2520 = vmatpush1.bf16.msra.mxu0 0
        %2521 = vmatprep.subr.bf16.mxu0 0
        %2522 = vmatpush1.bf16.msra.mxu0 0
        %2523 = vmatprep.subr.bf16.mxu0 0
        %2524 = vmatpush1.bf16.msra.mxu0 0
        %2525 = vmatprep.subr.bf16.mxu0 0
        %2526 = vmatpush1.bf16.msra.mxu0 0
        %2527 = vmatprep.subr.bf16.mxu0 0
        %2528 = vmatpush1.bf16.msra.mxu0 0
        %2529 = vmatprep.subr.bf16.mxu0 0
        %2530 = vmatpush1.bf16.msra.mxu0 0
        %2531 = vmatprep.subr.bf16.mxu0 0
        %2532 = vmatpush1.bf16.msra.mxu0 0
        %2533 = vmatprep.subr.bf16.mxu0 0
        %2534 = vmatpush1.bf16.msra.mxu0 %v2517
        %2535 = vmatprep.subr.bf16.mxu0 0
        %2536 = vmatpush2.bf16.msra.mxu0 0
        %2537 = vmatprep.subr.bf16.mxu0 0
        %2538 = vmatpush2.bf16.msra.mxu0 0
        %2539 = vmatprep.subr.bf16.mxu0 0
        %2540 = vmatpush2.bf16.msra.mxu0 0
        %2541 = vmatprep.subr.bf16.mxu0 0
        %2542 = vmatpush2.bf16.msra.mxu0 0
        %2543 = vmatprep.subr.bf16.mxu0 0
        %2544 = vmatpush2.bf16.msra.mxu0 0
        %2545 = vmatprep.subr.bf16.mxu0 0
        %2546 = vmatpush2.bf16.msra.mxu0 0
        %2547 = vmatprep.subr.bf16.mxu0 0
        %2548 = vmatpush2.bf16.msra.mxu0 0
        %2549 = vmatprep.subr.bf16.mxu0 0
        %2550 = vmatpush2.bf16.msra.mxu0 0
        %2551 = vmatprep.mubr.bf16.mxu0 0
        %2552 = vmatmul.mubr.bf16.gmra.mxu0 %v2514
        %v2553 = vpop.f32.mrf.mxu0
        %v2554 = vadd.f32 0.0, %v2553
        %v2555 = vpop.f32.mrf.mxu0
        %v2556 = vpop.f32.mrf.mxu0
        %v2557 = vpop.f32.mrf.mxu0
        %2558 = vdwg.mxu0
        %v2560 = vsel %vm2323, %v2415, 0
        %v2563 = vsel %vm2423, %v1929, 0
        %2565 = vmatprep.subr.bf16.mxu0 0
        %2566 = vmatpush1.bf16.msra.mxu0 0
        %2567 = vmatprep.subr.bf16.mxu0 0
        %2568 = vmatpush1.bf16.msra.mxu0 0
        %2569 = vmatprep.subr.bf16.mxu0 0
        %2570 = vmatpush1.bf16.msra.mxu0 0
        %2571 = vmatprep.subr.bf16.mxu0 0
        %2572 = vmatpush1.bf16.msra.mxu0 0
        %2573 = vmatprep.subr.bf16.mxu0 0
        %2574 = vmatpush1.bf16.msra.mxu0 0
        %2575 = vmatprep.subr.bf16.mxu0 0
        %2576 = vmatpush1.bf16.msra.mxu0 0
        %2577 = vmatprep.subr.bf16.mxu0 0
        %2578 = vmatpush1.bf16.msra.mxu0 0
        %2579 = vmatprep.subr.bf16.mxu0 0
        %2580 = vmatpush1.bf16.msra.mxu0 %v2563
        %2581 = vmatprep.subr.bf16.mxu0 0
        %2582 = vmatpush2.bf16.msra.mxu0 0
        %2583 = vmatprep.subr.bf16.mxu0 0
        %2584 = vmatpush2.bf16.msra.mxu0 0
        %2585 = vmatprep.subr.bf16.mxu0 0
        %2586 = vmatpush2.bf16.msra.mxu0 0
        %2587 = vmatprep.subr.bf16.mxu0 0
        %2588 = vmatpush2.bf16.msra.mxu0 0
        %2589 = vmatprep.subr.bf16.mxu0 0
        %2590 = vmatpush2.bf16.msra.mxu0 0
        %2591 = vmatprep.subr.bf16.mxu0 0
        %2592 = vmatpush2.bf16.msra.mxu0 0
        %2593 = vmatprep.subr.bf16.mxu0 0
        %2594 = vmatpush2.bf16.msra.mxu0 0
        %2595 = vmatprep.subr.bf16.mxu0 0
        %2596 = vmatpush2.bf16.msra.mxu0 0
        %2597 = vmatprep.mubr.bf16.mxu0 0
        %2598 = vmatmul.mubr.bf16.gmra.mxu0 %v2560
        %v2599 = vpop.f32.mrf.mxu0
        %v2600 = vadd.f32 0.0, %v2599
        %v2601 = vpop.f32.mrf.mxu0
        %v2602 = vpop.f32.mrf.mxu0
        %v2603 = vpop.f32.mrf.mxu0
        %2604 = vdwg.mxu0
        %v2606 = vsel %vm2323, %v2416, 0
        %v2609 = vsel %vm2423, %v1930, 0
        %2611 = vmatprep.subr.bf16.mxu0 0
        %2612 = vmatpush1.bf16.msra.mxu0 0
        %2613 = vmatprep.subr.bf16.mxu0 0
        %2614 = vmatpush1.bf16.msra.mxu0 0
        %2615 = vmatprep.subr.bf16.mxu0 0
        %2616 = vmatpush1.bf16.msra.mxu0 0
        %2617 = vmatprep.subr.bf16.mxu0 0
        %2618 = vmatpush1.bf16.msra.mxu0 0
        %2619 = vmatprep.subr.bf16.mxu0 0
        %2620 = vmatpush1.bf16.msra.mxu0 0
        %2621 = vmatprep.subr.bf16.mxu0 0
        %2622 = vmatpush1.bf16.msra.mxu0 0
        %2623 = vmatprep.subr.bf16.mxu0 0
        %2624 = vmatpush1.bf16.msra.mxu0 0
        %2625 = vmatprep.subr.bf16.mxu0 0
        %2626 = vmatpush1.bf16.msra.mxu0 %v2609
        %2627 = vmatprep.subr.bf16.mxu0 0
        %2628 = vmatpush2.bf16.msra.mxu0 0
        %2629 = vmatprep.subr.bf16.mxu0 0
        %2630 = vmatpush2.bf16.msra.mxu0 0
        %2631 = vmatprep.subr.bf16.mxu0 0
        %2632 = vmatpush2.bf16.msra.mxu0 0
        %2633 = vmatprep.subr.bf16.mxu0 0
        %2634 = vmatpush2.bf16.msra.mxu0 0
        %2635 = vmatprep.subr.bf16.mxu0 0
        %2636 = vmatpush2.bf16.msra.mxu0 0
        %2637 = vmatprep.subr.bf16.mxu0 0
        %2638 = vmatpush2.bf16.msra.mxu0 0
        %2639 = vmatprep.subr.bf16.mxu0 0
        %2640 = vmatpush2.bf16.msra.mxu0 0
        %2641 = vmatprep.subr.bf16.mxu0 0
        %2642 = vmatpush2.bf16.msra.mxu0 0
        %2643 = vmatprep.mubr.bf16.mxu0 0
        %2644 = vmatmul.mubr.bf16.gmra.mxu0 %v2606
        %v2645 = vpop.f32.mrf.mxu0
        %v2646 = vadd.f32 0.0, %v2645
        %v2647 = vpop.f32.mrf.mxu0
        %v2648 = vpop.f32.mrf.mxu0
        %v2649 = vpop.f32.mrf.mxu0
        %2650 = vdwg.mxu0
        %v2652 = vsel %vm2323, %v2417, 0
        %v2655 = vsel %vm2423, %v1931, 0
        %2657 = vmatprep.subr.bf16.mxu0 0
        %2658 = vmatpush1.bf16.msra.mxu0 0
        %2659 = vmatprep.subr.bf16.mxu0 0
        %2660 = vmatpush1.bf16.msra.mxu0 0
        %2661 = vmatprep.subr.bf16.mxu0 0
        %2662 = vmatpush1.bf16.msra.mxu0 0
        %2663 = vmatprep.subr.bf16.mxu0 0
        %2664 = vmatpush1.bf16.msra.mxu0 0
        %2665 = vmatprep.subr.bf16.mxu0 0
        %2666 = vmatpush1.bf16.msra.mxu0 0
        %2667 = vmatprep.subr.bf16.mxu0 0
        %2668 = vmatpush1.bf16.msra.mxu0 0
        %2669 = vmatprep.subr.bf16.mxu0 0
        %2670 = vmatpush1.bf16.msra.mxu0 0
        %2671 = vmatprep.subr.bf16.mxu0 0
        %2672 = vmatpush1.bf16.msra.mxu0 %v2655
        %2673 = vmatprep.subr.bf16.mxu0 0
        %2674 = vmatpush2.bf16.msra.mxu0 0
        %2675 = vmatprep.subr.bf16.mxu0 0
        %2676 = vmatpush2.bf16.msra.mxu0 0
        %2677 = vmatprep.subr.bf16.mxu0 0
        %2678 = vmatpush2.bf16.msra.mxu0 0
        %2679 = vmatprep.subr.bf16.mxu0 0
        %2680 = vmatpush2.bf16.msra.mxu0 0
        %2681 = vmatprep.subr.bf16.mxu0 0
        %2682 = vmatpush2.bf16.msra.mxu0 0
        %2683 = vmatprep.subr.bf16.mxu0 0
        %2684 = vmatpush2.bf16.msra.mxu0 0
        %2685 = vmatprep.subr.bf16.mxu0 0
        %2686 = vmatpush2.bf16.msra.mxu0 0
        %2687 = vmatprep.subr.bf16.mxu0 0
        %2688 = vmatpush2.bf16.msra.mxu0 0
        %2689 = vmatprep.mubr.bf16.mxu0 0
        %2690 = vmatmul.mubr.bf16.gmra.mxu0 %v2652
        %v2691 = vpop.f32.mrf.mxu0
        %v2692 = vadd.f32 0.0, %v2691
        %v2693 = vpop.f32.mrf.mxu0
        %v2694 = vpop.f32.mrf.mxu0
        %v2695 = vpop.f32.mrf.mxu0
        %2696 = vdwg.mxu0
        %v2698 = vsel %vm2323, %v2418, 0
        %v2701 = vsel %vm2423, %v1932, 0
        %2703 = vmatprep.subr.bf16.mxu0 0
        %2704 = vmatpush1.bf16.msra.mxu0 0
        %2705 = vmatprep.subr.bf16.mxu0 0
        %2706 = vmatpush1.bf16.msra.mxu0 0
        %2707 = vmatprep.subr.bf16.mxu0 0
        %2708 = vmatpush1.bf16.msra.mxu0 0
        %2709 = vmatprep.subr.bf16.mxu0 0
        %2710 = vmatpush1.bf16.msra.mxu0 0
        %2711 = vmatprep.subr.bf16.mxu0 0
        %2712 = vmatpush1.bf16.msra.mxu0 0
        %2713 = vmatprep.subr.bf16.mxu0 0
        %2714 = vmatpush1.bf16.msra.mxu0 0
        %2715 = vmatprep.subr.bf16.mxu0 0
        %2716 = vmatpush1.bf16.msra.mxu0 0
        %2717 = vmatprep.subr.bf16.mxu0 0
        %2718 = vmatpush1.bf16.msra.mxu0 %v2701
        %2719 = vmatprep.subr.bf16.mxu0 0
        %2720 = vmatpush2.bf16.msra.mxu0 0
        %2721 = vmatprep.subr.bf16.mxu0 0
        %2722 = vmatpush2.bf16.msra.mxu0 0
        %2723 = vmatprep.subr.bf16.mxu0 0
        %2724 = vmatpush2.bf16.msra.mxu0 0
        %2725 = vmatprep.subr.bf16.mxu0 0
        %2726 = vmatpush2.bf16.msra.mxu0 0
        %2727 = vmatprep.subr.bf16.mxu0 0
        %2728 = vmatpush2.bf16.msra.mxu0 0
        %2729 = vmatprep.subr.bf16.mxu0 0
        %2730 = vmatpush2.bf16.msra.mxu0 0
        %2731 = vmatprep.subr.bf16.mxu0 0
        %2732 = vmatpush2.bf16.msra.mxu0 0
        %2733 = vmatprep.subr.bf16.mxu0 0
        %2734 = vmatpush2.bf16.msra.mxu0 0
        %2735 = vmatprep.mubr.bf16.mxu0 0
        %2736 = vmatmul.mubr.bf16.gmra.mxu0 %v2698
        %v2737 = vpop.f32.mrf.mxu0
        %v2738 = vadd.f32 0.0, %v2737
        %v2739 = vpop.f32.mrf.mxu0
        %v2740 = vpop.f32.mrf.mxu0
        %v2741 = vpop.f32.mrf.mxu0
        %2742 = vdwg.mxu0
        %v2744 = vsel %vm2323, %v2419, 0
        %v2747 = vsel %vm2423, %v1933, 0
        %2749 = vmatprep.subr.bf16.mxu0 0
        %2750 = vmatpush1.bf16.msra.mxu0 0
        %2751 = vmatprep.subr.bf16.mxu0 0
        %2752 = vmatpush1.bf16.msra.mxu0 0
        %2753 = vmatprep.subr.bf16.mxu0 0
        %2754 = vmatpush1.bf16.msra.mxu0 0
        %2755 = vmatprep.subr.bf16.mxu0 0
        %2756 = vmatpush1.bf16.msra.mxu0 0
        %2757 = vmatprep.subr.bf16.mxu0 0
        %2758 = vmatpush1.bf16.msra.mxu0 0
        %2759 = vmatprep.subr.bf16.mxu0 0
        %2760 = vmatpush1.bf16.msra.mxu0 0
        %2761 = vmatprep.subr.bf16.mxu0 0
        %2762 = vmatpush1.bf16.msra.mxu0 0
        %2763 = vmatprep.subr.bf16.mxu0 0
        %2764 = vmatpush1.bf16.msra.mxu0 %v2747
        %2765 = vmatprep.subr.bf16.mxu0 0
        %2766 = vmatpush2.bf16.msra.mxu0 0
        %2767 = vmatprep.subr.bf16.mxu0 0
        %2768 = vmatpush2.bf16.msra.mxu0 0
        %2769 = vmatprep.subr.bf16.mxu0 0
        %2770 = vmatpush2.bf16.msra.mxu0 0
        %2771 = vmatprep.subr.bf16.mxu0 0
        %2772 = vmatpush2.bf16.msra.mxu0 0
        %2773 = vmatprep.subr.bf16.mxu0 0
        %2774 = vmatpush2.bf16.msra.mxu0 0
        %2775 = vmatprep.subr.bf16.mxu0 0
        %2776 = vmatpush2.bf16.msra.mxu0 0
        %2777 = vmatprep.subr.bf16.mxu0 0
        %2778 = vmatpush2.bf16.msra.mxu0 0
        %2779 = vmatprep.subr.bf16.mxu0 0
        %2780 = vmatpush2.bf16.msra.mxu0 0
        %2781 = vmatprep.mubr.bf16.mxu0 0
        %2782 = vmatmul.mubr.bf16.gmra.mxu0 %v2744
        %v2783 = vpop.f32.mrf.mxu0
        %v2784 = vadd.f32 0.0, %v2783
        %v2785 = vpop.f32.mrf.mxu0
        %v2786 = vpop.f32.mrf.mxu0
        %v2787 = vpop.f32.mrf.mxu0
        %2788 = vdwg.mxu0
        %v2789 = vcombine.low %v2462, %v2554
        %v2790 = vcombine.high %v2462, %v2554
        %v2792 = vunpack.c.l.s4 1983009808
        %v2793 = vunpack.c.0.s8 %v2792
        %v2794 = vlaneseq
        %v2795 = vshrl.u32 %v2794, 7
        %v2796 = vsub.s32 %v2793, %v2795
        %v2797 = vrot.slane %v2789, %v2796
        %v2799 = vunpack.c.l.s4 1983009808
        %v2800 = vunpack.c.0.s8 %v2799
        %v2801 = vlaneseq
        %v2802 = vshrl.u32 %v2801, 7
        %v2803 = vsub.s32 %v2800, %v2802
        %v2804 = vrot.slane %v2790, %v2803
        %v2805 = vcombine.low %v2508, %v2600
        %v2806 = vcombine.high %v2508, %v2600
        %v2808 = vunpack.c.l.s4 1983009808
        %v2809 = vunpack.c.0.s8 %v2808
        %v2810 = vlaneseq
        %v2811 = vshrl.u32 %v2810, 7
        %v2812 = vsub.s32 %v2809, %v2811
        %v2813 = vrot.slane %v2805, %v2812
        %v2815 = vunpack.c.l.s4 1983009808
        %v2816 = vunpack.c.0.s8 %v2815
        %v2817 = vlaneseq
        %v2818 = vshrl.u32 %v2817, 7
        %v2819 = vsub.s32 %v2816, %v2818
        %v2820 = vrot.slane %v2806, %v2819
        %v2821 = vcombine.low %v2797, %v2813
        %v2822 = vcombine.high %v2797, %v2813
        %v2824 = vunpack.c.l.s4 1934713408
        %v2825 = vunpack.c.0.s8 %v2824
        %v2826 = vlaneseq
        %v2827 = vshrl.u32 %v2826, 7
        %v2828 = vsub.s32 %v2825, %v2827
        %v2829 = vrot.slane %v2821, %v2828
        %v2831 = vunpack.c.l.s4 1934713408
        %v2832 = vunpack.c.0.s8 %v2831
        %v2833 = vlaneseq
        %v2834 = vshrl.u32 %v2833, 7
        %v2835 = vsub.s32 %v2832, %v2834
        %v2836 = vrot.slane %v2822, %v2835
        %v2837 = vcombine.low %v2804, %v2820
        %v2838 = vcombine.high %v2804, %v2820
        %v2840 = vunpack.c.l.s4 1934713408
        %v2841 = vunpack.c.0.s8 %v2840
        %v2842 = vlaneseq
        %v2843 = vshrl.u32 %v2842, 7
        %v2844 = vsub.s32 %v2841, %v2843
        %v2845 = vrot.slane %v2837, %v2844
        %v2847 = vunpack.c.l.s4 1934713408
        %v2848 = vunpack.c.0.s8 %v2847
        %v2849 = vlaneseq
        %v2850 = vshrl.u32 %v2849, 7
        %v2851 = vsub.s32 %v2848, %v2850
        %v2852 = vrot.slane %v2838, %v2851
        %v2853 = vcombine.high %v2829, 0.0
        %v2854 = vcombine.high %v2836, 0.0
        %v2855 = vcombine.high %v2845, 0.0
        %v2856 = vcombine.high %v2852, 0.0
        %v2857 = vcombine.low %v2646, %v2738
        %v2858 = vcombine.high %v2646, %v2738
        %v2860 = vunpack.c.l.s4 1983009808
        %v2861 = vunpack.c.0.s8 %v2860
        %v2862 = vlaneseq
        %v2863 = vshrl.u32 %v2862, 7
        %v2864 = vsub.s32 %v2861, %v2863
        %v2865 = vrot.slane %v2857, %v2864
        %v2867 = vunpack.c.l.s4 1983009808
        %v2868 = vunpack.c.0.s8 %v2867
        %v2869 = vlaneseq
        %v2870 = vshrl.u32 %v2869, 7
        %v2871 = vsub.s32 %v2868, %v2870
        %v2872 = vrot.slane %v2858, %v2871
        %v2873 = vcombine.low %v2692, %v2784
        %v2874 = vcombine.high %v2692, %v2784
        %v2876 = vunpack.c.l.s4 1983009808
        %v2877 = vunpack.c.0.s8 %v2876
        %v2878 = vlaneseq
        %v2879 = vshrl.u32 %v2878, 7
        %v2880 = vsub.s32 %v2877, %v2879
        %v2881 = vrot.slane %v2873, %v2880
        %v2883 = vunpack.c.l.s4 1983009808
        %v2884 = vunpack.c.0.s8 %v2883
        %v2885 = vlaneseq
        %v2886 = vshrl.u32 %v2885, 7
        %v2887 = vsub.s32 %v2884, %v2886
        %v2888 = vrot.slane %v2874, %v2887
        %v2889 = vcombine.low %v2865, %v2881
        %v2890 = vcombine.high %v2865, %v2881
        %v2892 = vunpack.c.l.s4 1934713408
        %v2893 = vunpack.c.0.s8 %v2892
        %v2894 = vlaneseq
        %v2895 = vshrl.u32 %v2894, 7
        %v2896 = vsub.s32 %v2893, %v2895
        %v2897 = vrot.slane %v2889, %v2896
        %v2899 = vunpack.c.l.s4 1934713408
        %v2900 = vunpack.c.0.s8 %v2899
        %v2901 = vlaneseq
        %v2902 = vshrl.u32 %v2901, 7
        %v2903 = vsub.s32 %v2900, %v2902
        %v2904 = vrot.slane %v2890, %v2903
        %v2905 = vcombine.low %v2872, %v2888
        %v2906 = vcombine.high %v2872, %v2888
        %v2908 = vunpack.c.l.s4 1934713408
        %v2909 = vunpack.c.0.s8 %v2908
        %v2910 = vlaneseq
        %v2911 = vshrl.u32 %v2910, 7
        %v2912 = vsub.s32 %v2909, %v2911
        %v2913 = vrot.slane %v2905, %v2912
        %v2915 = vunpack.c.l.s4 1934713408
        %v2916 = vunpack.c.0.s8 %v2915
        %v2917 = vlaneseq
        %v2918 = vshrl.u32 %v2917, 7
        %v2919 = vsub.s32 %v2916, %v2918
        %v2920 = vrot.slane %v2906, %v2919
        %v2921 = vcombine.high %v2897, 0.0
        %v2922 = vcombine.high %v2904, 0.0
        %v2923 = vcombine.high %v2913, 0.0
        %v2924 = vcombine.high %v2920, 0.0
        %v2925 = vcombine.low %v2829, %v2836
        %v2927 = vunpack.c.l.s4 1983009808
        %v2928 = vunpack.c.0.s8 %v2927
        %v2929 = vlaneseq
        %v2930 = vshrl.u32 %v2929, 7
        %v2931 = vsub.s32 %v2928, %v2930
        %v2932 = vrot.slane %v2925, %v2931
        %v2933 = vcombine.low %v2853, %v2854
        %v2935 = vunpack.c.l.s4 1983009808
        %v2936 = vunpack.c.0.s8 %v2935
        %v2937 = vlaneseq
        %v2938 = vshrl.u32 %v2937, 7
        %v2939 = vsub.s32 %v2936, %v2938
        %v2940 = vrot.slane %v2933, %v2939
        %v2941 = vcombine.low %v2845, %v2852
        %v2943 = vunpack.c.l.s4 1983009808
        %v2944 = vunpack.c.0.s8 %v2943
        %v2945 = vlaneseq
        %v2946 = vshrl.u32 %v2945, 7
        %v2947 = vsub.s32 %v2944, %v2946
        %v2948 = vrot.slane %v2941, %v2947
        %v2949 = vcombine.low %v2855, %v2856
        %v2951 = vunpack.c.l.s4 1983009808
        %v2952 = vunpack.c.0.s8 %v2951
        %v2953 = vlaneseq
        %v2954 = vshrl.u32 %v2953, 7
        %v2955 = vsub.s32 %v2952, %v2954
        %v2956 = vrot.slane %v2949, %v2955
        %v2957 = vcombine.low %v2932, %v2940
        %v2958 = vcombine.high %v2932, %v2940
        %v2960 = vunpack.c.l.s4 1934713408
        %v2961 = vunpack.c.0.s8 %v2960
        %v2962 = vlaneseq
        %v2963 = vshrl.u32 %v2962, 7
        %v2964 = vsub.s32 %v2961, %v2963
        %v2965 = vrot.slane %v2957, %v2964
        %v2967 = vunpack.c.l.s4 1934713408
        %v2968 = vunpack.c.0.s8 %v2967
        %v2969 = vlaneseq
        %v2970 = vshrl.u32 %v2969, 7
        %v2971 = vsub.s32 %v2968, %v2970
        %v2972 = vrot.slane %v2958, %v2971
        %v2973 = vcombine.low %v2948, %v2956
        %v2974 = vcombine.high %v2948, %v2956
        %v2976 = vunpack.c.l.s4 1934713408
        %v2977 = vunpack.c.0.s8 %v2976
        %v2978 = vlaneseq
        %v2979 = vshrl.u32 %v2978, 7
        %v2980 = vsub.s32 %v2977, %v2979
        %v2981 = vrot.slane %v2973, %v2980
        %v2983 = vunpack.c.l.s4 1934713408
        %v2984 = vunpack.c.0.s8 %v2983
        %v2985 = vlaneseq
        %v2986 = vshrl.u32 %v2985, 7
        %v2987 = vsub.s32 %v2984, %v2986
        %v2988 = vrot.slane %v2974, %v2987
        %v2989 = vcombine.low %v2965, %v2981
        %v2990 = vcombine.high %v2965, %v2981
        %v2991 = vcombine.low %v2972, %v2988
        %v2992 = vcombine.high %v2972, %v2988
        %v2993 = vcombine.low %v2897, %v2904
        %v2995 = vunpack.c.l.s4 1983009808
        %v2996 = vunpack.c.0.s8 %v2995
        %v2997 = vlaneseq
        %v2998 = vshrl.u32 %v2997, 7
        %v2999 = vsub.s32 %v2996, %v2998
        %v3000 = vrot.slane %v2993, %v2999
        %v3001 = vcombine.low %v2921, %v2922
        %v3003 = vunpack.c.l.s4 1983009808
        %v3004 = vunpack.c.0.s8 %v3003
        %v3005 = vlaneseq
        %v3006 = vshrl.u32 %v3005, 7
        %v3007 = vsub.s32 %v3004, %v3006
        %v3008 = vrot.slane %v3001, %v3007
        %v3009 = vcombine.low %v2913, %v2920
        %v3011 = vunpack.c.l.s4 1983009808
        %v3012 = vunpack.c.0.s8 %v3011
        %v3013 = vlaneseq
        %v3014 = vshrl.u32 %v3013, 7
        %v3015 = vsub.s32 %v3012, %v3014
        %v3016 = vrot.slane %v3009, %v3015
        %v3017 = vcombine.low %v2923, %v2924
        %v3019 = vunpack.c.l.s4 1983009808
        %v3020 = vunpack.c.0.s8 %v3019
        %v3021 = vlaneseq
        %v3022 = vshrl.u32 %v3021, 7
        %v3023 = vsub.s32 %v3020, %v3022
        %v3024 = vrot.slane %v3017, %v3023
        %v3025 = vcombine.low %v3000, %v3008
        %v3026 = vcombine.high %v3000, %v3008
        %v3028 = vunpack.c.l.s4 1934713408
        %v3029 = vunpack.c.0.s8 %v3028
        %v3030 = vlaneseq
        %v3031 = vshrl.u32 %v3030, 7
        %v3032 = vsub.s32 %v3029, %v3031
        %v3033 = vrot.slane %v3025, %v3032
        %v3035 = vunpack.c.l.s4 1934713408
        %v3036 = vunpack.c.0.s8 %v3035
        %v3037 = vlaneseq
        %v3038 = vshrl.u32 %v3037, 7
        %v3039 = vsub.s32 %v3036, %v3038
        %v3040 = vrot.slane %v3026, %v3039
        %v3041 = vcombine.low %v3016, %v3024
        %v3042 = vcombine.high %v3016, %v3024
        %v3044 = vunpack.c.l.s4 1934713408
        %v3045 = vunpack.c.0.s8 %v3044
        %v3046 = vlaneseq
        %v3047 = vshrl.u32 %v3046, 7
        %v3048 = vsub.s32 %v3045, %v3047
        %v3049 = vrot.slane %v3041, %v3048
        %v3051 = vunpack.c.l.s4 1934713408
        %v3052 = vunpack.c.0.s8 %v3051
        %v3053 = vlaneseq
        %v3054 = vshrl.u32 %v3053, 7
        %v3055 = vsub.s32 %v3052, %v3054
        %v3056 = vrot.slane %v3042, %v3055
        %v3057 = vcombine.low %v3033, %v3049
        %v3058 = vcombine.high %v3033, %v3049
        %v3059 = vcombine.low %v3040, %v3056
        %v3060 = vcombine.high %v3040, %v3056
        %3063 = vrot.lane.b32.xlu0 %v2990, 32
        %v3064 = vpop.permute.xlu0 %3063
        %3065 = vrot.lane.b32.xlu0 %v3058, 32
        %v3066 = vpop.permute.xlu0 %3065
        %3071 = vrot.lane.b32.xlu0 %v2991, 64
        %v3072 = vpop.permute.xlu0 %3071
        %3073 = vrot.lane.b32.xlu0 %v3059, 64
        %v3074 = vpop.permute.xlu0 %3073
        %3079 = vrot.lane.b32.xlu0 %v2992, 96
        %v3080 = vpop.permute.xlu0 %3079
        %3081 = vrot.lane.b32.xlu0 %v3060, 96
        %v3082 = vpop.permute.xlu0 %3081
        %v3085 = vsel %vm1934, %v2989, %v3064
        %v3086 = vsel %vm1934, %v3057, %v3066
        %vm3087 = vcmask 523264
        %v3088 = vsel %vm3087, %v3085, %v3072
        %v3089 = vsel %vm3087, %v3086, %v3074
        %vm3090 = vcmask 785408
        %v3091 = vsel %vm3090, %v3088, %v3080
        %v3092 = vsel %vm3090, %v3089, %v3082
        %v3093 = vpack.c.bf16 %v3092, %v3091
        %v3095 = vlaneseq
        %v3096 = vshrl.u32 %v3095, 7
        %v3097 = vsub.s32 0, %v3096
        %v3098 = vrot.slane %v804, %v3097
        %v3116 = vunpack.c.l.b16 %v788
        %v3117 = vunpack.c.l.b16 %v789
        %v3118 = vunpack.c.l.b16 %v790
        %v3119 = vunpack.c.l.b16 %v791
        %v3120 = vunpack.c.l.b16 %v792
        %v3121 = vunpack.c.l.b16 %v793
        %v3122 = vunpack.c.l.b16 %v794
        %v3123 = vunpack.c.l.b16 %v795
        %v3124 = vunpack.c.l.b16 %v796
        %v3125 = vunpack.c.l.b16 %v797
        %v3126 = vunpack.c.l.b16 %v798
        %v3127 = vunpack.c.l.b16 %v799
        %v3128 = vunpack.c.l.b16 %v800
        %v3129 = vunpack.c.l.b16 %v801
        %v3130 = vunpack.c.l.b16 %v802
        %v3131 = vunpack.c.l.b16 %v803
        %v3132 = vpack.c.b16 %v3117, %v3116
        %v3133 = vpack.c.b16 %v3119, %v3118
        %v3134 = vpack.c.b16 %v3121, %v3120
        %v3135 = vpack.c.b16 %v3123, %v3122
        %v3136 = vpack.c.b16 %v3125, %v3124
        %v3137 = vpack.c.b16 %v3127, %v3126
        %v3138 = vpack.c.b16 %v3129, %v3128
        %v3139 = vpack.c.b16 %v3131, %v3130
        %3148 = vmatprep.subr.bf16.mxu0 0
        %3149 = vmatpush1.bf16.msra.mxu0 %v3139
        %3150 = vmatprep.subr.bf16.mxu0 0
        %3151 = vmatpush1.bf16.msra.mxu0 %v3138
        %3152 = vmatprep.subr.bf16.mxu0 0
        %3153 = vmatpush1.bf16.msra.mxu0 %v3137
        %3154 = vmatprep.subr.bf16.mxu0 0
        %3155 = vmatpush1.bf16.msra.mxu0 %v3136
        %3156 = vmatprep.subr.bf16.mxu0 0
        %3157 = vmatpush1.bf16.msra.mxu0 %v3135
        %3158 = vmatprep.subr.bf16.mxu0 0
        %3159 = vmatpush1.bf16.msra.mxu0 %v3134
        %3160 = vmatprep.subr.bf16.mxu0 0
        %3161 = vmatpush1.bf16.msra.mxu0 %v3133
        %3162 = vmatprep.subr.bf16.mxu0 0
        %3163 = vmatpush1.bf16.msra.mxu0 %v3132
        %3164 = vmatprep.subr.bf16.mxu0 0
        %3165 = vmatpush2.bf16.msra.mxu0 0
        %3166 = vmatprep.subr.bf16.mxu0 0
        %3167 = vmatpush2.bf16.msra.mxu0 0
        %3168 = vmatprep.subr.bf16.mxu0 0
        %3169 = vmatpush2.bf16.msra.mxu0 0
        %3170 = vmatprep.subr.bf16.mxu0 0
        %3171 = vmatpush2.bf16.msra.mxu0 0
        %3172 = vmatprep.subr.bf16.mxu0 0
        %3173 = vmatpush2.bf16.msra.mxu0 0
        %3174 = vmatprep.subr.bf16.mxu0 0
        %3175 = vmatpush2.bf16.msra.mxu0 0
        %3176 = vmatprep.subr.bf16.mxu0 0
        %3177 = vmatpush2.bf16.msra.mxu0 0
        %3178 = vmatprep.subr.bf16.mxu0 0
        %3179 = vmatpush2.bf16.msra.mxu0 0
        %3180 = vmatprep.mubr.bf16.mxu0 0
        %3181 = vmatmul.mubr.bf16.gmra.mxu0 %v3093
        %v3182 = vpop.f32.mrf.mxu0
        %v3183 = vadd.f32 %v3098, %v3182
        %v3184 = vpop.f32.mrf.mxu0
        %v3185 = vpop.f32.mrf.mxu0
        %v3186 = vadd.f32 %v3098, %v3185
        %v3187 = vpop.f32.mrf.mxu0
        %3188 = vdwg.mxu0
        %v3189 = vadd.f32 %v751, %v3183
        %v3190 = vadd.f32 %v752, %v3186
        %v3191 = vld [vmem:[%s725] sm:$0x1]
        %v3192 = vld [vmem:[%s728] sm:$0x1]
        %3193 = vadd.xlane.f32.xlu0 %v3189
        %v3194 = vpop.xlane.xlu0 %3193
        %3195 = vadd.xlane.f32.xlu0 %v3190
        %v3196 = vpop.xlane.xlu0 %3195
        %v3197 = vrcp.pop 128.0
        %v3198 = vmul.f32 %v3194, %v3197
        %v3199 = vmul.f32 %v3196, %v3197
        %v3200 = vsub.f32 %v3189, %v3198
        %v3201 = vsub.f32 %v3190, %v3199
        %v3202 = vmul.f32 %v3200, %v3200
        %v3203 = vmul.f32 %v3201, %v3201
        %3204 = vadd.xlane.f32.xlu0 %v3202
        %v3205 = vpop.xlane.xlu0 %3204
        %3206 = vadd.xlane.f32.xlu0 %v3203
        %v3207 = vpop.xlane.xlu0 %3206
        %v3208 = vmul.f32 %v3205, %v3197
        %v3209 = vmul.f32 %v3207, %v3197
        %v3210 = vadd.f32 %v3208, 1e-05
        %v3211 = vadd.f32 %v3209, 1e-05
        %v3212 = vrsqrt.pop %v3210
        %v3213 = vrsqrt.pop %v3211
        %v3214 = vmul.f32 %v3200, %v3212
        %v3215 = vmul.f32 %v3201, %v3213
        %v3217 = vlaneseq
        %v3218 = vshrl.u32 %v3217, 7
        %v3219 = vsub.s32 0, %v3218
        %v3220 = vrot.slane %v3191, %v3219
        %v3222 = vmul.f32 %v3214, %v3220
        %v3223 = vmul.f32 %v3215, %v3220
        %v3225 = vlaneseq
        %v3226 = vshrl.u32 %v3225, 7
        %v3227 = vsub.s32 0, %v3226
        %v3228 = vrot.slane %v3192, %v3227
        %v3230 = vadd.f32 %v3222, %v3228
        %v3231 = vadd.f32 %v3223, %v3228
        %v3232 = vld [vmem:[%s617] sm:$0xff]
        %v3233 = vld [vmem:[%s617 + $0x8] sm:$0xff]
        %v3234 = vld [vmem:[%s617 + $0x10] sm:$0xff]
        %v3235 = vld [vmem:[%s617 + $0x18] sm:$0xff]
        %v3236 = vld [vmem:[%s617 + $0x20] sm:$0xff]
        %v3237 = vld [vmem:[%s617 + $0x28] sm:$0xff]
        %v3238 = vld [vmem:[%s617 + $0x30] sm:$0xff]
        %v3239 = vld [vmem:[%s617 + $0x38] sm:$0xff]
        %v3240 = vld [vmem:[%s617 + $0x40] sm:$0xff]
        %v3241 = vld [vmem:[%s617 + $0x48] sm:$0xff]
        %v3242 = vld [vmem:[%s617 + $0x50] sm:$0xff]
        %v3243 = vld [vmem:[%s617 + $0x58] sm:$0xff]
        %v3244 = vld [vmem:[%s617 + $0x60] sm:$0xff]
        %v3245 = vld [vmem:[%s617 + $0x68] sm:$0xff]
        %v3246 = vld [vmem:[%s617 + $0x70] sm:$0xff]
        %v3247 = vld [vmem:[%s617 + $0x78] sm:$0xff]
        %v3248 = vld [vmem:[%s732] sm:$0x3]
        %v3249 = vld [vmem:[%s626] sm:$0xf]
        %v3250 = vld [vmem:[%s626 + $0x4] sm:$0xf]
        %v3251 = vld [vmem:[%s626 + $0x8] sm:$0xf]
        %v3252 = vld [vmem:[%s626 + $0xc] sm:$0xf]
        %v3253 = vld [vmem:[%s626 + $0x10] sm:$0xf]
        %v3254 = vld [vmem:[%s626 + $0x14] sm:$0xf]
        %v3255 = vld [vmem:[%s626 + $0x18] sm:$0xf]
        %v3256 = vld [vmem:[%s626 + $0x1c] sm:$0xf]
        %v3257 = vld [vmem:[%s626 + $0x20] sm:$0xf]
        %v3258 = vld [vmem:[%s626 + $0x24] sm:$0xf]
        %v3259 = vld [vmem:[%s626 + $0x28] sm:$0xf]
        %v3260 = vld [vmem:[%s626 + $0x2c] sm:$0xf]
        %v3261 = vld [vmem:[%s626 + $0x30] sm:$0xf]
        %v3262 = vld [vmem:[%s626 + $0x34] sm:$0xf]
        %v3263 = vld [vmem:[%s626 + $0x38] sm:$0xf]
        %v3264 = vld [vmem:[%s626 + $0x3c] sm:$0xf]
        %v3265 = vld [vmem:[%s626 + $0x40] sm:$0xf]
        %v3266 = vld [vmem:[%s626 + $0x44] sm:$0xf]
        %v3267 = vld [vmem:[%s626 + $0x48] sm:$0xf]
        %v3268 = vld [vmem:[%s626 + $0x4c] sm:$0xf]
        %v3269 = vld [vmem:[%s626 + $0x50] sm:$0xf]
        %v3270 = vld [vmem:[%s626 + $0x54] sm:$0xf]
        %v3271 = vld [vmem:[%s626 + $0x58] sm:$0xf]
        %v3272 = vld [vmem:[%s626 + $0x5c] sm:$0xf]
        %v3273 = vld [vmem:[%s626 + $0x60] sm:$0xf]
        %v3274 = vld [vmem:[%s626 + $0x64] sm:$0xf]
        %v3275 = vld [vmem:[%s626 + $0x68] sm:$0xf]
        %v3276 = vld [vmem:[%s626 + $0x6c] sm:$0xf]
        %v3277 = vld [vmem:[%s626 + $0x70] sm:$0xf]
        %v3278 = vld [vmem:[%s626 + $0x74] sm:$0xf]
        %v3279 = vld [vmem:[%s626 + $0x78] sm:$0xf]
        %v3280 = vld [vmem:[%s626 + $0x7c] sm:$0xf]
        %v3281 = vld [vmem:[%s735] sm:$0x1]
        %v3282 = vpack.c.bf16 %v3231, %v3230
        %v3284 = vlaneseq
        %v3285 = vshrl.u32 %v3284, 7
        %v3286 = vsub.s32 0, %v3285
        %v3287 = vrot.slane %v3248, %v3286
        %v3288 = vlaneseq
        %v3289 = vshrl.u32 %v3288, 7
        %v3290 = vsub.s32 1, %v3289
        %v3291 = vrot.slane %v3248, %v3290
        %v3310 = vunpack.c.l.b16 %v3232
        %v3311 = vunpack.c.h.b16 %v3232
        %v3312 = vunpack.c.l.b16 %v3233
        %v3313 = vunpack.c.h.b16 %v3233
        %v3314 = vunpack.c.l.b16 %v3234
        %v3315 = vunpack.c.h.b16 %v3234
        %v3316 = vunpack.c.l.b16 %v3235
        %v3317 = vunpack.c.h.b16 %v3235
        %v3318 = vunpack.c.l.b16 %v3236
        %v3319 = vunpack.c.h.b16 %v3236
        %v3320 = vunpack.c.l.b16 %v3237
        %v3321 = vunpack.c.h.b16 %v3237
        %v3322 = vunpack.c.l.b16 %v3238
        %v3323 = vunpack.c.h.b16 %v3238
        %v3324 = vunpack.c.l.b16 %v3239
        %v3325 = vunpack.c.h.b16 %v3239
        %v3326 = vunpack.c.l.b16 %v3240
        %v3327 = vunpack.c.h.b16 %v3240
        %v3328 = vunpack.c.l.b16 %v3241
        %v3329 = vunpack.c.h.b16 %v3241
        %v3330 = vunpack.c.l.b16 %v3242
        %v3331 = vunpack.c.h.b16 %v3242
        %v3332 = vunpack.c.l.b16 %v3243
        %v3333 = vunpack.c.h.b16 %v3243
        %v3334 = vunpack.c.l.b16 %v3244
        %v3335 = vunpack.c.h.b16 %v3244
        %v3336 = vunpack.c.l.b16 %v3245
        %v3337 = vunpack.c.h.b16 %v3245
        %v3338 = vunpack.c.l.b16 %v3246
        %v3339 = vunpack.c.h.b16 %v3246
        %v3340 = vunpack.c.l.b16 %v3247
        %v3341 = vunpack.c.h.b16 %v3247
        %v3342 = vpack.c.b16 %v3312, %v3310
        %v3343 = vpack.c.b16 %v3313, %v3311
        %v3344 = vpack.c.b16 %v3316, %v3314
        %v3345 = vpack.c.b16 %v3317, %v3315
        %v3346 = vpack.c.b16 %v3320, %v3318
        %v3347 = vpack.c.b16 %v3321, %v3319
        %v3348 = vpack.c.b16 %v3324, %v3322
        %v3349 = vpack.c.b16 %v3325, %v3323
        %v3350 = vpack.c.b16 %v3328, %v3326
        %v3351 = vpack.c.b16 %v3329, %v3327
        %v3352 = vpack.c.b16 %v3332, %v3330
        %v3353 = vpack.c.b16 %v3333, %v3331
        %v3354 = vpack.c.b16 %v3336, %v3334
        %v3355 = vpack.c.b16 %v3337, %v3335
        %v3356 = vpack.c.b16 %v3340, %v3338
        %v3357 = vpack.c.b16 %v3341, %v3339
        %3374 = vmatprep.subr.bf16.mxu0 %v3357
        %3375 = vmatpush1.bf16.msra.mxu0 %v3356
        %3376 = vmatprep.subr.bf16.mxu0 %v3355
        %3377 = vmatpush1.bf16.msra.mxu0 %v3354
        %3378 = vmatprep.subr.bf16.mxu0 %v3353
        %3379 = vmatpush1.bf16.msra.mxu0 %v3352
        %3380 = vmatprep.subr.bf16.mxu0 %v3351
        %3381 = vmatpush1.bf16.msra.mxu0 %v3350
        %3382 = vmatprep.subr.bf16.mxu0 %v3349
        %3383 = vmatpush1.bf16.msra.mxu0 %v3348
        %3384 = vmatprep.subr.bf16.mxu0 %v3347
        %3385 = vmatpush1.bf16.msra.mxu0 %v3346
        %3386 = vmatprep.subr.bf16.mxu0 %v3345
        %3387 = vmatpush1.bf16.msra.mxu0 %v3344
        %3388 = vmatprep.subr.bf16.mxu0 %v3343
        %3389 = vmatpush1.bf16.msra.mxu0 %v3342
        %3390 = vmatprep.subr.bf16.mxu0 0
        %3391 = vmatpush2.bf16.msra.mxu0 0
        %3392 = vmatprep.subr.bf16.mxu0 0
        %3393 = vmatpush2.bf16.msra.mxu0 0
        %3394 = vmatprep.subr.bf16.mxu0 0
        %3395 = vmatpush2.bf16.msra.mxu0 0
        %3396 = vmatprep.subr.bf16.mxu0 0
        %3397 = vmatpush2.bf16.msra.mxu0 0
        %3398 = vmatprep.subr.bf16.mxu0 0
        %3399 = vmatpush2.bf16.msra.mxu0 0
        %3400 = vmatprep.subr.bf16.mxu0 0
        %3401 = vmatpush2.bf16.msra.mxu0 0
        %3402 = vmatprep.subr.bf16.mxu0 0
        %3403 = vmatpush2.bf16.msra.mxu0 0
        %3404 = vmatprep.subr.bf16.mxu0 0
        %3405 = vmatpush2.bf16.msra.mxu0 0
        %3406 = vmatprep.mubr.bf16.mxu0 0
        %3407 = vmatmul.mubr.bf16.gmra.mxu0 %v3282
        %v3408 = vpop.f32.mrf.mxu0
        %v3409 = vadd.f32 %v3287, %v3408
        %v3410 = vpop.f32.mrf.mxu0
        %v3411 = vadd.f32 %v3291, %v3410
        %v3412 = vpop.f32.mrf.mxu0
        %v3413 = vadd.f32 %v3287, %v3412
        %v3414 = vpop.f32.mrf.mxu0
        %v3415 = vadd.f32 %v3291, %v3414
        %3416 = vdwg.mxu0
        %v3417 = vmax.f32 %v3409, 0.0
        %v3418 = vmax.f32 %v3411, 0.0
        %v3419 = vmax.f32 %v3413, 0.0
        %v3420 = vmax.f32 %v3415, 0.0
        %v3421 = vpack.c.bf16 %v3419, %v3417
        %v3422 = vpack.c.bf16 %v3420, %v3418
        %v3424 = vlaneseq
        %v3425 = vshrl.u32 %v3424, 7
        %v3426 = vsub.s32 0, %v3425
        %v3427 = vrot.slane %v3281, %v3426
        %v3461 = vunpack.c.l.b16 %v3249
        %v3462 = vunpack.c.l.b16 %v3250
        %v3463 = vunpack.c.l.b16 %v3251
        %v3464 = vunpack.c.l.b16 %v3252
        %v3465 = vunpack.c.l.b16 %v3253
        %v3466 = vunpack.c.l.b16 %v3254
        %v3467 = vunpack.c.l.b16 %v3255
        %v3468 = vunpack.c.l.b16 %v3256
        %v3469 = vunpack.c.l.b16 %v3257
        %v3470 = vunpack.c.l.b16 %v3258
        %v3471 = vunpack.c.l.b16 %v3259
        %v3472 = vunpack.c.l.b16 %v3260
        %v3473 = vunpack.c.l.b16 %v3261
        %v3474 = vunpack.c.l.b16 %v3262
        %v3475 = vunpack.c.l.b16 %v3263
        %v3476 = vunpack.c.l.b16 %v3264
        %v3477 = vunpack.c.l.b16 %v3265
        %v3478 = vunpack.c.l.b16 %v3266
        %v3479 = vunpack.c.l.b16 %v3267
        %v3480 = vunpack.c.l.b16 %v3268
        %v3481 = vunpack.c.l.b16 %v3269
        %v3482 = vunpack.c.l.b16 %v3270
        %v3483 = vunpack.c.l.b16 %v3271
        %v3484 = vunpack.c.l.b16 %v3272
        %v3485 = vunpack.c.l.b16 %v3273
        %v3486 = vunpack.c.l.b16 %v3274
        %v3487 = vunpack.c.l.b16 %v3275
        %v3488 = vunpack.c.l.b16 %v3276
        %v3489 = vunpack.c.l.b16 %v3277
        %v3490 = vunpack.c.l.b16 %v3278
        %v3491 = vunpack.c.l.b16 %v3279
        %v3492 = vunpack.c.l.b16 %v3280
        %v3493 = vpack.c.b16 %v3462, %v3461
        %v3494 = vpack.c.b16 %v3464, %v3463
        %v3495 = vpack.c.b16 %v3466, %v3465
        %v3496 = vpack.c.b16 %v3468, %v3467
        %v3497 = vpack.c.b16 %v3470, %v3469
        %v3498 = vpack.c.b16 %v3472, %v3471
        %v3499 = vpack.c.b16 %v3474, %v3473
        %v3500 = vpack.c.b16 %v3476, %v3475
        %v3501 = vpack.c.b16 %v3478, %v3477
        %v3502 = vpack.c.b16 %v3480, %v3479
        %v3503 = vpack.c.b16 %v3482, %v3481
        %v3504 = vpack.c.b16 %v3484, %v3483
        %v3505 = vpack.c.b16 %v3486, %v3485
        %v3506 = vpack.c.b16 %v3488, %v3487
        %v3507 = vpack.c.b16 %v3490, %v3489
        %v3508 = vpack.c.b16 %v3492, %v3491
        %3525 = vmatprep.subr.bf16.mxu0 0
        %3526 = vmatpush1.bf16.msra.mxu0 %v3500
        %3527 = vmatprep.subr.bf16.mxu0 0
        %3528 = vmatpush1.bf16.msra.mxu0 %v3499
        %3529 = vmatprep.subr.bf16.mxu0 0
        %3530 = vmatpush1.bf16.msra.mxu0 %v3498
        %3531 = vmatprep.subr.bf16.mxu0 0
        %3532 = vmatpush1.bf16.msra.mxu0 %v3497
        %3533 = vmatprep.subr.bf16.mxu0 0
        %3534 = vmatpush1.bf16.msra.mxu0 %v3496
        %3535 = vmatprep.subr.bf16.mxu0 0
        %3536 = vmatpush1.bf16.msra.mxu0 %v3495
        %3537 = vmatprep.subr.bf16.mxu0 0
        %3538 = vmatpush1.bf16.msra.mxu0 %v3494
        %3539 = vmatprep.subr.bf16.mxu0 0
        %3540 = vmatpush1.bf16.msra.mxu0 %v3493
        %3541 = vmatprep.subr.bf16.mxu0 0
        %3542 = vmatpush2.bf16.msra.mxu0 %v3508
        %3543 = vmatprep.subr.bf16.mxu0 0
        %3544 = vmatpush2.bf16.msra.mxu0 %v3507
        %3545 = vmatprep.subr.bf16.mxu0 0
        %3546 = vmatpush2.bf16.msra.mxu0 %v3506
        %3547 = vmatprep.subr.bf16.mxu0 0
        %3548 = vmatpush2.bf16.msra.mxu0 %v3505
        %3549 = vmatprep.subr.bf16.mxu0 0
        %3550 = vmatpush2.bf16.msra.mxu0 %v3504
        %3551 = vmatprep.subr.bf16.mxu0 0
        %3552 = vmatpush2.bf16.msra.mxu0 %v3503
        %3553 = vmatprep.subr.bf16.mxu0 0
        %3554 = vmatpush2.bf16.msra.mxu0 %v3502
        %3555 = vmatprep.subr.bf16.mxu0 0
        %3556 = vmatpush2.bf16.msra.mxu0 %v3501
        %3557 = vmatprep.mubr.bf16.mxu0 %v3422
        %3558 = vmatmul.mubr.bf16.gmra.mxu0 %v3421
        %v3559 = vpop.f32.mrf.mxu0
        %v3560 = vadd.f32 %v3427, %v3559
        %v3561 = vpop.f32.mrf.mxu0
        %v3562 = vpop.f32.mrf.mxu0
        %v3563 = vadd.f32 %v3427, %v3562
        %v3564 = vpop.f32.mrf.mxu0
        %3565 = vdwg.mxu0
        %v3566 = vadd.f32 %v3230, %v3560
        %v3567 = vadd.f32 %v3231, %v3563
        %v3568 = vld [vmem:[%s738] sm:$0x1]
        %v3569 = vld [vmem:[%s741] sm:$0x1]
        %3570 = vadd.xlane.f32.xlu0 %v3566
        %v3571 = vpop.xlane.xlu0 %3570
        %3572 = vadd.xlane.f32.xlu0 %v3567
        %v3573 = vpop.xlane.xlu0 %3572
        %v3574 = vmul.f32 %v3571, %v3197
        %v3575 = vmul.f32 %v3573, %v3197
        %v3576 = vsub.f32 %v3566, %v3574
        %v3577 = vsub.f32 %v3567, %v3575
        %v3578 = vmul.f32 %v3576, %v3576
        %v3579 = vmul.f32 %v3577, %v3577
        %3580 = vadd.xlane.f32.xlu0 %v3578
        %v3581 = vpop.xlane.xlu0 %3580
        %3582 = vadd.xlane.f32.xlu0 %v3579
        %v3583 = vpop.xlane.xlu0 %3582
        %v3584 = vmul.f32 %v3581, %v3197
        %v3585 = vmul.f32 %v3583, %v3197
        %v3586 = vadd.f32 %v3584, 1e-05
        %v3587 = vadd.f32 %v3585, 1e-05
        %v3588 = vrsqrt.pop %v3586
        %v3589 = vrsqrt.pop %v3587
        %v3590 = vmul.f32 %v3576, %v3588
        %v3591 = vmul.f32 %v3577, %v3589
        %v3593 = vlaneseq
        %v3594 = vshrl.u32 %v3593, 7
        %v3595 = vsub.s32 0, %v3594
        %v3596 = vrot.slane %v3568, %v3595
        %v3598 = vmul.f32 %v3590, %v3596
        %v3599 = vmul.f32 %v3591, %v3596
        %v3601 = vlaneseq
        %v3602 = vshrl.u32 %v3601, 7
        %v3603 = vsub.s32 0, %v3602
        %v3604 = vrot.slane %v3569, %v3603
        %v3606 = vadd.f32 %v3598, %v3604
        %v3607 = vadd.f32 %v3599, %v3604
        %3608 = vst [vmem:[%s16] sm:$0xff] %v3606
        %3609 = vst [vmem:[%s16 + $0x8] sm:$0xff] %v3607
        %p3610 = scmp.eq.s32.totalorder %s33, 1
        // Predicated region
        $region101: #{forward.3} parent=83 // pred_check
          %p3611 = pneg %p3610
        $region102: #{forward.3} parent=83 // pred_check_branch
          %3613 = sbr.rel (%p3611) target = $region104
        $region103: #{forward.3} parent=83 // pred_region
          %v3614 = vld [vmem:[%s14] sm:$0x1]
          %v3615 = vld [vmem:[%s15] sm:$0x1]
          %3616 = vadd.xlane.f32.xlu0 %v3606
          %v3617 = vpop.xlane.xlu0 %3616
          %3618 = vadd.xlane.f32.xlu0 %v3607
          %v3619 = vpop.xlane.xlu0 %3618
          %v3620 = vmul.f32 %v3617, %v3197
          %v3621 = vmul.f32 %v3619, %v3197
          %v3622 = vsub.f32 %v3606, %v3620
          %v3623 = vsub.f32 %v3607, %v3621
          %v3624 = vmul.f32 %v3622, %v3622
          %v3625 = vmul.f32 %v3623, %v3623
          %3626 = vadd.xlane.f32.xlu0 %v3624
          %v3627 = vpop.xlane.xlu0 %3626
          %3628 = vadd.xlane.f32.xlu0 %v3625
          %v3629 = vpop.xlane.xlu0 %3628
          %v3630 = vmul.f32 %v3627, %v3197
          %v3631 = vmul.f32 %v3629, %v3197
          %v3632 = vadd.f32 %v3630, 1e-05
          %v3633 = vadd.f32 %v3631, 1e-05
          %v3634 = vrsqrt.pop %v3632
          %v3635 = vrsqrt.pop %v3633
          %v3636 = vmul.f32 %v3622, %v3634
          %v3637 = vmul.f32 %v3623, %v3635
          %v3639 = vlaneseq
          %v3640 = vshrl.u32 %v3639, 7
          %v3641 = vsub.s32 0, %v3640
          %v3642 = vrot.slane %v3614, %v3641
          %v3644 = vmul.f32 %v3636, %v3642
          %v3645 = vmul.f32 %v3637, %v3642
          %v3647 = vlaneseq
          %v3648 = vshrl.u32 %v3647, 7
          %v3649 = vsub.s32 0, %v3648
          %v3650 = vrot.slane %v3615, %v3649
          %v3652 = vadd.f32 %v3644, %v3650
          %v3653 = vadd.f32 %v3645, %v3650
          %3654 = vst [vmem:[%s16] sm:$0xff] %v3652
          %3655 = vst [vmem:[%s16 + $0x8] sm:$0xff] %v3653
        $region104: #{forward.3} parent=83 // pred_fallthru
          _
        // Predicated region
        $region105: #{forward.3} parent=83 // pred_check
          %p3656 = pneg %p442
        $region106: #{forward.3} parent=83 // pred_check_branch
          %3658 = sbr.rel (%p3656) target = $region108
        $region107: #{forward.3} parent=83 // pred_region
          _
        $region108: #{forward.3} parent=83 // pred_fallthru
          _
        // Predicated region
        $region109: #{forward.3} parent=83 // pred_check
          %p3659 = pneg %p442
        $region110: #{forward.3} parent=83 // pred_check_branch
          %3661 = sbr.rel (%p3659) target = $region112
        $region111: #{forward.3} parent=83 // pred_region
          _
        $region112: #{forward.3} parent=83 // pred_fallthru
          _
      $region84: #{forward.3} parent=5 // pred_fallthru
        _
      %p3662 = scmp.le.s32.totalorder 2, %s28
      // Predicated region
      $region113: #{forward.3} parent=5 // pred_check
        %p3663 = pneg %p3662
      $region114: #{forward.3} parent=5 // pred_check_branch
        %3665 = sbr.rel (%p3663) target = $region116
      $region115: #{forward.3} parent=5 // pred_region
        %s3666 = ssub.s32 %s28, 2
      $region116: #{forward.3} parent=5 // pred_fallthru
        _
    $region6: #{forward.3} parent=1 // loop_footer
      %s32 = sadd.s32 1, %s28
    $region7: #{forward.3} parent=1 // loop_footer_branch
      %27 = sbr.rel target = $region3
    $region8: #{forward.3} parent=1 // loop_exit
      _
    %3667 = vsyncpa [#allocation3], 1
    %s3668 = scalar_lea.sflag [#allocation3], 1
    %3669 = vsyncpa %s3668, 1
    %3670 = vsyncpa [#allocation5], 1
    %s3671 = scalar_lea.sflag [#allocation5], 1
    %3672 = vsyncpa %s3671, 1

// kernel: forward.4
$region0: #{forward.4}
  #allocation0 [shape = 'u32[]', space=smem, size = 0x4, offset = 0x4, fixed_abs, tag = 'smem constant byte address 0x4 - core index']
  #allocation1 [shape = 'u32[144,128]{1,0:T(1,128)}', space=vmem, size = 0x12000, scoped, tag = 'internal scratch']
  %s0 = inlined_call_operand.vmem [shape: f32[2,8,128], index: 0, kind: input, shape index: {}]
  %s1 = inlined_call_operand.vmem [shape: f32[2,8,128], index: 1, kind: input, shape index: {}]
  %s2 = inlined_call_operand.vmem [shape: f32[2,1,8], index: 2, kind: input, shape index: {}]
  %s3 = inlined_call_operand.vmem [shape: f32[2,1,8], index: 3, kind: input, shape index: {}]
  %s4 = inlined_call_operand.vmem [shape: bf16[2,128,384], index: 4, kind: input, shape index: {}]
  %s5 = inlined_call_operand.vmem [shape: f32[2,1,384], index: 5, kind: input, shape index: {}]
  %s6 = inlined_call_operand.vmem [shape: bf16[2,128,128], index: 6, kind: input, shape index: {}]
  %s7 = inlined_call_operand.vmem [shape: f32[2,1,128], index: 7, kind: input, shape index: {}]
  %s8 = inlined_call_operand.vmem [shape: f32[2,1,128], index: 8, kind: input, shape index: {}]
  %s9 = inlined_call_operand.vmem [shape: f32[2,1,128], index: 9, kind: input, shape index: {}]
  %s10 = inlined_call_operand.hbm [shape: bf16[2,128,128], index: 10, kind: input, shape index: {}]
  %s11 = inlined_call_operand.vmem [shape: f32[2,1,128], index: 11, kind: input, shape index: {}]
  %s12 = inlined_call_operand.vmem [shape: bf16[2,128,256], index: 12, kind: input, shape index: {}]
  %s13 = inlined_call_operand.vmem [shape: f32[2,1,256], index: 13, kind: input, shape index: {}]
  %s14 = inlined_call_operand.hbm [shape: bf16[2,128,128], index: 14, kind: input, shape index: {}]
  %s15 = inlined_call_operand.vmem [shape: f32[2,1,128], index: 15, kind: input, shape index: {}]
  %s16 = inlined_call_operand.vmem [shape: f32[2,1,128], index: 16, kind: input, shape index: {}]
  %s17 = inlined_call_operand.vmem [shape: f32[2,1,128], index: 17, kind: input, shape index: {}]
  %s18 = inlined_call_operand.vmem [shape: bf16[2,128,256], index: 18, kind: input, shape index: {}]
  %s19 = inlined_call_operand.vmem [shape: f32[2,1,256], index: 19, kind: input, shape index: {}]
  %s20 = inlined_call_operand.hbm [shape: bf16[2,256,128], index: 20, kind: input, shape index: {}]
  %s21 = inlined_call_operand.vmem [shape: f32[2,1,128], index: 21, kind: input, shape index: {}]
  %s22 = inlined_call_operand.vmem [shape: f32[2,1,128], index: 22, kind: input, shape index: {}]
  %s23 = inlined_call_operand.vmem [shape: f32[2,1,128], index: 23, kind: input, shape index: {}]
  %s24 = inlined_call_operand.vmem [shape: f32[1,128], index: 24, kind: input, shape index: {}]
  %s25 = inlined_call_operand.vmem [shape: f32[1,128], index: 25, kind: input, shape index: {}]
  %s26 = inlined_call_operand.vmem [shape: f32[2,8,128], index: 26, kind: output, shape index: {}]
  %s27 = sld [smem:[#allocation0]]
  $region157: #{forward.4} parent=0
    _
  %s29 = ssub.s32 1, %s27
  %s30 = scalar_select 0, %s29, %s27
  $region1: #{forward.4} parent=0
    #allocation2 [shape = 'u8[65536]{0}', space=vmem, size = 0x10000, scoped, tag = 'input window, operand 10']
    #allocation3 [shape = 's32[2]{0}', space=sflag, size = 0x8, scoped, tag = 'scoped memory for forward.4']
    #allocation4 [shape = 'u8[65536]{0}', space=vmem, size = 0x10000, scoped, tag = 'input window, operand 14']
    #allocation5 [shape = 's32[2]{0}', space=sflag, size = 0x8, scoped, tag = 'scoped memory for forward.4']
    #allocation6 [shape = 'u8[131072]{0}', space=vmem, size = 0x20000, scoped, tag = 'input window, operand 20']
    %31 = vsyncpa [#allocation3], 0
    %s32 = scalar_lea.sflag [#allocation3], 1
    %33 = vsyncpa %s32, 0
    %34 = vsyncpa [#allocation5], 0
    %s35 = scalar_lea.sflag [#allocation5], 1
    %36 = vsyncpa %s35, 0
    loop: start=0, step=1, limit=4
    $region2: #{forward.4} parent=1 // loop_pre_header
      _
    $region3: #{forward.4} parent=1 // loop_header
      %s38 = sphi 0, %s42
      %p39 = scmp.ge.s32.totalorder %s38, 4
      %s46 = sphi 0, %s46
      %s48 = sphi 0, %s46
      %s49 = sphi 0, %s48
      %s63 = sphi 0, %s49
      %s67 = sphi 0, %s67
      %s69 = sphi 0, %s67
      %s70 = sphi 0, %s69
      %s84 = sphi 0, %s70
      %s88 = sphi 0, %s88
      %s90 = sphi 0, %s88
      %s91 = sphi 0, %s90
      %s105 = sphi 0, %s91
      %s109 = sphi 0, %s109
      %s111 = sphi 0, %s109
      %s112 = sphi 0, %s111
      %s126 = sphi 0, %s112
      %s132 = sphi 0, %s134
      %s135 = sphi 0, %s132
      %s136 = sphi 0, %s135
      %s152 = sphi 0, %s136
      %s158 = sphi 0, %s160
      %s161 = sphi 0, %s158
      %s162 = sphi 0, %s161
      %s178 = sphi 0, %s162
      %s184 = sphi 0, %s186
      %s187 = sphi 0, %s184
      %s188 = sphi 0, %s187
      %s204 = sphi 0, %s188
      %s210 = sphi 0, %s212
      %s213 = sphi 0, %s210
      %s214 = sphi 0, %s213
      %s230 = sphi 0, %s214
      %s236 = sphi 0, %s238
      %s239 = sphi 0, %s236
      %s240 = sphi 0, %s239
      %s256 = sphi 0, %s240
      %s262 = sphi 0, %s264
      %s265 = sphi 0, %s262
      %s266 = sphi 0, %s265
      %s282 = sphi 0, %s266
      %s288 = sphi 0, %s290
      %s291 = sphi 0, %s288
      %s292 = sphi 0, %s291
      %s308 = sphi 0, %s292
      %s314 = sphi 0, %s316
      %s317 = sphi 0, %s314
      %s318 = sphi 0, %s317
      %s334 = sphi 0, %s318
      %s340 = sphi 0, %s342
      %s343 = sphi 0, %s340
      %s344 = sphi 0, %s343
      %s360 = sphi 0, %s344
      %s366 = sphi 0, %s368
      %s369 = sphi 0, %s366
      %s370 = sphi 0, %s369
      %s386 = sphi 0, %s370
      %s392 = sphi 0, %s394
      %s395 = sphi 0, %s392
      %s396 = sphi 0, %s395
      %s412 = sphi 0, %s396
      %s418 = sphi 0, %s420
      %s421 = sphi 0, %s418
      %s422 = sphi 0, %s421
      %s438 = sphi 0, %s422
      %s444 = sphi 0, %s446
      %s447 = sphi 0, %s444
      %s448 = sphi 0, %s447
      %s464 = sphi 0, %s448
      %s470 = sphi 0, %s472
      %s473 = sphi 0, %s470
      %s474 = sphi 0, %s473
      %s490 = sphi 0, %s474
      %s496 = sphi 0, %s498
      %s499 = sphi 0, %s496
      %s500 = sphi 0, %s499
      %s516 = sphi 0, %s500
      %s522 = sphi 0, %s524
      %s525 = sphi 0, %s522
      %s526 = sphi 0, %s525
      %s542 = sphi 0, %s526
      %s548 = sphi 0, %s550
      %s551 = sphi 0, %s548
      %s552 = sphi 0, %s551
      %s568 = sphi 0, %s552
      %s574 = sphi 0, %s576
      %s577 = sphi 0, %s574
      %s578 = sphi 0, %s577
      %s594 = sphi 0, %s578
      %s600 = sphi 0, %s602
      %s603 = sphi 0, %s600
      %s604 = sphi 0, %s603
      %s620 = sphi 0, %s604
      %s626 = sphi 0, %s628
      %s629 = sphi 0, %s626
      %s630 = sphi 0, %s629
      %s646 = sphi 0, %s630
      %s650 = sphi 0, %s650
      %s652 = sphi 0, %s650
      %s653 = sphi 0, %s652
      %s667 = sphi 0, %s653
      %s671 = sphi 0, %s671
      %s673 = sphi 0, %s671
      %s674 = sphi 0, %s673
      %s688 = sphi 0, %s674
      %s692 = sphi 0, %s692
      %s694 = sphi 0, %s692
      %s695 = sphi 0, %s694
      %s709 = sphi 0, %s695
    $region4: #{forward.4} parent=1 // loop_header_branch
      %41 = sbr.rel (%p39) target = $region8
    $region5: #{forward.4} parent=1 // loop_body
      %s43 = ssub.s32 %s38, 1
      %s44 = ssub.s32 %s38, 2
      %s45 = sadd.s32 %s38, 1
      %s47 = sadd.s32 %s46, 1
      %p50 = scmp.eq.s32.totalorder %s38, 1
      %p51 = scmp.ne.s32.totalorder %s46, %s48
      %p52 = scmp.eq.s32.totalorder %s38, 0
      %p53 = por %p51, %p52
      %p54 = scmp.ne.s32.totalorder %s46, %s48
      %p55 = scmp.eq.s32.totalorder %s43, 1
      %p56 = por %p54, %p55
      %p57 = scmp.ne.s32.totalorder %s48, %s49
      %p58 = scmp.eq.s32.totalorder %s43, 0
      %p59 = por %p57, %p58
      %p60 = scmp.ne.s32.totalorder %s48, %s49
      %p61 = scmp.eq.s32.totalorder %s44, 1
      %p62 = por %p60, %p61
      %p64 = scmp.ne.s32.totalorder %s49, %s63
      %p65 = scmp.eq.s32.totalorder %s44, 0
      %p66 = por %p64, %p65
      %s68 = sadd.s32 %s67, 1
      %p71 = scmp.eq.s32.totalorder %s38, 1
      %p72 = scmp.ne.s32.totalorder %s67, %s69
      %p73 = scmp.eq.s32.totalorder %s38, 0
      %p74 = por %p72, %p73
      %p75 = scmp.ne.s32.totalorder %s67, %s69
      %p76 = scmp.eq.s32.totalorder %s43, 1
      %p77 = por %p75, %p76
      %p78 = scmp.ne.s32.totalorder %s69, %s70
      %p79 = scmp.eq.s32.totalorder %s43, 0
      %p80 = por %p78, %p79
      %p81 = scmp.ne.s32.totalorder %s69, %s70
      %p82 = scmp.eq.s32.totalorder %s44, 1
      %p83 = por %p81, %p82
      %p85 = scmp.ne.s32.totalorder %s70, %s84
      %p86 = scmp.eq.s32.totalorder %s44, 0
      %p87 = por %p85, %p86
      %s89 = sadd.s32 %s88, 1
      %p92 = scmp.eq.s32.totalorder %s38, 1
      %p93 = scmp.ne.s32.totalorder %s88, %s90
      %p94 = scmp.eq.s32.totalorder %s38, 0
      %p95 = por %p93, %p94
      %p96 = scmp.ne.s32.totalorder %s88, %s90
      %p97 = scmp.eq.s32.totalorder %s43, 1
      %p98 = por %p96, %p97
      %p99 = scmp.ne.s32.totalorder %s90, %s91
      %p100 = scmp.eq.s32.totalorder %s43, 0
      %p101 = por %p99, %p100
      %p102 = scmp.ne.s32.totalorder %s90, %s91
      %p103 = scmp.eq.s32.totalorder %s44, 1
      %p104 = por %p102, %p103
      %p106 = scmp.ne.s32.totalorder %s91, %s105
      %p107 = scmp.eq.s32.totalorder %s44, 0
      %p108 = por %p106, %p107
      %s110 = sadd.s32 %s109, 1
      %p113 = scmp.eq.s32.totalorder %s38, 1
      %p114 = scmp.ne.s32.totalorder %s109, %s111
      %p115 = scmp.eq.s32.totalorder %s38, 0
      %p116 = por %p114, %p115
      %p117 = scmp.ne.s32.totalorder %s109, %s111
      %p118 = scmp.eq.s32.totalorder %s43, 1
      %p119 = por %p117, %p118
      %p120 = scmp.ne.s32.totalorder %s111, %s112
      %p121 = scmp.eq.s32.totalorder %s43, 0
      %p122 = por %p120, %p121
      %p123 = scmp.ne.s32.totalorder %s111, %s112
      %p124 = scmp.eq.s32.totalorder %s44, 1
      %p125 = por %p123, %p124
      %p127 = scmp.ne.s32.totalorder %s112, %s126
      %p128 = scmp.eq.s32.totalorder %s44, 0
      %p129 = por %p127, %p128
      %s130 = ssub.s32 %s38, %s45
      %p131 = scmp.eq.s32.totalorder %s130, 0
      %s133 = sadd.s32 %s132, 1
      %s134 = scalar_select %p131, %s132, %s133
      %p137 = pneg %p131
      %p138 = scmp.eq.s32.totalorder %s38, 1
      %p139 = por %p137, %p138
      %p140 = scmp.ne.s32.totalorder %s132, %s135
      %p141 = scmp.eq.s32.totalorder %s38, 0
      %p142 = por %p140, %p141
      %p143 = scmp.ne.s32.totalorder %s132, %s135
      %p144 = scmp.eq.s32.totalorder %s43, 1
      %p145 = por %p143, %p144
      %p146 = scmp.ne.s32.totalorder %s135, %s136
      %p147 = scmp.eq.s32.totalorder %s43, 0
      %p148 = por %p146, %p147
      %p149 = scmp.ne.s32.totalorder %s135, %s136
      %p150 = scmp.eq.s32.totalorder %s44, 1
      %p151 = por %p149, %p150
      %p153 = scmp.ne.s32.totalorder %s136, %s152
      %p154 = scmp.eq.s32.totalorder %s44, 0
      %p155 = por %p153, %p154
      %s156 = ssub.s32 %s38, %s45
      %p157 = scmp.eq.s32.totalorder %s156, 0
      %s159 = sadd.s32 %s158, 1
      %s160 = scalar_select %p157, %s158, %s159
      %p163 = pneg %p157
      %p164 = scmp.eq.s32.totalorder %s38, 1
      %p165 = por %p163, %p164
      %p166 = scmp.ne.s32.totalorder %s158, %s161
      %p167 = scmp.eq.s32.totalorder %s38, 0
      %p168 = por %p166, %p167
      %p169 = scmp.ne.s32.totalorder %s158, %s161
      %p170 = scmp.eq.s32.totalorder %s43, 1
      %p171 = por %p169, %p170
      %p172 = scmp.ne.s32.totalorder %s161, %s162
      %p173 = scmp.eq.s32.totalorder %s43, 0
      %p174 = por %p172, %p173
      %p175 = scmp.ne.s32.totalorder %s161, %s162
      %p176 = scmp.eq.s32.totalorder %s44, 1
      %p177 = por %p175, %p176
      %p179 = scmp.ne.s32.totalorder %s162, %s178
      %p180 = scmp.eq.s32.totalorder %s44, 0
      %p181 = por %p179, %p180
      %s182 = ssub.s32 %s38, %s45
      %p183 = scmp.eq.s32.totalorder %s182, 0
      %s185 = sadd.s32 %s184, 1
      %s186 = scalar_select %p183, %s184, %s185
      %p189 = pneg %p183
      %p190 = scmp.eq.s32.totalorder %s38, 1
      %p191 = por %p189, %p190
      %p192 = scmp.ne.s32.totalorder %s184, %s187
      %p193 = scmp.eq.s32.totalorder %s38, 0
      %p194 = por %p192, %p193
      %p195 = scmp.ne.s32.totalorder %s184, %s187
      %p196 = scmp.eq.s32.totalorder %s43, 1
      %p197 = por %p195, %p196
      %p198 = scmp.ne.s32.totalorder %s187, %s188
      %p199 = scmp.eq.s32.totalorder %s43, 0
      %p200 = por %p198, %p199
      %p201 = scmp.ne.s32.totalorder %s187, %s188
      %p202 = scmp.eq.s32.totalorder %s44, 1
      %p203 = por %p201, %p202
      %p205 = scmp.ne.s32.totalorder %s188, %s204
      %p206 = scmp.eq.s32.totalorder %s44, 0
      %p207 = por %p205, %p206
      %s208 = ssub.s32 %s38, %s45
      %p209 = scmp.eq.s32.totalorder %s208, 0
      %s211 = sadd.s32 %s210, 1
      %s212 = scalar_select %p209, %s210, %s211
      %p215 = pneg %p209
      %p216 = scmp.eq.s32.totalorder %s38, 1
      %p217 = por %p215, %p216
      %p218 = scmp.ne.s32.totalorder %s210, %s213
      %p219 = scmp.eq.s32.totalorder %s38, 0
      %p220 = por %p218, %p219
      %p221 = scmp.ne.s32.totalorder %s210, %s213
      %p222 = scmp.eq.s32.totalorder %s43, 1
      %p223 = por %p221, %p222
      %p224 = scmp.ne.s32.totalorder %s213, %s214
      %p225 = scmp.eq.s32.totalorder %s43, 0
      %p226 = por %p224, %p225
      %p227 = scmp.ne.s32.totalorder %s213, %s214
      %p228 = scmp.eq.s32.totalorder %s44, 1
      %p229 = por %p227, %p228
      %p231 = scmp.ne.s32.totalorder %s214, %s230
      %p232 = scmp.eq.s32.totalorder %s44, 0
      %p233 = por %p231, %p232
      %s234 = ssub.s32 %s38, %s45
      %p235 = scmp.eq.s32.totalorder %s234, 0
      %s237 = sadd.s32 %s236, 1
      %s238 = scalar_select %p235, %s236, %s237
      %p241 = pneg %p235
      %p242 = scmp.eq.s32.totalorder %s38, 1
      %p243 = por %p241, %p242
      %p244 = scmp.ne.s32.totalorder %s236, %s239
      %p245 = scmp.eq.s32.totalorder %s38, 0
      %p246 = por %p244, %p245
      %p247 = scmp.ne.s32.totalorder %s236, %s239
      %p248 = scmp.eq.s32.totalorder %s43, 1
      %p249 = por %p247, %p248
      %p250 = scmp.ne.s32.totalorder %s239, %s240
      %p251 = scmp.eq.s32.totalorder %s43, 0
      %p252 = por %p250, %p251
      %p253 = scmp.ne.s32.totalorder %s239, %s240
      %p254 = scmp.eq.s32.totalorder %s44, 1
      %p255 = por %p253, %p254
      %p257 = scmp.ne.s32.totalorder %s240, %s256
      %p258 = scmp.eq.s32.totalorder %s44, 0
      %p259 = por %p257, %p258
      %s260 = ssub.s32 %s38, %s45
      %p261 = scmp.eq.s32.totalorder %s260, 0
      %s263 = sadd.s32 %s262, 1
      %s264 = scalar_select %p261, %s262, %s263
      %p267 = pneg %p261
      %p268 = scmp.eq.s32.totalorder %s38, 1
      %p269 = por %p267, %p268
      %p270 = scmp.ne.s32.totalorder %s262, %s265
      %p271 = scmp.eq.s32.totalorder %s38, 0
      %p272 = por %p270, %p271
      %p273 = scmp.ne.s32.totalorder %s262, %s265
      %p274 = scmp.eq.s32.totalorder %s43, 1
      %p275 = por %p273, %p274
      %p276 = scmp.ne.s32.totalorder %s265, %s266
      %p277 = scmp.eq.s32.totalorder %s43, 0
      %p278 = por %p276, %p277
      %p279 = scmp.ne.s32.totalorder %s265, %s266
      %p280 = scmp.eq.s32.totalorder %s44, 1
      %p281 = por %p279, %p280
      %p283 = scmp.ne.s32.totalorder %s266, %s282
      %p284 = scmp.eq.s32.totalorder %s44, 0
      %p285 = por %p283, %p284
      %s286 = ssub.s32 %s38, %s45
      %p287 = scmp.eq.s32.totalorder %s286, 0
      %s289 = sadd.s32 %s288, 1
      %s290 = scalar_select %p287, %s288, %s289
      %p293 = pneg %p287
      %p294 = scmp.eq.s32.totalorder %s38, 1
      %p295 = por %p293, %p294
      %p296 = scmp.ne.s32.totalorder %s288, %s291
      %p297 = scmp.eq.s32.totalorder %s38, 0
      %p298 = por %p296, %p297
      %p299 = scmp.ne.s32.totalorder %s288, %s291
      %p300 = scmp.eq.s32.totalorder %s43, 1
      %p301 = por %p299, %p300
      %p302 = scmp.ne.s32.totalorder %s291, %s292
      %p303 = scmp.eq.s32.totalorder %s43, 0
      %p304 = por %p302, %p303
      %p305 = scmp.ne.s32.totalorder %s291, %s292
      %p306 = scmp.eq.s32.totalorder %s44, 1
      %p307 = por %p305, %p306
      %p309 = scmp.ne.s32.totalorder %s292, %s308
      %p310 = scmp.eq.s32.totalorder %s44, 0
      %p311 = por %p309, %p310
      %s312 = ssub.s32 %s38, %s45
      %p313 = scmp.eq.s32.totalorder %s312, 0
      %s315 = sadd.s32 %s314, 1
      %s316 = scalar_select %p313, %s314, %s315
      %p319 = pneg %p313
      %p320 = scmp.eq.s32.totalorder %s38, 1
      %p321 = por %p319, %p320
      %p322 = scmp.ne.s32.totalorder %s314, %s317
      %p323 = scmp.eq.s32.totalorder %s38, 0
      %p324 = por %p322, %p323
      %p325 = scmp.ne.s32.totalorder %s314, %s317
      %p326 = scmp.eq.s32.totalorder %s43, 1
      %p327 = por %p325, %p326
      %p328 = scmp.ne.s32.totalorder %s317, %s318
      %p329 = scmp.eq.s32.totalorder %s43, 0
      %p330 = por %p328, %p329
      %p331 = scmp.ne.s32.totalorder %s317, %s318
      %p332 = scmp.eq.s32.totalorder %s44, 1
      %p333 = por %p331, %p332
      %p335 = scmp.ne.s32.totalorder %s318, %s334
      %p336 = scmp.eq.s32.totalorder %s44, 0
      %p337 = por %p335, %p336
      %s338 = ssub.s32 %s38, %s45
      %p339 = scmp.eq.s32.totalorder %s338, 0
      %s341 = sadd.s32 %s340, 1
      %s342 = scalar_select %p339, %s340, %s341
      %p345 = pneg %p339
      %p346 = scmp.eq.s32.totalorder %s38, 1
      %p347 = por %p345, %p346
      %p348 = scmp.ne.s32.totalorder %s340, %s343
      %p349 = scmp.eq.s32.totalorder %s38, 0
      %p350 = por %p348, %p349
      %p351 = scmp.ne.s32.totalorder %s340, %s343
      %p352 = scmp.eq.s32.totalorder %s43, 1
      %p353 = por %p351, %p352
      %p354 = scmp.ne.s32.totalorder %s343, %s344
      %p355 = scmp.eq.s32.totalorder %s43, 0
      %p356 = por %p354, %p355
      %p357 = scmp.ne.s32.totalorder %s343, %s344
      %p358 = scmp.eq.s32.totalorder %s44, 1
      %p359 = por %p357, %p358
      %p361 = scmp.ne.s32.totalorder %s344, %s360
      %p362 = scmp.eq.s32.totalorder %s44, 0
      %p363 = por %p361, %p362
      %s364 = ssub.s32 %s38, %s45
      %p365 = scmp.eq.s32.totalorder %s364, 0
      %s367 = sadd.s32 %s366, 1
      %s368 = scalar_select %p365, %s366, %s367
      %p371 = pneg %p365
      %p372 = scmp.eq.s32.totalorder %s38, 1
      %p373 = por %p371, %p372
      %p374 = scmp.ne.s32.totalorder %s366, %s369
      %p375 = scmp.eq.s32.totalorder %s38, 0
      %p376 = por %p374, %p375
      %p377 = scmp.ne.s32.totalorder %s366, %s369
      %p378 = scmp.eq.s32.totalorder %s43, 1
      %p379 = por %p377, %p378
      %p380 = scmp.ne.s32.totalorder %s369, %s370
      %p381 = scmp.eq.s32.totalorder %s43, 0
      %p382 = por %p380, %p381
      %p383 = scmp.ne.s32.totalorder %s369, %s370
      %p384 = scmp.eq.s32.totalorder %s44, 1
      %p385 = por %p383, %p384
      %p387 = scmp.ne.s32.totalorder %s370, %s386
      %p388 = scmp.eq.s32.totalorder %s44, 0
      %p389 = por %p387, %p388
      %s390 = ssub.s32 %s38, %s45
      %p391 = scmp.eq.s32.totalorder %s390, 0
      %s393 = sadd.s32 %s392, 1
      %s394 = scalar_select %p391, %s392, %s393
      %p397 = pneg %p391
      %p398 = scmp.eq.s32.totalorder %s38, 1
      %p399 = por %p397, %p398
      %p400 = scmp.ne.s32.totalorder %s392, %s395
      %p401 = scmp.eq.s32.totalorder %s38, 0
      %p402 = por %p400, %p401
      %p403 = scmp.ne.s32.totalorder %s392, %s395
      %p404 = scmp.eq.s32.totalorder %s43, 1
      %p405 = por %p403, %p404
      %p406 = scmp.ne.s32.totalorder %s395, %s396
      %p407 = scmp.eq.s32.totalorder %s43, 0
      %p408 = por %p406, %p407
      %p409 = scmp.ne.s32.totalorder %s395, %s396
      %p410 = scmp.eq.s32.totalorder %s44, 1
      %p411 = por %p409, %p410
      %p413 = scmp.ne.s32.totalorder %s396, %s412
      %p414 = scmp.eq.s32.totalorder %s44, 0
      %p415 = por %p413, %p414
      %s416 = ssub.s32 %s38, %s45
      %p417 = scmp.eq.s32.totalorder %s416, 0
      %s419 = sadd.s32 %s418, 1
      %s420 = scalar_select %p417, %s418, %s419
      %p423 = pneg %p417
      %p424 = scmp.eq.s32.totalorder %s38, 1
      %p425 = por %p423, %p424
      %p426 = scmp.ne.s32.totalorder %s418, %s421
      %p427 = scmp.eq.s32.totalorder %s38, 0
      %p428 = por %p426, %p427
      %p429 = scmp.ne.s32.totalorder %s418, %s421
      %p430 = scmp.eq.s32.totalorder %s43, 1
      %p431 = por %p429, %p430
      %p432 = scmp.ne.s32.totalorder %s421, %s422
      %p433 = scmp.eq.s32.totalorder %s43, 0
      %p434 = por %p432, %p433
      %p435 = scmp.ne.s32.totalorder %s421, %s422
      %p436 = scmp.eq.s32.totalorder %s44, 1
      %p437 = por %p435, %p436
      %p439 = scmp.ne.s32.totalorder %s422, %s438
      %p440 = scmp.eq.s32.totalorder %s44, 0
      %p441 = por %p439, %p440
      %s442 = ssub.s32 %s38, %s45
      %p443 = scmp.eq.s32.totalorder %s442, 0
      %s445 = sadd.s32 %s444, 1
      %s446 = scalar_select %p443, %s444, %s445
      %p449 = pneg %p443
      %p450 = scmp.eq.s32.totalorder %s38, 1
      %p451 = por %p449, %p450
      %p452 = scmp.ne.s32.totalorder %s444, %s447
      %p453 = scmp.eq.s32.totalorder %s38, 0
      %p454 = por %p452, %p453
      %p455 = scmp.ne.s32.totalorder %s444, %s447
      %p456 = scmp.eq.s32.totalorder %s43, 1
      %p457 = por %p455, %p456
      %p458 = scmp.ne.s32.totalorder %s447, %s448
      %p459 = scmp.eq.s32.totalorder %s43, 0
      %p460 = por %p458, %p459
      %p461 = scmp.ne.s32.totalorder %s447, %s448
      %p462 = scmp.eq.s32.totalorder %s44, 1
      %p463 = por %p461, %p462
      %p465 = scmp.ne.s32.totalorder %s448, %s464
      %p466 = scmp.eq.s32.totalorder %s44, 0
      %p467 = por %p465, %p466
      %s468 = ssub.s32 %s38, %s45
      %p469 = scmp.eq.s32.totalorder %s468, 0
      %s471 = sadd.s32 %s470, 1
      %s472 = scalar_select %p469, %s470, %s471
      %p475 = pneg %p469
      %p476 = scmp.eq.s32.totalorder %s38, 1
      %p477 = por %p475, %p476
      %p478 = scmp.ne.s32.totalorder %s470, %s473
      %p479 = scmp.eq.s32.totalorder %s38, 0
      %p480 = por %p478, %p479
      %p481 = scmp.ne.s32.totalorder %s470, %s473
      %p482 = scmp.eq.s32.totalorder %s43, 1
      %p483 = por %p481, %p482
      %p484 = scmp.ne.s32.totalorder %s473, %s474
      %p485 = scmp.eq.s32.totalorder %s43, 0
      %p486 = por %p484, %p485
      %p487 = scmp.ne.s32.totalorder %s473, %s474
      %p488 = scmp.eq.s32.totalorder %s44, 1
      %p489 = por %p487, %p488
      %p491 = scmp.ne.s32.totalorder %s474, %s490
      %p492 = scmp.eq.s32.totalorder %s44, 0
      %p493 = por %p491, %p492
      %s494 = ssub.s32 %s38, %s45
      %p495 = scmp.eq.s32.totalorder %s494, 0
      %s497 = sadd.s32 %s496, 1
      %s498 = scalar_select %p495, %s496, %s497
      %p501 = pneg %p495
      %p502 = scmp.eq.s32.totalorder %s38, 1
      %p503 = por %p501, %p502
      %p504 = scmp.ne.s32.totalorder %s496, %s499
      %p505 = scmp.eq.s32.totalorder %s38, 0
      %p506 = por %p504, %p505
      %p507 = scmp.ne.s32.totalorder %s496, %s499
      %p508 = scmp.eq.s32.totalorder %s43, 1
      %p509 = por %p507, %p508
      %p510 = scmp.ne.s32.totalorder %s499, %s500
      %p511 = scmp.eq.s32.totalorder %s43, 0
      %p512 = por %p510, %p511
      %p513 = scmp.ne.s32.totalorder %s499, %s500
      %p514 = scmp.eq.s32.totalorder %s44, 1
      %p515 = por %p513, %p514
      %p517 = scmp.ne.s32.totalorder %s500, %s516
      %p518 = scmp.eq.s32.totalorder %s44, 0
      %p519 = por %p517, %p518
      %s520 = ssub.s32 %s38, %s45
      %p521 = scmp.eq.s32.totalorder %s520, 0
      %s523 = sadd.s32 %s522, 1
      %s524 = scalar_select %p521, %s522, %s523
      %p527 = pneg %p521
      %p528 = scmp.eq.s32.totalorder %s38, 1
      %p529 = por %p527, %p528
      %p530 = scmp.ne.s32.totalorder %s522, %s525
      %p531 = scmp.eq.s32.totalorder %s38, 0
      %p532 = por %p530, %p531
      %p533 = scmp.ne.s32.totalorder %s522, %s525
      %p534 = scmp.eq.s32.totalorder %s43, 1
      %p535 = por %p533, %p534
      %p536 = scmp.ne.s32.totalorder %s525, %s526
      %p537 = scmp.eq.s32.totalorder %s43, 0
      %p538 = por %p536, %p537
      %p539 = scmp.ne.s32.totalorder %s525, %s526
      %p540 = scmp.eq.s32.totalorder %s44, 1
      %p541 = por %p539, %p540
      %p543 = scmp.ne.s32.totalorder %s526, %s542
      %p544 = scmp.eq.s32.totalorder %s44, 0
      %p545 = por %p543, %p544
      %s546 = ssub.s32 %s38, %s45
      %p547 = scmp.eq.s32.totalorder %s546, 0
      %s549 = sadd.s32 %s548, 1
      %s550 = scalar_select %p547, %s548, %s549
      %p553 = pneg %p547
      %p554 = scmp.eq.s32.totalorder %s38, 1
      %p555 = por %p553, %p554
      %p556 = scmp.ne.s32.totalorder %s548, %s551
      %p557 = scmp.eq.s32.totalorder %s38, 0
      %p558 = por %p556, %p557
      %p559 = scmp.ne.s32.totalorder %s548, %s551
      %p560 = scmp.eq.s32.totalorder %s43, 1
      %p561 = por %p559, %p560
      %p562 = scmp.ne.s32.totalorder %s551, %s552
      %p563 = scmp.eq.s32.totalorder %s43, 0
      %p564 = por %p562, %p563
      %p565 = scmp.ne.s32.totalorder %s551, %s552
      %p566 = scmp.eq.s32.totalorder %s44, 1
      %p567 = por %p565, %p566
      %p569 = scmp.ne.s32.totalorder %s552, %s568
      %p570 = scmp.eq.s32.totalorder %s44, 0
      %p571 = por %p569, %p570
      %s572 = ssub.s32 %s38, %s45
      %p573 = scmp.eq.s32.totalorder %s572, 0
      %s575 = sadd.s32 %s574, 1
      %s576 = scalar_select %p573, %s574, %s575
      %p579 = pneg %p573
      %p580 = scmp.eq.s32.totalorder %s38, 1
      %p581 = por %p579, %p580
      %p582 = scmp.ne.s32.totalorder %s574, %s577
      %p583 = scmp.eq.s32.totalorder %s38, 0
      %p584 = por %p582, %p583
      %p585 = scmp.ne.s32.totalorder %s574, %s577
      %p586 = scmp.eq.s32.totalorder %s43, 1
      %p587 = por %p585, %p586
      %p588 = scmp.ne.s32.totalorder %s577, %s578
      %p589 = scmp.eq.s32.totalorder %s43, 0
      %p590 = por %p588, %p589
      %p591 = scmp.ne.s32.totalorder %s577, %s578
      %p592 = scmp.eq.s32.totalorder %s44, 1
      %p593 = por %p591, %p592
      %p595 = scmp.ne.s32.totalorder %s578, %s594
      %p596 = scmp.eq.s32.totalorder %s44, 0
      %p597 = por %p595, %p596
      %s598 = ssub.s32 %s38, %s45
      %p599 = scmp.eq.s32.totalorder %s598, 0
      %s601 = sadd.s32 %s600, 1
      %s602 = scalar_select %p599, %s600, %s601
      %p605 = pneg %p599
      %p606 = scmp.eq.s32.totalorder %s38, 1
      %p607 = por %p605, %p606
      %p608 = scmp.ne.s32.totalorder %s600, %s603
      %p609 = scmp.eq.s32.totalorder %s38, 0
      %p610 = por %p608, %p609
      %p611 = scmp.ne.s32.totalorder %s600, %s603
      %p612 = scmp.eq.s32.totalorder %s43, 1
      %p613 = por %p611, %p612
      %p614 = scmp.ne.s32.totalorder %s603, %s604
      %p615 = scmp.eq.s32.totalorder %s43, 0
      %p616 = por %p614, %p615
      %p617 = scmp.ne.s32.totalorder %s603, %s604
      %p618 = scmp.eq.s32.totalorder %s44, 1
      %p619 = por %p617, %p618
      %p621 = scmp.ne.s32.totalorder %s604, %s620
      %p622 = scmp.eq.s32.totalorder %s44, 0
      %p623 = por %p621, %p622
      %s624 = ssub.s32 %s38, %s45
      %p625 = scmp.eq.s32.totalorder %s624, 0
      %s627 = sadd.s32 %s626, 1
      %s628 = scalar_select %p625, %s626, %s627
      %p631 = pneg %p625
      %p632 = scmp.eq.s32.totalorder %s38, 1
      %p633 = por %p631, %p632
      %p634 = scmp.ne.s32.totalorder %s626, %s629
      %p635 = scmp.eq.s32.totalorder %s38, 0
      %p636 = por %p634, %p635
      %p637 = scmp.ne.s32.totalorder %s626, %s629
      %p638 = scmp.eq.s32.totalorder %s43, 1
      %p639 = por %p637, %p638
      %p640 = scmp.ne.s32.totalorder %s629, %s630
      %p641 = scmp.eq.s32.totalorder %s43, 0
      %p642 = por %p640, %p641
      %p643 = scmp.ne.s32.totalorder %s629, %s630
      %p644 = scmp.eq.s32.totalorder %s44, 1
      %p645 = por %p643, %p644
      %p647 = scmp.ne.s32.totalorder %s630, %s646
      %p648 = scmp.eq.s32.totalorder %s44, 0
      %p649 = por %p647, %p648
      %s651 = sadd.s32 %s650, 1
      %p654 = scmp.eq.s32.totalorder %s38, 1
      %p655 = scmp.ne.s32.totalorder %s650, %s652
      %p656 = scmp.eq.s32.totalorder %s38, 0
      %p657 = por %p655, %p656
      %p658 = scmp.ne.s32.totalorder %s650, %s652
      %p659 = scmp.eq.s32.totalorder %s43, 1
      %p660 = por %p658, %p659
      %p661 = scmp.ne.s32.totalorder %s652, %s653
      %p662 = scmp.eq.s32.totalorder %s43, 0
      %p663 = por %p661, %p662
      %p664 = scmp.ne.s32.totalorder %s652, %s653
      %p665 = scmp.eq.s32.totalorder %s44, 1
      %p666 = por %p664, %p665
      %p668 = scmp.ne.s32.totalorder %s653, %s667
      %p669 = scmp.eq.s32.totalorder %s44, 0
      %p670 = por %p668, %p669
      %s672 = sadd.s32 %s671, 1
      %p675 = scmp.eq.s32.totalorder %s38, 1
      %p676 = scmp.ne.s32.totalorder %s671, %s673
      %p677 = scmp.eq.s32.totalorder %s38, 0
      %p678 = por %p676, %p677
      %p679 = scmp.ne.s32.totalorder %s671, %s673
      %p680 = scmp.eq.s32.totalorder %s43, 1
      %p681 = por %p679, %p680
      %p682 = scmp.ne.s32.totalorder %s673, %s674
      %p683 = scmp.eq.s32.totalorder %s43, 0
      %p684 = por %p682, %p683
      %p685 = scmp.ne.s32.totalorder %s673, %s674
      %p686 = scmp.eq.s32.totalorder %s44, 1
      %p687 = por %p685, %p686
      %p689 = scmp.ne.s32.totalorder %s674, %s688
      %p690 = scmp.eq.s32.totalorder %s44, 0
      %p691 = por %p689, %p690
      %s693 = sadd.s32 %s692, 1
      %p696 = scmp.eq.s32.totalorder %s38, 1
      %p697 = scmp.ne.s32.totalorder %s692, %s694
      %p698 = scmp.eq.s32.totalorder %s38, 0
      %p699 = por %p697, %p698
      %p700 = scmp.ne.s32.totalorder %s692, %s694
      %p701 = scmp.eq.s32.totalorder %s43, 1
      %p702 = por %p700, %p701
      %p703 = scmp.ne.s32.totalorder %s694, %s695
      %p704 = scmp.eq.s32.totalorder %s43, 0
      %p705 = por %p703, %p704
      %p706 = scmp.ne.s32.totalorder %s694, %s695
      %p707 = scmp.eq.s32.totalorder %s44, 1
      %p708 = por %p706, %p707
      %p710 = scmp.ne.s32.totalorder %s695, %s709
      %p711 = scmp.eq.s32.totalorder %s44, 0
      %p712 = por %p710, %p711
      %p713 = scmp.le.s32.totalorder 1, %s38
      %p714 = scmp.lt.s32.totalorder %s38, 3
      %p715 = pnand %p713, %p714
      %p716 = pneg %p715
      // Predicated region
      $region9: #{forward.4} parent=5 // pred_check
        _
      $region10: #{forward.4} parent=5 // pred_check_branch
        %718 = sbr.rel (%p715) target = $region12
      $region11: #{forward.4} parent=5 // pred_region
        %s719 = ssub.s32 %s38, 1
        // Predicated region
        $region13: #{forward.4} parent=11 // pred_check
          %p720 = pneg %p59
        $region14: #{forward.4} parent=11 // pred_check_branch
          %722 = sbr.rel (%p720) target = $region16
        $region15: #{forward.4} parent=11 // pred_region
          _
        $region16: #{forward.4} parent=11 // pred_fallthru
          _
        // Predicated region
        $region17: #{forward.4} parent=11 // pred_check
          %p723 = pneg %p80
        $region18: #{forward.4} parent=11 // pred_check_branch
          %725 = sbr.rel (%p723) target = $region20
        $region19: #{forward.4} parent=11 // pred_region
          _
        $region20: #{forward.4} parent=11 // pred_fallthru
          _
        // Predicated region
        $region21: #{forward.4} parent=11 // pred_check
          %p726 = pneg %p101
        $region22: #{forward.4} parent=11 // pred_check_branch
          %728 = sbr.rel (%p726) target = $region24
        $region23: #{forward.4} parent=11 // pred_region
          _
        $region24: #{forward.4} parent=11 // pred_fallthru
          _
        // Predicated region
        $region25: #{forward.4} parent=11 // pred_check
          %p729 = pneg %p122
        $region26: #{forward.4} parent=11 // pred_check_branch
          %731 = sbr.rel (%p729) target = $region28
        $region27: #{forward.4} parent=11 // pred_region
          _
        $region28: #{forward.4} parent=11 // pred_fallthru
          _
        // Predicated region
        $region29: #{forward.4} parent=11 // pred_check
          %p732 = pneg %p663
        $region30: #{forward.4} parent=11 // pred_check_branch
          %734 = sbr.rel (%p732) target = $region32
        $region31: #{forward.4} parent=11 // pred_region
          _
        $region32: #{forward.4} parent=11 // pred_fallthru
          _
        // Predicated region
        $region33: #{forward.4} parent=11 // pred_check
          %p735 = pneg %p684
        $region34: #{forward.4} parent=11 // pred_check_branch
          %737 = sbr.rel (%p735) target = $region36
        $region35: #{forward.4} parent=11 // pred_region
          _
        $region36: #{forward.4} parent=11 // pred_fallthru
          _
      $region12: #{forward.4} parent=5 // pred_fallthru
        _
      %p738 = scmp.lt.s32.totalorder %s38, 2
      // Predicated region
      $region37: #{forward.4} parent=5 // pred_check
        %p739 = pneg %p738
      $region38: #{forward.4} parent=5 // pred_check_branch
        %741 = sbr.rel (%p739) target = $region40
      $region39: #{forward.4} parent=5 // pred_region
        // Predicated region
        $region41: #{forward.4} parent=39 // pred_check
          %p742 = pneg %p142
        $region42: #{forward.4} parent=39 // pred_check_branch
          %744 = sbr.rel (%p742) target = $region44
        $region43: #{forward.4} parent=39 // pred_region
          %p745 = scmp.lt.s32.totalorder %s38, 1
          %s746 = scalar_select %p745, %s38, 1
          %s747 = smul.addr %s746, 48
          %s748 = smul.addr %s747, 4
          %s749 = scalar_lea.vmem %s4, %s748
        $region44: #{forward.4} parent=39 // pred_fallthru
          _
        // Predicated region
        $region45: #{forward.4} parent=39 // pred_check
          %p750 = pneg %p168
        $region46: #{forward.4} parent=39 // pred_check_branch
          %752 = sbr.rel (%p750) target = $region48
        $region47: #{forward.4} parent=39 // pred_region
          %p753 = scmp.lt.s32.totalorder %s38, 1
          %s754 = scalar_select %p753, %s38, 1
          %s755 = smul.addr %s754, 3
          %s756 = scalar_lea.vmem %s5, %s755
        $region48: #{forward.4} parent=39 // pred_fallthru
          _
        // Predicated region
        $region49: #{forward.4} parent=39 // pred_check
          %p757 = pneg %p194
        $region50: #{forward.4} parent=39 // pred_check_branch
          %759 = sbr.rel (%p757) target = $region52
        $region51: #{forward.4} parent=39 // pred_region
          %p760 = scmp.lt.s32.totalorder %s38, 1
          %s761 = scalar_select %p760, %s38, 1
          %s762 = smul.addr %s761, 16
          %s763 = smul.addr %s762, 4
          %s764 = scalar_lea.vmem %s6, %s763
        $region52: #{forward.4} parent=39 // pred_fallthru
          _
        // Predicated region
        $region53: #{forward.4} parent=39 // pred_check
          %p765 = pneg %p220
        $region54: #{forward.4} parent=39 // pred_check_branch
          %767 = sbr.rel (%p765) target = $region56
        $region55: #{forward.4} parent=39 // pred_region
          %p768 = scmp.lt.s32.totalorder %s38, 1
          %s769 = scalar_select %p768, %s38, 1
          %s770 = scalar_lea.vmem %s7, %s769
        $region56: #{forward.4} parent=39 // pred_fallthru
          _
        // Predicated region
        $region57: #{forward.4} parent=39 // pred_check
          %p771 = pneg %p246
        $region58: #{forward.4} parent=39 // pred_check_branch
          %773 = sbr.rel (%p771) target = $region60
        $region59: #{forward.4} parent=39 // pred_region
          %p774 = scmp.lt.s32.totalorder %s38, 1
          %s775 = scalar_select %p774, %s38, 1
          %s776 = scalar_lea.vmem %s8, %s775
        $region60: #{forward.4} parent=39 // pred_fallthru
          _
        // Predicated region
        $region61: #{forward.4} parent=39 // pred_check
          %p777 = pneg %p272
        $region62: #{forward.4} parent=39 // pred_check_branch
          %779 = sbr.rel (%p777) target = $region64
        $region63: #{forward.4} parent=39 // pred_region
          %p780 = scmp.lt.s32.totalorder %s38, 1
          %s781 = scalar_select %p780, %s38, 1
          %s782 = scalar_lea.vmem %s9, %s781
        $region64: #{forward.4} parent=39 // pred_fallthru
          _
        // Predicated region
        $region65: #{forward.4} parent=39 // pred_check
          %p783 = pneg %p298
        $region66: #{forward.4} parent=39 // pred_check_branch
          %785 = sbr.rel (%p783) target = $region68
        $region67: #{forward.4} parent=39 // pred_region
          %s786 = sand.u32 %s288, 1
          %s787 = scalar_lea.sflag [#allocation3], %s786
          %s788 = sand.u32 %s288, 1
          %s789 = smul.addr %s788, 64
          %s790 = scalar_lea.vmem [#allocation2], %s789
          %s792 = ssub.s32 1024, 1024
          %793 = vsyncadd %s787, %s792
          %s794 = smul.addr %s38, 16
          %s795 = smul.addr %s794, 64
          %s796 = scalar_lea.hbm %s10, %s795
          %s797 = sshll.u32 %s790, 4
          %s798 = int_to_ptr.vmem [resolvable:$true] %s797
          %803 = dma.hbm_to_vmem [thread:$0]  %s796, 1024, %s798, %s787, 64, 64, 4
        $region68: #{forward.4} parent=39 // pred_fallthru
          _
        // Predicated region
        $region69: #{forward.4} parent=39 // pred_check
          %p804 = pneg %p324
        $region70: #{forward.4} parent=39 // pred_check_branch
          %806 = sbr.rel (%p804) target = $region72
        $region71: #{forward.4} parent=39 // pred_region
          %p807 = scmp.lt.s32.totalorder %s38, 1
          %s808 = scalar_select %p807, %s38, 1
          %s809 = scalar_lea.vmem %s11, %s808
        $region72: #{forward.4} parent=39 // pred_fallthru
          _
        // Predicated region
        $region73: #{forward.4} parent=39 // pred_check
          %p810 = pneg %p350
        $region74: #{forward.4} parent=39 // pred_check_branch
          %812 = sbr.rel (%p810) target = $region76
        $region75: #{forward.4} parent=39 // pred_region
          %p813 = scmp.lt.s32.totalorder %s38, 1
          %s814 = scalar_select %p813, %s38, 1
          %s815 = smul.addr %s814, 32
          %s816 = smul.addr %s815, 4
          %s817 = scalar_lea.vmem %s12, %s816
        $region76: #{forward.4} parent=39 // pred_fallthru
          _
        // Predicated region
        $region77: #{forward.4} parent=39 // pred_check
          %p818 = pneg %p376
        $region78: #{forward.4} parent=39 // pred_check_branch
          %820 = sbr.rel (%p818) target = $region80
        $region79: #{forward.4} parent=39 // pred_region
          %p821 = scmp.lt.s32.totalorder %s38, 1
          %s822 = scalar_select %p821, %s38, 1
          %s823 = smul.addr %s822, 2
          %s824 = scalar_lea.vmem %s13, %s823
        $region80: #{forward.4} parent=39 // pred_fallthru
          _
        // Predicated region
        $region81: #{forward.4} parent=39 // pred_check
          %p825 = pneg %p402
        $region82: #{forward.4} parent=39 // pred_check_branch
          %827 = sbr.rel (%p825) target = $region84
        $region83: #{forward.4} parent=39 // pred_region
          %s828 = sand.u32 %s38, 1
          %s829 = scalar_lea.sflag [#allocation5], %s828
          %s830 = sand.u32 %s392, 1
          %s831 = smul.addr %s830, 64
          %s832 = scalar_lea.vmem [#allocation4], %s831
          %s834 = ssub.s32 1024, 1024
          %835 = vsyncadd %s829, %s834
          %s836 = smul.addr %s38, 16
          %s837 = smul.addr %s836, 64
          %s838 = scalar_lea.hbm %s14, %s837
          %s839 = sshll.u32 %s832, 4
          %s840 = int_to_ptr.vmem [resolvable:$true] %s839
          %845 = dma.hbm_to_vmem [thread:$0]  %s838, 1024, %s840, %s829, 64, 64, 4
        $region84: #{forward.4} parent=39 // pred_fallthru
          _
        // Predicated region
        $region85: #{forward.4} parent=39 // pred_check
          %p846 = pneg %p428
        $region86: #{forward.4} parent=39 // pred_check_branch
          %848 = sbr.rel (%p846) target = $region88
        $region87: #{forward.4} parent=39 // pred_region
          %p849 = scmp.lt.s32.totalorder %s38, 1
          %s850 = scalar_select %p849, %s38, 1
          %s851 = scalar_lea.vmem %s15, %s850
        $region88: #{forward.4} parent=39 // pred_fallthru
          _
        // Predicated region
        $region89: #{forward.4} parent=39 // pred_check
          %p852 = pneg %p454
        $region90: #{forward.4} parent=39 // pred_check_branch
          %854 = sbr.rel (%p852) target = $region92
        $region91: #{forward.4} parent=39 // pred_region
          %p855 = scmp.lt.s32.totalorder %s38, 1
          %s856 = scalar_select %p855, %s38, 1
          %s857 = scalar_lea.vmem %s16, %s856
        $region92: #{forward.4} parent=39 // pred_fallthru
          _
        // Predicated region
        $region93: #{forward.4} parent=39 // pred_check
          %p858 = pneg %p480
        $region94: #{forward.4} parent=39 // pred_check_branch
          %860 = sbr.rel (%p858) target = $region96
        $region95: #{forward.4} parent=39 // pred_region
          %p861 = scmp.lt.s32.totalorder %s38, 1
          %s862 = scalar_select %p861, %s38, 1
          %s863 = scalar_lea.vmem %s17, %s862
        $region96: #{forward.4} parent=39 // pred_fallthru
          _
        // Predicated region
        $region97: #{forward.4} parent=39 // pred_check
          %p864 = pneg %p506
        $region98: #{forward.4} parent=39 // pred_check_branch
          %866 = sbr.rel (%p864) target = $region100
        $region99: #{forward.4} parent=39 // pred_region
          %p867 = scmp.lt.s32.totalorder %s38, 1
          %s868 = scalar_select %p867, %s38, 1
          %s869 = smul.addr %s868, 32
          %s870 = smul.addr %s869, 4
          %s871 = scalar_lea.vmem %s18, %s870
        $region100: #{forward.4} parent=39 // pred_fallthru
          _
        // Predicated region
        $region101: #{forward.4} parent=39 // pred_check
          %p872 = pneg %p532
        $region102: #{forward.4} parent=39 // pred_check_branch
          %874 = sbr.rel (%p872) target = $region104
        $region103: #{forward.4} parent=39 // pred_region
          %p875 = scmp.lt.s32.totalorder %s38, 1
          %s876 = scalar_select %p875, %s38, 1
          %s877 = smul.addr %s876, 2
          %s878 = scalar_lea.vmem %s19, %s877
        $region104: #{forward.4} parent=39 // pred_fallthru
          _
        // Predicated region
        $region105: #{forward.4} parent=39 // pred_check
          %p879 = pneg %p558
        $region106: #{forward.4} parent=39 // pred_check_branch
          %881 = sbr.rel (%p879) target = $region108
        $region107: #{forward.4} parent=39 // pred_region
          %s882 = sand.u32 %s38, 1
          %s883 = scalar_lea.sflag [#allocation5], %s882
          %s884 = sand.u32 %s548, 1
          %s885 = smul.addr %s884, 128
          %s886 = scalar_lea.vmem [#allocation6], %s885
          %s888 = ssub.s32 2048, 2048
          %889 = vsyncadd %s883, %s888
          %s890 = smul.addr %s38, 32
          %s891 = smul.addr %s890, 64
          %s892 = scalar_lea.hbm %s20, %s891
          %s893 = sshll.u32 %s886, 4
          %s894 = int_to_ptr.vmem [resolvable:$true] %s893
          %899 = dma.hbm_to_vmem [thread:$0]  %s892, 2048, %s894, %s883, 64, 64, 4
        $region108: #{forward.4} parent=39 // pred_fallthru
          _
        // Predicated region
        $region109: #{forward.4} parent=39 // pred_check
          %p900 = pneg %p584
        $region110: #{forward.4} parent=39 // pred_check_branch
          %902 = sbr.rel (%p900) target = $region112
        $region111: #{forward.4} parent=39 // pred_region
          %p903 = scmp.lt.s32.totalorder %s38, 1
          %s904 = scalar_select %p903, %s38, 1
          %s905 = scalar_lea.vmem %s21, %s904
        $region112: #{forward.4} parent=39 // pred_fallthru
          _
        // Predicated region
        $region113: #{forward.4} parent=39 // pred_check
          %p906 = pneg %p610
        $region114: #{forward.4} parent=39 // pred_check_branch
          %908 = sbr.rel (%p906) target = $region116
        $region115: #{forward.4} parent=39 // pred_region
          %p909 = scmp.lt.s32.totalorder %s38, 1
          %s910 = scalar_select %p909, %s38, 1
          %s911 = scalar_lea.vmem %s22, %s910
        $region116: #{forward.4} parent=39 // pred_fallthru
          _
        // Predicated region
        $region117: #{forward.4} parent=39 // pred_check
          %p912 = pneg %p636
        $region118: #{forward.4} parent=39 // pred_check_branch
          %914 = sbr.rel (%p912) target = $region120
        $region119: #{forward.4} parent=39 // pred_region
          %p915 = scmp.lt.s32.totalorder %s38, 1
          %s916 = scalar_select %p915, %s38, 1
          %s917 = scalar_lea.vmem %s23, %s916
        $region120: #{forward.4} parent=39 // pred_fallthru
          _
      $region40: #{forward.4} parent=5 // pred_fallthru
        _
      %p918 = scmp.le.s32.totalorder 1, %s38
      %p919 = scmp.lt.s32.totalorder %s38, 3
      %p920 = pnand %p918, %p919
      %p921 = pneg %p920
      // Predicated region
      $region121: #{forward.4} parent=5 // pred_check
        _
      $region122: #{forward.4} parent=5 // pred_check_branch
        %923 = sbr.rel (%p920) target = $region124
      $region123: #{forward.4} parent=5 // pred_region
        %s924 = ssub.s32 %s38, 1
        %s925 = sand.u32 %s291, 1
        %s926 = scalar_lea.sflag [#allocation3], %s925
        %s927 = sand.u32 %s291, 1
        %s928 = smul.addr %s927, 64
        %s929 = scalar_lea.vmem [#allocation2], %s928
        // Predicated region
        $region125: #{forward.4} parent=123 // pred_check
          %p930 = pneg %p304
        $region126: #{forward.4} parent=123 // pred_check_branch
          %932 = sbr.rel (%p930) target = $region128
        $region127: #{forward.4} parent=123 // pred_region
          %933 = dma.done %s926, 1024
        $region128: #{forward.4} parent=123 // pred_fallthru
          _
        %s934 = sand.u32 %s43, 1
        %s935 = scalar_lea.sflag [#allocation5], %s934
        %s936 = sand.u32 %s395, 1
        %s937 = smul.addr %s936, 64
        %s938 = scalar_lea.vmem [#allocation4], %s937
        // Predicated region
        $region129: #{forward.4} parent=123 // pred_check
          %p939 = pneg %p408
        $region130: #{forward.4} parent=123 // pred_check_branch
          %941 = sbr.rel (%p939) target = $region132
        $region131: #{forward.4} parent=123 // pred_region
          %942 = dma.done %s935, 1024
        $region132: #{forward.4} parent=123 // pred_fallthru
          _
        %s943 = sand.u32 %s43, 1
        %s944 = scalar_lea.sflag [#allocation5], %s943
        %s945 = sand.u32 %s551, 1
        %s946 = smul.addr %s945, 128
        %s947 = scalar_lea.vmem [#allocation6], %s946
        // Predicated region
        $region133: #{forward.4} parent=123 // pred_check
          %p948 = pneg %p564
        $region134: #{forward.4} parent=123 // pred_check_branch
          %950 = sbr.rel (%p948) target = $region136
        $region135: #{forward.4} parent=123 // pred_region
          %951 = dma.done %s944, 2048
        $region136: #{forward.4} parent=123 // pred_fallthru
          _
        %p952 = pneg %p59
        %p953 = pneg %p56
        %p954 = pneg %p80
        %p955 = pneg %p77
        %p956 = pneg %p101
        %p957 = pneg %p98
        %p958 = pneg %p122
        %p959 = pneg %p119
        %p960 = scmp.lt.s32.totalorder %s43, 1
        %s961 = scalar_select %p960, %s43, 1
        %s962 = smul.addr %s961, 48
        %s963 = smul.addr %s962, 4
        %s964 = scalar_lea.vmem %s4, %s963
        %p965 = pneg %p148
        %p966 = pneg %p145
        %p967 = scmp.lt.s32.totalorder %s43, 1
        %s968 = scalar_select %p967, %s43, 1
        %s969 = smul.addr %s968, 3
        %s970 = scalar_lea.vmem %s5, %s969
        %p971 = pneg %p174
        %p972 = pneg %p171
        %p973 = scmp.lt.s32.totalorder %s43, 1
        %s974 = scalar_select %p973, %s43, 1
        %s975 = smul.addr %s974, 16
        %s976 = smul.addr %s975, 4
        %s977 = scalar_lea.vmem %s6, %s976
        %p978 = pneg %p200
        %p979 = pneg %p197
        %p980 = scmp.lt.s32.totalorder %s43, 1
        %s981 = scalar_select %p980, %s43, 1
        %s982 = scalar_lea.vmem %s7, %s981
        %p983 = pneg %p226
        %p984 = pneg %p223
        %p985 = scmp.lt.s32.totalorder %s43, 1
        %s986 = scalar_select %p985, %s43, 1
        %s987 = scalar_lea.vmem %s8, %s986
        %p988 = pneg %p252
        %p989 = pneg %p249
        %p990 = scmp.lt.s32.totalorder %s43, 1
        %s991 = scalar_select %p990, %s43, 1
        %s992 = scalar_lea.vmem %s9, %s991
        %p993 = pneg %p278
        %p994 = pneg %p275
        %s995 = sand.u32 %s291, 1
        %s996 = scalar_lea.sflag [#allocation3], %s995
        %s997 = sand.u32 %s291, 1
        %s998 = smul.addr %s997, 64
        %s999 = scalar_lea.vmem [#allocation2], %s998
        %p1000 = pneg %p304
        %p1001 = pneg %p301
        %p1002 = scmp.lt.s32.totalorder %s43, 1
        %s1003 = scalar_select %p1002, %s43, 1
        %s1004 = scalar_lea.vmem %s11, %s1003
        %p1005 = pneg %p330
        %p1006 = pneg %p327
        %p1007 = scmp.lt.s32.totalorder %s43, 1
        %s1008 = scalar_select %p1007, %s43, 1
        %s1009 = smul.addr %s1008, 32
        %s1010 = smul.addr %s1009, 4
        %s1011 = scalar_lea.vmem %s12, %s1010
        %p1012 = pneg %p356
        %p1013 = pneg %p353
        %p1014 = scmp.lt.s32.totalorder %s43, 1
        %s1015 = scalar_select %p1014, %s43, 1
        %s1016 = smul.addr %s1015, 2
        %s1017 = scalar_lea.vmem %s13, %s1016
        %p1018 = pneg %p382
        %p1019 = pneg %p379
        %s1020 = sand.u32 %s43, 1
        %s1021 = scalar_lea.sflag [#allocation5], %s1020
        %s1022 = sand.u32 %s395, 1
        %s1023 = smul.addr %s1022, 64
        %s1024 = scalar_lea.vmem [#allocation4], %s1023
        %p1025 = pneg %p408
        %p1026 = pneg %p405
        %p1027 = scmp.lt.s32.totalorder %s43, 1
        %s1028 = scalar_select %p1027, %s43, 1
        %s1029 = scalar_lea.vmem %s15, %s1028
        %p1030 = pneg %p434
        %p1031 = pneg %p431
        %p1032 = scmp.lt.s32.totalorder %s43, 1
        %s1033 = scalar_select %p1032, %s43, 1
        %s1034 = scalar_lea.vmem %s16, %s1033
        %p1035 = pneg %p460
        %p1036 = pneg %p457
        %p1037 = scmp.lt.s32.totalorder %s43, 1
        %s1038 = scalar_select %p1037, %s43, 1
        %s1039 = scalar_lea.vmem %s17, %s1038
        %p1040 = pneg %p486
        %p1041 = pneg %p483
        %p1042 = scmp.lt.s32.totalorder %s43, 1
        %s1043 = scalar_select %p1042, %s43, 1
        %s1044 = smul.addr %s1043, 32
        %s1045 = smul.addr %s1044, 4
        %s1046 = scalar_lea.vmem %s18, %s1045
        %p1047 = pneg %p512
        %p1048 = pneg %p509
        %p1049 = scmp.lt.s32.totalorder %s43, 1
        %s1050 = scalar_select %p1049, %s43, 1
        %s1051 = smul.addr %s1050, 2
        %s1052 = scalar_lea.vmem %s19, %s1051
        %p1053 = pneg %p538
        %p1054 = pneg %p535
        %s1055 = sand.u32 %s43, 1
        %s1056 = scalar_lea.sflag [#allocation5], %s1055
        %s1057 = sand.u32 %s551, 1
        %s1058 = smul.addr %s1057, 128
        %s1059 = scalar_lea.vmem [#allocation6], %s1058
        %p1060 = pneg %p564
        %p1061 = pneg %p561
        %p1062 = scmp.lt.s32.totalorder %s43, 1
        %s1063 = scalar_select %p1062, %s43, 1
        %s1064 = scalar_lea.vmem %s21, %s1063
        %p1065 = pneg %p590
        %p1066 = pneg %p587
        %p1067 = scmp.lt.s32.totalorder %s43, 1
        %s1068 = scalar_select %p1067, %s43, 1
        %s1069 = scalar_lea.vmem %s22, %s1068
        %p1070 = pneg %p616
        %p1071 = pneg %p613
        %p1072 = scmp.lt.s32.totalorder %s43, 1
        %s1073 = scalar_select %p1072, %s43, 1
        %s1074 = scalar_lea.vmem %s23, %s1073
        %p1075 = pneg %p642
        %p1076 = pneg %p639
        %p1077 = pneg %p663
        %p1078 = pneg %p660
        %p1079 = pneg %p684
        %p1080 = pneg %p681
        %p1081 = pneg %p705
        %p1082 = pneg %p702
        %p1083 = scmp.lt.s32.totalorder %s43, 1
        %s1084 = scalar_select %p1083, %s43, 1
        %s1085 = smul.addr %s1084, 48
        %s1086 = smul.addr %s1085, 4
        %s1087 = scalar_lea.vmem %s4, %s1086
        %p1088 = scmp.lt.s32.totalorder %s43, 1
        %s1089 = scalar_select %p1088, %s43, 1
        %s1090 = smul.addr %s1089, 3
        %s1091 = scalar_lea.vmem %s5, %s1090
        %p1092 = scmp.lt.s32.totalorder %s43, 1
        %s1093 = scalar_select %p1092, %s43, 1
        %s1094 = smul.addr %s1093, 16
        %s1095 = smul.addr %s1094, 4
        %s1096 = scalar_lea.vmem %s6, %s1095
        %p1097 = scmp.lt.s32.totalorder %s43, 1
        %s1098 = scalar_select %p1097, %s43, 1
        %s1099 = scalar_lea.vmem %s7, %s1098
        %p1100 = scmp.lt.s32.totalorder %s43, 1
        %s1101 = scalar_select %p1100, %s43, 1
        %s1102 = scalar_lea.vmem %s8, %s1101
        %p1103 = scmp.lt.s32.totalorder %s43, 1
        %s1104 = scalar_select %p1103, %s43, 1
        %s1105 = scalar_lea.vmem %s9, %s1104
        %p1106 = scmp.lt.s32.totalorder %s43, 1
        %s1107 = scalar_select %p1106, %s43, 1
        %s1108 = scalar_lea.vmem %s11, %s1107
        %p1109 = scmp.lt.s32.totalorder %s43, 1
        %s1110 = scalar_select %p1109, %s43, 1
        %s1111 = smul.addr %s1110, 32
        %s1112 = smul.addr %s1111, 4
        %s1113 = scalar_lea.vmem %s12, %s1112
        %p1114 = scmp.lt.s32.totalorder %s43, 1
        %s1115 = scalar_select %p1114, %s43, 1
        %s1116 = smul.addr %s1115, 2
        %s1117 = scalar_lea.vmem %s13, %s1116
        %p1118 = scmp.lt.s32.totalorder %s43, 1
        %s1119 = scalar_select %p1118, %s43, 1
        %s1120 = scalar_lea.vmem %s15, %s1119
        %p1121 = scmp.lt.s32.totalorder %s43, 1
        %s1122 = scalar_select %p1121, %s43, 1
        %s1123 = scalar_lea.vmem %s16, %s1122
        %p1124 = scmp.lt.s32.totalorder %s43, 1
        %s1125 = scalar_select %p1124, %s43, 1
        %s1126 = scalar_lea.vmem %s17, %s1125
        %p1127 = scmp.lt.s32.totalorder %s43, 1
        %s1128 = scalar_select %p1127, %s43, 1
        %s1129 = smul.addr %s1128, 32
        %s1130 = smul.addr %s1129, 4
        %s1131 = scalar_lea.vmem %s18, %s1130
        %p1132 = scmp.lt.s32.totalorder %s43, 1
        %s1133 = scalar_select %p1132, %s43, 1
        %s1134 = smul.addr %s1133, 2
        %s1135 = scalar_lea.vmem %s19, %s1134
        %p1136 = scmp.lt.s32.totalorder %s43, 1
        %s1137 = scalar_select %p1136, %s43, 1
        %s1138 = scalar_lea.vmem %s21, %s1137
        %p1139 = scmp.lt.s32.totalorder %s43, 1
        %s1140 = scalar_select %p1139, %s43, 1
        %s1141 = scalar_lea.vmem %s22, %s1140
        %p1142 = scmp.lt.s32.totalorder %s43, 1
        %s1143 = scalar_select %p1142, %s43, 1
        %s1144 = scalar_lea.vmem %s23, %s1143
        %p1146 = scmp.eq.s32.totalorder %s43, 0
        // Predicated region
        $region137: #{forward.4} parent=123 // pred_check
          %p1147 = pneg %p1146
        $region138: #{forward.4} parent=123 // pred_check_branch
          %1149 = sbr.rel (%p1147) target = $region140
        $region139: #{forward.4} parent=123 // pred_region
          %v1150 = vld [vmem:[%s0] sm:$0xff]
          %v1151 = vld [vmem:[%s0 + $0x8] sm:$0xff]
          %1152 = vst [vmem:[%s26] sm:$0xff] %v1150
          %1153 = vst [vmem:[%s26 + $0x8] sm:$0xff] %v1151
        $region140: #{forward.4} parent=123 // pred_fallthru
          _
        %v1154 = vld [vmem:[%s26] sm:$0xff]
        %v1155 = vld [vmem:[%s26 + $0x8] sm:$0xff]
        %v1156 = vld [vmem:[%s1] sm:$0xff]
        %v1157 = vld [vmem:[%s1 + $0x8] sm:$0xff]
        %v1158 = vlaneseq
        %v1159 = vshrl.u32 %v1158, 7
        %v1160 = vlaneseq
        %v1161 = vand.u32 %v1160, 127
        %vm1162 = vcmp.gt.s32.totalorder %v1161, %v1159
        %v1163 = vsel %vm1162, -1e+09, 0.0
        %v1164 = vld [vmem:[%s2] sm:$0x1]
        %v1165 = vld [vmem:[%s2 + $0x1] sm:$0x1]
        %v1168 = vlaneseq
        %v1169 = vshrl.u32 %v1168, 7
        %v1170 = vsub.s32 0, %v1169
        %v1171 = vrot.slane %v1164, %v1170
        %v1172 = vlaneseq
        %v1173 = vshrl.u32 %v1172, 7
        %v1174 = vsub.s32 0, %v1173
        %v1175 = vrot.slane %v1165, %v1174
        %v1178 = vadd.f32 %v1163, %v1171
        %v1179 = vadd.f32 %v1163, %v1175
        %v1180 = vld [vmem:[%s1087] sm:$0xff]
        %v1181 = vld [vmem:[%s1087 + $0x8] sm:$0xf]
        %v1182 = vld [vmem:[%s1087 + $0xc] sm:$0xff]
        %v1183 = vld [vmem:[%s1087 + $0x14] sm:$0xf]
        %v1184 = vld [vmem:[%s1087 + $0x18] sm:$0xff]
        %v1185 = vld [vmem:[%s1087 + $0x20] sm:$0xf]
        %v1186 = vld [vmem:[%s1087 + $0x24] sm:$0xff]
        %v1187 = vld [vmem:[%s1087 + $0x2c] sm:$0xf]
        %v1188 = vld [vmem:[%s1087 + $0x30] sm:$0xff]
        %v1189 = vld [vmem:[%s1087 + $0x38] sm:$0xf]
        %v1190 = vld [vmem:[%s1087 + $0x3c] sm:$0xff]
        %v1191 = vld [vmem:[%s1087 + $0x44] sm:$0xf]
        %v1192 = vld [vmem:[%s1087 + $0x48] sm:$0xff]
        %v1193 = vld [vmem:[%s1087 + $0x50] sm:$0xf]
        %v1194 = vld [vmem:[%s1087 + $0x54] sm:$0xff]
        %v1195 = vld [vmem:[%s1087 + $0x5c] sm:$0xf]
        %v1196 = vld [vmem:[%s1087 + $0x60] sm:$0xff]
        %v1197 = vld [vmem:[%s1087 + $0x68] sm:$0xf]
        %v1198 = vld [vmem:[%s1087 + $0x6c] sm:$0xff]
        %v1199 = vld [vmem:[%s1087 + $0x74] sm:$0xf]
        %v1200 = vld [vmem:[%s1087 + $0x78] sm:$0xff]
        %v1201 = vld [vmem:[%s1087 + $0x80] sm:$0xf]
        %v1202 = vld [vmem:[%s1087 + $0x84] sm:$0xff]
        %v1203 = vld [vmem:[%s1087 + $0x8c] sm:$0xf]
        %v1204 = vld [vmem:[%s1087 + $0x90] sm:$0xff]
        %v1205 = vld [vmem:[%s1087 + $0x98] sm:$0xf]
        %v1206 = vld [vmem:[%s1087 + $0x9c] sm:$0xff]
        %v1207 = vld [vmem:[%s1087 + $0xa4] sm:$0xf]
        %v1208 = vld [vmem:[%s1087 + $0xa8] sm:$0xff]
        %v1209 = vld [vmem:[%s1087 + $0xb0] sm:$0xf]
        %v1210 = vld [vmem:[%s1087 + $0xb4] sm:$0xff]
        %v1211 = vld [vmem:[%s1087 + $0xbc] sm:$0xf]
        %v1212 = vld [vmem:[%s1091] sm:$0x7]
        %v1213 = vld [vmem:[%s1096] sm:$0xf]
        %v1214 = vld [vmem:[%s1096 + $0x4] sm:$0xf]
        %v1215 = vld [vmem:[%s1096 + $0x8] sm:$0xf]
        %v1216 = vld [vmem:[%s1096 + $0xc] sm:$0xf]
        %v1217 = vld [vmem:[%s1096 + $0x10] sm:$0xf]
        %v1218 = vld [vmem:[%s1096 + $0x14] sm:$0xf]
        %v1219 = vld [vmem:[%s1096 + $0x18] sm:$0xf]
        %v1220 = vld [vmem:[%s1096 + $0x1c] sm:$0xf]
        %v1221 = vld [vmem:[%s1096 + $0x20] sm:$0xf]
        %v1222 = vld [vmem:[%s1096 + $0x24] sm:$0xf]
        %v1223 = vld [vmem:[%s1096 + $0x28] sm:$0xf]
        %v1224 = vld [vmem:[%s1096 + $0x2c] sm:$0xf]
        %v1225 = vld [vmem:[%s1096 + $0x30] sm:$0xf]
        %v1226 = vld [vmem:[%s1096 + $0x34] sm:$0xf]
        %v1227 = vld [vmem:[%s1096 + $0x38] sm:$0xf]
        %v1228 = vld [vmem:[%s1096 + $0x3c] sm:$0xf]
        %v1229 = vld [vmem:[%s1099] sm:$0x1]
        %v1230 = vpack.c.bf16 %v1155, %v1154
        %v1232 = vlaneseq
        %v1233 = vshrl.u32 %v1232, 7
        %v1234 = vsub.s32 0, %v1233
        %v1235 = vrot.slane %v1212, %v1234
        %v1236 = vlaneseq
        %v1237 = vshrl.u32 %v1236, 7
        %v1238 = vsub.s32 1, %v1237
        %v1239 = vrot.slane %v1212, %v1238
        %v1240 = vlaneseq
        %v1241 = vshrl.u32 %v1240, 7
        %v1242 = vsub.s32 2, %v1241
        %v1243 = vrot.slane %v1212, %v1242
        %v1279 = vunpack.c.l.b16 %v1180
        %v1280 = vunpack.c.h.b16 %v1180
        %v1281 = vunpack.c.l.b16 %v1181
        %v1282 = vunpack.c.l.b16 %v1182
        %v1283 = vunpack.c.h.b16 %v1182
        %v1284 = vunpack.c.l.b16 %v1183
        %v1285 = vunpack.c.l.b16 %v1184
        %v1286 = vunpack.c.h.b16 %v1184
        %v1287 = vunpack.c.l.b16 %v1185
        %v1288 = vunpack.c.l.b16 %v1186
        %v1289 = vunpack.c.h.b16 %v1186
        %v1290 = vunpack.c.l.b16 %v1187
        %v1291 = vunpack.c.l.b16 %v1188
        %v1292 = vunpack.c.h.b16 %v1188
        %v1293 = vunpack.c.l.b16 %v1189
        %v1294 = vunpack.c.l.b16 %v1190
        %v1295 = vunpack.c.h.b16 %v1190
        %v1296 = vunpack.c.l.b16 %v1191
        %v1297 = vunpack.c.l.b16 %v1192
        %v1298 = vunpack.c.h.b16 %v1192
        %v1299 = vunpack.c.l.b16 %v1193
        %v1300 = vunpack.c.l.b16 %v1194
        %v1301 = vunpack.c.h.b16 %v1194
        %v1302 = vunpack.c.l.b16 %v1195
        %v1303 = vunpack.c.l.b16 %v1196
        %v1304 = vunpack.c.h.b16 %v1196
        %v1305 = vunpack.c.l.b16 %v1197
        %v1306 = vunpack.c.l.b16 %v1198
        %v1307 = vunpack.c.h.b16 %v1198
        %v1308 = vunpack.c.l.b16 %v1199
        %v1309 = vunpack.c.l.b16 %v1200
        %v1310 = vunpack.c.h.b16 %v1200
        %v1311 = vunpack.c.l.b16 %v1201
        %v1312 = vunpack.c.l.b16 %v1202
        %v1313 = vunpack.c.h.b16 %v1202
        %v1314 = vunpack.c.l.b16 %v1203
        %v1315 = vunpack.c.l.b16 %v1204
        %v1316 = vunpack.c.h.b16 %v1204
        %v1317 = vunpack.c.l.b16 %v1205
        %v1318 = vunpack.c.l.b16 %v1206
        %v1319 = vunpack.c.h.b16 %v1206
        %v1320 = vunpack.c.l.b16 %v1207
        %v1321 = vunpack.c.l.b16 %v1208
        %v1322 = vunpack.c.h.b16 %v1208
        %v1323 = vunpack.c.l.b16 %v1209
        %v1324 = vunpack.c.l.b16 %v1210
        %v1325 = vunpack.c.h.b16 %v1210
        %v1326 = vunpack.c.l.b16 %v1211
        %v1327 = vpack.c.b16 %v1282, %v1279
        %v1328 = vpack.c.b16 %v1283, %v1280
        %v1329 = vpack.c.b16 %v1284, %v1281
        %v1330 = vpack.c.b16 %v1288, %v1285
        %v1331 = vpack.c.b16 %v1289, %v1286
        %v1332 = vpack.c.b16 %v1290, %v1287
        %v1333 = vpack.c.b16 %v1294, %v1291
        %v1334 = vpack.c.b16 %v1295, %v1292
        %v1335 = vpack.c.b16 %v1296, %v1293
        %v1336 = vpack.c.b16 %v1300, %v1297
        %v1337 = vpack.c.b16 %v1301, %v1298
        %v1338 = vpack.c.b16 %v1302, %v1299
        %v1339 = vpack.c.b16 %v1306, %v1303
        %v1340 = vpack.c.b16 %v1307, %v1304
        %v1341 = vpack.c.b16 %v1308, %v1305
        %v1342 = vpack.c.b16 %v1312, %v1309
        %v1343 = vpack.c.b16 %v1313, %v1310
        %v1344 = vpack.c.b16 %v1314, %v1311
        %v1345 = vpack.c.b16 %v1318, %v1315
        %v1346 = vpack.c.b16 %v1319, %v1316
        %v1347 = vpack.c.b16 %v1320, %v1317
        %v1348 = vpack.c.b16 %v1324, %v1321
        %v1349 = vpack.c.b16 %v1325, %v1322
        %v1350 = vpack.c.b16 %v1326, %v1323
        %1375 = vmatprep.subr.bf16.mxu0 %v1349
        %1376 = vmatpush1.bf16.msra.mxu0 %v1348
        %1377 = vmatprep.subr.bf16.mxu0 %v1346
        %1378 = vmatpush1.bf16.msra.mxu0 %v1345
        %1379 = vmatprep.subr.bf16.mxu0 %v1343
        %1380 = vmatpush1.bf16.msra.mxu0 %v1342
        %1381 = vmatprep.subr.bf16.mxu0 %v1340
        %1382 = vmatpush1.bf16.msra.mxu0 %v1339
        %1383 = vmatprep.subr.bf16.mxu0 %v1337
        %1384 = vmatpush1.bf16.msra.mxu0 %v1336
        %1385 = vmatprep.subr.bf16.mxu0 %v1334
        %1386 = vmatpush1.bf16.msra.mxu0 %v1333
        %1387 = vmatprep.subr.bf16.mxu0 %v1331
        %1388 = vmatpush1.bf16.msra.mxu0 %v1330
        %1389 = vmatprep.subr.bf16.mxu0 %v1328
        %1390 = vmatpush1.bf16.msra.mxu0 %v1327
        %1391 = vmatprep.subr.bf16.mxu0 0
        %1392 = vmatpush2.bf16.msra.mxu0 0
        %1393 = vmatprep.subr.bf16.mxu0 0
        %1394 = vmatpush2.bf16.msra.mxu0 0
        %1395 = vmatprep.subr.bf16.mxu0 0
        %1396 = vmatpush2.bf16.msra.mxu0 0
        %1397 = vmatprep.subr.bf16.mxu0 0
        %1398 = vmatpush2.bf16.msra.mxu0 0
        %1399 = vmatprep.subr.bf16.mxu0 0
        %1400 = vmatpush2.bf16.msra.mxu0 0
        %1401 = vmatprep.subr.bf16.mxu0 0
        %1402 = vmatpush2.bf16.msra.mxu0 0
        %1403 = vmatprep.subr.bf16.mxu0 0
        %1404 = vmatpush2.bf16.msra.mxu0 0
        %1405 = vmatprep.subr.bf16.mxu0 0
        %1406 = vmatpush2.bf16.msra.mxu0 0
        %1407 = vmatprep.mubr.bf16.mxu0 0
        %1408 = vmatmul.mubr.bf16.gmra.mxu0 %v1230
        %v1409 = vpop.f32.mrf.mxu0
        %v1410 = vadd.f32 %v1235, %v1409
        %v1411 = vpop.f32.mrf.mxu0
        %v1412 = vadd.f32 %v1239, %v1411
        %v1413 = vpop.f32.mrf.mxu0
        %v1414 = vadd.f32 %v1235, %v1413
        %v1415 = vpop.f32.mrf.mxu0
        %v1416 = vadd.f32 %v1239, %v1415
        %1417 = vdwg.mxu0
        %1418 = vmatprep.subr.bf16.mxu0 0
        %1419 = vmatpush1.bf16.msra.mxu0 %v1350
        %1420 = vmatprep.subr.bf16.mxu0 0
        %1421 = vmatpush1.bf16.msra.mxu0 %v1347
        %1422 = vmatprep.subr.bf16.mxu0 0
        %1423 = vmatpush1.bf16.msra.mxu0 %v1344
        %1424 = vmatprep.subr.bf16.mxu0 0
        %1425 = vmatpush1.bf16.msra.mxu0 %v1341
        %1426 = vmatprep.subr.bf16.mxu0 0
        %1427 = vmatpush1.bf16.msra.mxu0 %v1338
        %1428 = vmatprep.subr.bf16.mxu0 0
        %1429 = vmatpush1.bf16.msra.mxu0 %v1335
        %1430 = vmatprep.subr.bf16.mxu0 0
        %1431 = vmatpush1.bf16.msra.mxu0 %v1332
        %1432 = vmatprep.subr.bf16.mxu0 0
        %1433 = vmatpush1.bf16.msra.mxu0 %v1329
        %1434 = vmatprep.subr.bf16.mxu0 0
        %1435 = vmatpush2.bf16.msra.mxu0 0
        %1436 = vmatprep.subr.bf16.mxu0 0
        %1437 = vmatpush2.bf16.msra.mxu0 0
        %1438 = vmatprep.subr.bf16.mxu0 0
        %1439 = vmatpush2.bf16.msra.mxu0 0
        %1440 = vmatprep.subr.bf16.mxu0 0
        %1441 = vmatpush2.bf16.msra.mxu0 0
        %1442 = vmatprep.subr.bf16.mxu0 0
        %1443 = vmatpush2.bf16.msra.mxu0 0
        %1444 = vmatprep.subr.bf16.mxu0 0
        %1445 = vmatpush2.bf16.msra.mxu0 0
        %1446 = vmatprep.subr.bf16.mxu0 0
        %1447 = vmatpush2.bf16.msra.mxu0 0
        %1448 = vmatprep.subr.bf16.mxu0 0
        %1449 = vmatpush2.bf16.msra.mxu0 0
        %1450 = vmatprep.mubr.bf16.mxu0 0
        %1451 = vmatmul.mubr.bf16.gmra.mxu0 %v1230
        %v1452 = vpop.f32.mrf.mxu0
        %v1453 = vadd.f32 %v1243, %v1452
        %v1454 = vpop.f32.mrf.mxu0
        %v1455 = vpop.f32.mrf.mxu0
        %v1456 = vadd.f32 %v1243, %v1455
        %v1457 = vpop.f32.mrf.mxu0
        %1458 = vdwg.mxu0
        %1461 = vrot.lane.b32.xlu0 %v1410, 96
        %v1462 = vpop.permute.xlu0 %1461
        %1463 = vrot.lane.b32.xlu0 %v1414, 96
        %v1464 = vpop.permute.xlu0 %1463
        %1467 = vrot.lane.b32.xlu0 %v1410, 64
        %v1468 = vpop.permute.xlu0 %1467
        %1469 = vrot.lane.b32.xlu0 %v1414, 64
        %v1470 = vpop.permute.xlu0 %1469
        %1473 = vrot.lane.b32.xlu0 %v1410, 32
        %v1474 = vpop.permute.xlu0 %1473
        %1475 = vrot.lane.b32.xlu0 %v1414, 32
        %v1476 = vpop.permute.xlu0 %1475
        %v1479 = vcombine.low %v1410, %v1468
        %v1480 = vcombine.high %v1410, %v1468
        %v1482 = vunpack.c.l.s4 1983009808
        %v1483 = vunpack.c.0.s8 %v1482
        %v1484 = vlaneseq
        %v1485 = vshrl.u32 %v1484, 7
        %v1486 = vsub.s32 %v1483, %v1485
        %v1487 = vrot.slane %v1479, %v1486
        %v1489 = vunpack.c.l.s4 1983009808
        %v1490 = vunpack.c.0.s8 %v1489
        %v1491 = vlaneseq
        %v1492 = vshrl.u32 %v1491, 7
        %v1493 = vsub.s32 %v1490, %v1492
        %v1494 = vrot.slane %v1480, %v1493
        %v1495 = vcombine.low %v1462, %v1474
        %v1496 = vcombine.high %v1462, %v1474
        %v1498 = vunpack.c.l.s4 1983009808
        %v1499 = vunpack.c.0.s8 %v1498
        %v1500 = vlaneseq
        %v1501 = vshrl.u32 %v1500, 7
        %v1502 = vsub.s32 %v1499, %v1501
        %v1503 = vrot.slane %v1495, %v1502
        %v1505 = vunpack.c.l.s4 1983009808
        %v1506 = vunpack.c.0.s8 %v1505
        %v1507 = vlaneseq
        %v1508 = vshrl.u32 %v1507, 7
        %v1509 = vsub.s32 %v1506, %v1508
        %v1510 = vrot.slane %v1496, %v1509
        %v1511 = vcombine.low %v1487, %v1503
        %v1512 = vcombine.high %v1487, %v1503
        %v1514 = vunpack.c.l.s4 1934713408
        %v1515 = vunpack.c.0.s8 %v1514
        %v1516 = vlaneseq
        %v1517 = vshrl.u32 %v1516, 7
        %v1518 = vsub.s32 %v1515, %v1517
        %v1519 = vrot.slane %v1511, %v1518
        %v1521 = vunpack.c.l.s4 1934713408
        %v1522 = vunpack.c.0.s8 %v1521
        %v1523 = vlaneseq
        %v1524 = vshrl.u32 %v1523, 7
        %v1525 = vsub.s32 %v1522, %v1524
        %v1526 = vrot.slane %v1512, %v1525
        %v1527 = vcombine.low %v1494, %v1510
        %v1528 = vcombine.high %v1494, %v1510
        %v1530 = vunpack.c.l.s4 1934713408
        %v1531 = vunpack.c.0.s8 %v1530
        %v1532 = vlaneseq
        %v1533 = vshrl.u32 %v1532, 7
        %v1534 = vsub.s32 %v1531, %v1533
        %v1535 = vrot.slane %v1527, %v1534
        %v1537 = vunpack.c.l.s4 1934713408
        %v1538 = vunpack.c.0.s8 %v1537
        %v1539 = vlaneseq
        %v1540 = vshrl.u32 %v1539, 7
        %v1541 = vsub.s32 %v1538, %v1540
        %v1542 = vrot.slane %v1528, %v1541
        %v1543 = vcombine.high %v1519, 0.0
        %v1544 = vcombine.high %v1526, 0.0
        %v1545 = vcombine.high %v1535, 0.0
        %v1546 = vcombine.high %v1542, 0.0
        %v1547 = vcombine.low %v1414, %v1470
        %v1548 = vcombine.high %v1414, %v1470
        %v1550 = vunpack.c.l.s4 1983009808
        %v1551 = vunpack.c.0.s8 %v1550
        %v1552 = vlaneseq
        %v1553 = vshrl.u32 %v1552, 7
        %v1554 = vsub.s32 %v1551, %v1553
        %v1555 = vrot.slane %v1547, %v1554
        %v1557 = vunpack.c.l.s4 1983009808
        %v1558 = vunpack.c.0.s8 %v1557
        %v1559 = vlaneseq
        %v1560 = vshrl.u32 %v1559, 7
        %v1561 = vsub.s32 %v1558, %v1560
        %v1562 = vrot.slane %v1548, %v1561
        %v1563 = vcombine.low %v1464, %v1476
        %v1564 = vcombine.high %v1464, %v1476
        %v1566 = vunpack.c.l.s4 1983009808
        %v1567 = vunpack.c.0.s8 %v1566
        %v1568 = vlaneseq
        %v1569 = vshrl.u32 %v1568, 7
        %v1570 = vsub.s32 %v1567, %v1569
        %v1571 = vrot.slane %v1563, %v1570
        %v1573 = vunpack.c.l.s4 1983009808
        %v1574 = vunpack.c.0.s8 %v1573
        %v1575 = vlaneseq
        %v1576 = vshrl.u32 %v1575, 7
        %v1577 = vsub.s32 %v1574, %v1576
        %v1578 = vrot.slane %v1564, %v1577
        %v1579 = vcombine.low %v1555, %v1571
        %v1580 = vcombine.high %v1555, %v1571
        %v1582 = vunpack.c.l.s4 1934713408
        %v1583 = vunpack.c.0.s8 %v1582
        %v1584 = vlaneseq
        %v1585 = vshrl.u32 %v1584, 7
        %v1586 = vsub.s32 %v1583, %v1585
        %v1587 = vrot.slane %v1579, %v1586
        %v1589 = vunpack.c.l.s4 1934713408
        %v1590 = vunpack.c.0.s8 %v1589
        %v1591 = vlaneseq
        %v1592 = vshrl.u32 %v1591, 7
        %v1593 = vsub.s32 %v1590, %v1592
        %v1594 = vrot.slane %v1580, %v1593
        %v1595 = vcombine.low %v1562, %v1578
        %v1596 = vcombine.high %v1562, %v1578
        %v1598 = vunpack.c.l.s4 1934713408
        %v1599 = vunpack.c.0.s8 %v1598
        %v1600 = vlaneseq
        %v1601 = vshrl.u32 %v1600, 7
        %v1602 = vsub.s32 %v1599, %v1601
        %v1603 = vrot.slane %v1595, %v1602
        %v1605 = vunpack.c.l.s4 1934713408
        %v1606 = vunpack.c.0.s8 %v1605
        %v1607 = vlaneseq
        %v1608 = vshrl.u32 %v1607, 7
        %v1609 = vsub.s32 %v1606, %v1608
        %v1610 = vrot.slane %v1596, %v1609
        %v1611 = vcombine.high %v1587, 0.0
        %v1612 = vcombine.high %v1594, 0.0
        %v1613 = vcombine.high %v1603, 0.0
        %v1614 = vcombine.high %v1610, 0.0
        %v1615 = vcombine.low %v1519, %v1526
        %v1617 = vunpack.c.l.s4 1983009808
        %v1618 = vunpack.c.0.s8 %v1617
        %v1619 = vlaneseq
        %v1620 = vshrl.u32 %v1619, 7
        %v1621 = vsub.s32 %v1618, %v1620
        %v1622 = vrot.slane %v1615, %v1621
        %v1623 = vcombine.low %v1543, %v1544
        %v1625 = vunpack.c.l.s4 1983009808
        %v1626 = vunpack.c.0.s8 %v1625
        %v1627 = vlaneseq
        %v1628 = vshrl.u32 %v1627, 7
        %v1629 = vsub.s32 %v1626, %v1628
        %v1630 = vrot.slane %v1623, %v1629
        %v1631 = vcombine.low %v1535, %v1542
        %v1633 = vunpack.c.l.s4 1983009808
        %v1634 = vunpack.c.0.s8 %v1633
        %v1635 = vlaneseq
        %v1636 = vshrl.u32 %v1635, 7
        %v1637 = vsub.s32 %v1634, %v1636
        %v1638 = vrot.slane %v1631, %v1637
        %v1639 = vcombine.low %v1545, %v1546
        %v1641 = vunpack.c.l.s4 1983009808
        %v1642 = vunpack.c.0.s8 %v1641
        %v1643 = vlaneseq
        %v1644 = vshrl.u32 %v1643, 7
        %v1645 = vsub.s32 %v1642, %v1644
        %v1646 = vrot.slane %v1639, %v1645
        %v1647 = vcombine.low %v1622, %v1630
        %v1648 = vcombine.high %v1622, %v1630
        %v1650 = vunpack.c.l.s4 1934713408
        %v1651 = vunpack.c.0.s8 %v1650
        %v1652 = vlaneseq
        %v1653 = vshrl.u32 %v1652, 7
        %v1654 = vsub.s32 %v1651, %v1653
        %v1655 = vrot.slane %v1647, %v1654
        %v1657 = vunpack.c.l.s4 1934713408
        %v1658 = vunpack.c.0.s8 %v1657
        %v1659 = vlaneseq
        %v1660 = vshrl.u32 %v1659, 7
        %v1661 = vsub.s32 %v1658, %v1660
        %v1662 = vrot.slane %v1648, %v1661
        %v1663 = vcombine.low %v1638, %v1646
        %v1664 = vcombine.high %v1638, %v1646
        %v1666 = vunpack.c.l.s4 1934713408
        %v1667 = vunpack.c.0.s8 %v1666
        %v1668 = vlaneseq
        %v1669 = vshrl.u32 %v1668, 7
        %v1670 = vsub.s32 %v1667, %v1669
        %v1671 = vrot.slane %v1663, %v1670
        %v1673 = vunpack.c.l.s4 1934713408
        %v1674 = vunpack.c.0.s8 %v1673
        %v1675 = vlaneseq
        %v1676 = vshrl.u32 %v1675, 7
        %v1677 = vsub.s32 %v1674, %v1676
        %v1678 = vrot.slane %v1664, %v1677
        %v1679 = vcombine.low %v1655, %v1671
        %v1680 = vcombine.high %v1655, %v1671
        %v1681 = vcombine.low %v1662, %v1678
        %v1682 = vcombine.high %v1662, %v1678
        %v1683 = vcombine.low %v1587, %v1594
        %v1685 = vunpack.c.l.s4 1983009808
        %v1686 = vunpack.c.0.s8 %v1685
        %v1687 = vlaneseq
        %v1688 = vshrl.u32 %v1687, 7
        %v1689 = vsub.s32 %v1686, %v1688
        %v1690 = vrot.slane %v1683, %v1689
        %v1691 = vcombine.low %v1611, %v1612
        %v1693 = vunpack.c.l.s4 1983009808
        %v1694 = vunpack.c.0.s8 %v1693
        %v1695 = vlaneseq
        %v1696 = vshrl.u32 %v1695, 7
        %v1697 = vsub.s32 %v1694, %v1696
        %v1698 = vrot.slane %v1691, %v1697
        %v1699 = vcombine.low %v1603, %v1610
        %v1701 = vunpack.c.l.s4 1983009808
        %v1702 = vunpack.c.0.s8 %v1701
        %v1703 = vlaneseq
        %v1704 = vshrl.u32 %v1703, 7
        %v1705 = vsub.s32 %v1702, %v1704
        %v1706 = vrot.slane %v1699, %v1705
        %v1707 = vcombine.low %v1613, %v1614
        %v1709 = vunpack.c.l.s4 1983009808
        %v1710 = vunpack.c.0.s8 %v1709
        %v1711 = vlaneseq
        %v1712 = vshrl.u32 %v1711, 7
        %v1713 = vsub.s32 %v1710, %v1712
        %v1714 = vrot.slane %v1707, %v1713
        %v1715 = vcombine.low %v1690, %v1698
        %v1716 = vcombine.high %v1690, %v1698
        %v1718 = vunpack.c.l.s4 1934713408
        %v1719 = vunpack.c.0.s8 %v1718
        %v1720 = vlaneseq
        %v1721 = vshrl.u32 %v1720, 7
        %v1722 = vsub.s32 %v1719, %v1721
        %v1723 = vrot.slane %v1715, %v1722
        %v1725 = vunpack.c.l.s4 1934713408
        %v1726 = vunpack.c.0.s8 %v1725
        %v1727 = vlaneseq
        %v1728 = vshrl.u32 %v1727, 7
        %v1729 = vsub.s32 %v1726, %v1728
        %v1730 = vrot.slane %v1716, %v1729
        %v1731 = vcombine.low %v1706, %v1714
        %v1732 = vcombine.high %v1706, %v1714
        %v1734 = vunpack.c.l.s4 1934713408
        %v1735 = vunpack.c.0.s8 %v1734
        %v1736 = vlaneseq
        %v1737 = vshrl.u32 %v1736, 7
        %v1738 = vsub.s32 %v1735, %v1737
        %v1739 = vrot.slane %v1731, %v1738
        %v1741 = vunpack.c.l.s4 1934713408
        %v1742 = vunpack.c.0.s8 %v1741
        %v1743 = vlaneseq
        %v1744 = vshrl.u32 %v1743, 7
        %v1745 = vsub.s32 %v1742, %v1744
        %v1746 = vrot.slane %v1732, %v1745
        %v1747 = vcombine.low %v1723, %v1739
        %v1748 = vcombine.high %v1723, %v1739
        %v1749 = vcombine.low %v1730, %v1746
        %v1750 = vcombine.high %v1730, %v1746
        %v1751 = vpack.c.bf16 %v1679, %v1679
        %v1752 = vpack.c.bf16 %v1680, %v1680
        %v1753 = vpack.c.bf16 %v1681, %v1681
        %v1754 = vpack.c.bf16 %v1682, %v1682
        %v1755 = vpack.c.bf16 %v1747, %v1747
        %v1756 = vpack.c.bf16 %v1748, %v1748
        %v1757 = vpack.c.bf16 %v1749, %v1749
        %v1758 = vpack.c.bf16 %v1750, %v1750
        %1761 = vrot.lane.b32.xlu0 %v1412, 96
        %v1762 = vpop.permute.xlu0 %1761
        %1763 = vrot.lane.b32.xlu0 %v1416, 96
        %v1764 = vpop.permute.xlu0 %1763
        %1767 = vrot.lane.b32.xlu0 %v1412, 64
        %v1768 = vpop.permute.xlu0 %1767
        %1769 = vrot.lane.b32.xlu0 %v1416, 64
        %v1770 = vpop.permute.xlu0 %1769
        %1773 = vrot.lane.b32.xlu0 %v1412, 32
        %v1774 = vpop.permute.xlu0 %1773
        %1775 = vrot.lane.b32.xlu0 %v1416, 32
        %v1776 = vpop.permute.xlu0 %1775
        %v1779 = vcombine.low %v1412, %v1768
        %v1780 = vcombine.high %v1412, %v1768
        %v1782 = vunpack.c.l.s4 1983009808
        %v1783 = vunpack.c.0.s8 %v1782
        %v1784 = vlaneseq
        %v1785 = vshrl.u32 %v1784, 7
        %v1786 = vsub.s32 %v1783, %v1785
        %v1787 = vrot.slane %v1779, %v1786
        %v1789 = vunpack.c.l.s4 1983009808
        %v1790 = vunpack.c.0.s8 %v1789
        %v1791 = vlaneseq
        %v1792 = vshrl.u32 %v1791, 7
        %v1793 = vsub.s32 %v1790, %v1792
        %v1794 = vrot.slane %v1780, %v1793
        %v1795 = vcombine.low %v1762, %v1774
        %v1796 = vcombine.high %v1762, %v1774
        %v1798 = vunpack.c.l.s4 1983009808
        %v1799 = vunpack.c.0.s8 %v1798
        %v1800 = vlaneseq
        %v1801 = vshrl.u32 %v1800, 7
        %v1802 = vsub.s32 %v1799, %v1801
        %v1803 = vrot.slane %v1795, %v1802
        %v1805 = vunpack.c.l.s4 1983009808
        %v1806 = vunpack.c.0.s8 %v1805
        %v1807 = vlaneseq
        %v1808 = vshrl.u32 %v1807, 7
        %v1809 = vsub.s32 %v1806, %v1808
        %v1810 = vrot.slane %v1796, %v1809
        %v1811 = vcombine.low %v1787, %v1803
        %v1812 = vcombine.high %v1787, %v1803
        %v1814 = vunpack.c.l.s4 1934713408
        %v1815 = vunpack.c.0.s8 %v1814
        %v1816 = vlaneseq
        %v1817 = vshrl.u32 %v1816, 7
        %v1818 = vsub.s32 %v1815, %v1817
        %v1819 = vrot.slane %v1811, %v1818
        %v1821 = vunpack.c.l.s4 1934713408
        %v1822 = vunpack.c.0.s8 %v1821
        %v1823 = vlaneseq
        %v1824 = vshrl.u32 %v1823, 7
        %v1825 = vsub.s32 %v1822, %v1824
        %v1826 = vrot.slane %v1812, %v1825
        %v1827 = vcombine.low %v1794, %v1810
        %v1828 = vcombine.high %v1794, %v1810
        %v1830 = vunpack.c.l.s4 1934713408
        %v1831 = vunpack.c.0.s8 %v1830
        %v1832 = vlaneseq
        %v1833 = vshrl.u32 %v1832, 7
        %v1834 = vsub.s32 %v1831, %v1833
        %v1835 = vrot.slane %v1827, %v1834
        %v1837 = vunpack.c.l.s4 1934713408
        %v1838 = vunpack.c.0.s8 %v1837
        %v1839 = vlaneseq
        %v1840 = vshrl.u32 %v1839, 7
        %v1841 = vsub.s32 %v1838, %v1840
        %v1842 = vrot.slane %v1828, %v1841
        %v1843 = vcombine.high %v1819, 0.0
        %v1844 = vcombine.high %v1826, 0.0
        %v1845 = vcombine.high %v1835, 0.0
        %v1846 = vcombine.high %v1842, 0.0
        %v1847 = vcombine.low %v1416, %v1770
        %v1848 = vcombine.high %v1416, %v1770
        %v1850 = vunpack.c.l.s4 1983009808
        %v1851 = vunpack.c.0.s8 %v1850
        %v1852 = vlaneseq
        %v1853 = vshrl.u32 %v1852, 7
        %v1854 = vsub.s32 %v1851, %v1853
        %v1855 = vrot.slane %v1847, %v1854
        %v1857 = vunpack.c.l.s4 1983009808
        %v1858 = vunpack.c.0.s8 %v1857
        %v1859 = vlaneseq
        %v1860 = vshrl.u32 %v1859, 7
        %v1861 = vsub.s32 %v1858, %v1860
        %v1862 = vrot.slane %v1848, %v1861
        %v1863 = vcombine.low %v1764, %v1776
        %v1864 = vcombine.high %v1764, %v1776
        %v1866 = vunpack.c.l.s4 1983009808
        %v1867 = vunpack.c.0.s8 %v1866
        %v1868 = vlaneseq
        %v1869 = vshrl.u32 %v1868, 7
        %v1870 = vsub.s32 %v1867, %v1869
        %v1871 = vrot.slane %v1863, %v1870
        %v1873 = vunpack.c.l.s4 1983009808
        %v1874 = vunpack.c.0.s8 %v1873
        %v1875 = vlaneseq
        %v1876 = vshrl.u32 %v1875, 7
        %v1877 = vsub.s32 %v1874, %v1876
        %v1878 = vrot.slane %v1864, %v1877
        %v1879 = vcombine.low %v1855, %v1871
        %v1880 = vcombine.high %v1855, %v1871
        %v1882 = vunpack.c.l.s4 1934713408
        %v1883 = vunpack.c.0.s8 %v1882
        %v1884 = vlaneseq
        %v1885 = vshrl.u32 %v1884, 7
        %v1886 = vsub.s32 %v1883, %v1885
        %v1887 = vrot.slane %v1879, %v1886
        %v1889 = vunpack.c.l.s4 1934713408
        %v1890 = vunpack.c.0.s8 %v1889
        %v1891 = vlaneseq
        %v1892 = vshrl.u32 %v1891, 7
        %v1893 = vsub.s32 %v1890, %v1892
        %v1894 = vrot.slane %v1880, %v1893
        %v1895 = vcombine.low %v1862, %v1878
        %v1896 = vcombine.high %v1862, %v1878
        %v1898 = vunpack.c.l.s4 1934713408
        %v1899 = vunpack.c.0.s8 %v1898
        %v1900 = vlaneseq
        %v1901 = vshrl.u32 %v1900, 7
        %v1902 = vsub.s32 %v1899, %v1901
        %v1903 = vrot.slane %v1895, %v1902
        %v1905 = vunpack.c.l.s4 1934713408
        %v1906 = vunpack.c.0.s8 %v1905
        %v1907 = vlaneseq
        %v1908 = vshrl.u32 %v1907, 7
        %v1909 = vsub.s32 %v1906, %v1908
        %v1910 = vrot.slane %v1896, %v1909
        %v1911 = vcombine.high %v1887, 0.0
        %v1912 = vcombine.high %v1894, 0.0
        %v1913 = vcombine.high %v1903, 0.0
        %v1914 = vcombine.high %v1910, 0.0
        %v1915 = vcombine.low %v1819, %v1826
        %v1917 = vunpack.c.l.s4 1983009808
        %v1918 = vunpack.c.0.s8 %v1917
        %v1919 = vlaneseq
        %v1920 = vshrl.u32 %v1919, 7
        %v1921 = vsub.s32 %v1918, %v1920
        %v1922 = vrot.slane %v1915, %v1921
        %v1923 = vcombine.low %v1843, %v1844
        %v1925 = vunpack.c.l.s4 1983009808
        %v1926 = vunpack.c.0.s8 %v1925
        %v1927 = vlaneseq
        %v1928 = vshrl.u32 %v1927, 7
        %v1929 = vsub.s32 %v1926, %v1928
        %v1930 = vrot.slane %v1923, %v1929
        %v1931 = vcombine.low %v1835, %v1842
        %v1933 = vunpack.c.l.s4 1983009808
        %v1934 = vunpack.c.0.s8 %v1933
        %v1935 = vlaneseq
        %v1936 = vshrl.u32 %v1935, 7
        %v1937 = vsub.s32 %v1934, %v1936
        %v1938 = vrot.slane %v1931, %v1937
        %v1939 = vcombine.low %v1845, %v1846
        %v1941 = vunpack.c.l.s4 1983009808
        %v1942 = vunpack.c.0.s8 %v1941
        %v1943 = vlaneseq
        %v1944 = vshrl.u32 %v1943, 7
        %v1945 = vsub.s32 %v1942, %v1944
        %v1946 = vrot.slane %v1939, %v1945
        %v1947 = vcombine.low %v1922, %v1930
        %v1948 = vcombine.high %v1922, %v1930
        %v1950 = vunpack.c.l.s4 1934713408
        %v1951 = vunpack.c.0.s8 %v1950
        %v1952 = vlaneseq
        %v1953 = vshrl.u32 %v1952, 7
        %v1954 = vsub.s32 %v1951, %v1953
        %v1955 = vrot.slane %v1947, %v1954
        %v1957 = vunpack.c.l.s4 1934713408
        %v1958 = vunpack.c.0.s8 %v1957
        %v1959 = vlaneseq
        %v1960 = vshrl.u32 %v1959, 7
        %v1961 = vsub.s32 %v1958, %v1960
        %v1962 = vrot.slane %v1948, %v1961
        %v1963 = vcombine.low %v1938, %v1946
        %v1964 = vcombine.high %v1938, %v1946
        %v1966 = vunpack.c.l.s4 1934713408
        %v1967 = vunpack.c.0.s8 %v1966
        %v1968 = vlaneseq
        %v1969 = vshrl.u32 %v1968, 7
        %v1970 = vsub.s32 %v1967, %v1969
        %v1971 = vrot.slane %v1963, %v1970
        %v1973 = vunpack.c.l.s4 1934713408
        %v1974 = vunpack.c.0.s8 %v1973
        %v1975 = vlaneseq
        %v1976 = vshrl.u32 %v1975, 7
        %v1977 = vsub.s32 %v1974, %v1976
        %v1978 = vrot.slane %v1964, %v1977
        %v1979 = vcombine.low %v1955, %v1971
        %v1980 = vcombine.high %v1955, %v1971
        %v1981 = vcombine.low %v1962, %v1978
        %v1982 = vcombine.high %v1962, %v1978
        %v1983 = vcombine.low %v1887, %v1894
        %v1985 = vunpack.c.l.s4 1983009808
        %v1986 = vunpack.c.0.s8 %v1985
        %v1987 = vlaneseq
        %v1988 = vshrl.u32 %v1987, 7
        %v1989 = vsub.s32 %v1986, %v1988
        %v1990 = vrot.slane %v1983, %v1989
        %v1991 = vcombine.low %v1911, %v1912
        %v1993 = vunpack.c.l.s4 1983009808
        %v1994 = vunpack.c.0.s8 %v1993
        %v1995 = vlaneseq
        %v1996 = vshrl.u32 %v1995, 7
        %v1997 = vsub.s32 %v1994, %v1996
        %v1998 = vrot.slane %v1991, %v1997
        %v1999 = vcombine.low %v1903, %v1910
        %v2001 = vunpack.c.l.s4 1983009808
        %v2002 = vunpack.c.0.s8 %v2001
        %v2003 = vlaneseq
        %v2004 = vshrl.u32 %v2003, 7
        %v2005 = vsub.s32 %v2002, %v2004
        %v2006 = vrot.slane %v1999, %v2005
        %v2007 = vcombine.low %v1913, %v1914
        %v2009 = vunpack.c.l.s4 1983009808
        %v2010 = vunpack.c.0.s8 %v2009
        %v2011 = vlaneseq
        %v2012 = vshrl.u32 %v2011, 7
        %v2013 = vsub.s32 %v2010, %v2012
        %v2014 = vrot.slane %v2007, %v2013
        %v2015 = vcombine.low %v1990, %v1998
        %v2016 = vcombine.high %v1990, %v1998
        %v2018 = vunpack.c.l.s4 1934713408
        %v2019 = vunpack.c.0.s8 %v2018
        %v2020 = vlaneseq
        %v2021 = vshrl.u32 %v2020, 7
        %v2022 = vsub.s32 %v2019, %v2021
        %v2023 = vrot.slane %v2015, %v2022
        %v2025 = vunpack.c.l.s4 1934713408
        %v2026 = vunpack.c.0.s8 %v2025
        %v2027 = vlaneseq
        %v2028 = vshrl.u32 %v2027, 7
        %v2029 = vsub.s32 %v2026, %v2028
        %v2030 = vrot.slane %v2016, %v2029
        %v2031 = vcombine.low %v2006, %v2014
        %v2032 = vcombine.high %v2006, %v2014
        %v2034 = vunpack.c.l.s4 1934713408
        %v2035 = vunpack.c.0.s8 %v2034
        %v2036 = vlaneseq
        %v2037 = vshrl.u32 %v2036, 7
        %v2038 = vsub.s32 %v2035, %v2037
        %v2039 = vrot.slane %v2031, %v2038
        %v2041 = vunpack.c.l.s4 1934713408
        %v2042 = vunpack.c.0.s8 %v2041
        %v2043 = vlaneseq
        %v2044 = vshrl.u32 %v2043, 7
        %v2045 = vsub.s32 %v2042, %v2044
        %v2046 = vrot.slane %v2032, %v2045
        %v2047 = vcombine.low %v2023, %v2039
        %v2048 = vcombine.high %v2023, %v2039
        %v2049 = vcombine.low %v2030, %v2046
        %v2050 = vcombine.high %v2030, %v2046
        %v2051 = vpack.c.bf16 %v1979, %v1979
        %v2052 = vpack.c.bf16 %v1980, %v1980
        %v2053 = vpack.c.bf16 %v1981, %v1981
        %v2054 = vpack.c.bf16 %v1982, %v1982
        %v2055 = vpack.c.bf16 %v2047, %v2047
        %v2056 = vpack.c.bf16 %v2048, %v2048
        %v2057 = vpack.c.bf16 %v2049, %v2049
        %v2058 = vpack.c.bf16 %v2050, %v2050
        %2061 = vrot.lane.b32.xlu0 %v1453, 96
        %v2062 = vpop.permute.xlu0 %2061
        %2063 = vrot.lane.b32.xlu0 %v1456, 96
        %v2064 = vpop.permute.xlu0 %2063
        %2067 = vrot.lane.b32.xlu0 %v1453, 64
        %v2068 = vpop.permute.xlu0 %2067
        %2069 = vrot.lane.b32.xlu0 %v1456, 64
        %v2070 = vpop.permute.xlu0 %2069
        %2073 = vrot.lane.b32.xlu0 %v1453, 32
        %v2074 = vpop.permute.xlu0 %2073
        %2075 = vrot.lane.b32.xlu0 %v1456, 32
        %v2076 = vpop.permute.xlu0 %2075
        %v2079 = vcombine.low %v1453, %v2068
        %v2080 = vcombine.high %v1453, %v2068
        %v2082 = vunpack.c.l.s4 1983009808
        %v2083 = vunpack.c.0.s8 %v2082
        %v2084 = vlaneseq
        %v2085 = vshrl.u32 %v2084, 7
        %v2086 = vsub.s32 %v2083, %v2085
        %v2087 = vrot.slane %v2079, %v2086
        %v2089 = vunpack.c.l.s4 1983009808
        %v2090 = vunpack.c.0.s8 %v2089
        %v2091 = vlaneseq
        %v2092 = vshrl.u32 %v2091, 7
        %v2093 = vsub.s32 %v2090, %v2092
        %v2094 = vrot.slane %v2080, %v2093
        %v2095 = vcombine.low %v2062, %v2074
        %v2096 = vcombine.high %v2062, %v2074
        %v2098 = vunpack.c.l.s4 1983009808
        %v2099 = vunpack.c.0.s8 %v2098
        %v2100 = vlaneseq
        %v2101 = vshrl.u32 %v2100, 7
        %v2102 = vsub.s32 %v2099, %v2101
        %v2103 = vrot.slane %v2095, %v2102
        %v2105 = vunpack.c.l.s4 1983009808
        %v2106 = vunpack.c.0.s8 %v2105
        %v2107 = vlaneseq
        %v2108 = vshrl.u32 %v2107, 7
        %v2109 = vsub.s32 %v2106, %v2108
        %v2110 = vrot.slane %v2096, %v2109
        %v2111 = vcombine.low %v2087, %v2103
        %v2112 = vcombine.high %v2087, %v2103
        %v2114 = vunpack.c.l.s4 1934713408
        %v2115 = vunpack.c.0.s8 %v2114
        %v2116 = vlaneseq
        %v2117 = vshrl.u32 %v2116, 7
        %v2118 = vsub.s32 %v2115, %v2117
        %v2119 = vrot.slane %v2111, %v2118
        %v2121 = vunpack.c.l.s4 1934713408
        %v2122 = vunpack.c.0.s8 %v2121
        %v2123 = vlaneseq
        %v2124 = vshrl.u32 %v2123, 7
        %v2125 = vsub.s32 %v2122, %v2124
        %v2126 = vrot.slane %v2112, %v2125
        %v2127 = vcombine.low %v2094, %v2110
        %v2128 = vcombine.high %v2094, %v2110
        %v2130 = vunpack.c.l.s4 1934713408
        %v2131 = vunpack.c.0.s8 %v2130
        %v2132 = vlaneseq
        %v2133 = vshrl.u32 %v2132, 7
        %v2134 = vsub.s32 %v2131, %v2133
        %v2135 = vrot.slane %v2127, %v2134
        %v2137 = vunpack.c.l.s4 1934713408
        %v2138 = vunpack.c.0.s8 %v2137
        %v2139 = vlaneseq
        %v2140 = vshrl.u32 %v2139, 7
        %v2141 = vsub.s32 %v2138, %v2140
        %v2142 = vrot.slane %v2128, %v2141
        %v2143 = vcombine.high %v2119, 0.0
        %v2144 = vcombine.high %v2126, 0.0
        %v2145 = vcombine.high %v2135, 0.0
        %v2146 = vcombine.high %v2142, 0.0
        %v2147 = vcombine.low %v1456, %v2070
        %v2148 = vcombine.high %v1456, %v2070
        %v2150 = vunpack.c.l.s4 1983009808
        %v2151 = vunpack.c.0.s8 %v2150
        %v2152 = vlaneseq
        %v2153 = vshrl.u32 %v2152, 7
        %v2154 = vsub.s32 %v2151, %v2153
        %v2155 = vrot.slane %v2147, %v2154
        %v2157 = vunpack.c.l.s4 1983009808
        %v2158 = vunpack.c.0.s8 %v2157
        %v2159 = vlaneseq
        %v2160 = vshrl.u32 %v2159, 7
        %v2161 = vsub.s32 %v2158, %v2160
        %v2162 = vrot.slane %v2148, %v2161
        %v2163 = vcombine.low %v2064, %v2076
        %v2164 = vcombine.high %v2064, %v2076
        %v2166 = vunpack.c.l.s4 1983009808
        %v2167 = vunpack.c.0.s8 %v2166
        %v2168 = vlaneseq
        %v2169 = vshrl.u32 %v2168, 7
        %v2170 = vsub.s32 %v2167, %v2169
        %v2171 = vrot.slane %v2163, %v2170
        %v2173 = vunpack.c.l.s4 1983009808
        %v2174 = vunpack.c.0.s8 %v2173
        %v2175 = vlaneseq
        %v2176 = vshrl.u32 %v2175, 7
        %v2177 = vsub.s32 %v2174, %v2176
        %v2178 = vrot.slane %v2164, %v2177
        %v2179 = vcombine.low %v2155, %v2171
        %v2180 = vcombine.high %v2155, %v2171
        %v2182 = vunpack.c.l.s4 1934713408
        %v2183 = vunpack.c.0.s8 %v2182
        %v2184 = vlaneseq
        %v2185 = vshrl.u32 %v2184, 7
        %v2186 = vsub.s32 %v2183, %v2185
        %v2187 = vrot.slane %v2179, %v2186
        %v2189 = vunpack.c.l.s4 1934713408
        %v2190 = vunpack.c.0.s8 %v2189
        %v2191 = vlaneseq
        %v2192 = vshrl.u32 %v2191, 7
        %v2193 = vsub.s32 %v2190, %v2192
        %v2194 = vrot.slane %v2180, %v2193
        %v2195 = vcombine.low %v2162, %v2178
        %v2196 = vcombine.high %v2162, %v2178
        %v2198 = vunpack.c.l.s4 1934713408
        %v2199 = vunpack.c.0.s8 %v2198
        %v2200 = vlaneseq
        %v2201 = vshrl.u32 %v2200, 7
        %v2202 = vsub.s32 %v2199, %v2201
        %v2203 = vrot.slane %v2195, %v2202
        %v2205 = vunpack.c.l.s4 1934713408
        %v2206 = vunpack.c.0.s8 %v2205
        %v2207 = vlaneseq
        %v2208 = vshrl.u32 %v2207, 7
        %v2209 = vsub.s32 %v2206, %v2208
        %v2210 = vrot.slane %v2196, %v2209
        %v2211 = vcombine.high %v2187, 0.0
        %v2212 = vcombine.high %v2194, 0.0
        %v2213 = vcombine.high %v2203, 0.0
        %v2214 = vcombine.high %v2210, 0.0
        %v2215 = vcombine.low %v2119, %v2126
        %v2217 = vunpack.c.l.s4 1983009808
        %v2218 = vunpack.c.0.s8 %v2217
        %v2219 = vlaneseq
        %v2220 = vshrl.u32 %v2219, 7
        %v2221 = vsub.s32 %v2218, %v2220
        %v2222 = vrot.slane %v2215, %v2221
        %v2223 = vcombine.low %v2143, %v2144
        %v2225 = vunpack.c.l.s4 1983009808
        %v2226 = vunpack.c.0.s8 %v2225
        %v2227 = vlaneseq
        %v2228 = vshrl.u32 %v2227, 7
        %v2229 = vsub.s32 %v2226, %v2228
        %v2230 = vrot.slane %v2223, %v2229
        %v2231 = vcombine.low %v2135, %v2142
        %v2233 = vunpack.c.l.s4 1983009808
        %v2234 = vunpack.c.0.s8 %v2233
        %v2235 = vlaneseq
        %v2236 = vshrl.u32 %v2235, 7
        %v2237 = vsub.s32 %v2234, %v2236
        %v2238 = vrot.slane %v2231, %v2237
        %v2239 = vcombine.low %v2145, %v2146
        %v2241 = vunpack.c.l.s4 1983009808
        %v2242 = vunpack.c.0.s8 %v2241
        %v2243 = vlaneseq
        %v2244 = vshrl.u32 %v2243, 7
        %v2245 = vsub.s32 %v2242, %v2244
        %v2246 = vrot.slane %v2239, %v2245
        %v2247 = vcombine.low %v2222, %v2230
        %v2248 = vcombine.high %v2222, %v2230
        %v2250 = vunpack.c.l.s4 1934713408
        %v2251 = vunpack.c.0.s8 %v2250
        %v2252 = vlaneseq
        %v2253 = vshrl.u32 %v2252, 7
        %v2254 = vsub.s32 %v2251, %v2253
        %v2255 = vrot.slane %v2247, %v2254
        %v2257 = vunpack.c.l.s4 1934713408
        %v2258 = vunpack.c.0.s8 %v2257
        %v2259 = vlaneseq
        %v2260 = vshrl.u32 %v2259, 7
        %v2261 = vsub.s32 %v2258, %v2260
        %v2262 = vrot.slane %v2248, %v2261
        %v2263 = vcombine.low %v2238, %v2246
        %v2264 = vcombine.high %v2238, %v2246
        %v2266 = vunpack.c.l.s4 1934713408
        %v2267 = vunpack.c.0.s8 %v2266
        %v2268 = vlaneseq
        %v2269 = vshrl.u32 %v2268, 7
        %v2270 = vsub.s32 %v2267, %v2269
        %v2271 = vrot.slane %v2263, %v2270
        %v2273 = vunpack.c.l.s4 1934713408
        %v2274 = vunpack.c.0.s8 %v2273
        %v2275 = vlaneseq
        %v2276 = vshrl.u32 %v2275, 7
        %v2277 = vsub.s32 %v2274, %v2276
        %v2278 = vrot.slane %v2264, %v2277
        %v2279 = vcombine.low %v2255, %v2271
        %v2280 = vcombine.high %v2255, %v2271
        %v2281 = vcombine.low %v2262, %v2278
        %v2282 = vcombine.high %v2262, %v2278
        %v2283 = vcombine.low %v2187, %v2194
        %v2285 = vunpack.c.l.s4 1983009808
        %v2286 = vunpack.c.0.s8 %v2285
        %v2287 = vlaneseq
        %v2288 = vshrl.u32 %v2287, 7
        %v2289 = vsub.s32 %v2286, %v2288
        %v2290 = vrot.slane %v2283, %v2289
        %v2291 = vcombine.low %v2211, %v2212
        %v2293 = vunpack.c.l.s4 1983009808
        %v2294 = vunpack.c.0.s8 %v2293
        %v2295 = vlaneseq
        %v2296 = vshrl.u32 %v2295, 7
        %v2297 = vsub.s32 %v2294, %v2296
        %v2298 = vrot.slane %v2291, %v2297
        %v2299 = vcombine.low %v2203, %v2210
        %v2301 = vunpack.c.l.s4 1983009808
        %v2302 = vunpack.c.0.s8 %v2301
        %v2303 = vlaneseq
        %v2304 = vshrl.u32 %v2303, 7
        %v2305 = vsub.s32 %v2302, %v2304
        %v2306 = vrot.slane %v2299, %v2305
        %v2307 = vcombine.low %v2213, %v2214
        %v2309 = vunpack.c.l.s4 1983009808
        %v2310 = vunpack.c.0.s8 %v2309
        %v2311 = vlaneseq
        %v2312 = vshrl.u32 %v2311, 7
        %v2313 = vsub.s32 %v2310, %v2312
        %v2314 = vrot.slane %v2307, %v2313
        %v2315 = vcombine.low %v2290, %v2298
        %v2316 = vcombine.high %v2290, %v2298
        %v2318 = vunpack.c.l.s4 1934713408
        %v2319 = vunpack.c.0.s8 %v2318
        %v2320 = vlaneseq
        %v2321 = vshrl.u32 %v2320, 7
        %v2322 = vsub.s32 %v2319, %v2321
        %v2323 = vrot.slane %v2315, %v2322
        %v2325 = vunpack.c.l.s4 1934713408
        %v2326 = vunpack.c.0.s8 %v2325
        %v2327 = vlaneseq
        %v2328 = vshrl.u32 %v2327, 7
        %v2329 = vsub.s32 %v2326, %v2328
        %v2330 = vrot.slane %v2316, %v2329
        %v2331 = vcombine.low %v2306, %v2314
        %v2332 = vcombine.high %v2306, %v2314
        %v2334 = vunpack.c.l.s4 1934713408
        %v2335 = vunpack.c.0.s8 %v2334
        %v2336 = vlaneseq
        %v2337 = vshrl.u32 %v2336, 7
        %v2338 = vsub.s32 %v2335, %v2337
        %v2339 = vrot.slane %v2331, %v2338
        %v2341 = vunpack.c.l.s4 1934713408
        %v2342 = vunpack.c.0.s8 %v2341
        %v2343 = vlaneseq
        %v2344 = vshrl.u32 %v2343, 7
        %v2345 = vsub.s32 %v2342, %v2344
        %v2346 = vrot.slane %v2332, %v2345
        %v2347 = vcombine.low %v2323, %v2339
        %v2348 = vcombine.high %v2323, %v2339
        %v2349 = vcombine.low %v2330, %v2346
        %v2350 = vcombine.high %v2330, %v2346
        %v2351 = vpack.c.bf16 %v2279, %v2279
        %v2352 = vpack.c.bf16 %v2280, %v2280
        %v2353 = vpack.c.bf16 %v2281, %v2281
        %v2354 = vpack.c.bf16 %v2282, %v2282
        %v2355 = vpack.c.bf16 %v2347, %v2347
        %v2356 = vpack.c.bf16 %v2348, %v2348
        %v2357 = vpack.c.bf16 %v2349, %v2349
        %v2358 = vpack.c.bf16 %v2350, %v2350
        %vm2359 = vcmask 261120
        %v2361 = vsel %vm2359, %v1751, 0
        %v2364 = vsel %vm2359, %v2051, 0
        %2366 = vmatprep.subr.bf16.mxu0 0
        %2367 = vmatpush1.bf16.xpose.msra.mxu0 0
        %2368 = vmatprep.subr.bf16.mxu0 0
        %2369 = vmatpush1.bf16.xpose.msra.mxu0 0
        %2370 = vmatprep.subr.bf16.mxu0 0
        %2371 = vmatpush1.bf16.xpose.msra.mxu0 0
        %2372 = vmatprep.subr.bf16.mxu0 0
        %2373 = vmatpush1.bf16.xpose.msra.mxu0 0
        %2374 = vmatprep.subr.bf16.mxu0 0
        %2375 = vmatpush1.bf16.xpose.msra.mxu0 0
        %2376 = vmatprep.subr.bf16.mxu0 0
        %2377 = vmatpush1.bf16.xpose.msra.mxu0 0
        %2378 = vmatprep.subr.bf16.mxu0 0
        %2379 = vmatpush1.bf16.xpose.msra.mxu0 0
        %2380 = vmatprep.subr.bf16.mxu0 0
        %2381 = vmatpush1.bf16.xpose.msra.mxu0 %v2364
        %2382 = vmatprep.subr.bf16.mxu0 0
        %2383 = vmatpush2.bf16.xpose.msra.mxu0 0
        %2384 = vmatprep.subr.bf16.mxu0 0
        %2385 = vmatpush2.bf16.xpose.msra.mxu0 0
        %2386 = vmatprep.subr.bf16.mxu0 0
        %2387 = vmatpush2.bf16.xpose.msra.mxu0 0
        %2388 = vmatprep.subr.bf16.mxu0 0
        %2389 = vmatpush2.bf16.xpose.msra.mxu0 0
        %2390 = vmatprep.subr.bf16.mxu0 0
        %2391 = vmatpush2.bf16.xpose.msra.mxu0 0
        %2392 = vmatprep.subr.bf16.mxu0 0
        %2393 = vmatpush2.bf16.xpose.msra.mxu0 0
        %2394 = vmatprep.subr.bf16.mxu0 0
        %2395 = vmatpush2.bf16.xpose.msra.mxu0 0
        %2396 = vmatprep.subr.bf16.mxu0 0
        %2397 = vmatpush2.bf16.xpose.msra.mxu0 0
        %2398 = vmatprep.mubr.bf16.mxu0 0
        %2399 = vmatmul.mubr.bf16.gmra.mxu0 %v2361
        %v2400 = vpop.f32.mrf.mxu0
        %v2401 = vadd.f32 0.0, %v2400
        %v2402 = vpop.f32.mrf.mxu0
        %v2403 = vpop.f32.mrf.mxu0
        %v2404 = vpop.f32.mrf.mxu0
        %2405 = vdwg.mxu0
        %v2407 = vsel %vm2359, %v1752, 0
        %v2410 = vsel %vm2359, %v2052, 0
        %2412 = vmatprep.subr.bf16.mxu0 0
        %2413 = vmatpush1.bf16.xpose.msra.mxu0 0
        %2414 = vmatprep.subr.bf16.mxu0 0
        %2415 = vmatpush1.bf16.xpose.msra.mxu0 0
        %2416 = vmatprep.subr.bf16.mxu0 0
        %2417 = vmatpush1.bf16.xpose.msra.mxu0 0
        %2418 = vmatprep.subr.bf16.mxu0 0
        %2419 = vmatpush1.bf16.xpose.msra.mxu0 0
        %2420 = vmatprep.subr.bf16.mxu0 0
        %2421 = vmatpush1.bf16.xpose.msra.mxu0 0
        %2422 = vmatprep.subr.bf16.mxu0 0
        %2423 = vmatpush1.bf16.xpose.msra.mxu0 0
        %2424 = vmatprep.subr.bf16.mxu0 0
        %2425 = vmatpush1.bf16.xpose.msra.mxu0 0
        %2426 = vmatprep.subr.bf16.mxu0 0
        %2427 = vmatpush1.bf16.xpose.msra.mxu0 %v2410
        %2428 = vmatprep.subr.bf16.mxu0 0
        %2429 = vmatpush2.bf16.xpose.msra.mxu0 0
        %2430 = vmatprep.subr.bf16.mxu0 0
        %2431 = vmatpush2.bf16.xpose.msra.mxu0 0
        %2432 = vmatprep.subr.bf16.mxu0 0
        %2433 = vmatpush2.bf16.xpose.msra.mxu0 0
        %2434 = vmatprep.subr.bf16.mxu0 0
        %2435 = vmatpush2.bf16.xpose.msra.mxu0 0
        %2436 = vmatprep.subr.bf16.mxu0 0
        %2437 = vmatpush2.bf16.xpose.msra.mxu0 0
        %2438 = vmatprep.subr.bf16.mxu0 0
        %2439 = vmatpush2.bf16.xpose.msra.mxu0 0
        %2440 = vmatprep.subr.bf16.mxu0 0
        %2441 = vmatpush2.bf16.xpose.msra.mxu0 0
        %2442 = vmatprep.subr.bf16.mxu0 0
        %2443 = vmatpush2.bf16.xpose.msra.mxu0 0
        %2444 = vmatprep.mubr.bf16.mxu0 0
        %2445 = vmatmul.mubr.bf16.gmra.mxu0 %v2407
        %v2446 = vpop.f32.mrf.mxu0
        %v2447 = vadd.f32 0.0, %v2446
        %v2448 = vpop.f32.mrf.mxu0
        %v2449 = vpop.f32.mrf.mxu0
        %v2450 = vpop.f32.mrf.mxu0
        %2451 = vdwg.mxu0
        %v2453 = vsel %vm2359, %v1753, 0
        %v2456 = vsel %vm2359, %v2053, 0
        %2458 = vmatprep.subr.bf16.mxu0 0
        %2459 = vmatpush1.bf16.xpose.msra.mxu0 0
        %2460 = vmatprep.subr.bf16.mxu0 0
        %2461 = vmatpush1.bf16.xpose.msra.mxu0 0
        %2462 = vmatprep.subr.bf16.mxu0 0
        %2463 = vmatpush1.bf16.xpose.msra.mxu0 0
        %2464 = vmatprep.subr.bf16.mxu0 0
        %2465 = vmatpush1.bf16.xpose.msra.mxu0 0
        %2466 = vmatprep.subr.bf16.mxu0 0
        %2467 = vmatpush1.bf16.xpose.msra.mxu0 0
        %2468 = vmatprep.subr.bf16.mxu0 0
        %2469 = vmatpush1.bf16.xpose.msra.mxu0 0
        %2470 = vmatprep.subr.bf16.mxu0 0
        %2471 = vmatpush1.bf16.xpose.msra.mxu0 0
        %2472 = vmatprep.subr.bf16.mxu0 0
        %2473 = vmatpush1.bf16.xpose.msra.mxu0 %v2456
        %2474 = vmatprep.subr.bf16.mxu0 0
        %2475 = vmatpush2.bf16.xpose.msra.mxu0 0
        %2476 = vmatprep.subr.bf16.mxu0 0
        %2477 = vmatpush2.bf16.xpose.msra.mxu0 0
        %2478 = vmatprep.subr.bf16.mxu0 0
        %2479 = vmatpush2.bf16.xpose.msra.mxu0 0
        %2480 = vmatprep.subr.bf16.mxu0 0
        %2481 = vmatpush2.bf16.xpose.msra.mxu0 0
        %2482 = vmatprep.subr.bf16.mxu0 0
        %2483 = vmatpush2.bf16.xpose.msra.mxu0 0
        %2484 = vmatprep.subr.bf16.mxu0 0
        %2485 = vmatpush2.bf16.xpose.msra.mxu0 0
        %2486 = vmatprep.subr.bf16.mxu0 0
        %2487 = vmatpush2.bf16.xpose.msra.mxu0 0
        %2488 = vmatprep.subr.bf16.mxu0 0
        %2489 = vmatpush2.bf16.xpose.msra.mxu0 0
        %2490 = vmatprep.mubr.bf16.mxu0 0
        %2491 = vmatmul.mubr.bf16.gmra.mxu0 %v2453
        %v2492 = vpop.f32.mrf.mxu0
        %v2493 = vadd.f32 0.0, %v2492
        %v2494 = vpop.f32.mrf.mxu0
        %v2495 = vpop.f32.mrf.mxu0
        %v2496 = vpop.f32.mrf.mxu0
        %2497 = vdwg.mxu0
        %v2499 = vsel %vm2359, %v1754, 0
        %v2502 = vsel %vm2359, %v2054, 0
        %2504 = vmatprep.subr.bf16.mxu0 0
        %2505 = vmatpush1.bf16.xpose.msra.mxu0 0
        %2506 = vmatprep.subr.bf16.mxu0 0
        %2507 = vmatpush1.bf16.xpose.msra.mxu0 0
        %2508 = vmatprep.subr.bf16.mxu0 0
        %2509 = vmatpush1.bf16.xpose.msra.mxu0 0
        %2510 = vmatprep.subr.bf16.mxu0 0
        %2511 = vmatpush1.bf16.xpose.msra.mxu0 0
        %2512 = vmatprep.subr.bf16.mxu0 0
        %2513 = vmatpush1.bf16.xpose.msra.mxu0 0
        %2514 = vmatprep.subr.bf16.mxu0 0
        %2515 = vmatpush1.bf16.xpose.msra.mxu0 0
        %2516 = vmatprep.subr.bf16.mxu0 0
        %2517 = vmatpush1.bf16.xpose.msra.mxu0 0
        %2518 = vmatprep.subr.bf16.mxu0 0
        %2519 = vmatpush1.bf16.xpose.msra.mxu0 %v2502
        %2520 = vmatprep.subr.bf16.mxu0 0
        %2521 = vmatpush2.bf16.xpose.msra.mxu0 0
        %2522 = vmatprep.subr.bf16.mxu0 0
        %2523 = vmatpush2.bf16.xpose.msra.mxu0 0
        %2524 = vmatprep.subr.bf16.mxu0 0
        %2525 = vmatpush2.bf16.xpose.msra.mxu0 0
        %2526 = vmatprep.subr.bf16.mxu0 0
        %2527 = vmatpush2.bf16.xpose.msra.mxu0 0
        %2528 = vmatprep.subr.bf16.mxu0 0
        %2529 = vmatpush2.bf16.xpose.msra.mxu0 0
        %2530 = vmatprep.subr.bf16.mxu0 0
        %2531 = vmatpush2.bf16.xpose.msra.mxu0 0
        %2532 = vmatprep.subr.bf16.mxu0 0
        %2533 = vmatpush2.bf16.xpose.msra.mxu0 0
        %2534 = vmatprep.subr.bf16.mxu0 0
        %2535 = vmatpush2.bf16.xpose.msra.mxu0 0
        %2536 = vmatprep.mubr.bf16.mxu0 0
        %2537 = vmatmul.mubr.bf16.gmra.mxu0 %v2499
        %v2538 = vpop.f32.mrf.mxu0
        %v2539 = vadd.f32 0.0, %v2538
        %v2540 = vpop.f32.mrf.mxu0
        %v2541 = vpop.f32.mrf.mxu0
        %v2542 = vpop.f32.mrf.mxu0
        %2543 = vdwg.mxu0
        %v2545 = vsel %vm2359, %v1755, 0
        %v2548 = vsel %vm2359, %v2055, 0
        %2550 = vmatprep.subr.bf16.mxu0 0
        %2551 = vmatpush1.bf16.xpose.msra.mxu0 0
        %2552 = vmatprep.subr.bf16.mxu0 0
        %2553 = vmatpush1.bf16.xpose.msra.mxu0 0
        %2554 = vmatprep.subr.bf16.mxu0 0
        %2555 = vmatpush1.bf16.xpose.msra.mxu0 0
        %2556 = vmatprep.subr.bf16.mxu0 0
        %2557 = vmatpush1.bf16.xpose.msra.mxu0 0
        %2558 = vmatprep.subr.bf16.mxu0 0
        %2559 = vmatpush1.bf16.xpose.msra.mxu0 0
        %2560 = vmatprep.subr.bf16.mxu0 0
        %2561 = vmatpush1.bf16.xpose.msra.mxu0 0
        %2562 = vmatprep.subr.bf16.mxu0 0
        %2563 = vmatpush1.bf16.xpose.msra.mxu0 0
        %2564 = vmatprep.subr.bf16.mxu0 0
        %2565 = vmatpush1.bf16.xpose.msra.mxu0 %v2548
        %2566 = vmatprep.subr.bf16.mxu0 0
        %2567 = vmatpush2.bf16.xpose.msra.mxu0 0
        %2568 = vmatprep.subr.bf16.mxu0 0
        %2569 = vmatpush2.bf16.xpose.msra.mxu0 0
        %2570 = vmatprep.subr.bf16.mxu0 0
        %2571 = vmatpush2.bf16.xpose.msra.mxu0 0
        %2572 = vmatprep.subr.bf16.mxu0 0
        %2573 = vmatpush2.bf16.xpose.msra.mxu0 0
        %2574 = vmatprep.subr.bf16.mxu0 0
        %2575 = vmatpush2.bf16.xpose.msra.mxu0 0
        %2576 = vmatprep.subr.bf16.mxu0 0
        %2577 = vmatpush2.bf16.xpose.msra.mxu0 0
        %2578 = vmatprep.subr.bf16.mxu0 0
        %2579 = vmatpush2.bf16.xpose.msra.mxu0 0
        %2580 = vmatprep.subr.bf16.mxu0 0
        %2581 = vmatpush2.bf16.xpose.msra.mxu0 0
        %2582 = vmatprep.mubr.bf16.mxu0 0
        %2583 = vmatmul.mubr.bf16.gmra.mxu0 %v2545
        %v2584 = vpop.f32.mrf.mxu0
        %v2585 = vadd.f32 0.0, %v2584
        %v2586 = vpop.f32.mrf.mxu0
        %v2587 = vpop.f32.mrf.mxu0
        %v2588 = vpop.f32.mrf.mxu0
        %2589 = vdwg.mxu0
        %v2591 = vsel %vm2359, %v1756, 0
        %v2594 = vsel %vm2359, %v2056, 0
        %2596 = vmatprep.subr.bf16.mxu0 0
        %2597 = vmatpush1.bf16.xpose.msra.mxu0 0
        %2598 = vmatprep.subr.bf16.mxu0 0
        %2599 = vmatpush1.bf16.xpose.msra.mxu0 0
        %2600 = vmatprep.subr.bf16.mxu0 0
        %2601 = vmatpush1.bf16.xpose.msra.mxu0 0
        %2602 = vmatprep.subr.bf16.mxu0 0
        %2603 = vmatpush1.bf16.xpose.msra.mxu0 0
        %2604 = vmatprep.subr.bf16.mxu0 0
        %2605 = vmatpush1.bf16.xpose.msra.mxu0 0
        %2606 = vmatprep.subr.bf16.mxu0 0
        %2607 = vmatpush1.bf16.xpose.msra.mxu0 0
        %2608 = vmatprep.subr.bf16.mxu0 0
        %2609 = vmatpush1.bf16.xpose.msra.mxu0 0
        %2610 = vmatprep.subr.bf16.mxu0 0
        %2611 = vmatpush1.bf16.xpose.msra.mxu0 %v2594
        %2612 = vmatprep.subr.bf16.mxu0 0
        %2613 = vmatpush2.bf16.xpose.msra.mxu0 0
        %2614 = vmatprep.subr.bf16.mxu0 0
        %2615 = vmatpush2.bf16.xpose.msra.mxu0 0
        %2616 = vmatprep.subr.bf16.mxu0 0
        %2617 = vmatpush2.bf16.xpose.msra.mxu0 0
        %2618 = vmatprep.subr.bf16.mxu0 0
        %2619 = vmatpush2.bf16.xpose.msra.mxu0 0
        %2620 = vmatprep.subr.bf16.mxu0 0
        %2621 = vmatpush2.bf16.xpose.msra.mxu0 0
        %2622 = vmatprep.subr.bf16.mxu0 0
        %2623 = vmatpush2.bf16.xpose.msra.mxu0 0
        %2624 = vmatprep.subr.bf16.mxu0 0
        %2625 = vmatpush2.bf16.xpose.msra.mxu0 0
        %2626 = vmatprep.subr.bf16.mxu0 0
        %2627 = vmatpush2.bf16.xpose.msra.mxu0 0
        %2628 = vmatprep.mubr.bf16.mxu0 0
        %2629 = vmatmul.mubr.bf16.gmra.mxu0 %v2591
        %v2630 = vpop.f32.mrf.mxu0
        %v2631 = vadd.f32 0.0, %v2630
        %v2632 = vpop.f32.mrf.mxu0
        %v2633 = vpop.f32.mrf.mxu0
        %v2634 = vpop.f32.mrf.mxu0
        %2635 = vdwg.mxu0
        %v2637 = vsel %vm2359, %v1757, 0
        %v2640 = vsel %vm2359, %v2057, 0
        %2642 = vmatprep.subr.bf16.mxu0 0
        %2643 = vmatpush1.bf16.xpose.msra.mxu0 0
        %2644 = vmatprep.subr.bf16.mxu0 0
        %2645 = vmatpush1.bf16.xpose.msra.mxu0 0
        %2646 = vmatprep.subr.bf16.mxu0 0
        %2647 = vmatpush1.bf16.xpose.msra.mxu0 0
        %2648 = vmatprep.subr.bf16.mxu0 0
        %2649 = vmatpush1.bf16.xpose.msra.mxu0 0
        %2650 = vmatprep.subr.bf16.mxu0 0
        %2651 = vmatpush1.bf16.xpose.msra.mxu0 0
        %2652 = vmatprep.subr.bf16.mxu0 0
        %2653 = vmatpush1.bf16.xpose.msra.mxu0 0
        %2654 = vmatprep.subr.bf16.mxu0 0
        %2655 = vmatpush1.bf16.xpose.msra.mxu0 0
        %2656 = vmatprep.subr.bf16.mxu0 0
        %2657 = vmatpush1.bf16.xpose.msra.mxu0 %v2640
        %2658 = vmatprep.subr.bf16.mxu0 0
        %2659 = vmatpush2.bf16.xpose.msra.mxu0 0
        %2660 = vmatprep.subr.bf16.mxu0 0
        %2661 = vmatpush2.bf16.xpose.msra.mxu0 0
        %2662 = vmatprep.subr.bf16.mxu0 0
        %2663 = vmatpush2.bf16.xpose.msra.mxu0 0
        %2664 = vmatprep.subr.bf16.mxu0 0
        %2665 = vmatpush2.bf16.xpose.msra.mxu0 0
        %2666 = vmatprep.subr.bf16.mxu0 0
        %2667 = vmatpush2.bf16.xpose.msra.mxu0 0
        %2668 = vmatprep.subr.bf16.mxu0 0
        %2669 = vmatpush2.bf16.xpose.msra.mxu0 0
        %2670 = vmatprep.subr.bf16.mxu0 0
        %2671 = vmatpush2.bf16.xpose.msra.mxu0 0
        %2672 = vmatprep.subr.bf16.mxu0 0
        %2673 = vmatpush2.bf16.xpose.msra.mxu0 0
        %2674 = vmatprep.mubr.bf16.mxu0 0
        %2675 = vmatmul.mubr.bf16.gmra.mxu0 %v2637
        %v2676 = vpop.f32.mrf.mxu0
        %v2677 = vadd.f32 0.0, %v2676
        %v2678 = vpop.f32.mrf.mxu0
        %v2679 = vpop.f32.mrf.mxu0
        %v2680 = vpop.f32.mrf.mxu0
        %2681 = vdwg.mxu0
        %v2683 = vsel %vm2359, %v1758, 0
        %v2686 = vsel %vm2359, %v2058, 0
        %2688 = vmatprep.subr.bf16.mxu0 0
        %2689 = vmatpush1.bf16.xpose.msra.mxu0 0
        %2690 = vmatprep.subr.bf16.mxu0 0
        %2691 = vmatpush1.bf16.xpose.msra.mxu0 0
        %2692 = vmatprep.subr.bf16.mxu0 0
        %2693 = vmatpush1.bf16.xpose.msra.mxu0 0
        %2694 = vmatprep.subr.bf16.mxu0 0
        %2695 = vmatpush1.bf16.xpose.msra.mxu0 0
        %2696 = vmatprep.subr.bf16.mxu0 0
        %2697 = vmatpush1.bf16.xpose.msra.mxu0 0
        %2698 = vmatprep.subr.bf16.mxu0 0
        %2699 = vmatpush1.bf16.xpose.msra.mxu0 0
        %2700 = vmatprep.subr.bf16.mxu0 0
        %2701 = vmatpush1.bf16.xpose.msra.mxu0 0
        %2702 = vmatprep.subr.bf16.mxu0 0
        %2703 = vmatpush1.bf16.xpose.msra.mxu0 %v2686
        %2704 = vmatprep.subr.bf16.mxu0 0
        %2705 = vmatpush2.bf16.xpose.msra.mxu0 0
        %2706 = vmatprep.subr.bf16.mxu0 0
        %2707 = vmatpush2.bf16.xpose.msra.mxu0 0
        %2708 = vmatprep.subr.bf16.mxu0 0
        %2709 = vmatpush2.bf16.xpose.msra.mxu0 0
        %2710 = vmatprep.subr.bf16.mxu0 0
        %2711 = vmatpush2.bf16.xpose.msra.mxu0 0
        %2712 = vmatprep.subr.bf16.mxu0 0
        %2713 = vmatpush2.bf16.xpose.msra.mxu0 0
        %2714 = vmatprep.subr.bf16.mxu0 0
        %2715 = vmatpush2.bf16.xpose.msra.mxu0 0
        %2716 = vmatprep.subr.bf16.mxu0 0
        %2717 = vmatpush2.bf16.xpose.msra.mxu0 0
        %2718 = vmatprep.subr.bf16.mxu0 0
        %2719 = vmatpush2.bf16.xpose.msra.mxu0 0
        %2720 = vmatprep.mubr.bf16.mxu0 0
        %2721 = vmatmul.mubr.bf16.gmra.mxu0 %v2683
        %v2722 = vpop.f32.mrf.mxu0
        %v2723 = vadd.f32 0.0, %v2722
        %v2724 = vpop.f32.mrf.mxu0
        %v2725 = vpop.f32.mrf.mxu0
        %v2726 = vpop.f32.mrf.mxu0
        %2727 = vdwg.mxu0
        %v2728 = vadd.f32 %v2401, %v1178
        %v2729 = vadd.f32 %v2447, %v1178
        %v2730 = vadd.f32 %v2493, %v1178
        %v2731 = vadd.f32 %v2539, %v1178
        %v2732 = vadd.f32 %v2585, %v1179
        %v2733 = vadd.f32 %v2631, %v1179
        %v2734 = vadd.f32 %v2677, %v1179
        %v2735 = vadd.f32 %v2723, %v1179
        %vm2736 = vcmask 64512
        %v2737 = vsel %vm2736, %v2728, -inf
        %2738 = vmax.xlane.f32.xlu0 %v2737
        %v2739 = vpop.xlane.xlu0 %2738
        %v2740 = vsel %vm2736, %v2729, -inf
        %2741 = vmax.xlane.f32.xlu0 %v2740
        %v2742 = vpop.xlane.xlu0 %2741
        %v2743 = vsel %vm2736, %v2730, -inf
        %2744 = vmax.xlane.f32.xlu0 %v2743
        %v2745 = vpop.xlane.xlu0 %2744
        %v2746 = vsel %vm2736, %v2731, -inf
        %2747 = vmax.xlane.f32.xlu0 %v2746
        %v2748 = vpop.xlane.xlu0 %2747
        %v2749 = vsel %vm2736, %v2732, -inf
        %2750 = vmax.xlane.f32.xlu0 %v2749
        %v2751 = vpop.xlane.xlu0 %2750
        %v2752 = vsel %vm2736, %v2733, -inf
        %2753 = vmax.xlane.f32.xlu0 %v2752
        %v2754 = vpop.xlane.xlu0 %2753
        %v2755 = vsel %vm2736, %v2734, -inf
        %2756 = vmax.xlane.f32.xlu0 %v2755
        %v2757 = vpop.xlane.xlu0 %2756
        %v2758 = vsel %vm2736, %v2735, -inf
        %2759 = vmax.xlane.f32.xlu0 %v2758
        %v2760 = vpop.xlane.xlu0 %2759
        %v2761 = vsub.f32 %v2728, %v2739
        %v2762 = vsub.f32 %v2729, %v2742
        %v2763 = vsub.f32 %v2730, %v2745
        %v2764 = vsub.f32 %v2731, %v2748
        %v2765 = vsub.f32 %v2732, %v2751
        %v2766 = vsub.f32 %v2733, %v2754
        %v2767 = vsub.f32 %v2734, %v2757
        %v2768 = vsub.f32 %v2735, %v2760
        %v2769 = vmul.f32 %v2761, 1.442695
        %v2770 = vpow.pop %v2769
        %v2771 = vmul.f32 %v2762, 1.442695
        %v2772 = vpow.pop %v2771
        %v2773 = vmul.f32 %v2763, 1.442695
        %v2774 = vpow.pop %v2773
        %v2775 = vmul.f32 %v2764, 1.442695
        %v2776 = vpow.pop %v2775
        %v2777 = vmul.f32 %v2765, 1.442695
        %v2778 = vpow.pop %v2777
        %v2779 = vmul.f32 %v2766, 1.442695
        %v2780 = vpow.pop %v2779
        %v2781 = vmul.f32 %v2767, 1.442695
        %v2782 = vpow.pop %v2781
        %v2783 = vmul.f32 %v2768, 1.442695
        %v2784 = vpow.pop %v2783
        %v2785 = vsel %vm2736, %v2770, 0.0
        %2786 = vadd.xlane.f32.xlu0 %v2785
        %v2787 = vpop.xlane.xlu0 %2786
        %v2788 = vsel %vm2736, %v2772, 0.0
        %2789 = vadd.xlane.f32.xlu0 %v2788
        %v2790 = vpop.xlane.xlu0 %2789
        %v2791 = vsel %vm2736, %v2774, 0.0
        %2792 = vadd.xlane.f32.xlu0 %v2791
        %v2793 = vpop.xlane.xlu0 %2792
        %v2794 = vsel %vm2736, %v2776, 0.0
        %2795 = vadd.xlane.f32.xlu0 %v2794
        %v2796 = vpop.xlane.xlu0 %2795
        %v2797 = vsel %vm2736, %v2778, 0.0
        %2798 = vadd.xlane.f32.xlu0 %v2797
        %v2799 = vpop.xlane.xlu0 %2798
        %v2800 = vsel %vm2736, %v2780, 0.0
        %2801 = vadd.xlane.f32.xlu0 %v2800
        %v2802 = vpop.xlane.xlu0 %2801
        %v2803 = vsel %vm2736, %v2782, 0.0
        %2804 = vadd.xlane.f32.xlu0 %v2803
        %v2805 = vpop.xlane.xlu0 %2804
        %v2806 = vsel %vm2736, %v2784, 0.0
        %2807 = vadd.xlane.f32.xlu0 %v2806
        %v2808 = vpop.xlane.xlu0 %2807
        %v2809 = vrcp.pop %v2787
        %v2810 = vrcp.pop %v2790
        %v2811 = vrcp.pop %v2793
        %v2812 = vrcp.pop %v2796
        %v2813 = vrcp.pop %v2799
        %v2814 = vrcp.pop %v2802
        %v2815 = vrcp.pop %v2805
        %v2816 = vrcp.pop %v2808
        %v2817 = vmul.f32 %v2770, %v2809
        %v2818 = vmul.f32 %v2772, %v2810
        %v2819 = vmul.f32 %v2774, %v2811
        %v2820 = vmul.f32 %v2776, %v2812
        %v2821 = vmul.f32 %v2778, %v2813
        %v2822 = vmul.f32 %v2780, %v2814
        %v2823 = vmul.f32 %v2782, %v2815
        %v2824 = vmul.f32 %v2784, %v2816
        %v2825 = vpack.c.bf16 %v2817, %v2817
        %v2826 = vpack.c.bf16 %v2818, %v2818
        %v2827 = vpack.c.bf16 %v2819, %v2819
        %v2828 = vpack.c.bf16 %v2820, %v2820
        %v2829 = vpack.c.bf16 %v2821, %v2821
        %v2830 = vpack.c.bf16 %v2822, %v2822
        %v2831 = vpack.c.bf16 %v2823, %v2823
        %v2832 = vpack.c.bf16 %v2824, %v2824
        %v2834 = vsel %vm2736, %v2825, 0
        %vm2836 = vcmask 1043456
        %v2838 = vsel %vm2836, %v2351, 0
        %2840 = vmatprep.subr.bf16.mxu0 0
        %2841 = vmatpush1.bf16.msra.mxu0 0
        %2842 = vmatprep.subr.bf16.mxu0 0
        %2843 = vmatpush1.bf16.msra.mxu0 0
        %2844 = vmatprep.subr.bf16.mxu0 0
        %2845 = vmatpush1.bf16.msra.mxu0 0
        %2846 = vmatprep.subr.bf16.mxu0 0
        %2847 = vmatpush1.bf16.msra.mxu0 0
        %2848 = vmatprep.subr.bf16.mxu0 0
        %2849 = vmatpush1.bf16.msra.mxu0 0
        %2850 = vmatprep.subr.bf16.mxu0 0
        %2851 = vmatpush1.bf16.msra.mxu0 0
        %2852 = vmatprep.subr.bf16.mxu0 0
        %2853 = vmatpush1.bf16.msra.mxu0 0
        %2854 = vmatprep.subr.bf16.mxu0 0
        %2855 = vmatpush1.bf16.msra.mxu0 %v2838
        %2856 = vmatprep.subr.bf16.mxu0 0
        %2857 = vmatpush2.bf16.msra.mxu0 0
        %2858 = vmatprep.subr.bf16.mxu0 0
        %2859 = vmatpush2.bf16.msra.mxu0 0
        %2860 = vmatprep.subr.bf16.mxu0 0
        %2861 = vmatpush2.bf16.msra.mxu0 0
        %2862 = vmatprep.subr.bf16.mxu0 0
        %2863 = vmatpush2.bf16.msra.mxu0 0
        %2864 = vmatprep.subr.bf16.mxu0 0
        %2865 = vmatpush2.bf16.msra.mxu0 0
        %2866 = vmatprep.subr.bf16.mxu0 0
        %2867 = vmatpush2.bf16.msra.mxu0 0
        %2868 = vmatprep.subr.bf16.mxu0 0
        %2869 = vmatpush2.bf16.msra.mxu0 0
        %2870 = vmatprep.subr.bf16.mxu0 0
        %2871 = vmatpush2.bf16.msra.mxu0 0
        %2872 = vmatprep.mubr.bf16.mxu0 0
        %2873 = vmatmul.mubr.bf16.gmra.mxu0 %v2834
        %v2874 = vpop.f32.mrf.mxu0
        %v2875 = vadd.f32 0.0, %v2874
        %v2876 = vpop.f32.mrf.mxu0
        %v2877 = vpop.f32.mrf.mxu0
        %v2878 = vpop.f32.mrf.mxu0
        %2879 = vdwg.mxu0
        %v2881 = vsel %vm2736, %v2826, 0
        %v2884 = vsel %vm2836, %v2352, 0
        %2886 = vmatprep.subr.bf16.mxu0 0
        %2887 = vmatpush1.bf16.msra.mxu0 0
        %2888 = vmatprep.subr.bf16.mxu0 0
        %2889 = vmatpush1.bf16.msra.mxu0 0
        %2890 = vmatprep.subr.bf16.mxu0 0
        %2891 = vmatpush1.bf16.msra.mxu0 0
        %2892 = vmatprep.subr.bf16.mxu0 0
        %2893 = vmatpush1.bf16.msra.mxu0 0
        %2894 = vmatprep.subr.bf16.mxu0 0
        %2895 = vmatpush1.bf16.msra.mxu0 0
        %2896 = vmatprep.subr.bf16.mxu0 0
        %2897 = vmatpush1.bf16.msra.mxu0 0
        %2898 = vmatprep.subr.bf16.mxu0 0
        %2899 = vmatpush1.bf16.msra.mxu0 0
        %2900 = vmatprep.subr.bf16.mxu0 0
        %2901 = vmatpush1.bf16.msra.mxu0 %v2884
        %2902 = vmatprep.subr.bf16.mxu0 0
        %2903 = vmatpush2.bf16.msra.mxu0 0
        %2904 = vmatprep.subr.bf16.mxu0 0
        %2905 = vmatpush2.bf16.msra.mxu0 0
        %2906 = vmatprep.subr.bf16.mxu0 0
        %2907 = vmatpush2.bf16.msra.mxu0 0
        %2908 = vmatprep.subr.bf16.mxu0 0
        %2909 = vmatpush2.bf16.msra.mxu0 0
        %2910 = vmatprep.subr.bf16.mxu0 0
        %2911 = vmatpush2.bf16.msra.mxu0 0
        %2912 = vmatprep.subr.bf16.mxu0 0
        %2913 = vmatpush2.bf16.msra.mxu0 0
        %2914 = vmatprep.subr.bf16.mxu0 0
        %2915 = vmatpush2.bf16.msra.mxu0 0
        %2916 = vmatprep.subr.bf16.mxu0 0
        %2917 = vmatpush2.bf16.msra.mxu0 0
        %2918 = vmatprep.mubr.bf16.mxu0 0
        %2919 = vmatmul.mubr.bf16.gmra.mxu0 %v2881
        %v2920 = vpop.f32.mrf.mxu0
        %v2921 = vadd.f32 0.0, %v2920
        %v2922 = vpop.f32.mrf.mxu0
        %v2923 = vpop.f32.mrf.mxu0
        %v2924 = vpop.f32.mrf.mxu0
        %2925 = vdwg.mxu0
        %v2927 = vsel %vm2736, %v2827, 0
        %v2930 = vsel %vm2836, %v2353, 0
        %2932 = vmatprep.subr.bf16.mxu0 0
        %2933 = vmatpush1.bf16.msra.mxu0 0
        %2934 = vmatprep.subr.bf16.mxu0 0
        %2935 = vmatpush1.bf16.msra.mxu0 0
        %2936 = vmatprep.subr.bf16.mxu0 0
        %2937 = vmatpush1.bf16.msra.mxu0 0
        %2938 = vmatprep.subr.bf16.mxu0 0
        %2939 = vmatpush1.bf16.msra.mxu0 0
        %2940 = vmatprep.subr.bf16.mxu0 0
        %2941 = vmatpush1.bf16.msra.mxu0 0
        %2942 = vmatprep.subr.bf16.mxu0 0
        %2943 = vmatpush1.bf16.msra.mxu0 0
        %2944 = vmatprep.subr.bf16.mxu0 0
        %2945 = vmatpush1.bf16.msra.mxu0 0
        %2946 = vmatprep.subr.bf16.mxu0 0
        %2947 = vmatpush1.bf16.msra.mxu0 %v2930
        %2948 = vmatprep.subr.bf16.mxu0 0
        %2949 = vmatpush2.bf16.msra.mxu0 0
        %2950 = vmatprep.subr.bf16.mxu0 0
        %2951 = vmatpush2.bf16.msra.mxu0 0
        %2952 = vmatprep.subr.bf16.mxu0 0
        %2953 = vmatpush2.bf16.msra.mxu0 0
        %2954 = vmatprep.subr.bf16.mxu0 0
        %2955 = vmatpush2.bf16.msra.mxu0 0
        %2956 = vmatprep.subr.bf16.mxu0 0
        %2957 = vmatpush2.bf16.msra.mxu0 0
        %2958 = vmatprep.subr.bf16.mxu0 0
        %2959 = vmatpush2.bf16.msra.mxu0 0
        %2960 = vmatprep.subr.bf16.mxu0 0
        %2961 = vmatpush2.bf16.msra.mxu0 0
        %2962 = vmatprep.subr.bf16.mxu0 0
        %2963 = vmatpush2.bf16.msra.mxu0 0
        %2964 = vmatprep.mubr.bf16.mxu0 0
        %2965 = vmatmul.mubr.bf16.gmra.mxu0 %v2927
        %v2966 = vpop.f32.mrf.mxu0
        %v2967 = vadd.f32 0.0, %v2966
        %v2968 = vpop.f32.mrf.mxu0
        %v2969 = vpop.f32.mrf.mxu0
        %v2970 = vpop.f32.mrf.mxu0
        %2971 = vdwg.mxu0
        %v2973 = vsel %vm2736, %v2828, 0
        %v2976 = vsel %vm2836, %v2354, 0
        %2978 = vmatprep.subr.bf16.mxu0 0
        %2979 = vmatpush1.bf16.msra.mxu0 0
        %2980 = vmatprep.subr.bf16.mxu0 0
        %2981 = vmatpush1.bf16.msra.mxu0 0
        %2982 = vmatprep.subr.bf16.mxu0 0
        %2983 = vmatpush1.bf16.msra.mxu0 0
        %2984 = vmatprep.subr.bf16.mxu0 0
        %2985 = vmatpush1.bf16.msra.mxu0 0
        %2986 = vmatprep.subr.bf16.mxu0 0
        %2987 = vmatpush1.bf16.msra.mxu0 0
        %2988 = vmatprep.subr.bf16.mxu0 0
        %2989 = vmatpush1.bf16.msra.mxu0 0
        %2990 = vmatprep.subr.bf16.mxu0 0
        %2991 = vmatpush1.bf16.msra.mxu0 0
        %2992 = vmatprep.subr.bf16.mxu0 0
        %2993 = vmatpush1.bf16.msra.mxu0 %v2976
        %2994 = vmatprep.subr.bf16.mxu0 0
        %2995 = vmatpush2.bf16.msra.mxu0 0
        %2996 = vmatprep.subr.bf16.mxu0 0
        %2997 = vmatpush2.bf16.msra.mxu0 0
        %2998 = vmatprep.subr.bf16.mxu0 0
        %2999 = vmatpush2.bf16.msra.mxu0 0
        %3000 = vmatprep.subr.bf16.mxu0 0
        %3001 = vmatpush2.bf16.msra.mxu0 0
        %3002 = vmatprep.subr.bf16.mxu0 0
        %3003 = vmatpush2.bf16.msra.mxu0 0
        %3004 = vmatprep.subr.bf16.mxu0 0
        %3005 = vmatpush2.bf16.msra.mxu0 0
        %3006 = vmatprep.subr.bf16.mxu0 0
        %3007 = vmatpush2.bf16.msra.mxu0 0
        %3008 = vmatprep.subr.bf16.mxu0 0
        %3009 = vmatpush2.bf16.msra.mxu0 0
        %3010 = vmatprep.mubr.bf16.mxu0 0
        %3011 = vmatmul.mubr.bf16.gmra.mxu0 %v2973
        %v3012 = vpop.f32.mrf.mxu0
        %v3013 = vadd.f32 0.0, %v3012
        %v3014 = vpop.f32.mrf.mxu0
        %v3015 = vpop.f32.mrf.mxu0
        %v3016 = vpop.f32.mrf.mxu0
        %3017 = vdwg.mxu0
        %v3019 = vsel %vm2736, %v2829, 0
        %v3022 = vsel %vm2836, %v2355, 0
        %3024 = vmatprep.subr.bf16.mxu0 0
        %3025 = vmatpush1.bf16.msra.mxu0 0
        %3026 = vmatprep.subr.bf16.mxu0 0
        %3027 = vmatpush1.bf16.msra.mxu0 0
        %3028 = vmatprep.subr.bf16.mxu0 0
        %3029 = vmatpush1.bf16.msra.mxu0 0
        %3030 = vmatprep.subr.bf16.mxu0 0
        %3031 = vmatpush1.bf16.msra.mxu0 0
        %3032 = vmatprep.subr.bf16.mxu0 0
        %3033 = vmatpush1.bf16.msra.mxu0 0
        %3034 = vmatprep.subr.bf16.mxu0 0
        %3035 = vmatpush1.bf16.msra.mxu0 0
        %3036 = vmatprep.subr.bf16.mxu0 0
        %3037 = vmatpush1.bf16.msra.mxu0 0
        %3038 = vmatprep.subr.bf16.mxu0 0
        %3039 = vmatpush1.bf16.msra.mxu0 %v3022
        %3040 = vmatprep.subr.bf16.mxu0 0
        %3041 = vmatpush2.bf16.msra.mxu0 0
        %3042 = vmatprep.subr.bf16.mxu0 0
        %3043 = vmatpush2.bf16.msra.mxu0 0
        %3044 = vmatprep.subr.bf16.mxu0 0
        %3045 = vmatpush2.bf16.msra.mxu0 0
        %3046 = vmatprep.subr.bf16.mxu0 0
        %3047 = vmatpush2.bf16.msra.mxu0 0
        %3048 = vmatprep.subr.bf16.mxu0 0
        %3049 = vmatpush2.bf16.msra.mxu0 0
        %3050 = vmatprep.subr.bf16.mxu0 0
        %3051 = vmatpush2.bf16.msra.mxu0 0
        %3052 = vmatprep.subr.bf16.mxu0 0
        %3053 = vmatpush2.bf16.msra.mxu0 0
        %3054 = vmatprep.subr.bf16.mxu0 0
        %3055 = vmatpush2.bf16.msra.mxu0 0
        %3056 = vmatprep.mubr.bf16.mxu0 0
        %3057 = vmatmul.mubr.bf16.gmra.mxu0 %v3019
        %v3058 = vpop.f32.mrf.mxu0
        %v3059 = vadd.f32 0.0, %v3058
        %v3060 = vpop.f32.mrf.mxu0
        %v3061 = vpop.f32.mrf.mxu0
        %v3062 = vpop.f32.mrf.mxu0
        %3063 = vdwg.mxu0
        %v3065 = vsel %vm2736, %v2830, 0
        %v3068 = vsel %vm2836, %v2356, 0
        %3070 = vmatprep.subr.bf16.mxu0 0
        %3071 = vmatpush1.bf16.msra.mxu0 0
        %3072 = vmatprep.subr.bf16.mxu0 0
        %3073 = vmatpush1.bf16.msra.mxu0 0
        %3074 = vmatprep.subr.bf16.mxu0 0
        %3075 = vmatpush1.bf16.msra.mxu0 0
        %3076 = vmatprep.subr.bf16.mxu0 0
        %3077 = vmatpush1.bf16.msra.mxu0 0
        %3078 = vmatprep.subr.bf16.mxu0 0
        %3079 = vmatpush1.bf16.msra.mxu0 0
        %3080 = vmatprep.subr.bf16.mxu0 0
        %3081 = vmatpush1.bf16.msra.mxu0 0
        %3082 = vmatprep.subr.bf16.mxu0 0
        %3083 = vmatpush1.bf16.msra.mxu0 0
        %3084 = vmatprep.subr.bf16.mxu0 0
        %3085 = vmatpush1.bf16.msra.mxu0 %v3068
        %3086 = vmatprep.subr.bf16.mxu0 0
        %3087 = vmatpush2.bf16.msra.mxu0 0
        %3088 = vmatprep.subr.bf16.mxu0 0
        %3089 = vmatpush2.bf16.msra.mxu0 0
        %3090 = vmatprep.subr.bf16.mxu0 0
        %3091 = vmatpush2.bf16.msra.mxu0 0
        %3092 = vmatprep.subr.bf16.mxu0 0
        %3093 = vmatpush2.bf16.msra.mxu0 0
        %3094 = vmatprep.subr.bf16.mxu0 0
        %3095 = vmatpush2.bf16.msra.mxu0 0
        %3096 = vmatprep.subr.bf16.mxu0 0
        %3097 = vmatpush2.bf16.msra.mxu0 0
        %3098 = vmatprep.subr.bf16.mxu0 0
        %3099 = vmatpush2.bf16.msra.mxu0 0
        %3100 = vmatprep.subr.bf16.mxu0 0
        %3101 = vmatpush2.bf16.msra.mxu0 0
        %3102 = vmatprep.mubr.bf16.mxu0 0
        %3103 = vmatmul.mubr.bf16.gmra.mxu0 %v3065
        %v3104 = vpop.f32.mrf.mxu0
        %v3105 = vadd.f32 0.0, %v3104
        %v3106 = vpop.f32.mrf.mxu0
        %v3107 = vpop.f32.mrf.mxu0
        %v3108 = vpop.f32.mrf.mxu0
        %3109 = vdwg.mxu0
        %v3111 = vsel %vm2736, %v2831, 0
        %v3114 = vsel %vm2836, %v2357, 0
        %3116 = vmatprep.subr.bf16.mxu0 0
        %3117 = vmatpush1.bf16.msra.mxu0 0
        %3118 = vmatprep.subr.bf16.mxu0 0
        %3119 = vmatpush1.bf16.msra.mxu0 0
        %3120 = vmatprep.subr.bf16.mxu0 0
        %3121 = vmatpush1.bf16.msra.mxu0 0
        %3122 = vmatprep.subr.bf16.mxu0 0
        %3123 = vmatpush1.bf16.msra.mxu0 0
        %3124 = vmatprep.subr.bf16.mxu0 0
        %3125 = vmatpush1.bf16.msra.mxu0 0
        %3126 = vmatprep.subr.bf16.mxu0 0
        %3127 = vmatpush1.bf16.msra.mxu0 0
        %3128 = vmatprep.subr.bf16.mxu0 0
        %3129 = vmatpush1.bf16.msra.mxu0 0
        %3130 = vmatprep.subr.bf16.mxu0 0
        %3131 = vmatpush1.bf16.msra.mxu0 %v3114
        %3132 = vmatprep.subr.bf16.mxu0 0
        %3133 = vmatpush2.bf16.msra.mxu0 0
        %3134 = vmatprep.subr.bf16.mxu0 0
        %3135 = vmatpush2.bf16.msra.mxu0 0
        %3136 = vmatprep.subr.bf16.mxu0 0
        %3137 = vmatpush2.bf16.msra.mxu0 0
        %3138 = vmatprep.subr.bf16.mxu0 0
        %3139 = vmatpush2.bf16.msra.mxu0 0
        %3140 = vmatprep.subr.bf16.mxu0 0
        %3141 = vmatpush2.bf16.msra.mxu0 0
        %3142 = vmatprep.subr.bf16.mxu0 0
        %3143 = vmatpush2.bf16.msra.mxu0 0
        %3144 = vmatprep.subr.bf16.mxu0 0
        %3145 = vmatpush2.bf16.msra.mxu0 0
        %3146 = vmatprep.subr.bf16.mxu0 0
        %3147 = vmatpush2.bf16.msra.mxu0 0
        %3148 = vmatprep.mubr.bf16.mxu0 0
        %3149 = vmatmul.mubr.bf16.gmra.mxu0 %v3111
        %v3150 = vpop.f32.mrf.mxu0
        %v3151 = vadd.f32 0.0, %v3150
        %v3152 = vpop.f32.mrf.mxu0
        %v3153 = vpop.f32.mrf.mxu0
        %v3154 = vpop.f32.mrf.mxu0
        %3155 = vdwg.mxu0
        %v3157 = vsel %vm2736, %v2832, 0
        %v3160 = vsel %vm2836, %v2358, 0
        %3162 = vmatprep.subr.bf16.mxu0 0
        %3163 = vmatpush1.bf16.msra.mxu0 0
        %3164 = vmatprep.subr.bf16.mxu0 0
        %3165 = vmatpush1.bf16.msra.mxu0 0
        %3166 = vmatprep.subr.bf16.mxu0 0
        %3167 = vmatpush1.bf16.msra.mxu0 0
        %3168 = vmatprep.subr.bf16.mxu0 0
        %3169 = vmatpush1.bf16.msra.mxu0 0
        %3170 = vmatprep.subr.bf16.mxu0 0
        %3171 = vmatpush1.bf16.msra.mxu0 0
        %3172 = vmatprep.subr.bf16.mxu0 0
        %3173 = vmatpush1.bf16.msra.mxu0 0
        %3174 = vmatprep.subr.bf16.mxu0 0
        %3175 = vmatpush1.bf16.msra.mxu0 0
        %3176 = vmatprep.subr.bf16.mxu0 0
        %3177 = vmatpush1.bf16.msra.mxu0 %v3160
        %3178 = vmatprep.subr.bf16.mxu0 0
        %3179 = vmatpush2.bf16.msra.mxu0 0
        %3180 = vmatprep.subr.bf16.mxu0 0
        %3181 = vmatpush2.bf16.msra.mxu0 0
        %3182 = vmatprep.subr.bf16.mxu0 0
        %3183 = vmatpush2.bf16.msra.mxu0 0
        %3184 = vmatprep.subr.bf16.mxu0 0
        %3185 = vmatpush2.bf16.msra.mxu0 0
        %3186 = vmatprep.subr.bf16.mxu0 0
        %3187 = vmatpush2.bf16.msra.mxu0 0
        %3188 = vmatprep.subr.bf16.mxu0 0
        %3189 = vmatpush2.bf16.msra.mxu0 0
        %3190 = vmatprep.subr.bf16.mxu0 0
        %3191 = vmatpush2.bf16.msra.mxu0 0
        %3192 = vmatprep.subr.bf16.mxu0 0
        %3193 = vmatpush2.bf16.msra.mxu0 0
        %3194 = vmatprep.mubr.bf16.mxu0 0
        %3195 = vmatmul.mubr.bf16.gmra.mxu0 %v3157
        %v3196 = vpop.f32.mrf.mxu0
        %v3197 = vadd.f32 0.0, %v3196
        %v3198 = vpop.f32.mrf.mxu0
        %v3199 = vpop.f32.mrf.mxu0
        %v3200 = vpop.f32.mrf.mxu0
        %3201 = vdwg.mxu0
        %v3202 = vcombine.low %v2875, %v2967
        %v3203 = vcombine.high %v2875, %v2967
        %v3205 = vunpack.c.l.s4 1983009808
        %v3206 = vunpack.c.0.s8 %v3205
        %v3207 = vlaneseq
        %v3208 = vshrl.u32 %v3207, 7
        %v3209 = vsub.s32 %v3206, %v3208
        %v3210 = vrot.slane %v3202, %v3209
        %v3212 = vunpack.c.l.s4 1983009808
        %v3213 = vunpack.c.0.s8 %v3212
        %v3214 = vlaneseq
        %v3215 = vshrl.u32 %v3214, 7
        %v3216 = vsub.s32 %v3213, %v3215
        %v3217 = vrot.slane %v3203, %v3216
        %v3218 = vcombine.low %v2921, %v3013
        %v3219 = vcombine.high %v2921, %v3013
        %v3221 = vunpack.c.l.s4 1983009808
        %v3222 = vunpack.c.0.s8 %v3221
        %v3223 = vlaneseq
        %v3224 = vshrl.u32 %v3223, 7
        %v3225 = vsub.s32 %v3222, %v3224
        %v3226 = vrot.slane %v3218, %v3225
        %v3228 = vunpack.c.l.s4 1983009808
        %v3229 = vunpack.c.0.s8 %v3228
        %v3230 = vlaneseq
        %v3231 = vshrl.u32 %v3230, 7
        %v3232 = vsub.s32 %v3229, %v3231
        %v3233 = vrot.slane %v3219, %v3232
        %v3234 = vcombine.low %v3210, %v3226
        %v3235 = vcombine.high %v3210, %v3226
        %v3237 = vunpack.c.l.s4 1934713408
        %v3238 = vunpack.c.0.s8 %v3237
        %v3239 = vlaneseq
        %v3240 = vshrl.u32 %v3239, 7
        %v3241 = vsub.s32 %v3238, %v3240
        %v3242 = vrot.slane %v3234, %v3241
        %v3244 = vunpack.c.l.s4 1934713408
        %v3245 = vunpack.c.0.s8 %v3244
        %v3246 = vlaneseq
        %v3247 = vshrl.u32 %v3246, 7
        %v3248 = vsub.s32 %v3245, %v3247
        %v3249 = vrot.slane %v3235, %v3248
        %v3250 = vcombine.low %v3217, %v3233
        %v3251 = vcombine.high %v3217, %v3233
        %v3253 = vunpack.c.l.s4 1934713408
        %v3254 = vunpack.c.0.s8 %v3253
        %v3255 = vlaneseq
        %v3256 = vshrl.u32 %v3255, 7
        %v3257 = vsub.s32 %v3254, %v3256
        %v3258 = vrot.slane %v3250, %v3257
        %v3260 = vunpack.c.l.s4 1934713408
        %v3261 = vunpack.c.0.s8 %v3260
        %v3262 = vlaneseq
        %v3263 = vshrl.u32 %v3262, 7
        %v3264 = vsub.s32 %v3261, %v3263
        %v3265 = vrot.slane %v3251, %v3264
        %v3266 = vcombine.high %v3242, 0.0
        %v3267 = vcombine.high %v3249, 0.0
        %v3268 = vcombine.high %v3258, 0.0
        %v3269 = vcombine.high %v3265, 0.0
        %v3270 = vcombine.low %v3059, %v3151
        %v3271 = vcombine.high %v3059, %v3151
        %v3273 = vunpack.c.l.s4 1983009808
        %v3274 = vunpack.c.0.s8 %v3273
        %v3275 = vlaneseq
        %v3276 = vshrl.u32 %v3275, 7
        %v3277 = vsub.s32 %v3274, %v3276
        %v3278 = vrot.slane %v3270, %v3277
        %v3280 = vunpack.c.l.s4 1983009808
        %v3281 = vunpack.c.0.s8 %v3280
        %v3282 = vlaneseq
        %v3283 = vshrl.u32 %v3282, 7
        %v3284 = vsub.s32 %v3281, %v3283
        %v3285 = vrot.slane %v3271, %v3284
        %v3286 = vcombine.low %v3105, %v3197
        %v3287 = vcombine.high %v3105, %v3197
        %v3289 = vunpack.c.l.s4 1983009808
        %v3290 = vunpack.c.0.s8 %v3289
        %v3291 = vlaneseq
        %v3292 = vshrl.u32 %v3291, 7
        %v3293 = vsub.s32 %v3290, %v3292
        %v3294 = vrot.slane %v3286, %v3293
        %v3296 = vunpack.c.l.s4 1983009808
        %v3297 = vunpack.c.0.s8 %v3296
        %v3298 = vlaneseq
        %v3299 = vshrl.u32 %v3298, 7
        %v3300 = vsub.s32 %v3297, %v3299
        %v3301 = vrot.slane %v3287, %v3300
        %v3302 = vcombine.low %v3278, %v3294
        %v3303 = vcombine.high %v3278, %v3294
        %v3305 = vunpack.c.l.s4 1934713408
        %v3306 = vunpack.c.0.s8 %v3305
        %v3307 = vlaneseq
        %v3308 = vshrl.u32 %v3307, 7
        %v3309 = vsub.s32 %v3306, %v3308
        %v3310 = vrot.slane %v3302, %v3309
        %v3312 = vunpack.c.l.s4 1934713408
        %v3313 = vunpack.c.0.s8 %v3312
        %v3314 = vlaneseq
        %v3315 = vshrl.u32 %v3314, 7
        %v3316 = vsub.s32 %v3313, %v3315
        %v3317 = vrot.slane %v3303, %v3316
        %v3318 = vcombine.low %v3285, %v3301
        %v3319 = vcombine.high %v3285, %v3301
        %v3321 = vunpack.c.l.s4 1934713408
        %v3322 = vunpack.c.0.s8 %v3321
        %v3323 = vlaneseq
        %v3324 = vshrl.u32 %v3323, 7
        %v3325 = vsub.s32 %v3322, %v3324
        %v3326 = vrot.slane %v3318, %v3325
        %v3328 = vunpack.c.l.s4 1934713408
        %v3329 = vunpack.c.0.s8 %v3328
        %v3330 = vlaneseq
        %v3331 = vshrl.u32 %v3330, 7
        %v3332 = vsub.s32 %v3329, %v3331
        %v3333 = vrot.slane %v3319, %v3332
        %v3334 = vcombine.high %v3310, 0.0
        %v3335 = vcombine.high %v3317, 0.0
        %v3336 = vcombine.high %v3326, 0.0
        %v3337 = vcombine.high %v3333, 0.0
        %v3338 = vcombine.low %v3242, %v3249
        %v3340 = vunpack.c.l.s4 1983009808
        %v3341 = vunpack.c.0.s8 %v3340
        %v3342 = vlaneseq
        %v3343 = vshrl.u32 %v3342, 7
        %v3344 = vsub.s32 %v3341, %v3343
        %v3345 = vrot.slane %v3338, %v3344
        %v3346 = vcombine.low %v3266, %v3267
        %v3348 = vunpack.c.l.s4 1983009808
        %v3349 = vunpack.c.0.s8 %v3348
        %v3350 = vlaneseq
        %v3351 = vshrl.u32 %v3350, 7
        %v3352 = vsub.s32 %v3349, %v3351
        %v3353 = vrot.slane %v3346, %v3352
        %v3354 = vcombine.low %v3258, %v3265
        %v3356 = vunpack.c.l.s4 1983009808
        %v3357 = vunpack.c.0.s8 %v3356
        %v3358 = vlaneseq
        %v3359 = vshrl.u32 %v3358, 7
        %v3360 = vsub.s32 %v3357, %v3359
        %v3361 = vrot.slane %v3354, %v3360
        %v3362 = vcombine.low %v3268, %v3269
        %v3364 = vunpack.c.l.s4 1983009808
        %v3365 = vunpack.c.0.s8 %v3364
        %v3366 = vlaneseq
        %v3367 = vshrl.u32 %v3366, 7
        %v3368 = vsub.s32 %v3365, %v3367
        %v3369 = vrot.slane %v3362, %v3368
        %v3370 = vcombine.low %v3345, %v3353
        %v3371 = vcombine.high %v3345, %v3353
        %v3373 = vunpack.c.l.s4 1934713408
        %v3374 = vunpack.c.0.s8 %v3373
        %v3375 = vlaneseq
        %v3376 = vshrl.u32 %v3375, 7
        %v3377 = vsub.s32 %v3374, %v3376
        %v3378 = vrot.slane %v3370, %v3377
        %v3380 = vunpack.c.l.s4 1934713408
        %v3381 = vunpack.c.0.s8 %v3380
        %v3382 = vlaneseq
        %v3383 = vshrl.u32 %v3382, 7
        %v3384 = vsub.s32 %v3381, %v3383
        %v3385 = vrot.slane %v3371, %v3384
        %v3386 = vcombine.low %v3361, %v3369
        %v3387 = vcombine.high %v3361, %v3369
        %v3389 = vunpack.c.l.s4 1934713408
        %v3390 = vunpack.c.0.s8 %v3389
        %v3391 = vlaneseq
        %v3392 = vshrl.u32 %v3391, 7
        %v3393 = vsub.s32 %v3390, %v3392
        %v3394 = vrot.slane %v3386, %v3393
        %v3396 = vunpack.c.l.s4 1934713408
        %v3397 = vunpack.c.0.s8 %v3396
        %v3398 = vlaneseq
        %v3399 = vshrl.u32 %v3398, 7
        %v3400 = vsub.s32 %v3397, %v3399
        %v3401 = vrot.slane %v3387, %v3400
        %v3402 = vcombine.low %v3378, %v3394
        %v3403 = vcombine.high %v3378, %v3394
        %v3404 = vcombine.low %v3385, %v3401
        %v3405 = vcombine.high %v3385, %v3401
        %v3406 = vcombine.low %v3310, %v3317
        %v3408 = vunpack.c.l.s4 1983009808
        %v3409 = vunpack.c.0.s8 %v3408
        %v3410 = vlaneseq
        %v3411 = vshrl.u32 %v3410, 7
        %v3412 = vsub.s32 %v3409, %v3411
        %v3413 = vrot.slane %v3406, %v3412
        %v3414 = vcombine.low %v3334, %v3335
        %v3416 = vunpack.c.l.s4 1983009808
        %v3417 = vunpack.c.0.s8 %v3416
        %v3418 = vlaneseq
        %v3419 = vshrl.u32 %v3418, 7
        %v3420 = vsub.s32 %v3417, %v3419
        %v3421 = vrot.slane %v3414, %v3420
        %v3422 = vcombine.low %v3326, %v3333
        %v3424 = vunpack.c.l.s4 1983009808
        %v3425 = vunpack.c.0.s8 %v3424
        %v3426 = vlaneseq
        %v3427 = vshrl.u32 %v3426, 7
        %v3428 = vsub.s32 %v3425, %v3427
        %v3429 = vrot.slane %v3422, %v3428
        %v3430 = vcombine.low %v3336, %v3337
        %v3432 = vunpack.c.l.s4 1983009808
        %v3433 = vunpack.c.0.s8 %v3432
        %v3434 = vlaneseq
        %v3435 = vshrl.u32 %v3434, 7
        %v3436 = vsub.s32 %v3433, %v3435
        %v3437 = vrot.slane %v3430, %v3436
        %v3438 = vcombine.low %v3413, %v3421
        %v3439 = vcombine.high %v3413, %v3421
        %v3441 = vunpack.c.l.s4 1934713408
        %v3442 = vunpack.c.0.s8 %v3441
        %v3443 = vlaneseq
        %v3444 = vshrl.u32 %v3443, 7
        %v3445 = vsub.s32 %v3442, %v3444
        %v3446 = vrot.slane %v3438, %v3445
        %v3448 = vunpack.c.l.s4 1934713408
        %v3449 = vunpack.c.0.s8 %v3448
        %v3450 = vlaneseq
        %v3451 = vshrl.u32 %v3450, 7
        %v3452 = vsub.s32 %v3449, %v3451
        %v3453 = vrot.slane %v3439, %v3452
        %v3454 = vcombine.low %v3429, %v3437
        %v3455 = vcombine.high %v3429, %v3437
        %v3457 = vunpack.c.l.s4 1934713408
        %v3458 = vunpack.c.0.s8 %v3457
        %v3459 = vlaneseq
        %v3460 = vshrl.u32 %v3459, 7
        %v3461 = vsub.s32 %v3458, %v3460
        %v3462 = vrot.slane %v3454, %v3461
        %v3464 = vunpack.c.l.s4 1934713408
        %v3465 = vunpack.c.0.s8 %v3464
        %v3466 = vlaneseq
        %v3467 = vshrl.u32 %v3466, 7
        %v3468 = vsub.s32 %v3465, %v3467
        %v3469 = vrot.slane %v3455, %v3468
        %v3470 = vcombine.low %v3446, %v3462
        %v3471 = vcombine.high %v3446, %v3462
        %v3472 = vcombine.low %v3453, %v3469
        %v3473 = vcombine.high %v3453, %v3469
        %3476 = vrot.lane.b32.xlu0 %v3403, 32
        %v3477 = vpop.permute.xlu0 %3476
        %3478 = vrot.lane.b32.xlu0 %v3471, 32
        %v3479 = vpop.permute.xlu0 %3478
        %3484 = vrot.lane.b32.xlu0 %v3404, 64
        %v3485 = vpop.permute.xlu0 %3484
        %3486 = vrot.lane.b32.xlu0 %v3472, 64
        %v3487 = vpop.permute.xlu0 %3486
        %3492 = vrot.lane.b32.xlu0 %v3405, 96
        %v3493 = vpop.permute.xlu0 %3492
        %3494 = vrot.lane.b32.xlu0 %v3473, 96
        %v3495 = vpop.permute.xlu0 %3494
        %v3498 = vsel %vm2359, %v3402, %v3477
        %v3499 = vsel %vm2359, %v3470, %v3479
        %vm3500 = vcmask 523264
        %v3501 = vsel %vm3500, %v3498, %v3485
        %v3502 = vsel %vm3500, %v3499, %v3487
        %vm3503 = vcmask 785408
        %v3504 = vsel %vm3503, %v3501, %v3493
        %v3505 = vsel %vm3503, %v3502, %v3495
        %v3506 = vpack.c.bf16 %v3505, %v3504
        %v3508 = vlaneseq
        %v3509 = vshrl.u32 %v3508, 7
        %v3510 = vsub.s32 0, %v3509
        %v3511 = vrot.slane %v1229, %v3510
        %v3529 = vunpack.c.l.b16 %v1213
        %v3530 = vunpack.c.l.b16 %v1214
        %v3531 = vunpack.c.l.b16 %v1215
        %v3532 = vunpack.c.l.b16 %v1216
        %v3533 = vunpack.c.l.b16 %v1217
        %v3534 = vunpack.c.l.b16 %v1218
        %v3535 = vunpack.c.l.b16 %v1219
        %v3536 = vunpack.c.l.b16 %v1220
        %v3537 = vunpack.c.l.b16 %v1221
        %v3538 = vunpack.c.l.b16 %v1222
        %v3539 = vunpack.c.l.b16 %v1223
        %v3540 = vunpack.c.l.b16 %v1224
        %v3541 = vunpack.c.l.b16 %v1225
        %v3542 = vunpack.c.l.b16 %v1226
        %v3543 = vunpack.c.l.b16 %v1227
        %v3544 = vunpack.c.l.b16 %v1228
        %v3545 = vpack.c.b16 %v3530, %v3529
        %v3546 = vpack.c.b16 %v3532, %v3531
        %v3547 = vpack.c.b16 %v3534, %v3533
        %v3548 = vpack.c.b16 %v3536, %v3535
        %v3549 = vpack.c.b16 %v3538, %v3537
        %v3550 = vpack.c.b16 %v3540, %v3539
        %v3551 = vpack.c.b16 %v3542, %v3541
        %v3552 = vpack.c.b16 %v3544, %v3543
        %3561 = vmatprep.subr.bf16.mxu0 0
        %3562 = vmatpush1.bf16.msra.mxu0 %v3552
        %3563 = vmatprep.subr.bf16.mxu0 0
        %3564 = vmatpush1.bf16.msra.mxu0 %v3551
        %3565 = vmatprep.subr.bf16.mxu0 0
        %3566 = vmatpush1.bf16.msra.mxu0 %v3550
        %3567 = vmatprep.subr.bf16.mxu0 0
        %3568 = vmatpush1.bf16.msra.mxu0 %v3549
        %3569 = vmatprep.subr.bf16.mxu0 0
        %3570 = vmatpush1.bf16.msra.mxu0 %v3548
        %3571 = vmatprep.subr.bf16.mxu0 0
        %3572 = vmatpush1.bf16.msra.mxu0 %v3547
        %3573 = vmatprep.subr.bf16.mxu0 0
        %3574 = vmatpush1.bf16.msra.mxu0 %v3546
        %3575 = vmatprep.subr.bf16.mxu0 0
        %3576 = vmatpush1.bf16.msra.mxu0 %v3545
        %3577 = vmatprep.subr.bf16.mxu0 0
        %3578 = vmatpush2.bf16.msra.mxu0 0
        %3579 = vmatprep.subr.bf16.mxu0 0
        %3580 = vmatpush2.bf16.msra.mxu0 0
        %3581 = vmatprep.subr.bf16.mxu0 0
        %3582 = vmatpush2.bf16.msra.mxu0 0
        %3583 = vmatprep.subr.bf16.mxu0 0
        %3584 = vmatpush2.bf16.msra.mxu0 0
        %3585 = vmatprep.subr.bf16.mxu0 0
        %3586 = vmatpush2.bf16.msra.mxu0 0
        %3587 = vmatprep.subr.bf16.mxu0 0
        %3588 = vmatpush2.bf16.msra.mxu0 0
        %3589 = vmatprep.subr.bf16.mxu0 0
        %3590 = vmatpush2.bf16.msra.mxu0 0
        %3591 = vmatprep.subr.bf16.mxu0 0
        %3592 = vmatpush2.bf16.msra.mxu0 0
        %3593 = vmatprep.mubr.bf16.mxu0 0
        %3594 = vmatmul.mubr.bf16.gmra.mxu0 %v3506
        %v3595 = vpop.f32.mrf.mxu0
        %v3596 = vadd.f32 %v3511, %v3595
        %v3597 = vpop.f32.mrf.mxu0
        %v3598 = vpop.f32.mrf.mxu0
        %v3599 = vadd.f32 %v3511, %v3598
        %v3600 = vpop.f32.mrf.mxu0
        %3601 = vdwg.mxu0
        %v3602 = vadd.f32 %v1154, %v3596
        %v3603 = vadd.f32 %v1155, %v3599
        %v3604 = vld [vmem:[%s1102] sm:$0x1]
        %v3605 = vld [vmem:[%s1105] sm:$0x1]
        %3606 = vadd.xlane.f32.xlu0 %v3602
        %v3607 = vpop.xlane.xlu0 %3606
        %3608 = vadd.xlane.f32.xlu0 %v3603
        %v3609 = vpop.xlane.xlu0 %3608
        %v3610 = vrcp.pop 128.0
        %v3611 = vmul.f32 %v3607, %v3610
        %v3612 = vmul.f32 %v3609, %v3610
        %v3613 = vsub.f32 %v3602, %v3611
        %v3614 = vsub.f32 %v3603, %v3612
        %v3615 = vmul.f32 %v3613, %v3613
        %v3616 = vmul.f32 %v3614, %v3614
        %3617 = vadd.xlane.f32.xlu0 %v3615
        %v3618 = vpop.xlane.xlu0 %3617
        %3619 = vadd.xlane.f32.xlu0 %v3616
        %v3620 = vpop.xlane.xlu0 %3619
        %v3621 = vmul.f32 %v3618, %v3610
        %v3622 = vmul.f32 %v3620, %v3610
        %v3623 = vadd.f32 %v3621, 1e-05
        %v3624 = vadd.f32 %v3622, 1e-05
        %v3625 = vrsqrt.pop %v3623
        %v3626 = vrsqrt.pop %v3624
        %v3627 = vmul.f32 %v3613, %v3625
        %v3628 = vmul.f32 %v3614, %v3626
        %v3630 = vlaneseq
        %v3631 = vshrl.u32 %v3630, 7
        %v3632 = vsub.s32 0, %v3631
        %v3633 = vrot.slane %v3604, %v3632
        %v3635 = vmul.f32 %v3627, %v3633
        %v3636 = vmul.f32 %v3628, %v3633
        %v3638 = vlaneseq
        %v3639 = vshrl.u32 %v3638, 7
        %v3640 = vsub.s32 0, %v3639
        %v3641 = vrot.slane %v3605, %v3640
        %v3643 = vadd.f32 %v3635, %v3641
        %v3644 = vadd.f32 %v3636, %v3641
        %v3645 = vld [vmem:[%s3] sm:$0x1]
        %v3646 = vld [vmem:[%s3 + $0x1] sm:$0x1]
        %v3647 = vld [vmem:[%s929] sm:$0xf]
        %v3648 = vld [vmem:[%s929 + $0x4] sm:$0xf]
        %v3649 = vld [vmem:[%s929 + $0x8] sm:$0xf]
        %v3650 = vld [vmem:[%s929 + $0xc] sm:$0xf]
        %v3651 = vld [vmem:[%s929 + $0x10] sm:$0xf]
        %v3652 = vld [vmem:[%s929 + $0x14] sm:$0xf]
        %v3653 = vld [vmem:[%s929 + $0x18] sm:$0xf]
        %v3654 = vld [vmem:[%s929 + $0x1c] sm:$0xf]
        %v3655 = vld [vmem:[%s929 + $0x20] sm:$0xf]
        %v3656 = vld [vmem:[%s929 + $0x24] sm:$0xf]
        %v3657 = vld [vmem:[%s929 + $0x28] sm:$0xf]
        %v3658 = vld [vmem:[%s929 + $0x2c] sm:$0xf]
        %v3659 = vld [vmem:[%s929 + $0x30] sm:$0xf]
        %v3660 = vld [vmem:[%s929 + $0x34] sm:$0xf]
        %v3661 = vld [vmem:[%s929 + $0x38] sm:$0xf]
        %v3662 = vld [vmem:[%s929 + $0x3c] sm:$0xf]
        %v3663 = vld [vmem:[%s1108] sm:$0x1]
        %v3664 = vld [vmem:[%s1113] sm:$0xff]
        %v3665 = vld [vmem:[%s1113 + $0x8] sm:$0xff]
        %v3666 = vld [vmem:[%s1113 + $0x10] sm:$0xff]
        %v3667 = vld [vmem:[%s1113 + $0x18] sm:$0xff]
        %v3668 = vld [vmem:[%s1113 + $0x20] sm:$0xff]
        %v3669 = vld [vmem:[%s1113 + $0x28] sm:$0xff]
        %v3670 = vld [vmem:[%s1113 + $0x30] sm:$0xff]
        %v3671 = vld [vmem:[%s1113 + $0x38] sm:$0xff]
        %v3672 = vld [vmem:[%s1113 + $0x40] sm:$0xff]
        %v3673 = vld [vmem:[%s1113 + $0x48] sm:$0xff]
        %v3674 = vld [vmem:[%s1113 + $0x50] sm:$0xff]
        %v3675 = vld [vmem:[%s1113 + $0x58] sm:$0xff]
        %v3676 = vld [vmem:[%s1113 + $0x60] sm:$0xff]
        %v3677 = vld [vmem:[%s1113 + $0x68] sm:$0xff]
        %v3678 = vld [vmem:[%s1113 + $0x70] sm:$0xff]
        %v3679 = vld [vmem:[%s1113 + $0x78] sm:$0xff]
        %v3680 = vld [vmem:[%s1117] sm:$0x3]
        %v3681 = vld [vmem:[%s938] sm:$0xf]
        %v3682 = vld [vmem:[%s938 + $0x4] sm:$0xf]
        %v3683 = vld [vmem:[%s938 + $0x8] sm:$0xf]
        %v3684 = vld [vmem:[%s938 + $0xc] sm:$0xf]
        %v3685 = vld [vmem:[%s938 + $0x10] sm:$0xf]
        %v3686 = vld [vmem:[%s938 + $0x14] sm:$0xf]
        %v3687 = vld [vmem:[%s938 + $0x18] sm:$0xf]
        %v3688 = vld [vmem:[%s938 + $0x1c] sm:$0xf]
        %v3689 = vld [vmem:[%s938 + $0x20] sm:$0xf]
        %v3690 = vld [vmem:[%s938 + $0x24] sm:$0xf]
        %v3691 = vld [vmem:[%s938 + $0x28] sm:$0xf]
        %v3692 = vld [vmem:[%s938 + $0x2c] sm:$0xf]
        %v3693 = vld [vmem:[%s938 + $0x30] sm:$0xf]
        %v3694 = vld [vmem:[%s938 + $0x34] sm:$0xf]
        %v3695 = vld [vmem:[%s938 + $0x38] sm:$0xf]
        %v3696 = vld [vmem:[%s938 + $0x3c] sm:$0xf]
        %v3697 = vld [vmem:[%s1120] sm:$0x1]
        %v3698 = vpack.c.bf16 %v3644, %v3643
        %v3700 = vlaneseq
        %v3701 = vshrl.u32 %v3700, 7
        %v3702 = vsub.s32 0, %v3701
        %v3703 = vrot.slane %v3663, %v3702
        %v3721 = vunpack.c.l.b16 %v3647
        %v3722 = vunpack.c.l.b16 %v3648
        %v3723 = vunpack.c.l.b16 %v3649
        %v3724 = vunpack.c.l.b16 %v3650
        %v3725 = vunpack.c.l.b16 %v3651
        %v3726 = vunpack.c.l.b16 %v3652
        %v3727 = vunpack.c.l.b16 %v3653
        %v3728 = vunpack.c.l.b16 %v3654
        %v3729 = vunpack.c.l.b16 %v3655
        %v3730 = vunpack.c.l.b16 %v3656
        %v3731 = vunpack.c.l.b16 %v3657
        %v3732 = vunpack.c.l.b16 %v3658
        %v3733 = vunpack.c.l.b16 %v3659
        %v3734 = vunpack.c.l.b16 %v3660
        %v3735 = vunpack.c.l.b16 %v3661
        %v3736 = vunpack.c.l.b16 %v3662
        %v3737 = vpack.c.b16 %v3722, %v3721
        %v3738 = vpack.c.b16 %v3724, %v3723
        %v3739 = vpack.c.b16 %v3726, %v3725
        %v3740 = vpack.c.b16 %v3728, %v3727
        %v3741 = vpack.c.b16 %v3730, %v3729
        %v3742 = vpack.c.b16 %v3732, %v3731
        %v3743 = vpack.c.b16 %v3734, %v3733
        %v3744 = vpack.c.b16 %v3736, %v3735
        %3753 = vmatprep.subr.bf16.mxu0 0
        %3754 = vmatpush1.bf16.msra.mxu0 %v3744
        %3755 = vmatprep.subr.bf16.mxu0 0
        %3756 = vmatpush1.bf16.msra.mxu0 %v3743
        %3757 = vmatprep.subr.bf16.mxu0 0
        %3758 = vmatpush1.bf16.msra.mxu0 %v3742
        %3759 = vmatprep.subr.bf16.mxu0 0
        %3760 = vmatpush1.bf16.msra.mxu0 %v3741
        %3761 = vmatprep.subr.bf16.mxu0 0
        %3762 = vmatpush1.bf16.msra.mxu0 %v3740
        %3763 = vmatprep.subr.bf16.mxu0 0
        %3764 = vmatpush1.bf16.msra.mxu0 %v3739
        %3765 = vmatprep.subr.bf16.mxu0 0
        %3766 = vmatpush1.bf16.msra.mxu0 %v3738
        %3767 = vmatprep.subr.bf16.mxu0 0
        %3768 = vmatpush1.bf16.msra.mxu0 %v3737
        %3769 = vmatprep.subr.bf16.mxu0 0
        %3770 = vmatpush2.bf16.msra.mxu0 0
        %3771 = vmatprep.subr.bf16.mxu0 0
        %3772 = vmatpush2.bf16.msra.mxu0 0
        %3773 = vmatprep.subr.bf16.mxu0 0
        %3774 = vmatpush2.bf16.msra.mxu0 0
        %3775 = vmatprep.subr.bf16.mxu0 0
        %3776 = vmatpush2.bf16.msra.mxu0 0
        %3777 = vmatprep.subr.bf16.mxu0 0
        %3778 = vmatpush2.bf16.msra.mxu0 0
        %3779 = vmatprep.subr.bf16.mxu0 0
        %3780 = vmatpush2.bf16.msra.mxu0 0
        %3781 = vmatprep.subr.bf16.mxu0 0
        %3782 = vmatpush2.bf16.msra.mxu0 0
        %3783 = vmatprep.subr.bf16.mxu0 0
        %3784 = vmatpush2.bf16.msra.mxu0 0
        %3785 = vmatprep.mubr.bf16.mxu0 0
        %3786 = vmatmul.mubr.bf16.gmra.mxu0 %v3698
        %v3787 = vpop.f32.mrf.mxu0
        %v3788 = vadd.f32 %v3703, %v3787
        %v3789 = vpop.f32.mrf.mxu0
        %v3790 = vpop.f32.mrf.mxu0
        %v3791 = vadd.f32 %v3703, %v3790
        %v3792 = vpop.f32.mrf.mxu0
        %3793 = vdwg.mxu0
        %v3794 = vpack.c.bf16 %v1157, %v1156
        %v3796 = vlaneseq
        %v3797 = vshrl.u32 %v3796, 7
        %v3798 = vsub.s32 0, %v3797
        %v3799 = vrot.slane %v3680, %v3798
        %v3800 = vlaneseq
        %v3801 = vshrl.u32 %v3800, 7
        %v3802 = vsub.s32 1, %v3801
        %v3803 = vrot.slane %v3680, %v3802
        %v3822 = vunpack.c.l.b16 %v3664
        %v3823 = vunpack.c.h.b16 %v3664
        %v3824 = vunpack.c.l.b16 %v3665
        %v3825 = vunpack.c.h.b16 %v3665
        %v3826 = vunpack.c.l.b16 %v3666
        %v3827 = vunpack.c.h.b16 %v3666
        %v3828 = vunpack.c.l.b16 %v3667
        %v3829 = vunpack.c.h.b16 %v3667
        %v3830 = vunpack.c.l.b16 %v3668
        %v3831 = vunpack.c.h.b16 %v3668
        %v3832 = vunpack.c.l.b16 %v3669
        %v3833 = vunpack.c.h.b16 %v3669
        %v3834 = vunpack.c.l.b16 %v3670
        %v3835 = vunpack.c.h.b16 %v3670
        %v3836 = vunpack.c.l.b16 %v3671
        %v3837 = vunpack.c.h.b16 %v3671
        %v3838 = vunpack.c.l.b16 %v3672
        %v3839 = vunpack.c.h.b16 %v3672
        %v3840 = vunpack.c.l.b16 %v3673
        %v3841 = vunpack.c.h.b16 %v3673
        %v3842 = vunpack.c.l.b16 %v3674
        %v3843 = vunpack.c.h.b16 %v3674
        %v3844 = vunpack.c.l.b16 %v3675
        %v3845 = vunpack.c.h.b16 %v3675
        %v3846 = vunpack.c.l.b16 %v3676
        %v3847 = vunpack.c.h.b16 %v3676
        %v3848 = vunpack.c.l.b16 %v3677
        %v3849 = vunpack.c.h.b16 %v3677
        %v3850 = vunpack.c.l.b16 %v3678
        %v3851 = vunpack.c.h.b16 %v3678
        %v3852 = vunpack.c.l.b16 %v3679
        %v3853 = vunpack.c.h.b16 %v3679
        %v3854 = vpack.c.b16 %v3824, %v3822
        %v3855 = vpack.c.b16 %v3825, %v3823
        %v3856 = vpack.c.b16 %v3828, %v3826
        %v3857 = vpack.c.b16 %v3829, %v3827
        %v3858 = vpack.c.b16 %v3832, %v3830
        %v3859 = vpack.c.b16 %v3833, %v3831
        %v3860 = vpack.c.b16 %v3836, %v3834
        %v3861 = vpack.c.b16 %v3837, %v3835
        %v3862 = vpack.c.b16 %v3840, %v3838
        %v3863 = vpack.c.b16 %v3841, %v3839
        %v3864 = vpack.c.b16 %v3844, %v3842
        %v3865 = vpack.c.b16 %v3845, %v3843
        %v3866 = vpack.c.b16 %v3848, %v3846
        %v3867 = vpack.c.b16 %v3849, %v3847
        %v3868 = vpack.c.b16 %v3852, %v3850
        %v3869 = vpack.c.b16 %v3853, %v3851
        %3886 = vmatprep.subr.bf16.mxu0 %v3869
        %3887 = vmatpush1.bf16.msra.mxu0 %v3868
        %3888 = vmatprep.subr.bf16.mxu0 %v3867
        %3889 = vmatpush1.bf16.msra.mxu0 %v3866
        %3890 = vmatprep.subr.bf16.mxu0 %v3865
        %3891 = vmatpush1.bf16.msra.mxu0 %v3864
        %3892 = vmatprep.subr.bf16.mxu0 %v3863
        %3893 = vmatpush1.bf16.msra.mxu0 %v3862
        %3894 = vmatprep.subr.bf16.mxu0 %v3861
        %3895 = vmatpush1.bf16.msra.mxu0 %v3860
        %3896 = vmatprep.subr.bf16.mxu0 %v3859
        %3897 = vmatpush1.bf16.msra.mxu0 %v3858
        %3898 = vmatprep.subr.bf16.mxu0 %v3857
        %3899 = vmatpush1.bf16.msra.mxu0 %v3856
        %3900 = vmatprep.subr.bf16.mxu0 %v3855
        %3901 = vmatpush1.bf16.msra.mxu0 %v3854
        %3902 = vmatprep.subr.bf16.mxu0 0
        %3903 = vmatpush2.bf16.msra.mxu0 0
        %3904 = vmatprep.subr.bf16.mxu0 0
        %3905 = vmatpush2.bf16.msra.mxu0 0
        %3906 = vmatprep.subr.bf16.mxu0 0
        %3907 = vmatpush2.bf16.msra.mxu0 0
        %3908 = vmatprep.subr.bf16.mxu0 0
        %3909 = vmatpush2.bf16.msra.mxu0 0
        %3910 = vmatprep.subr.bf16.mxu0 0
        %3911 = vmatpush2.bf16.msra.mxu0 0
        %3912 = vmatprep.subr.bf16.mxu0 0
        %3913 = vmatpush2.bf16.msra.mxu0 0
        %3914 = vmatprep.subr.bf16.mxu0 0
        %3915 = vmatpush2.bf16.msra.mxu0 0
        %3916 = vmatprep.subr.bf16.mxu0 0
        %3917 = vmatpush2.bf16.msra.mxu0 0
        %3918 = vmatprep.mubr.bf16.mxu0 0
        %3919 = vmatmul.mubr.bf16.gmra.mxu0 %v3794
        %v3920 = vpop.f32.mrf.mxu0
        %v3921 = vadd.f32 %v3799, %v3920
        %v3922 = vpop.f32.mrf.mxu0
        %v3923 = vadd.f32 %v3803, %v3922
        %v3924 = vpop.f32.mrf.mxu0
        %v3925 = vadd.f32 %v3799, %v3924
        %v3926 = vpop.f32.mrf.mxu0
        %v3927 = vadd.f32 %v3803, %v3926
        %3928 = vdwg.mxu0
        %3931 = vrot.lane.b32.xlu0 %v3788, 96
        %v3932 = vpop.permute.xlu0 %3931
        %3933 = vrot.lane.b32.xlu0 %v3791, 96
        %v3934 = vpop.permute.xlu0 %3933
        %3937 = vrot.lane.b32.xlu0 %v3788, 64
        %v3938 = vpop.permute.xlu0 %3937
        %3939 = vrot.lane.b32.xlu0 %v3791, 64
        %v3940 = vpop.permute.xlu0 %3939
        %3943 = vrot.lane.b32.xlu0 %v3788, 32
        %v3944 = vpop.permute.xlu0 %3943
        %3945 = vrot.lane.b32.xlu0 %v3791, 32
        %v3946 = vpop.permute.xlu0 %3945
        %v3949 = vcombine.low %v3788, %v3938
        %v3950 = vcombine.high %v3788, %v3938
        %v3952 = vunpack.c.l.s4 1983009808
        %v3953 = vunpack.c.0.s8 %v3952
        %v3954 = vlaneseq
        %v3955 = vshrl.u32 %v3954, 7
        %v3956 = vsub.s32 %v3953, %v3955
        %v3957 = vrot.slane %v3949, %v3956
        %v3959 = vunpack.c.l.s4 1983009808
        %v3960 = vunpack.c.0.s8 %v3959
        %v3961 = vlaneseq
        %v3962 = vshrl.u32 %v3961, 7
        %v3963 = vsub.s32 %v3960, %v3962
        %v3964 = vrot.slane %v3950, %v3963
        %v3965 = vcombine.low %v3932, %v3944
        %v3966 = vcombine.high %v3932, %v3944
        %v3968 = vunpack.c.l.s4 1983009808
        %v3969 = vunpack.c.0.s8 %v3968
        %v3970 = vlaneseq
        %v3971 = vshrl.u32 %v3970, 7
        %v3972 = vsub.s32 %v3969, %v3971
        %v3973 = vrot.slane %v3965, %v3972
        %v3975 = vunpack.c.l.s4 1983009808
        %v3976 = vunpack.c.0.s8 %v3975
        %v3977 = vlaneseq
        %v3978 = vshrl.u32 %v3977, 7
        %v3979 = vsub.s32 %v3976, %v3978
        %v3980 = vrot.slane %v3966, %v3979
        %v3981 = vcombine.low %v3957, %v3973
        %v3982 = vcombine.high %v3957, %v3973
        %v3984 = vunpack.c.l.s4 1934713408
        %v3985 = vunpack.c.0.s8 %v3984
        %v3986 = vlaneseq
        %v3987 = vshrl.u32 %v3986, 7
        %v3988 = vsub.s32 %v3985, %v3987
        %v3989 = vrot.slane %v3981, %v3988
        %v3991 = vunpack.c.l.s4 1934713408
        %v3992 = vunpack.c.0.s8 %v3991
        %v3993 = vlaneseq
        %v3994 = vshrl.u32 %v3993, 7
        %v3995 = vsub.s32 %v3992, %v3994
        %v3996 = vrot.slane %v3982, %v3995
        %v3997 = vcombine.low %v3964, %v3980
        %v3998 = vcombine.high %v3964, %v3980
        %v4000 = vunpack.c.l.s4 1934713408
        %v4001 = vunpack.c.0.s8 %v4000
        %v4002 = vlaneseq
        %v4003 = vshrl.u32 %v4002, 7
        %v4004 = vsub.s32 %v4001, %v4003
        %v4005 = vrot.slane %v3997, %v4004
        %v4007 = vunpack.c.l.s4 1934713408
        %v4008 = vunpack.c.0.s8 %v4007
        %v4009 = vlaneseq
        %v4010 = vshrl.u32 %v4009, 7
        %v4011 = vsub.s32 %v4008, %v4010
        %v4012 = vrot.slane %v3998, %v4011
        %v4013 = vcombine.high %v3989, 0.0
        %v4014 = vcombine.high %v3996, 0.0
        %v4015 = vcombine.high %v4005, 0.0
        %v4016 = vcombine.high %v4012, 0.0
        %v4017 = vcombine.low %v3791, %v3940
        %v4018 = vcombine.high %v3791, %v3940
        %v4020 = vunpack.c.l.s4 1983009808
        %v4021 = vunpack.c.0.s8 %v4020
        %v4022 = vlaneseq
        %v4023 = vshrl.u32 %v4022, 7
        %v4024 = vsub.s32 %v4021, %v4023
        %v4025 = vrot.slane %v4017, %v4024
        %v4027 = vunpack.c.l.s4 1983009808
        %v4028 = vunpack.c.0.s8 %v4027
        %v4029 = vlaneseq
        %v4030 = vshrl.u32 %v4029, 7
        %v4031 = vsub.s32 %v4028, %v4030
        %v4032 = vrot.slane %v4018, %v4031
        %v4033 = vcombine.low %v3934, %v3946
        %v4034 = vcombine.high %v3934, %v3946
        %v4036 = vunpack.c.l.s4 1983009808
        %v4037 = vunpack.c.0.s8 %v4036
        %v4038 = vlaneseq
        %v4039 = vshrl.u32 %v4038, 7
        %v4040 = vsub.s32 %v4037, %v4039
        %v4041 = vrot.slane %v4033, %v4040
        %v4043 = vunpack.c.l.s4 1983009808
        %v4044 = vunpack.c.0.s8 %v4043
        %v4045 = vlaneseq
        %v4046 = vshrl.u32 %v4045, 7
        %v4047 = vsub.s32 %v4044, %v4046
        %v4048 = vrot.slane %v4034, %v4047
        %v4049 = vcombine.low %v4025, %v4041
        %v4050 = vcombine.high %v4025, %v4041
        %v4052 = vunpack.c.l.s4 1934713408
        %v4053 = vunpack.c.0.s8 %v4052
        %v4054 = vlaneseq
        %v4055 = vshrl.u32 %v4054, 7
        %v4056 = vsub.s32 %v4053, %v4055
        %v4057 = vrot.slane %v4049, %v4056
        %v4059 = vunpack.c.l.s4 1934713408
        %v4060 = vunpack.c.0.s8 %v4059
        %v4061 = vlaneseq
        %v4062 = vshrl.u32 %v4061, 7
        %v4063 = vsub.s32 %v4060, %v4062
        %v4064 = vrot.slane %v4050, %v4063
        %v4065 = vcombine.low %v4032, %v4048
        %v4066 = vcombine.high %v4032, %v4048
        %v4068 = vunpack.c.l.s4 1934713408
        %v4069 = vunpack.c.0.s8 %v4068
        %v4070 = vlaneseq
        %v4071 = vshrl.u32 %v4070, 7
        %v4072 = vsub.s32 %v4069, %v4071
        %v4073 = vrot.slane %v4065, %v4072
        %v4075 = vunpack.c.l.s4 1934713408
        %v4076 = vunpack.c.0.s8 %v4075
        %v4077 = vlaneseq
        %v4078 = vshrl.u32 %v4077, 7
        %v4079 = vsub.s32 %v4076, %v4078
        %v4080 = vrot.slane %v4066, %v4079
        %v4081 = vcombine.high %v4057, 0.0
        %v4082 = vcombine.high %v4064, 0.0
        %v4083 = vcombine.high %v4073, 0.0
        %v4084 = vcombine.high %v4080, 0.0
        %v4085 = vcombine.low %v3989, %v3996
        %v4087 = vunpack.c.l.s4 1983009808
        %v4088 = vunpack.c.0.s8 %v4087
        %v4089 = vlaneseq
        %v4090 = vshrl.u32 %v4089, 7
        %v4091 = vsub.s32 %v4088, %v4090
        %v4092 = vrot.slane %v4085, %v4091
        %v4093 = vcombine.low %v4013, %v4014
        %v4095 = vunpack.c.l.s4 1983009808
        %v4096 = vunpack.c.0.s8 %v4095
        %v4097 = vlaneseq
        %v4098 = vshrl.u32 %v4097, 7
        %v4099 = vsub.s32 %v4096, %v4098
        %v4100 = vrot.slane %v4093, %v4099
        %v4101 = vcombine.low %v4005, %v4012
        %v4103 = vunpack.c.l.s4 1983009808
        %v4104 = vunpack.c.0.s8 %v4103
        %v4105 = vlaneseq
        %v4106 = vshrl.u32 %v4105, 7
        %v4107 = vsub.s32 %v4104, %v4106
        %v4108 = vrot.slane %v4101, %v4107
        %v4109 = vcombine.low %v4015, %v4016
        %v4111 = vunpack.c.l.s4 1983009808
        %v4112 = vunpack.c.0.s8 %v4111
        %v4113 = vlaneseq
        %v4114 = vshrl.u32 %v4113, 7
        %v4115 = vsub.s32 %v4112, %v4114
        %v4116 = vrot.slane %v4109, %v4115
        %v4117 = vcombine.low %v4092, %v4100
        %v4118 = vcombine.high %v4092, %v4100
        %v4120 = vunpack.c.l.s4 1934713408
        %v4121 = vunpack.c.0.s8 %v4120
        %v4122 = vlaneseq
        %v4123 = vshrl.u32 %v4122, 7
        %v4124 = vsub.s32 %v4121, %v4123
        %v4125 = vrot.slane %v4117, %v4124
        %v4127 = vunpack.c.l.s4 1934713408
        %v4128 = vunpack.c.0.s8 %v4127
        %v4129 = vlaneseq
        %v4130 = vshrl.u32 %v4129, 7
        %v4131 = vsub.s32 %v4128, %v4130
        %v4132 = vrot.slane %v4118, %v4131
        %v4133 = vcombine.low %v4108, %v4116
        %v4134 = vcombine.high %v4108, %v4116
        %v4136 = vunpack.c.l.s4 1934713408
        %v4137 = vunpack.c.0.s8 %v4136
        %v4138 = vlaneseq
        %v4139 = vshrl.u32 %v4138, 7
        %v4140 = vsub.s32 %v4137, %v4139
        %v4141 = vrot.slane %v4133, %v4140
        %v4143 = vunpack.c.l.s4 1934713408
        %v4144 = vunpack.c.0.s8 %v4143
        %v4145 = vlaneseq
        %v4146 = vshrl.u32 %v4145, 7
        %v4147 = vsub.s32 %v4144, %v4146
        %v4148 = vrot.slane %v4134, %v4147
        %v4149 = vcombine.low %v4125, %v4141
        %v4150 = vcombine.high %v4125, %v4141
        %v4151 = vcombine.low %v4132, %v4148
        %v4152 = vcombine.high %v4132, %v4148
        %v4153 = vcombine.low %v4057, %v4064
        %v4155 = vunpack.c.l.s4 1983009808
        %v4156 = vunpack.c.0.s8 %v4155
        %v4157 = vlaneseq
        %v4158 = vshrl.u32 %v4157, 7
        %v4159 = vsub.s32 %v4156, %v4158
        %v4160 = vrot.slane %v4153, %v4159
        %v4161 = vcombine.low %v4081, %v4082
        %v4163 = vunpack.c.l.s4 1983009808
        %v4164 = vunpack.c.0.s8 %v4163
        %v4165 = vlaneseq
        %v4166 = vshrl.u32 %v4165, 7
        %v4167 = vsub.s32 %v4164, %v4166
        %v4168 = vrot.slane %v4161, %v4167
        %v4169 = vcombine.low %v4073, %v4080
        %v4171 = vunpack.c.l.s4 1983009808
        %v4172 = vunpack.c.0.s8 %v4171
        %v4173 = vlaneseq
        %v4174 = vshrl.u32 %v4173, 7
        %v4175 = vsub.s32 %v4172, %v4174
        %v4176 = vrot.slane %v4169, %v4175
        %v4177 = vcombine.low %v4083, %v4084
        %v4179 = vunpack.c.l.s4 1983009808
        %v4180 = vunpack.c.0.s8 %v4179
        %v4181 = vlaneseq
        %v4182 = vshrl.u32 %v4181, 7
        %v4183 = vsub.s32 %v4180, %v4182
        %v4184 = vrot.slane %v4177, %v4183
        %v4185 = vcombine.low %v4160, %v4168
        %v4186 = vcombine.high %v4160, %v4168
        %v4188 = vunpack.c.l.s4 1934713408
        %v4189 = vunpack.c.0.s8 %v4188
        %v4190 = vlaneseq
        %v4191 = vshrl.u32 %v4190, 7
        %v4192 = vsub.s32 %v4189, %v4191
        %v4193 = vrot.slane %v4185, %v4192
        %v4195 = vunpack.c.l.s4 1934713408
        %v4196 = vunpack.c.0.s8 %v4195
        %v4197 = vlaneseq
        %v4198 = vshrl.u32 %v4197, 7
        %v4199 = vsub.s32 %v4196, %v4198
        %v4200 = vrot.slane %v4186, %v4199
        %v4201 = vcombine.low %v4176, %v4184
        %v4202 = vcombine.high %v4176, %v4184
        %v4204 = vunpack.c.l.s4 1934713408
        %v4205 = vunpack.c.0.s8 %v4204
        %v4206 = vlaneseq
        %v4207 = vshrl.u32 %v4206, 7
        %v4208 = vsub.s32 %v4205, %v4207
        %v4209 = vrot.slane %v4201, %v4208
        %v4211 = vunpack.c.l.s4 1934713408
        %v4212 = vunpack.c.0.s8 %v4211
        %v4213 = vlaneseq
        %v4214 = vshrl.u32 %v4213, 7
        %v4215 = vsub.s32 %v4212, %v4214
        %v4216 = vrot.slane %v4202, %v4215
        %v4217 = vcombine.low %v4193, %v4209
        %v4218 = vcombine.high %v4193, %v4209
        %v4219 = vcombine.low %v4200, %v4216
        %v4220 = vcombine.high %v4200, %v4216
        %v4221 = vpack.c.bf16 %v4149, %v4149
        %v4222 = vpack.c.bf16 %v4150, %v4150
        %v4223 = vpack.c.bf16 %v4151, %v4151
        %v4224 = vpack.c.bf16 %v4152, %v4152
        %v4225 = vpack.c.bf16 %v4217, %v4217
        %v4226 = vpack.c.bf16 %v4218, %v4218
        %v4227 = vpack.c.bf16 %v4219, %v4219
        %v4228 = vpack.c.bf16 %v4220, %v4220
        %4231 = vrot.lane.b32.xlu0 %v3921, 96
        %v4232 = vpop.permute.xlu0 %4231
        %4233 = vrot.lane.b32.xlu0 %v3925, 96
        %v4234 = vpop.permute.xlu0 %4233
        %4237 = vrot.lane.b32.xlu0 %v3921, 64
        %v4238 = vpop.permute.xlu0 %4237
        %4239 = vrot.lane.b32.xlu0 %v3925, 64
        %v4240 = vpop.permute.xlu0 %4239
        %4243 = vrot.lane.b32.xlu0 %v3921, 32
        %v4244 = vpop.permute.xlu0 %4243
        %4245 = vrot.lane.b32.xlu0 %v3925, 32
        %v4246 = vpop.permute.xlu0 %4245
        %v4249 = vcombine.low %v3921, %v4238
        %v4250 = vcombine.high %v3921, %v4238
        %v4252 = vunpack.c.l.s4 1983009808
        %v4253 = vunpack.c.0.s8 %v4252
        %v4254 = vlaneseq
        %v4255 = vshrl.u32 %v4254, 7
        %v4256 = vsub.s32 %v4253, %v4255
        %v4257 = vrot.slane %v4249, %v4256
        %v4259 = vunpack.c.l.s4 1983009808
        %v4260 = vunpack.c.0.s8 %v4259
        %v4261 = vlaneseq
        %v4262 = vshrl.u32 %v4261, 7
        %v4263 = vsub.s32 %v4260, %v4262
        %v4264 = vrot.slane %v4250, %v4263
        %v4265 = vcombine.low %v4232, %v4244
        %v4266 = vcombine.high %v4232, %v4244
        %v4268 = vunpack.c.l.s4 1983009808
        %v4269 = vunpack.c.0.s8 %v4268
        %v4270 = vlaneseq
        %v4271 = vshrl.u32 %v4270, 7
        %v4272 = vsub.s32 %v4269, %v4271
        %v4273 = vrot.slane %v4265, %v4272
        %v4275 = vunpack.c.l.s4 1983009808
        %v4276 = vunpack.c.0.s8 %v4275
        %v4277 = vlaneseq
        %v4278 = vshrl.u32 %v4277, 7
        %v4279 = vsub.s32 %v4276, %v4278
        %v4280 = vrot.slane %v4266, %v4279
        %v4281 = vcombine.low %v4257, %v4273
        %v4282 = vcombine.high %v4257, %v4273
        %v4284 = vunpack.c.l.s4 1934713408
        %v4285 = vunpack.c.0.s8 %v4284
        %v4286 = vlaneseq
        %v4287 = vshrl.u32 %v4286, 7
        %v4288 = vsub.s32 %v4285, %v4287
        %v4289 = vrot.slane %v4281, %v4288
        %v4291 = vunpack.c.l.s4 1934713408
        %v4292 = vunpack.c.0.s8 %v4291
        %v4293 = vlaneseq
        %v4294 = vshrl.u32 %v4293, 7
        %v4295 = vsub.s32 %v4292, %v4294
        %v4296 = vrot.slane %v4282, %v4295
        %v4297 = vcombine.low %v4264, %v4280
        %v4298 = vcombine.high %v4264, %v4280
        %v4300 = vunpack.c.l.s4 1934713408
        %v4301 = vunpack.c.0.s8 %v4300
        %v4302 = vlaneseq
        %v4303 = vshrl.u32 %v4302, 7
        %v4304 = vsub.s32 %v4301, %v4303
        %v4305 = vrot.slane %v4297, %v4304
        %v4307 = vunpack.c.l.s4 1934713408
        %v4308 = vunpack.c.0.s8 %v4307
        %v4309 = vlaneseq
        %v4310 = vshrl.u32 %v4309, 7
        %v4311 = vsub.s32 %v4308, %v4310
        %v4312 = vrot.slane %v4298, %v4311
        %v4313 = vcombine.high %v4289, 0.0
        %v4314 = vcombine.high %v4296, 0.0
        %v4315 = vcombine.high %v4305, 0.0
        %v4316 = vcombine.high %v4312, 0.0
        %v4317 = vcombine.low %v3925, %v4240
        %v4318 = vcombine.high %v3925, %v4240
        %v4320 = vunpack.c.l.s4 1983009808
        %v4321 = vunpack.c.0.s8 %v4320
        %v4322 = vlaneseq
        %v4323 = vshrl.u32 %v4322, 7
        %v4324 = vsub.s32 %v4321, %v4323
        %v4325 = vrot.slane %v4317, %v4324
        %v4327 = vunpack.c.l.s4 1983009808
        %v4328 = vunpack.c.0.s8 %v4327
        %v4329 = vlaneseq
        %v4330 = vshrl.u32 %v4329, 7
        %v4331 = vsub.s32 %v4328, %v4330
        %v4332 = vrot.slane %v4318, %v4331
        %v4333 = vcombine.low %v4234, %v4246
        %v4334 = vcombine.high %v4234, %v4246
        %v4336 = vunpack.c.l.s4 1983009808
        %v4337 = vunpack.c.0.s8 %v4336
        %v4338 = vlaneseq
        %v4339 = vshrl.u32 %v4338, 7
        %v4340 = vsub.s32 %v4337, %v4339
        %v4341 = vrot.slane %v4333, %v4340
        %v4343 = vunpack.c.l.s4 1983009808
        %v4344 = vunpack.c.0.s8 %v4343
        %v4345 = vlaneseq
        %v4346 = vshrl.u32 %v4345, 7
        %v4347 = vsub.s32 %v4344, %v4346
        %v4348 = vrot.slane %v4334, %v4347
        %v4349 = vcombine.low %v4325, %v4341
        %v4350 = vcombine.high %v4325, %v4341
        %v4352 = vunpack.c.l.s4 1934713408
        %v4353 = vunpack.c.0.s8 %v4352
        %v4354 = vlaneseq
        %v4355 = vshrl.u32 %v4354, 7
        %v4356 = vsub.s32 %v4353, %v4355
        %v4357 = vrot.slane %v4349, %v4356
        %v4359 = vunpack.c.l.s4 1934713408
        %v4360 = vunpack.c.0.s8 %v4359
        %v4361 = vlaneseq
        %v4362 = vshrl.u32 %v4361, 7
        %v4363 = vsub.s32 %v4360, %v4362
        %v4364 = vrot.slane %v4350, %v4363
        %v4365 = vcombine.low %v4332, %v4348
        %v4366 = vcombine.high %v4332, %v4348
        %v4368 = vunpack.c.l.s4 1934713408
        %v4369 = vunpack.c.0.s8 %v4368
        %v4370 = vlaneseq
        %v4371 = vshrl.u32 %v4370, 7
        %v4372 = vsub.s32 %v4369, %v4371
        %v4373 = vrot.slane %v4365, %v4372
        %v4375 = vunpack.c.l.s4 1934713408
        %v4376 = vunpack.c.0.s8 %v4375
        %v4377 = vlaneseq
        %v4378 = vshrl.u32 %v4377, 7
        %v4379 = vsub.s32 %v4376, %v4378
        %v4380 = vrot.slane %v4366, %v4379
        %v4381 = vcombine.high %v4357, 0.0
        %v4382 = vcombine.high %v4364, 0.0
        %v4383 = vcombine.high %v4373, 0.0
        %v4384 = vcombine.high %v4380, 0.0
        %v4385 = vcombine.low %v4289, %v4296
        %v4387 = vunpack.c.l.s4 1983009808
        %v4388 = vunpack.c.0.s8 %v4387
        %v4389 = vlaneseq
        %v4390 = vshrl.u32 %v4389, 7
        %v4391 = vsub.s32 %v4388, %v4390
        %v4392 = vrot.slane %v4385, %v4391
        %v4393 = vcombine.low %v4313, %v4314
        %v4395 = vunpack.c.l.s4 1983009808
        %v4396 = vunpack.c.0.s8 %v4395
        %v4397 = vlaneseq
        %v4398 = vshrl.u32 %v4397, 7
        %v4399 = vsub.s32 %v4396, %v4398
        %v4400 = vrot.slane %v4393, %v4399
        %v4401 = vcombine.low %v4305, %v4312
        %v4403 = vunpack.c.l.s4 1983009808
        %v4404 = vunpack.c.0.s8 %v4403
        %v4405 = vlaneseq
        %v4406 = vshrl.u32 %v4405, 7
        %v4407 = vsub.s32 %v4404, %v4406
        %v4408 = vrot.slane %v4401, %v4407
        %v4409 = vcombine.low %v4315, %v4316
        %v4411 = vunpack.c.l.s4 1983009808
        %v4412 = vunpack.c.0.s8 %v4411
        %v4413 = vlaneseq
        %v4414 = vshrl.u32 %v4413, 7
        %v4415 = vsub.s32 %v4412, %v4414
        %v4416 = vrot.slane %v4409, %v4415
        %v4417 = vcombine.low %v4392, %v4400
        %v4418 = vcombine.high %v4392, %v4400
        %v4420 = vunpack.c.l.s4 1934713408
        %v4421 = vunpack.c.0.s8 %v4420
        %v4422 = vlaneseq
        %v4423 = vshrl.u32 %v4422, 7
        %v4424 = vsub.s32 %v4421, %v4423
        %v4425 = vrot.slane %v4417, %v4424
        %v4427 = vunpack.c.l.s4 1934713408
        %v4428 = vunpack.c.0.s8 %v4427
        %v4429 = vlaneseq
        %v4430 = vshrl.u32 %v4429, 7
        %v4431 = vsub.s32 %v4428, %v4430
        %v4432 = vrot.slane %v4418, %v4431
        %v4433 = vcombine.low %v4408, %v4416
        %v4434 = vcombine.high %v4408, %v4416
        %v4436 = vunpack.c.l.s4 1934713408
        %v4437 = vunpack.c.0.s8 %v4436
        %v4438 = vlaneseq
        %v4439 = vshrl.u32 %v4438, 7
        %v4440 = vsub.s32 %v4437, %v4439
        %v4441 = vrot.slane %v4433, %v4440
        %v4443 = vunpack.c.l.s4 1934713408
        %v4444 = vunpack.c.0.s8 %v4443
        %v4445 = vlaneseq
        %v4446 = vshrl.u32 %v4445, 7
        %v4447 = vsub.s32 %v4444, %v4446
        %v4448 = vrot.slane %v4434, %v4447
        %v4449 = vcombine.low %v4425, %v4441
        %v4450 = vcombine.high %v4425, %v4441
        %v4451 = vcombine.low %v4432, %v4448
        %v4452 = vcombine.high %v4432, %v4448
        %v4453 = vcombine.low %v4357, %v4364
        %v4455 = vunpack.c.l.s4 1983009808
        %v4456 = vunpack.c.0.s8 %v4455
        %v4457 = vlaneseq
        %v4458 = vshrl.u32 %v4457, 7
        %v4459 = vsub.s32 %v4456, %v4458
        %v4460 = vrot.slane %v4453, %v4459
        %v4461 = vcombine.low %v4381, %v4382
        %v4463 = vunpack.c.l.s4 1983009808
        %v4464 = vunpack.c.0.s8 %v4463
        %v4465 = vlaneseq
        %v4466 = vshrl.u32 %v4465, 7
        %v4467 = vsub.s32 %v4464, %v4466
        %v4468 = vrot.slane %v4461, %v4467
        %v4469 = vcombine.low %v4373, %v4380
        %v4471 = vunpack.c.l.s4 1983009808
        %v4472 = vunpack.c.0.s8 %v4471
        %v4473 = vlaneseq
        %v4474 = vshrl.u32 %v4473, 7
        %v4475 = vsub.s32 %v4472, %v4474
        %v4476 = vrot.slane %v4469, %v4475
        %v4477 = vcombine.low %v4383, %v4384
        %v4479 = vunpack.c.l.s4 1983009808
        %v4480 = vunpack.c.0.s8 %v4479
        %v4481 = vlaneseq
        %v4482 = vshrl.u32 %v4481, 7
        %v4483 = vsub.s32 %v4480, %v4482
        %v4484 = vrot.slane %v4477, %v4483
        %v4485 = vcombine.low %v4460, %v4468
        %v4486 = vcombine.high %v4460, %v4468
        %v4488 = vunpack.c.l.s4 1934713408
        %v4489 = vunpack.c.0.s8 %v4488
        %v4490 = vlaneseq
        %v4491 = vshrl.u32 %v4490, 7
        %v4492 = vsub.s32 %v4489, %v4491
        %v4493 = vrot.slane %v4485, %v4492
        %v4495 = vunpack.c.l.s4 1934713408
        %v4496 = vunpack.c.0.s8 %v4495
        %v4497 = vlaneseq
        %v4498 = vshrl.u32 %v4497, 7
        %v4499 = vsub.s32 %v4496, %v4498
        %v4500 = vrot.slane %v4486, %v4499
        %v4501 = vcombine.low %v4476, %v4484
        %v4502 = vcombine.high %v4476, %v4484
        %v4504 = vunpack.c.l.s4 1934713408
        %v4505 = vunpack.c.0.s8 %v4504
        %v4506 = vlaneseq
        %v4507 = vshrl.u32 %v4506, 7
        %v4508 = vsub.s32 %v4505, %v4507
        %v4509 = vrot.slane %v4501, %v4508
        %v4511 = vunpack.c.l.s4 1934713408
        %v4512 = vunpack.c.0.s8 %v4511
        %v4513 = vlaneseq
        %v4514 = vshrl.u32 %v4513, 7
        %v4515 = vsub.s32 %v4512, %v4514
        %v4516 = vrot.slane %v4502, %v4515
        %v4517 = vcombine.low %v4493, %v4509
        %v4518 = vcombine.high %v4493, %v4509
        %v4519 = vcombine.low %v4500, %v4516
        %v4520 = vcombine.high %v4500, %v4516
        %v4521 = vpack.c.bf16 %v4449, %v4449
        %v4522 = vpack.c.bf16 %v4450, %v4450
        %v4523 = vpack.c.bf16 %v4451, %v4451
        %v4524 = vpack.c.bf16 %v4452, %v4452
        %v4525 = vpack.c.bf16 %v4517, %v4517
        %v4526 = vpack.c.bf16 %v4518, %v4518
        %v4527 = vpack.c.bf16 %v4519, %v4519
        %v4528 = vpack.c.bf16 %v4520, %v4520
        %4531 = vrot.lane.b32.xlu0 %v3923, 96
        %v4532 = vpop.permute.xlu0 %4531
        %4533 = vrot.lane.b32.xlu0 %v3927, 96
        %v4534 = vpop.permute.xlu0 %4533
        %4537 = vrot.lane.b32.xlu0 %v3923, 64
        %v4538 = vpop.permute.xlu0 %4537
        %4539 = vrot.lane.b32.xlu0 %v3927, 64
        %v4540 = vpop.permute.xlu0 %4539
        %4543 = vrot.lane.b32.xlu0 %v3923, 32
        %v4544 = vpop.permute.xlu0 %4543
        %4545 = vrot.lane.b32.xlu0 %v3927, 32
        %v4546 = vpop.permute.xlu0 %4545
        %v4549 = vcombine.low %v3923, %v4538
        %v4550 = vcombine.high %v3923, %v4538
        %v4552 = vunpack.c.l.s4 1983009808
        %v4553 = vunpack.c.0.s8 %v4552
        %v4554 = vlaneseq
        %v4555 = vshrl.u32 %v4554, 7
        %v4556 = vsub.s32 %v4553, %v4555
        %v4557 = vrot.slane %v4549, %v4556
        %v4559 = vunpack.c.l.s4 1983009808
        %v4560 = vunpack.c.0.s8 %v4559
        %v4561 = vlaneseq
        %v4562 = vshrl.u32 %v4561, 7
        %v4563 = vsub.s32 %v4560, %v4562
        %v4564 = vrot.slane %v4550, %v4563
        %v4565 = vcombine.low %v4532, %v4544
        %v4566 = vcombine.high %v4532, %v4544
        %v4568 = vunpack.c.l.s4 1983009808
        %v4569 = vunpack.c.0.s8 %v4568
        %v4570 = vlaneseq
        %v4571 = vshrl.u32 %v4570, 7
        %v4572 = vsub.s32 %v4569, %v4571
        %v4573 = vrot.slane %v4565, %v4572
        %v4575 = vunpack.c.l.s4 1983009808
        %v4576 = vunpack.c.0.s8 %v4575
        %v4577 = vlaneseq
        %v4578 = vshrl.u32 %v4577, 7
        %v4579 = vsub.s32 %v4576, %v4578
        %v4580 = vrot.slane %v4566, %v4579
        %v4581 = vcombine.low %v4557, %v4573
        %v4582 = vcombine.high %v4557, %v4573
        %v4584 = vunpack.c.l.s4 1934713408
        %v4585 = vunpack.c.0.s8 %v4584
        %v4586 = vlaneseq
        %v4587 = vshrl.u32 %v4586, 7
        %v4588 = vsub.s32 %v4585, %v4587
        %v4589 = vrot.slane %v4581, %v4588
        %v4591 = vunpack.c.l.s4 1934713408
        %v4592 = vunpack.c.0.s8 %v4591
        %v4593 = vlaneseq
        %v4594 = vshrl.u32 %v4593, 7
        %v4595 = vsub.s32 %v4592, %v4594
        %v4596 = vrot.slane %v4582, %v4595
        %v4597 = vcombine.low %v4564, %v4580
        %v4598 = vcombine.high %v4564, %v4580
        %v4600 = vunpack.c.l.s4 1934713408
        %v4601 = vunpack.c.0.s8 %v4600
        %v4602 = vlaneseq
        %v4603 = vshrl.u32 %v4602, 7
        %v4604 = vsub.s32 %v4601, %v4603
        %v4605 = vrot.slane %v4597, %v4604
        %v4607 = vunpack.c.l.s4 1934713408
        %v4608 = vunpack.c.0.s8 %v4607
        %v4609 = vlaneseq
        %v4610 = vshrl.u32 %v4609, 7
        %v4611 = vsub.s32 %v4608, %v4610
        %v4612 = vrot.slane %v4598, %v4611
        %v4613 = vcombine.high %v4589, 0.0
        %v4614 = vcombine.high %v4596, 0.0
        %v4615 = vcombine.high %v4605, 0.0
        %v4616 = vcombine.high %v4612, 0.0
        %v4617 = vcombine.low %v3927, %v4540
        %v4618 = vcombine.high %v3927, %v4540
        %v4620 = vunpack.c.l.s4 1983009808
        %v4621 = vunpack.c.0.s8 %v4620
        %v4622 = vlaneseq
        %v4623 = vshrl.u32 %v4622, 7
        %v4624 = vsub.s32 %v4621, %v4623
        %v4625 = vrot.slane %v4617, %v4624
        %v4627 = vunpack.c.l.s4 1983009808
        %v4628 = vunpack.c.0.s8 %v4627
        %v4629 = vlaneseq
        %v4630 = vshrl.u32 %v4629, 7
        %v4631 = vsub.s32 %v4628, %v4630
        %v4632 = vrot.slane %v4618, %v4631
        %v4633 = vcombine.low %v4534, %v4546
        %v4634 = vcombine.high %v4534, %v4546
        %v4636 = vunpack.c.l.s4 1983009808
        %v4637 = vunpack.c.0.s8 %v4636
        %v4638 = vlaneseq
        %v4639 = vshrl.u32 %v4638, 7
        %v4640 = vsub.s32 %v4637, %v4639
        %v4641 = vrot.slane %v4633, %v4640
        %v4643 = vunpack.c.l.s4 1983009808
        %v4644 = vunpack.c.0.s8 %v4643
        %v4645 = vlaneseq
        %v4646 = vshrl.u32 %v4645, 7
        %v4647 = vsub.s32 %v4644, %v4646
        %v4648 = vrot.slane %v4634, %v4647
        %v4649 = vcombine.low %v4625, %v4641
        %v4650 = vcombine.high %v4625, %v4641
        %v4652 = vunpack.c.l.s4 1934713408
        %v4653 = vunpack.c.0.s8 %v4652
        %v4654 = vlaneseq
        %v4655 = vshrl.u32 %v4654, 7
        %v4656 = vsub.s32 %v4653, %v4655
        %v4657 = vrot.slane %v4649, %v4656
        %v4659 = vunpack.c.l.s4 1934713408
        %v4660 = vunpack.c.0.s8 %v4659
        %v4661 = vlaneseq
        %v4662 = vshrl.u32 %v4661, 7
        %v4663 = vsub.s32 %v4660, %v4662
        %v4664 = vrot.slane %v4650, %v4663
        %v4665 = vcombine.low %v4632, %v4648
        %v4666 = vcombine.high %v4632, %v4648
        %v4668 = vunpack.c.l.s4 1934713408
        %v4669 = vunpack.c.0.s8 %v4668
        %v4670 = vlaneseq
        %v4671 = vshrl.u32 %v4670, 7
        %v4672 = vsub.s32 %v4669, %v4671
        %v4673 = vrot.slane %v4665, %v4672
        %v4675 = vunpack.c.l.s4 1934713408
        %v4676 = vunpack.c.0.s8 %v4675
        %v4677 = vlaneseq
        %v4678 = vshrl.u32 %v4677, 7
        %v4679 = vsub.s32 %v4676, %v4678
        %v4680 = vrot.slane %v4666, %v4679
        %v4681 = vcombine.high %v4657, 0.0
        %v4682 = vcombine.high %v4664, 0.0
        %v4683 = vcombine.high %v4673, 0.0
        %v4684 = vcombine.high %v4680, 0.0
        %v4685 = vcombine.low %v4589, %v4596
        %v4687 = vunpack.c.l.s4 1983009808
        %v4688 = vunpack.c.0.s8 %v4687
        %v4689 = vlaneseq
        %v4690 = vshrl.u32 %v4689, 7
        %v4691 = vsub.s32 %v4688, %v4690
        %v4692 = vrot.slane %v4685, %v4691
        %v4693 = vcombine.low %v4613, %v4614
        %v4695 = vunpack.c.l.s4 1983009808
        %v4696 = vunpack.c.0.s8 %v4695
        %v4697 = vlaneseq
        %v4698 = vshrl.u32 %v4697, 7
        %v4699 = vsub.s32 %v4696, %v4698
        %v4700 = vrot.slane %v4693, %v4699
        %v4701 = vcombine.low %v4605, %v4612
        %v4703 = vunpack.c.l.s4 1983009808
        %v4704 = vunpack.c.0.s8 %v4703
        %v4705 = vlaneseq
        %v4706 = vshrl.u32 %v4705, 7
        %v4707 = vsub.s32 %v4704, %v4706
        %v4708 = vrot.slane %v4701, %v4707
        %v4709 = vcombine.low %v4615, %v4616
        %v4711 = vunpack.c.l.s4 1983009808
        %v4712 = vunpack.c.0.s8 %v4711
        %v4713 = vlaneseq
        %v4714 = vshrl.u32 %v4713, 7
        %v4715 = vsub.s32 %v4712, %v4714
        %v4716 = vrot.slane %v4709, %v4715
        %v4717 = vcombine.low %v4692, %v4700
        %v4718 = vcombine.high %v4692, %v4700
        %v4720 = vunpack.c.l.s4 1934713408
        %v4721 = vunpack.c.0.s8 %v4720
        %v4722 = vlaneseq
        %v4723 = vshrl.u32 %v4722, 7
        %v4724 = vsub.s32 %v4721, %v4723
        %v4725 = vrot.slane %v4717, %v4724
        %v4727 = vunpack.c.l.s4 1934713408
        %v4728 = vunpack.c.0.s8 %v4727
        %v4729 = vlaneseq
        %v4730 = vshrl.u32 %v4729, 7
        %v4731 = vsub.s32 %v4728, %v4730
        %v4732 = vrot.slane %v4718, %v4731
        %v4733 = vcombine.low %v4708, %v4716
        %v4734 = vcombine.high %v4708, %v4716
        %v4736 = vunpack.c.l.s4 1934713408
        %v4737 = vunpack.c.0.s8 %v4736
        %v4738 = vlaneseq
        %v4739 = vshrl.u32 %v4738, 7
        %v4740 = vsub.s32 %v4737, %v4739
        %v4741 = vrot.slane %v4733, %v4740
        %v4743 = vunpack.c.l.s4 1934713408
        %v4744 = vunpack.c.0.s8 %v4743
        %v4745 = vlaneseq
        %v4746 = vshrl.u32 %v4745, 7
        %v4747 = vsub.s32 %v4744, %v4746
        %v4748 = vrot.slane %v4734, %v4747
        %v4749 = vcombine.low %v4725, %v4741
        %v4750 = vcombine.high %v4725, %v4741
        %v4751 = vcombine.low %v4732, %v4748
        %v4752 = vcombine.high %v4732, %v4748
        %v4753 = vcombine.low %v4657, %v4664
        %v4755 = vunpack.c.l.s4 1983009808
        %v4756 = vunpack.c.0.s8 %v4755
        %v4757 = vlaneseq
        %v4758 = vshrl.u32 %v4757, 7
        %v4759 = vsub.s32 %v4756, %v4758
        %v4760 = vrot.slane %v4753, %v4759
        %v4761 = vcombine.low %v4681, %v4682
        %v4763 = vunpack.c.l.s4 1983009808
        %v4764 = vunpack.c.0.s8 %v4763
        %v4765 = vlaneseq
        %v4766 = vshrl.u32 %v4765, 7
        %v4767 = vsub.s32 %v4764, %v4766
        %v4768 = vrot.slane %v4761, %v4767
        %v4769 = vcombine.low %v4673, %v4680
        %v4771 = vunpack.c.l.s4 1983009808
        %v4772 = vunpack.c.0.s8 %v4771
        %v4773 = vlaneseq
        %v4774 = vshrl.u32 %v4773, 7
        %v4775 = vsub.s32 %v4772, %v4774
        %v4776 = vrot.slane %v4769, %v4775
        %v4777 = vcombine.low %v4683, %v4684
        %v4779 = vunpack.c.l.s4 1983009808
        %v4780 = vunpack.c.0.s8 %v4779
        %v4781 = vlaneseq
        %v4782 = vshrl.u32 %v4781, 7
        %v4783 = vsub.s32 %v4780, %v4782
        %v4784 = vrot.slane %v4777, %v4783
        %v4785 = vcombine.low %v4760, %v4768
        %v4786 = vcombine.high %v4760, %v4768
        %v4788 = vunpack.c.l.s4 1934713408
        %v4789 = vunpack.c.0.s8 %v4788
        %v4790 = vlaneseq
        %v4791 = vshrl.u32 %v4790, 7
        %v4792 = vsub.s32 %v4789, %v4791
        %v4793 = vrot.slane %v4785, %v4792
        %v4795 = vunpack.c.l.s4 1934713408
        %v4796 = vunpack.c.0.s8 %v4795
        %v4797 = vlaneseq
        %v4798 = vshrl.u32 %v4797, 7
        %v4799 = vsub.s32 %v4796, %v4798
        %v4800 = vrot.slane %v4786, %v4799
        %v4801 = vcombine.low %v4776, %v4784
        %v4802 = vcombine.high %v4776, %v4784
        %v4804 = vunpack.c.l.s4 1934713408
        %v4805 = vunpack.c.0.s8 %v4804
        %v4806 = vlaneseq
        %v4807 = vshrl.u32 %v4806, 7
        %v4808 = vsub.s32 %v4805, %v4807
        %v4809 = vrot.slane %v4801, %v4808
        %v4811 = vunpack.c.l.s4 1934713408
        %v4812 = vunpack.c.0.s8 %v4811
        %v4813 = vlaneseq
        %v4814 = vshrl.u32 %v4813, 7
        %v4815 = vsub.s32 %v4812, %v4814
        %v4816 = vrot.slane %v4802, %v4815
        %v4817 = vcombine.low %v4793, %v4809
        %v4818 = vcombine.high %v4793, %v4809
        %v4819 = vcombine.low %v4800, %v4816
        %v4820 = vcombine.high %v4800, %v4816
        %v4821 = vpack.c.bf16 %v4749, %v4749
        %v4822 = vpack.c.bf16 %v4750, %v4750
        %v4823 = vpack.c.bf16 %v4751, %v4751
        %v4824 = vpack.c.bf16 %v4752, %v4752
        %v4825 = vpack.c.bf16 %v4817, %v4817
        %v4826 = vpack.c.bf16 %v4818, %v4818
        %v4827 = vpack.c.bf16 %v4819, %v4819
        %v4828 = vpack.c.bf16 %v4820, %v4820
        %v4830 = vsel %vm2359, %v4221, 0
        %v4833 = vsel %vm2359, %v4521, 0
        %4835 = vmatprep.subr.bf16.mxu0 0
        %4836 = vmatpush1.bf16.xpose.msra.mxu0 0
        %4837 = vmatprep.subr.bf16.mxu0 0
        %4838 = vmatpush1.bf16.xpose.msra.mxu0 0
        %4839 = vmatprep.subr.bf16.mxu0 0
        %4840 = vmatpush1.bf16.xpose.msra.mxu0 0
        %4841 = vmatprep.subr.bf16.mxu0 0
        %4842 = vmatpush1.bf16.xpose.msra.mxu0 0
        %4843 = vmatprep.subr.bf16.mxu0 0
        %4844 = vmatpush1.bf16.xpose.msra.mxu0 0
        %4845 = vmatprep.subr.bf16.mxu0 0
        %4846 = vmatpush1.bf16.xpose.msra.mxu0 0
        %4847 = vmatprep.subr.bf16.mxu0 0
        %4848 = vmatpush1.bf16.xpose.msra.mxu0 0
        %4849 = vmatprep.subr.bf16.mxu0 0
        %4850 = vmatpush1.bf16.xpose.msra.mxu0 %v4833
        %4851 = vmatprep.subr.bf16.mxu0 0
        %4852 = vmatpush2.bf16.xpose.msra.mxu0 0
        %4853 = vmatprep.subr.bf16.mxu0 0
        %4854 = vmatpush2.bf16.xpose.msra.mxu0 0
        %4855 = vmatprep.subr.bf16.mxu0 0
        %4856 = vmatpush2.bf16.xpose.msra.mxu0 0
        %4857 = vmatprep.subr.bf16.mxu0 0
        %4858 = vmatpush2.bf16.xpose.msra.mxu0 0
        %4859 = vmatprep.subr.bf16.mxu0 0
        %4860 = vmatpush2.bf16.xpose.msra.mxu0 0
        %4861 = vmatprep.subr.bf16.mxu0 0
        %4862 = vmatpush2.bf16.xpose.msra.mxu0 0
        %4863 = vmatprep.subr.bf16.mxu0 0
        %4864 = vmatpush2.bf16.xpose.msra.mxu0 0
        %4865 = vmatprep.subr.bf16.mxu0 0
        %4866 = vmatpush2.bf16.xpose.msra.mxu0 0
        %4867 = vmatprep.mubr.bf16.mxu0 0
        %4868 = vmatmul.mubr.bf16.gmra.mxu0 %v4830
        %v4869 = vpop.f32.mrf.mxu0
        %v4870 = vadd.f32 0.0, %v4869
        %v4871 = vpop.f32.mrf.mxu0
        %v4872 = vpop.f32.mrf.mxu0
        %v4873 = vpop.f32.mrf.mxu0
        %4874 = vdwg.mxu0
        %v4876 = vsel %vm2359, %v4222, 0
        %v4879 = vsel %vm2359, %v4522, 0
        %4881 = vmatprep.subr.bf16.mxu0 0
        %4882 = vmatpush1.bf16.xpose.msra.mxu0 0
        %4883 = vmatprep.subr.bf16.mxu0 0
        %4884 = vmatpush1.bf16.xpose.msra.mxu0 0
        %4885 = vmatprep.subr.bf16.mxu0 0
        %4886 = vmatpush1.bf16.xpose.msra.mxu0 0
        %4887 = vmatprep.subr.bf16.mxu0 0
        %4888 = vmatpush1.bf16.xpose.msra.mxu0 0
        %4889 = vmatprep.subr.bf16.mxu0 0
        %4890 = vmatpush1.bf16.xpose.msra.mxu0 0
        %4891 = vmatprep.subr.bf16.mxu0 0
        %4892 = vmatpush1.bf16.xpose.msra.mxu0 0
        %4893 = vmatprep.subr.bf16.mxu0 0
        %4894 = vmatpush1.bf16.xpose.msra.mxu0 0
        %4895 = vmatprep.subr.bf16.mxu0 0
        %4896 = vmatpush1.bf16.xpose.msra.mxu0 %v4879
        %4897 = vmatprep.subr.bf16.mxu0 0
        %4898 = vmatpush2.bf16.xpose.msra.mxu0 0
        %4899 = vmatprep.subr.bf16.mxu0 0
        %4900 = vmatpush2.bf16.xpose.msra.mxu0 0
        %4901 = vmatprep.subr.bf16.mxu0 0
        %4902 = vmatpush2.bf16.xpose.msra.mxu0 0
        %4903 = vmatprep.subr.bf16.mxu0 0
        %4904 = vmatpush2.bf16.xpose.msra.mxu0 0
        %4905 = vmatprep.subr.bf16.mxu0 0
        %4906 = vmatpush2.bf16.xpose.msra.mxu0 0
        %4907 = vmatprep.subr.bf16.mxu0 0
        %4908 = vmatpush2.bf16.xpose.msra.mxu0 0
        %4909 = vmatprep.subr.bf16.mxu0 0
        %4910 = vmatpush2.bf16.xpose.msra.mxu0 0
        %4911 = vmatprep.subr.bf16.mxu0 0
        %4912 = vmatpush2.bf16.xpose.msra.mxu0 0
        %4913 = vmatprep.mubr.bf16.mxu0 0
        %4914 = vmatmul.mubr.bf16.gmra.mxu0 %v4876
        %v4915 = vpop.f32.mrf.mxu0
        %v4916 = vadd.f32 0.0, %v4915
        %v4917 = vpop.f32.mrf.mxu0
        %v4918 = vpop.f32.mrf.mxu0
        %v4919 = vpop.f32.mrf.mxu0
        %4920 = vdwg.mxu0
        %v4922 = vsel %vm2359, %v4223, 0
        %v4925 = vsel %vm2359, %v4523, 0
        %4927 = vmatprep.subr.bf16.mxu0 0
        %4928 = vmatpush1.bf16.xpose.msra.mxu0 0
        %4929 = vmatprep.subr.bf16.mxu0 0
        %4930 = vmatpush1.bf16.xpose.msra.mxu0 0
        %4931 = vmatprep.subr.bf16.mxu0 0
        %4932 = vmatpush1.bf16.xpose.msra.mxu0 0
        %4933 = vmatprep.subr.bf16.mxu0 0
        %4934 = vmatpush1.bf16.xpose.msra.mxu0 0
        %4935 = vmatprep.subr.bf16.mxu0 0
        %4936 = vmatpush1.bf16.xpose.msra.mxu0 0
        %4937 = vmatprep.subr.bf16.mxu0 0
        %4938 = vmatpush1.bf16.xpose.msra.mxu0 0
        %4939 = vmatprep.subr.bf16.mxu0 0
        %4940 = vmatpush1.bf16.xpose.msra.mxu0 0
        %4941 = vmatprep.subr.bf16.mxu0 0
        %4942 = vmatpush1.bf16.xpose.msra.mxu0 %v4925
        %4943 = vmatprep.subr.bf16.mxu0 0
        %4944 = vmatpush2.bf16.xpose.msra.mxu0 0
        %4945 = vmatprep.subr.bf16.mxu0 0
        %4946 = vmatpush2.bf16.xpose.msra.mxu0 0
        %4947 = vmatprep.subr.bf16.mxu0 0
        %4948 = vmatpush2.bf16.xpose.msra.mxu0 0
        %4949 = vmatprep.subr.bf16.mxu0 0
        %4950 = vmatpush2.bf16.xpose.msra.mxu0 0
        %4951 = vmatprep.subr.bf16.mxu0 0
        %4952 = vmatpush2.bf16.xpose.msra.mxu0 0
        %4953 = vmatprep.subr.bf16.mxu0 0
        %4954 = vmatpush2.bf16.xpose.msra.mxu0 0
        %4955 = vmatprep.subr.bf16.mxu0 0
        %4956 = vmatpush2.bf16.xpose.msra.mxu0 0
        %4957 = vmatprep.subr.bf16.mxu0 0
        %4958 = vmatpush2.bf16.xpose.msra.mxu0 0
        %4959 = vmatprep.mubr.bf16.mxu0 0
        %4960 = vmatmul.mubr.bf16.gmra.mxu0 %v4922
        %v4961 = vpop.f32.mrf.mxu0
        %v4962 = vadd.f32 0.0, %v4961
        %v4963 = vpop.f32.mrf.mxu0
        %v4964 = vpop.f32.mrf.mxu0
        %v4965 = vpop.f32.mrf.mxu0
        %4966 = vdwg.mxu0
        %v4968 = vsel %vm2359, %v4224, 0
        %v4971 = vsel %vm2359, %v4524, 0
        %4973 = vmatprep.subr.bf16.mxu0 0
        %4974 = vmatpush1.bf16.xpose.msra.mxu0 0
        %4975 = vmatprep.subr.bf16.mxu0 0
        %4976 = vmatpush1.bf16.xpose.msra.mxu0 0
        %4977 = vmatprep.subr.bf16.mxu0 0
        %4978 = vmatpush1.bf16.xpose.msra.mxu0 0
        %4979 = vmatprep.subr.bf16.mxu0 0
        %4980 = vmatpush1.bf16.xpose.msra.mxu0 0
        %4981 = vmatprep.subr.bf16.mxu0 0
        %4982 = vmatpush1.bf16.xpose.msra.mxu0 0
        %4983 = vmatprep.subr.bf16.mxu0 0
        %4984 = vmatpush1.bf16.xpose.msra.mxu0 0
        %4985 = vmatprep.subr.bf16.mxu0 0
        %4986 = vmatpush1.bf16.xpose.msra.mxu0 0
        %4987 = vmatprep.subr.bf16.mxu0 0
        %4988 = vmatpush1.bf16.xpose.msra.mxu0 %v4971
        %4989 = vmatprep.subr.bf16.mxu0 0
        %4990 = vmatpush2.bf16.xpose.msra.mxu0 0
        %4991 = vmatprep.subr.bf16.mxu0 0
        %4992 = vmatpush2.bf16.xpose.msra.mxu0 0
        %4993 = vmatprep.subr.bf16.mxu0 0
        %4994 = vmatpush2.bf16.xpose.msra.mxu0 0
        %4995 = vmatprep.subr.bf16.mxu0 0
        %4996 = vmatpush2.bf16.xpose.msra.mxu0 0
        %4997 = vmatprep.subr.bf16.mxu0 0
        %4998 = vmatpush2.bf16.xpose.msra.mxu0 0
        %4999 = vmatprep.subr.bf16.mxu0 0
        %5000 = vmatpush2.bf16.xpose.msra.mxu0 0
        %5001 = vmatprep.subr.bf16.mxu0 0
        %5002 = vmatpush2.bf16.xpose.msra.mxu0 0
        %5003 = vmatprep.subr.bf16.mxu0 0
        %5004 = vmatpush2.bf16.xpose.msra.mxu0 0
        %5005 = vmatprep.mubr.bf16.mxu0 0
        %5006 = vmatmul.mubr.bf16.gmra.mxu0 %v4968
        %v5007 = vpop.f32.mrf.mxu0
        %v5008 = vadd.f32 0.0, %v5007
        %v5009 = vpop.f32.mrf.mxu0
        %v5010 = vpop.f32.mrf.mxu0
        %v5011 = vpop.f32.mrf.mxu0
        %5012 = vdwg.mxu0
        %v5014 = vsel %vm2359, %v4225, 0
        %v5017 = vsel %vm2359, %v4525, 0
        %5019 = vmatprep.subr.bf16.mxu0 0
        %5020 = vmatpush1.bf16.xpose.msra.mxu0 0
        %5021 = vmatprep.subr.bf16.mxu0 0
        %5022 = vmatpush1.bf16.xpose.msra.mxu0 0
        %5023 = vmatprep.subr.bf16.mxu0 0
        %5024 = vmatpush1.bf16.xpose.msra.mxu0 0
        %5025 = vmatprep.subr.bf16.mxu0 0
        %5026 = vmatpush1.bf16.xpose.msra.mxu0 0
        %5027 = vmatprep.subr.bf16.mxu0 0
        %5028 = vmatpush1.bf16.xpose.msra.mxu0 0
        %5029 = vmatprep.subr.bf16.mxu0 0
        %5030 = vmatpush1.bf16.xpose.msra.mxu0 0
        %5031 = vmatprep.subr.bf16.mxu0 0
        %5032 = vmatpush1.bf16.xpose.msra.mxu0 0
        %5033 = vmatprep.subr.bf16.mxu0 0
        %5034 = vmatpush1.bf16.xpose.msra.mxu0 %v5017
        %5035 = vmatprep.subr.bf16.mxu0 0
        %5036 = vmatpush2.bf16.xpose.msra.mxu0 0
        %5037 = vmatprep.subr.bf16.mxu0 0
        %5038 = vmatpush2.bf16.xpose.msra.mxu0 0
        %5039 = vmatprep.subr.bf16.mxu0 0
        %5040 = vmatpush2.bf16.xpose.msra.mxu0 0
        %5041 = vmatprep.subr.bf16.mxu0 0
        %5042 = vmatpush2.bf16.xpose.msra.mxu0 0
        %5043 = vmatprep.subr.bf16.mxu0 0
        %5044 = vmatpush2.bf16.xpose.msra.mxu0 0
        %5045 = vmatprep.subr.bf16.mxu0 0
        %5046 = vmatpush2.bf16.xpose.msra.mxu0 0
        %5047 = vmatprep.subr.bf16.mxu0 0
        %5048 = vmatpush2.bf16.xpose.msra.mxu0 0
        %5049 = vmatprep.subr.bf16.mxu0 0
        %5050 = vmatpush2.bf16.xpose.msra.mxu0 0
        %5051 = vmatprep.mubr.bf16.mxu0 0
        %5052 = vmatmul.mubr.bf16.gmra.mxu0 %v5014
        %v5053 = vpop.f32.mrf.mxu0
        %v5054 = vadd.f32 0.0, %v5053
        %v5055 = vpop.f32.mrf.mxu0
        %v5056 = vpop.f32.mrf.mxu0
        %v5057 = vpop.f32.mrf.mxu0
        %5058 = vdwg.mxu0
        %v5060 = vsel %vm2359, %v4226, 0
        %v5063 = vsel %vm2359, %v4526, 0
        %5065 = vmatprep.subr.bf16.mxu0 0
        %5066 = vmatpush1.bf16.xpose.msra.mxu0 0
        %5067 = vmatprep.subr.bf16.mxu0 0
        %5068 = vmatpush1.bf16.xpose.msra.mxu0 0
        %5069 = vmatprep.subr.bf16.mxu0 0
        %5070 = vmatpush1.bf16.xpose.msra.mxu0 0
        %5071 = vmatprep.subr.bf16.mxu0 0
        %5072 = vmatpush1.bf16.xpose.msra.mxu0 0
        %5073 = vmatprep.subr.bf16.mxu0 0
        %5074 = vmatpush1.bf16.xpose.msra.mxu0 0
        %5075 = vmatprep.subr.bf16.mxu0 0
        %5076 = vmatpush1.bf16.xpose.msra.mxu0 0
        %5077 = vmatprep.subr.bf16.mxu0 0
        %5078 = vmatpush1.bf16.xpose.msra.mxu0 0
        %5079 = vmatprep.subr.bf16.mxu0 0
        %5080 = vmatpush1.bf16.xpose.msra.mxu0 %v5063
        %5081 = vmatprep.subr.bf16.mxu0 0
        %5082 = vmatpush2.bf16.xpose.msra.mxu0 0
        %5083 = vmatprep.subr.bf16.mxu0 0
        %5084 = vmatpush2.bf16.xpose.msra.mxu0 0
        %5085 = vmatprep.subr.bf16.mxu0 0
        %5086 = vmatpush2.bf16.xpose.msra.mxu0 0
        %5087 = vmatprep.subr.bf16.mxu0 0
        %5088 = vmatpush2.bf16.xpose.msra.mxu0 0
        %5089 = vmatprep.subr.bf16.mxu0 0
        %5090 = vmatpush2.bf16.xpose.msra.mxu0 0
        %5091 = vmatprep.subr.bf16.mxu0 0
        %5092 = vmatpush2.bf16.xpose.msra.mxu0 0
        %5093 = vmatprep.subr.bf16.mxu0 0
        %5094 = vmatpush2.bf16.xpose.msra.mxu0 0
        %5095 = vmatprep.subr.bf16.mxu0 0
        %5096 = vmatpush2.bf16.xpose.msra.mxu0 0
        %5097 = vmatprep.mubr.bf16.mxu0 0
        %5098 = vmatmul.mubr.bf16.gmra.mxu0 %v5060
        %v5099 = vpop.f32.mrf.mxu0
        %v5100 = vadd.f32 0.0, %v5099
        %v5101 = vpop.f32.mrf.mxu0
        %v5102 = vpop.f32.mrf.mxu0
        %v5103 = vpop.f32.mrf.mxu0
        %5104 = vdwg.mxu0
        %v5106 = vsel %vm2359, %v4227, 0
        %v5109 = vsel %vm2359, %v4527, 0
        %5111 = vmatprep.subr.bf16.mxu0 0
        %5112 = vmatpush1.bf16.xpose.msra.mxu0 0
        %5113 = vmatprep.subr.bf16.mxu0 0
        %5114 = vmatpush1.bf16.xpose.msra.mxu0 0
        %5115 = vmatprep.subr.bf16.mxu0 0
        %5116 = vmatpush1.bf16.xpose.msra.mxu0 0
        %5117 = vmatprep.subr.bf16.mxu0 0
        %5118 = vmatpush1.bf16.xpose.msra.mxu0 0
        %5119 = vmatprep.subr.bf16.mxu0 0
        %5120 = vmatpush1.bf16.xpose.msra.mxu0 0
        %5121 = vmatprep.subr.bf16.mxu0 0
        %5122 = vmatpush1.bf16.xpose.msra.mxu0 0
        %5123 = vmatprep.subr.bf16.mxu0 0
        %5124 = vmatpush1.bf16.xpose.msra.mxu0 0
        %5125 = vmatprep.subr.bf16.mxu0 0
        %5126 = vmatpush1.bf16.xpose.msra.mxu0 %v5109
        %5127 = vmatprep.subr.bf16.mxu0 0
        %5128 = vmatpush2.bf16.xpose.msra.mxu0 0
        %5129 = vmatprep.subr.bf16.mxu0 0
        %5130 = vmatpush2.bf16.xpose.msra.mxu0 0
        %5131 = vmatprep.subr.bf16.mxu0 0
        %5132 = vmatpush2.bf16.xpose.msra.mxu0 0
        %5133 = vmatprep.subr.bf16.mxu0 0
        %5134 = vmatpush2.bf16.xpose.msra.mxu0 0
        %5135 = vmatprep.subr.bf16.mxu0 0
        %5136 = vmatpush2.bf16.xpose.msra.mxu0 0
        %5137 = vmatprep.subr.bf16.mxu0 0
        %5138 = vmatpush2.bf16.xpose.msra.mxu0 0
        %5139 = vmatprep.subr.bf16.mxu0 0
        %5140 = vmatpush2.bf16.xpose.msra.mxu0 0
        %5141 = vmatprep.subr.bf16.mxu0 0
        %5142 = vmatpush2.bf16.xpose.msra.mxu0 0
        %5143 = vmatprep.mubr.bf16.mxu0 0
        %5144 = vmatmul.mubr.bf16.gmra.mxu0 %v5106
        %v5145 = vpop.f32.mrf.mxu0
        %v5146 = vadd.f32 0.0, %v5145
        %v5147 = vpop.f32.mrf.mxu0
        %v5148 = vpop.f32.mrf.mxu0
        %v5149 = vpop.f32.mrf.mxu0
        %5150 = vdwg.mxu0
        %v5152 = vsel %vm2359, %v4228, 0
        %v5155 = vsel %vm2359, %v4528, 0
        %5157 = vmatprep.subr.bf16.mxu0 0
        %5158 = vmatpush1.bf16.xpose.msra.mxu0 0
        %5159 = vmatprep.subr.bf16.mxu0 0
        %5160 = vmatpush1.bf16.xpose.msra.mxu0 0
        %5161 = vmatprep.subr.bf16.mxu0 0
        %5162 = vmatpush1.bf16.xpose.msra.mxu0 0
        %5163 = vmatprep.subr.bf16.mxu0 0
        %5164 = vmatpush1.bf16.xpose.msra.mxu0 0
        %5165 = vmatprep.subr.bf16.mxu0 0
        %5166 = vmatpush1.bf16.xpose.msra.mxu0 0
        %5167 = vmatprep.subr.bf16.mxu0 0
        %5168 = vmatpush1.bf16.xpose.msra.mxu0 0
        %5169 = vmatprep.subr.bf16.mxu0 0
        %5170 = vmatpush1.bf16.xpose.msra.mxu0 0
        %5171 = vmatprep.subr.bf16.mxu0 0
        %5172 = vmatpush1.bf16.xpose.msra.mxu0 %v5155
        %5173 = vmatprep.subr.bf16.mxu0 0
        %5174 = vmatpush2.bf16.xpose.msra.mxu0 0
        %5175 = vmatprep.subr.bf16.mxu0 0
        %5176 = vmatpush2.bf16.xpose.msra.mxu0 0
        %5177 = vmatprep.subr.bf16.mxu0 0
        %5178 = vmatpush2.bf16.xpose.msra.mxu0 0
        %5179 = vmatprep.subr.bf16.mxu0 0
        %5180 = vmatpush2.bf16.xpose.msra.mxu0 0
        %5181 = vmatprep.subr.bf16.mxu0 0
        %5182 = vmatpush2.bf16.xpose.msra.mxu0 0
        %5183 = vmatprep.subr.bf16.mxu0 0
        %5184 = vmatpush2.bf16.xpose.msra.mxu0 0
        %5185 = vmatprep.subr.bf16.mxu0 0
        %5186 = vmatpush2.bf16.xpose.msra.mxu0 0
        %5187 = vmatprep.subr.bf16.mxu0 0
        %5188 = vmatpush2.bf16.xpose.msra.mxu0 0
        %5189 = vmatprep.mubr.bf16.mxu0 0
        %5190 = vmatmul.mubr.bf16.gmra.mxu0 %v5152
        %v5191 = vpop.f32.mrf.mxu0
        %v5192 = vadd.f32 0.0, %v5191
        %v5193 = vpop.f32.mrf.mxu0
        %v5194 = vpop.f32.mrf.mxu0
        %v5195 = vpop.f32.mrf.mxu0
        %5196 = vdwg.mxu0
        %v5199 = vlaneseq
        %v5200 = vshrl.u32 %v5199, 7
        %v5201 = vsub.s32 0, %v5200
        %v5202 = vrot.slane %v3645, %v5201
        %v5203 = vlaneseq
        %v5204 = vshrl.u32 %v5203, 7
        %v5205 = vsub.s32 0, %v5204
        %v5206 = vrot.slane %v3646, %v5205
        %v5209 = vadd.f32 %v4870, %v5202
        %v5210 = vadd.f32 %v4916, %v5202
        %v5211 = vadd.f32 %v4962, %v5202
        %v5212 = vadd.f32 %v5008, %v5202
        %v5213 = vadd.f32 %v5054, %v5206
        %v5214 = vadd.f32 %v5100, %v5206
        %v5215 = vadd.f32 %v5146, %v5206
        %v5216 = vadd.f32 %v5192, %v5206
        %v5217 = vsel %vm2736, %v5209, -inf
        %5218 = vmax.xlane.f32.xlu0 %v5217
        %v5219 = vpop.xlane.xlu0 %5218
        %v5220 = vsel %vm2736, %v5210, -inf
        %5221 = vmax.xlane.f32.xlu0 %v5220
        %v5222 = vpop.xlane.xlu0 %5221
        %v5223 = vsel %vm2736, %v5211, -inf
        %5224 = vmax.xlane.f32.xlu0 %v5223
        %v5225 = vpop.xlane.xlu0 %5224
        %v5226 = vsel %vm2736, %v5212, -inf
        %5227 = vmax.xlane.f32.xlu0 %v5226
        %v5228 = vpop.xlane.xlu0 %5227
        %v5229 = vsel %vm2736, %v5213, -inf
        %5230 = vmax.xlane.f32.xlu0 %v5229
        %v5231 = vpop.xlane.xlu0 %5230
        %v5232 = vsel %vm2736, %v5214, -inf
        %5233 = vmax.xlane.f32.xlu0 %v5232
        %v5234 = vpop.xlane.xlu0 %5233
        %v5235 = vsel %vm2736, %v5215, -inf
        %5236 = vmax.xlane.f32.xlu0 %v5235
        %v5237 = vpop.xlane.xlu0 %5236
        %v5238 = vsel %vm2736, %v5216, -inf
        %5239 = vmax.xlane.f32.xlu0 %v5238
        %v5240 = vpop.xlane.xlu0 %5239
        %v5241 = vsub.f32 %v5209, %v5219
        %v5242 = vsub.f32 %v5210, %v5222
        %v5243 = vsub.f32 %v5211, %v5225
        %v5244 = vsub.f32 %v5212, %v5228
        %v5245 = vsub.f32 %v5213, %v5231
        %v5246 = vsub.f32 %v5214, %v5234
        %v5247 = vsub.f32 %v5215, %v5237
        %v5248 = vsub.f32 %v5216, %v5240
        %v5249 = vmul.f32 %v5241, 1.442695
        %v5250 = vpow.pop %v5249
        %v5251 = vmul.f32 %v5242, 1.442695
        %v5252 = vpow.pop %v5251
        %v5253 = vmul.f32 %v5243, 1.442695
        %v5254 = vpow.pop %v5253
        %v5255 = vmul.f32 %v5244, 1.442695
        %v5256 = vpow.pop %v5255
        %v5257 = vmul.f32 %v5245, 1.442695
        %v5258 = vpow.pop %v5257
        %v5259 = vmul.f32 %v5246, 1.442695
        %v5260 = vpow.pop %v5259
        %v5261 = vmul.f32 %v5247, 1.442695
        %v5262 = vpow.pop %v5261
        %v5263 = vmul.f32 %v5248, 1.442695
        %v5264 = vpow.pop %v5263
        %v5265 = vsel %vm2736, %v5250, 0.0
        %5266 = vadd.xlane.f32.xlu0 %v5265
        %v5267 = vpop.xlane.xlu0 %5266
        %v5268 = vsel %vm2736, %v5252, 0.0
        %5269 = vadd.xlane.f32.xlu0 %v5268
        %v5270 = vpop.xlane.xlu0 %5269
        %v5271 = vsel %vm2736, %v5254, 0.0
        %5272 = vadd.xlane.f32.xlu0 %v5271
        %v5273 = vpop.xlane.xlu0 %5272
        %v5274 = vsel %vm2736, %v5256, 0.0
        %5275 = vadd.xlane.f32.xlu0 %v5274
        %v5276 = vpop.xlane.xlu0 %5275
        %v5277 = vsel %vm2736, %v5258, 0.0
        %5278 = vadd.xlane.f32.xlu0 %v5277
        %v5279 = vpop.xlane.xlu0 %5278
        %v5280 = vsel %vm2736, %v5260, 0.0
        %5281 = vadd.xlane.f32.xlu0 %v5280
        %v5282 = vpop.xlane.xlu0 %5281
        %v5283 = vsel %vm2736, %v5262, 0.0
        %5284 = vadd.xlane.f32.xlu0 %v5283
        %v5285 = vpop.xlane.xlu0 %5284
        %v5286 = vsel %vm2736, %v5264, 0.0
        %5287 = vadd.xlane.f32.xlu0 %v5286
        %v5288 = vpop.xlane.xlu0 %5287
        %v5289 = vrcp.pop %v5267
        %v5290 = vrcp.pop %v5270
        %v5291 = vrcp.pop %v5273
        %v5292 = vrcp.pop %v5276
        %v5293 = vrcp.pop %v5279
        %v5294 = vrcp.pop %v5282
        %v5295 = vrcp.pop %v5285
        %v5296 = vrcp.pop %v5288
        %v5297 = vmul.f32 %v5250, %v5289
        %v5298 = vmul.f32 %v5252, %v5290
        %v5299 = vmul.f32 %v5254, %v5291
        %v5300 = vmul.f32 %v5256, %v5292
        %v5301 = vmul.f32 %v5258, %v5293
        %v5302 = vmul.f32 %v5260, %v5294
        %v5303 = vmul.f32 %v5262, %v5295
        %v5304 = vmul.f32 %v5264, %v5296
        %v5305 = vpack.c.bf16 %v5297, %v5297
        %v5306 = vpack.c.bf16 %v5298, %v5298
        %v5307 = vpack.c.bf16 %v5299, %v5299
        %v5308 = vpack.c.bf16 %v5300, %v5300
        %v5309 = vpack.c.bf16 %v5301, %v5301
        %v5310 = vpack.c.bf16 %v5302, %v5302
        %v5311 = vpack.c.bf16 %v5303, %v5303
        %v5312 = vpack.c.bf16 %v5304, %v5304
        %v5314 = vsel %vm2736, %v5305, 0
        %v5317 = vsel %vm2836, %v4821, 0
        %5319 = vmatprep.subr.bf16.mxu0 0
        %5320 = vmatpush1.bf16.msra.mxu0 0
        %5321 = vmatprep.subr.bf16.mxu0 0
        %5322 = vmatpush1.bf16.msra.mxu0 0
        %5323 = vmatprep.subr.bf16.mxu0 0
        %5324 = vmatpush1.bf16.msra.mxu0 0
        %5325 = vmatprep.subr.bf16.mxu0 0
        %5326 = vmatpush1.bf16.msra.mxu0 0
        %5327 = vmatprep.subr.bf16.mxu0 0
        %5328 = vmatpush1.bf16.msra.mxu0 0
        %5329 = vmatprep.subr.bf16.mxu0 0
        %5330 = vmatpush1.bf16.msra.mxu0 0
        %5331 = vmatprep.subr.bf16.mxu0 0
        %5332 = vmatpush1.bf16.msra.mxu0 0
        %5333 = vmatprep.subr.bf16.mxu0 0
        %5334 = vmatpush1.bf16.msra.mxu0 %v5317
        %5335 = vmatprep.subr.bf16.mxu0 0
        %5336 = vmatpush2.bf16.msra.mxu0 0
        %5337 = vmatprep.subr.bf16.mxu0 0
        %5338 = vmatpush2.bf16.msra.mxu0 0
        %5339 = vmatprep.subr.bf16.mxu0 0
        %5340 = vmatpush2.bf16.msra.mxu0 0
        %5341 = vmatprep.subr.bf16.mxu0 0
        %5342 = vmatpush2.bf16.msra.mxu0 0
        %5343 = vmatprep.subr.bf16.mxu0 0
        %5344 = vmatpush2.bf16.msra.mxu0 0
        %5345 = vmatprep.subr.bf16.mxu0 0
        %5346 = vmatpush2.bf16.msra.mxu0 0
        %5347 = vmatprep.subr.bf16.mxu0 0
        %5348 = vmatpush2.bf16.msra.mxu0 0
        %5349 = vmatprep.subr.bf16.mxu0 0
        %5350 = vmatpush2.bf16.msra.mxu0 0
        %5351 = vmatprep.mubr.bf16.mxu0 0
        %5352 = vmatmul.mubr.bf16.gmra.mxu0 %v5314
        %v5353 = vpop.f32.mrf.mxu0
        %v5354 = vadd.f32 0.0, %v5353
        %v5355 = vpop.f32.mrf.mxu0
        %v5356 = vpop.f32.mrf.mxu0
        %v5357 = vpop.f32.mrf.mxu0
        %5358 = vdwg.mxu0
        %v5360 = vsel %vm2736, %v5306, 0
        %v5363 = vsel %vm2836, %v4822, 0
        %5365 = vmatprep.subr.bf16.mxu0 0
        %5366 = vmatpush1.bf16.msra.mxu0 0
        %5367 = vmatprep.subr.bf16.mxu0 0
        %5368 = vmatpush1.bf16.msra.mxu0 0
        %5369 = vmatprep.subr.bf16.mxu0 0
        %5370 = vmatpush1.bf16.msra.mxu0 0
        %5371 = vmatprep.subr.bf16.mxu0 0
        %5372 = vmatpush1.bf16.msra.mxu0 0
        %5373 = vmatprep.subr.bf16.mxu0 0
        %5374 = vmatpush1.bf16.msra.mxu0 0
        %5375 = vmatprep.subr.bf16.mxu0 0
        %5376 = vmatpush1.bf16.msra.mxu0 0
        %5377 = vmatprep.subr.bf16.mxu0 0
        %5378 = vmatpush1.bf16.msra.mxu0 0
        %5379 = vmatprep.subr.bf16.mxu0 0
        %5380 = vmatpush1.bf16.msra.mxu0 %v5363
        %5381 = vmatprep.subr.bf16.mxu0 0
        %5382 = vmatpush2.bf16.msra.mxu0 0
        %5383 = vmatprep.subr.bf16.mxu0 0
        %5384 = vmatpush2.bf16.msra.mxu0 0
        %5385 = vmatprep.subr.bf16.mxu0 0
        %5386 = vmatpush2.bf16.msra.mxu0 0
        %5387 = vmatprep.subr.bf16.mxu0 0
        %5388 = vmatpush2.bf16.msra.mxu0 0
        %5389 = vmatprep.subr.bf16.mxu0 0
        %5390 = vmatpush2.bf16.msra.mxu0 0
        %5391 = vmatprep.subr.bf16.mxu0 0
        %5392 = vmatpush2.bf16.msra.mxu0 0
        %5393 = vmatprep.subr.bf16.mxu0 0
        %5394 = vmatpush2.bf16.msra.mxu0 0
        %5395 = vmatprep.subr.bf16.mxu0 0
        %5396 = vmatpush2.bf16.msra.mxu0 0
        %5397 = vmatprep.mubr.bf16.mxu0 0
        %5398 = vmatmul.mubr.bf16.gmra.mxu0 %v5360
        %v5399 = vpop.f32.mrf.mxu0
        %v5400 = vadd.f32 0.0, %v5399
        %v5401 = vpop.f32.mrf.mxu0
        %v5402 = vpop.f32.mrf.mxu0
        %v5403 = vpop.f32.mrf.mxu0
        %5404 = vdwg.mxu0
        %v5406 = vsel %vm2736, %v5307, 0
        %v5409 = vsel %vm2836, %v4823, 0
        %5411 = vmatprep.subr.bf16.mxu0 0
        %5412 = vmatpush1.bf16.msra.mxu0 0
        %5413 = vmatprep.subr.bf16.mxu0 0
        %5414 = vmatpush1.bf16.msra.mxu0 0
        %5415 = vmatprep.subr.bf16.mxu0 0
        %5416 = vmatpush1.bf16.msra.mxu0 0
        %5417 = vmatprep.subr.bf16.mxu0 0
        %5418 = vmatpush1.bf16.msra.mxu0 0
        %5419 = vmatprep.subr.bf16.mxu0 0
        %5420 = vmatpush1.bf16.msra.mxu0 0
        %5421 = vmatprep.subr.bf16.mxu0 0
        %5422 = vmatpush1.bf16.msra.mxu0 0
        %5423 = vmatprep.subr.bf16.mxu0 0
        %5424 = vmatpush1.bf16.msra.mxu0 0
        %5425 = vmatprep.subr.bf16.mxu0 0
        %5426 = vmatpush1.bf16.msra.mxu0 %v5409
        %5427 = vmatprep.subr.bf16.mxu0 0
        %5428 = vmatpush2.bf16.msra.mxu0 0
        %5429 = vmatprep.subr.bf16.mxu0 0
        %5430 = vmatpush2.bf16.msra.mxu0 0
        %5431 = vmatprep.subr.bf16.mxu0 0
        %5432 = vmatpush2.bf16.msra.mxu0 0
        %5433 = vmatprep.subr.bf16.mxu0 0
        %5434 = vmatpush2.bf16.msra.mxu0 0
        %5435 = vmatprep.subr.bf16.mxu0 0
        %5436 = vmatpush2.bf16.msra.mxu0 0
        %5437 = vmatprep.subr.bf16.mxu0 0
        %5438 = vmatpush2.bf16.msra.mxu0 0
        %5439 = vmatprep.subr.bf16.mxu0 0
        %5440 = vmatpush2.bf16.msra.mxu0 0
        %5441 = vmatprep.subr.bf16.mxu0 0
        %5442 = vmatpush2.bf16.msra.mxu0 0
        %5443 = vmatprep.mubr.bf16.mxu0 0
        %5444 = vmatmul.mubr.bf16.gmra.mxu0 %v5406
        %v5445 = vpop.f32.mrf.mxu0
        %v5446 = vadd.f32 0.0, %v5445
        %v5447 = vpop.f32.mrf.mxu0
        %v5448 = vpop.f32.mrf.mxu0
        %v5449 = vpop.f32.mrf.mxu0
        %5450 = vdwg.mxu0
        %v5452 = vsel %vm2736, %v5308, 0
        %v5455 = vsel %vm2836, %v4824, 0
        %5457 = vmatprep.subr.bf16.mxu0 0
        %5458 = vmatpush1.bf16.msra.mxu0 0
        %5459 = vmatprep.subr.bf16.mxu0 0
        %5460 = vmatpush1.bf16.msra.mxu0 0
        %5461 = vmatprep.subr.bf16.mxu0 0
        %5462 = vmatpush1.bf16.msra.mxu0 0
        %5463 = vmatprep.subr.bf16.mxu0 0
        %5464 = vmatpush1.bf16.msra.mxu0 0
        %5465 = vmatprep.subr.bf16.mxu0 0
        %5466 = vmatpush1.bf16.msra.mxu0 0
        %5467 = vmatprep.subr.bf16.mxu0 0
        %5468 = vmatpush1.bf16.msra.mxu0 0
        %5469 = vmatprep.subr.bf16.mxu0 0
        %5470 = vmatpush1.bf16.msra.mxu0 0
        %5471 = vmatprep.subr.bf16.mxu0 0
        %5472 = vmatpush1.bf16.msra.mxu0 %v5455
        %5473 = vmatprep.subr.bf16.mxu0 0
        %5474 = vmatpush2.bf16.msra.mxu0 0
        %5475 = vmatprep.subr.bf16.mxu0 0
        %5476 = vmatpush2.bf16.msra.mxu0 0
        %5477 = vmatprep.subr.bf16.mxu0 0
        %5478 = vmatpush2.bf16.msra.mxu0 0
        %5479 = vmatprep.subr.bf16.mxu0 0
        %5480 = vmatpush2.bf16.msra.mxu0 0
        %5481 = vmatprep.subr.bf16.mxu0 0
        %5482 = vmatpush2.bf16.msra.mxu0 0
        %5483 = vmatprep.subr.bf16.mxu0 0
        %5484 = vmatpush2.bf16.msra.mxu0 0
        %5485 = vmatprep.subr.bf16.mxu0 0
        %5486 = vmatpush2.bf16.msra.mxu0 0
        %5487 = vmatprep.subr.bf16.mxu0 0
        %5488 = vmatpush2.bf16.msra.mxu0 0
        %5489 = vmatprep.mubr.bf16.mxu0 0
        %5490 = vmatmul.mubr.bf16.gmra.mxu0 %v5452
        %v5491 = vpop.f32.mrf.mxu0
        %v5492 = vadd.f32 0.0, %v5491
        %v5493 = vpop.f32.mrf.mxu0
        %v5494 = vpop.f32.mrf.mxu0
        %v5495 = vpop.f32.mrf.mxu0
        %5496 = vdwg.mxu0
        %v5498 = vsel %vm2736, %v5309, 0
        %v5501 = vsel %vm2836, %v4825, 0
        %5503 = vmatprep.subr.bf16.mxu0 0
        %5504 = vmatpush1.bf16.msra.mxu0 0
        %5505 = vmatprep.subr.bf16.mxu0 0
        %5506 = vmatpush1.bf16.msra.mxu0 0
        %5507 = vmatprep.subr.bf16.mxu0 0
        %5508 = vmatpush1.bf16.msra.mxu0 0
        %5509 = vmatprep.subr.bf16.mxu0 0
        %5510 = vmatpush1.bf16.msra.mxu0 0
        %5511 = vmatprep.subr.bf16.mxu0 0
        %5512 = vmatpush1.bf16.msra.mxu0 0
        %5513 = vmatprep.subr.bf16.mxu0 0
        %5514 = vmatpush1.bf16.msra.mxu0 0
        %5515 = vmatprep.subr.bf16.mxu0 0
        %5516 = vmatpush1.bf16.msra.mxu0 0
        %5517 = vmatprep.subr.bf16.mxu0 0
        %5518 = vmatpush1.bf16.msra.mxu0 %v5501
        %5519 = vmatprep.subr.bf16.mxu0 0
        %5520 = vmatpush2.bf16.msra.mxu0 0
        %5521 = vmatprep.subr.bf16.mxu0 0
        %5522 = vmatpush2.bf16.msra.mxu0 0
        %5523 = vmatprep.subr.bf16.mxu0 0
        %5524 = vmatpush2.bf16.msra.mxu0 0
        %5525 = vmatprep.subr.bf16.mxu0 0
        %5526 = vmatpush2.bf16.msra.mxu0 0
        %5527 = vmatprep.subr.bf16.mxu0 0
        %5528 = vmatpush2.bf16.msra.mxu0 0
        %5529 = vmatprep.subr.bf16.mxu0 0
        %5530 = vmatpush2.bf16.msra.mxu0 0
        %5531 = vmatprep.subr.bf16.mxu0 0
        %5532 = vmatpush2.bf16.msra.mxu0 0
        %5533 = vmatprep.subr.bf16.mxu0 0
        %5534 = vmatpush2.bf16.msra.mxu0 0
        %5535 = vmatprep.mubr.bf16.mxu0 0
        %5536 = vmatmul.mubr.bf16.gmra.mxu0 %v5498
        %v5537 = vpop.f32.mrf.mxu0
        %v5538 = vadd.f32 0.0, %v5537
        %v5539 = vpop.f32.mrf.mxu0
        %v5540 = vpop.f32.mrf.mxu0
        %v5541 = vpop.f32.mrf.mxu0
        %5542 = vdwg.mxu0
        %v5544 = vsel %vm2736, %v5310, 0
        %v5547 = vsel %vm2836, %v4826, 0
        %5549 = vmatprep.subr.bf16.mxu0 0
        %5550 = vmatpush1.bf16.msra.mxu0 0
        %5551 = vmatprep.subr.bf16.mxu0 0
        %5552 = vmatpush1.bf16.msra.mxu0 0
        %5553 = vmatprep.subr.bf16.mxu0 0
        %5554 = vmatpush1.bf16.msra.mxu0 0
        %5555 = vmatprep.subr.bf16.mxu0 0
        %5556 = vmatpush1.bf16.msra.mxu0 0
        %5557 = vmatprep.subr.bf16.mxu0 0
        %5558 = vmatpush1.bf16.msra.mxu0 0
        %5559 = vmatprep.subr.bf16.mxu0 0
        %5560 = vmatpush1.bf16.msra.mxu0 0
        %5561 = vmatprep.subr.bf16.mxu0 0
        %5562 = vmatpush1.bf16.msra.mxu0 0
        %5563 = vmatprep.subr.bf16.mxu0 0
        %5564 = vmatpush1.bf16.msra.mxu0 %v5547
        %5565 = vmatprep.subr.bf16.mxu0 0
        %5566 = vmatpush2.bf16.msra.mxu0 0
        %5567 = vmatprep.subr.bf16.mxu0 0
        %5568 = vmatpush2.bf16.msra.mxu0 0
        %5569 = vmatprep.subr.bf16.mxu0 0
        %5570 = vmatpush2.bf16.msra.mxu0 0
        %5571 = vmatprep.subr.bf16.mxu0 0
        %5572 = vmatpush2.bf16.msra.mxu0 0
        %5573 = vmatprep.subr.bf16.mxu0 0
        %5574 = vmatpush2.bf16.msra.mxu0 0
        %5575 = vmatprep.subr.bf16.mxu0 0
        %5576 = vmatpush2.bf16.msra.mxu0 0
        %5577 = vmatprep.subr.bf16.mxu0 0
        %5578 = vmatpush2.bf16.msra.mxu0 0
        %5579 = vmatprep.subr.bf16.mxu0 0
        %5580 = vmatpush2.bf16.msra.mxu0 0
        %5581 = vmatprep.mubr.bf16.mxu0 0
        %5582 = vmatmul.mubr.bf16.gmra.mxu0 %v5544
        %v5583 = vpop.f32.mrf.mxu0
        %v5584 = vadd.f32 0.0, %v5583
        %v5585 = vpop.f32.mrf.mxu0
        %v5586 = vpop.f32.mrf.mxu0
        %v5587 = vpop.f32.mrf.mxu0
        %5588 = vdwg.mxu0
        %v5590 = vsel %vm2736, %v5311, 0
        %v5593 = vsel %vm2836, %v4827, 0
        %5595 = vmatprep.subr.bf16.mxu0 0
        %5596 = vmatpush1.bf16.msra.mxu0 0
        %5597 = vmatprep.subr.bf16.mxu0 0
        %5598 = vmatpush1.bf16.msra.mxu0 0
        %5599 = vmatprep.subr.bf16.mxu0 0
        %5600 = vmatpush1.bf16.msra.mxu0 0
        %5601 = vmatprep.subr.bf16.mxu0 0
        %5602 = vmatpush1.bf16.msra.mxu0 0
        %5603 = vmatprep.subr.bf16.mxu0 0
        %5604 = vmatpush1.bf16.msra.mxu0 0
        %5605 = vmatprep.subr.bf16.mxu0 0
        %5606 = vmatpush1.bf16.msra.mxu0 0
        %5607 = vmatprep.subr.bf16.mxu0 0
        %5608 = vmatpush1.bf16.msra.mxu0 0
        %5609 = vmatprep.subr.bf16.mxu0 0
        %5610 = vmatpush1.bf16.msra.mxu0 %v5593
        %5611 = vmatprep.subr.bf16.mxu0 0
        %5612 = vmatpush2.bf16.msra.mxu0 0
        %5613 = vmatprep.subr.bf16.mxu0 0
        %5614 = vmatpush2.bf16.msra.mxu0 0
        %5615 = vmatprep.subr.bf16.mxu0 0
        %5616 = vmatpush2.bf16.msra.mxu0 0
        %5617 = vmatprep.subr.bf16.mxu0 0
        %5618 = vmatpush2.bf16.msra.mxu0 0
        %5619 = vmatprep.subr.bf16.mxu0 0
        %5620 = vmatpush2.bf16.msra.mxu0 0
        %5621 = vmatprep.subr.bf16.mxu0 0
        %5622 = vmatpush2.bf16.msra.mxu0 0
        %5623 = vmatprep.subr.bf16.mxu0 0
        %5624 = vmatpush2.bf16.msra.mxu0 0
        %5625 = vmatprep.subr.bf16.mxu0 0
        %5626 = vmatpush2.bf16.msra.mxu0 0
        %5627 = vmatprep.mubr.bf16.mxu0 0
        %5628 = vmatmul.mubr.bf16.gmra.mxu0 %v5590
        %v5629 = vpop.f32.mrf.mxu0
        %v5630 = vadd.f32 0.0, %v5629
        %v5631 = vpop.f32.mrf.mxu0
        %v5632 = vpop.f32.mrf.mxu0
        %v5633 = vpop.f32.mrf.mxu0
        %5634 = vdwg.mxu0
        %v5636 = vsel %vm2736, %v5312, 0
        %v5639 = vsel %vm2836, %v4828, 0
        %5641 = vmatprep.subr.bf16.mxu0 0
        %5642 = vmatpush1.bf16.msra.mxu0 0
        %5643 = vmatprep.subr.bf16.mxu0 0
        %5644 = vmatpush1.bf16.msra.mxu0 0
        %5645 = vmatprep.subr.bf16.mxu0 0
        %5646 = vmatpush1.bf16.msra.mxu0 0
        %5647 = vmatprep.subr.bf16.mxu0 0
        %5648 = vmatpush1.bf16.msra.mxu0 0
        %5649 = vmatprep.subr.bf16.mxu0 0
        %5650 = vmatpush1.bf16.msra.mxu0 0
        %5651 = vmatprep.subr.bf16.mxu0 0
        %5652 = vmatpush1.bf16.msra.mxu0 0
        %5653 = vmatprep.subr.bf16.mxu0 0
        %5654 = vmatpush1.bf16.msra.mxu0 0
        %5655 = vmatprep.subr.bf16.mxu0 0
        %5656 = vmatpush1.bf16.msra.mxu0 %v5639
        %5657 = vmatprep.subr.bf16.mxu0 0
        %5658 = vmatpush2.bf16.msra.mxu0 0
        %5659 = vmatprep.subr.bf16.mxu0 0
        %5660 = vmatpush2.bf16.msra.mxu0 0
        %5661 = vmatprep.subr.bf16.mxu0 0
        %5662 = vmatpush2.bf16.msra.mxu0 0
        %5663 = vmatprep.subr.bf16.mxu0 0
        %5664 = vmatpush2.bf16.msra.mxu0 0
        %5665 = vmatprep.subr.bf16.mxu0 0
        %5666 = vmatpush2.bf16.msra.mxu0 0
        %5667 = vmatprep.subr.bf16.mxu0 0
        %5668 = vmatpush2.bf16.msra.mxu0 0
        %5669 = vmatprep.subr.bf16.mxu0 0
        %5670 = vmatpush2.bf16.msra.mxu0 0
        %5671 = vmatprep.subr.bf16.mxu0 0
        %5672 = vmatpush2.bf16.msra.mxu0 0
        %5673 = vmatprep.mubr.bf16.mxu0 0
        %5674 = vmatmul.mubr.bf16.gmra.mxu0 %v5636
        %v5675 = vpop.f32.mrf.mxu0
        %v5676 = vadd.f32 0.0, %v5675
        %v5677 = vpop.f32.mrf.mxu0
        %v5678 = vpop.f32.mrf.mxu0
        %v5679 = vpop.f32.mrf.mxu0
        %5680 = vdwg.mxu0
        %v5681 = vcombine.low %v5354, %v5446
        %v5682 = vcombine.high %v5354, %v5446
        %v5684 = vunpack.c.l.s4 1983009808
        %v5685 = vunpack.c.0.s8 %v5684
        %v5686 = vlaneseq
        %v5687 = vshrl.u32 %v5686, 7
        %v5688 = vsub.s32 %v5685, %v5687
        %v5689 = vrot.slane %v5681, %v5688
        %v5691 = vunpack.c.l.s4 1983009808
        %v5692 = vunpack.c.0.s8 %v5691
        %v5693 = vlaneseq
        %v5694 = vshrl.u32 %v5693, 7
        %v5695 = vsub.s32 %v5692, %v5694
        %v5696 = vrot.slane %v5682, %v5695
        %v5697 = vcombine.low %v5400, %v5492
        %v5698 = vcombine.high %v5400, %v5492
        %v5700 = vunpack.c.l.s4 1983009808
        %v5701 = vunpack.c.0.s8 %v5700
        %v5702 = vlaneseq
        %v5703 = vshrl.u32 %v5702, 7
        %v5704 = vsub.s32 %v5701, %v5703
        %v5705 = vrot.slane %v5697, %v5704
        %v5707 = vunpack.c.l.s4 1983009808
        %v5708 = vunpack.c.0.s8 %v5707
        %v5709 = vlaneseq
        %v5710 = vshrl.u32 %v5709, 7
        %v5711 = vsub.s32 %v5708, %v5710
        %v5712 = vrot.slane %v5698, %v5711
        %v5713 = vcombine.low %v5689, %v5705
        %v5714 = vcombine.high %v5689, %v5705
        %v5716 = vunpack.c.l.s4 1934713408
        %v5717 = vunpack.c.0.s8 %v5716
        %v5718 = vlaneseq
        %v5719 = vshrl.u32 %v5718, 7
        %v5720 = vsub.s32 %v5717, %v5719
        %v5721 = vrot.slane %v5713, %v5720
        %v5723 = vunpack.c.l.s4 1934713408
        %v5724 = vunpack.c.0.s8 %v5723
        %v5725 = vlaneseq
        %v5726 = vshrl.u32 %v5725, 7
        %v5727 = vsub.s32 %v5724, %v5726
        %v5728 = vrot.slane %v5714, %v5727
        %v5729 = vcombine.low %v5696, %v5712
        %v5730 = vcombine.high %v5696, %v5712
        %v5732 = vunpack.c.l.s4 1934713408
        %v5733 = vunpack.c.0.s8 %v5732
        %v5734 = vlaneseq
        %v5735 = vshrl.u32 %v5734, 7
        %v5736 = vsub.s32 %v5733, %v5735
        %v5737 = vrot.slane %v5729, %v5736
        %v5739 = vunpack.c.l.s4 1934713408
        %v5740 = vunpack.c.0.s8 %v5739
        %v5741 = vlaneseq
        %v5742 = vshrl.u32 %v5741, 7
        %v5743 = vsub.s32 %v5740, %v5742
        %v5744 = vrot.slane %v5730, %v5743
        %v5745 = vcombine.high %v5721, 0.0
        %v5746 = vcombine.high %v5728, 0.0
        %v5747 = vcombine.high %v5737, 0.0
        %v5748 = vcombine.high %v5744, 0.0
        %v5749 = vcombine.low %v5538, %v5630
        %v5750 = vcombine.high %v5538, %v5630
        %v5752 = vunpack.c.l.s4 1983009808
        %v5753 = vunpack.c.0.s8 %v5752
        %v5754 = vlaneseq
        %v5755 = vshrl.u32 %v5754, 7
        %v5756 = vsub.s32 %v5753, %v5755
        %v5757 = vrot.slane %v5749, %v5756
        %v5759 = vunpack.c.l.s4 1983009808
        %v5760 = vunpack.c.0.s8 %v5759
        %v5761 = vlaneseq
        %v5762 = vshrl.u32 %v5761, 7
        %v5763 = vsub.s32 %v5760, %v5762
        %v5764 = vrot.slane %v5750, %v5763
        %v5765 = vcombine.low %v5584, %v5676
        %v5766 = vcombine.high %v5584, %v5676
        %v5768 = vunpack.c.l.s4 1983009808
        %v5769 = vunpack.c.0.s8 %v5768
        %v5770 = vlaneseq
        %v5771 = vshrl.u32 %v5770, 7
        %v5772 = vsub.s32 %v5769, %v5771
        %v5773 = vrot.slane %v5765, %v5772
        %v5775 = vunpack.c.l.s4 1983009808
        %v5776 = vunpack.c.0.s8 %v5775
        %v5777 = vlaneseq
        %v5778 = vshrl.u32 %v5777, 7
        %v5779 = vsub.s32 %v5776, %v5778
        %v5780 = vrot.slane %v5766, %v5779
        %v5781 = vcombine.low %v5757, %v5773
        %v5782 = vcombine.high %v5757, %v5773
        %v5784 = vunpack.c.l.s4 1934713408
        %v5785 = vunpack.c.0.s8 %v5784
        %v5786 = vlaneseq
        %v5787 = vshrl.u32 %v5786, 7
        %v5788 = vsub.s32 %v5785, %v5787
        %v5789 = vrot.slane %v5781, %v5788
        %v5791 = vunpack.c.l.s4 1934713408
        %v5792 = vunpack.c.0.s8 %v5791
        %v5793 = vlaneseq
        %v5794 = vshrl.u32 %v5793, 7
        %v5795 = vsub.s32 %v5792, %v5794
        %v5796 = vrot.slane %v5782, %v5795
        %v5797 = vcombine.low %v5764, %v5780
        %v5798 = vcombine.high %v5764, %v5780
        %v5800 = vunpack.c.l.s4 1934713408
        %v5801 = vunpack.c.0.s8 %v5800
        %v5802 = vlaneseq
        %v5803 = vshrl.u32 %v5802, 7
        %v5804 = vsub.s32 %v5801, %v5803
        %v5805 = vrot.slane %v5797, %v5804
        %v5807 = vunpack.c.l.s4 1934713408
        %v5808 = vunpack.c.0.s8 %v5807
        %v5809 = vlaneseq
        %v5810 = vshrl.u32 %v5809, 7
        %v5811 = vsub.s32 %v5808, %v5810
        %v5812 = vrot.slane %v5798, %v5811
        %v5813 = vcombine.high %v5789, 0.0
        %v5814 = vcombine.high %v5796, 0.0
        %v5815 = vcombine.high %v5805, 0.0
        %v5816 = vcombine.high %v5812, 0.0
        %v5817 = vcombine.low %v5721, %v5728
        %v5819 = vunpack.c.l.s4 1983009808
        %v5820 = vunpack.c.0.s8 %v5819
        %v5821 = vlaneseq
        %v5822 = vshrl.u32 %v5821, 7
        %v5823 = vsub.s32 %v5820, %v5822
        %v5824 = vrot.slane %v5817, %v5823
        %v5825 = vcombine.low %v5745, %v5746
        %v5827 = vunpack.c.l.s4 1983009808
        %v5828 = vunpack.c.0.s8 %v5827
        %v5829 = vlaneseq
        %v5830 = vshrl.u32 %v5829, 7
        %v5831 = vsub.s32 %v5828, %v5830
        %v5832 = vrot.slane %v5825, %v5831
        %v5833 = vcombine.low %v5737, %v5744
        %v5835 = vunpack.c.l.s4 1983009808
        %v5836 = vunpack.c.0.s8 %v5835
        %v5837 = vlaneseq
        %v5838 = vshrl.u32 %v5837, 7
        %v5839 = vsub.s32 %v5836, %v5838
        %v5840 = vrot.slane %v5833, %v5839
        %v5841 = vcombine.low %v5747, %v5748
        %v5843 = vunpack.c.l.s4 1983009808
        %v5844 = vunpack.c.0.s8 %v5843
        %v5845 = vlaneseq
        %v5846 = vshrl.u32 %v5845, 7
        %v5847 = vsub.s32 %v5844, %v5846
        %v5848 = vrot.slane %v5841, %v5847
        %v5849 = vcombine.low %v5824, %v5832
        %v5850 = vcombine.high %v5824, %v5832
        %v5852 = vunpack.c.l.s4 1934713408
        %v5853 = vunpack.c.0.s8 %v5852
        %v5854 = vlaneseq
        %v5855 = vshrl.u32 %v5854, 7
        %v5856 = vsub.s32 %v5853, %v5855
        %v5857 = vrot.slane %v5849, %v5856
        %v5859 = vunpack.c.l.s4 1934713408
        %v5860 = vunpack.c.0.s8 %v5859
        %v5861 = vlaneseq
        %v5862 = vshrl.u32 %v5861, 7
        %v5863 = vsub.s32 %v5860, %v5862
        %v5864 = vrot.slane %v5850, %v5863
        %v5865 = vcombine.low %v5840, %v5848
        %v5866 = vcombine.high %v5840, %v5848
        %v5868 = vunpack.c.l.s4 1934713408
        %v5869 = vunpack.c.0.s8 %v5868
        %v5870 = vlaneseq
        %v5871 = vshrl.u32 %v5870, 7
        %v5872 = vsub.s32 %v5869, %v5871
        %v5873 = vrot.slane %v5865, %v5872
        %v5875 = vunpack.c.l.s4 1934713408
        %v5876 = vunpack.c.0.s8 %v5875
        %v5877 = vlaneseq
        %v5878 = vshrl.u32 %v5877, 7
        %v5879 = vsub.s32 %v5876, %v5878
        %v5880 = vrot.slane %v5866, %v5879
        %v5881 = vcombine.low %v5857, %v5873
        %v5882 = vcombine.high %v5857, %v5873
        %v5883 = vcombine.low %v5864, %v5880
        %v5884 = vcombine.high %v5864, %v5880
        %v5885 = vcombine.low %v5789, %v5796
        %v5887 = vunpack.c.l.s4 1983009808
        %v5888 = vunpack.c.0.s8 %v5887
        %v5889 = vlaneseq
        %v5890 = vshrl.u32 %v5889, 7
        %v5891 = vsub.s32 %v5888, %v5890
        %v5892 = vrot.slane %v5885, %v5891
        %v5893 = vcombine.low %v5813, %v5814
        %v5895 = vunpack.c.l.s4 1983009808
        %v5896 = vunpack.c.0.s8 %v5895
        %v5897 = vlaneseq
        %v5898 = vshrl.u32 %v5897, 7
        %v5899 = vsub.s32 %v5896, %v5898
        %v5900 = vrot.slane %v5893, %v5899
        %v5901 = vcombine.low %v5805, %v5812
        %v5903 = vunpack.c.l.s4 1983009808
        %v5904 = vunpack.c.0.s8 %v5903
        %v5905 = vlaneseq
        %v5906 = vshrl.u32 %v5905, 7
        %v5907 = vsub.s32 %v5904, %v5906
        %v5908 = vrot.slane %v5901, %v5907
        %v5909 = vcombine.low %v5815, %v5816
        %v5911 = vunpack.c.l.s4 1983009808
        %v5912 = vunpack.c.0.s8 %v5911
        %v5913 = vlaneseq
        %v5914 = vshrl.u32 %v5913, 7
        %v5915 = vsub.s32 %v5912, %v5914
        %v5916 = vrot.slane %v5909, %v5915
        %v5917 = vcombine.low %v5892, %v5900
        %v5918 = vcombine.high %v5892, %v5900
        %v5920 = vunpack.c.l.s4 1934713408
        %v5921 = vunpack.c.0.s8 %v5920
        %v5922 = vlaneseq
        %v5923 = vshrl.u32 %v5922, 7
        %v5924 = vsub.s32 %v5921, %v5923
        %v5925 = vrot.slane %v5917, %v5924
        %v5927 = vunpack.c.l.s4 1934713408
        %v5928 = vunpack.c.0.s8 %v5927
        %v5929 = vlaneseq
        %v5930 = vshrl.u32 %v5929, 7
        %v5931 = vsub.s32 %v5928, %v5930
        %v5932 = vrot.slane %v5918, %v5931
        %v5933 = vcombine.low %v5908, %v5916
        %v5934 = vcombine.high %v5908, %v5916
        %v5936 = vunpack.c.l.s4 1934713408
        %v5937 = vunpack.c.0.s8 %v5936
        %v5938 = vlaneseq
        %v5939 = vshrl.u32 %v5938, 7
        %v5940 = vsub.s32 %v5937, %v5939
        %v5941 = vrot.slane %v5933, %v5940
        %v5943 = vunpack.c.l.s4 1934713408
        %v5944 = vunpack.c.0.s8 %v5943
        %v5945 = vlaneseq
        %v5946 = vshrl.u32 %v5945, 7
        %v5947 = vsub.s32 %v5944, %v5946
        %v5948 = vrot.slane %v5934, %v5947
        %v5949 = vcombine.low %v5925, %v5941
        %v5950 = vcombine.high %v5925, %v5941
        %v5951 = vcombine.low %v5932, %v5948
        %v5952 = vcombine.high %v5932, %v5948
        %5955 = vrot.lane.b32.xlu0 %v5882, 32
        %v5956 = vpop.permute.xlu0 %5955
        %5957 = vrot.lane.b32.xlu0 %v5950, 32
        %v5958 = vpop.permute.xlu0 %5957
        %5963 = vrot.lane.b32.xlu0 %v5883, 64
        %v5964 = vpop.permute.xlu0 %5963
        %5965 = vrot.lane.b32.xlu0 %v5951, 64
        %v5966 = vpop.permute.xlu0 %5965
        %5971 = vrot.lane.b32.xlu0 %v5884, 96
        %v5972 = vpop.permute.xlu0 %5971
        %5973 = vrot.lane.b32.xlu0 %v5952, 96
        %v5974 = vpop.permute.xlu0 %5973
        %v5977 = vsel %vm2359, %v5881, %v5956
        %v5978 = vsel %vm2359, %v5949, %v5958
        %v5979 = vsel %vm3500, %v5977, %v5964
        %v5980 = vsel %vm3500, %v5978, %v5966
        %v5981 = vsel %vm3503, %v5979, %v5972
        %v5982 = vsel %vm3503, %v5980, %v5974
        %v5983 = vpack.c.bf16 %v5982, %v5981
        %v5985 = vlaneseq
        %v5986 = vshrl.u32 %v5985, 7
        %v5987 = vsub.s32 0, %v5986
        %v5988 = vrot.slane %v3697, %v5987
        %v6006 = vunpack.c.l.b16 %v3681
        %v6007 = vunpack.c.l.b16 %v3682
        %v6008 = vunpack.c.l.b16 %v3683
        %v6009 = vunpack.c.l.b16 %v3684
        %v6010 = vunpack.c.l.b16 %v3685
        %v6011 = vunpack.c.l.b16 %v3686
        %v6012 = vunpack.c.l.b16 %v3687
        %v6013 = vunpack.c.l.b16 %v3688
        %v6014 = vunpack.c.l.b16 %v3689
        %v6015 = vunpack.c.l.b16 %v3690
        %v6016 = vunpack.c.l.b16 %v3691
        %v6017 = vunpack.c.l.b16 %v3692
        %v6018 = vunpack.c.l.b16 %v3693
        %v6019 = vunpack.c.l.b16 %v3694
        %v6020 = vunpack.c.l.b16 %v3695
        %v6021 = vunpack.c.l.b16 %v3696
        %v6022 = vpack.c.b16 %v6007, %v6006
        %v6023 = vpack.c.b16 %v6009, %v6008
        %v6024 = vpack.c.b16 %v6011, %v6010
        %v6025 = vpack.c.b16 %v6013, %v6012
        %v6026 = vpack.c.b16 %v6015, %v6014
        %v6027 = vpack.c.b16 %v6017, %v6016
        %v6028 = vpack.c.b16 %v6019, %v6018
        %v6029 = vpack.c.b16 %v6021, %v6020
        %6038 = vmatprep.subr.bf16.mxu0 0
        %6039 = vmatpush1.bf16.msra.mxu0 %v6029
        %6040 = vmatprep.subr.bf16.mxu0 0
        %6041 = vmatpush1.bf16.msra.mxu0 %v6028
        %6042 = vmatprep.subr.bf16.mxu0 0
        %6043 = vmatpush1.bf16.msra.mxu0 %v6027
        %6044 = vmatprep.subr.bf16.mxu0 0
        %6045 = vmatpush1.bf16.msra.mxu0 %v6026
        %6046 = vmatprep.subr.bf16.mxu0 0
        %6047 = vmatpush1.bf16.msra.mxu0 %v6025
        %6048 = vmatprep.subr.bf16.mxu0 0
        %6049 = vmatpush1.bf16.msra.mxu0 %v6024
        %6050 = vmatprep.subr.bf16.mxu0 0
        %6051 = vmatpush1.bf16.msra.mxu0 %v6023
        %6052 = vmatprep.subr.bf16.mxu0 0
        %6053 = vmatpush1.bf16.msra.mxu0 %v6022
        %6054 = vmatprep.subr.bf16.mxu0 0
        %6055 = vmatpush2.bf16.msra.mxu0 0
        %6056 = vmatprep.subr.bf16.mxu0 0
        %6057 = vmatpush2.bf16.msra.mxu0 0
        %6058 = vmatprep.subr.bf16.mxu0 0
        %6059 = vmatpush2.bf16.msra.mxu0 0
        %6060 = vmatprep.subr.bf16.mxu0 0
        %6061 = vmatpush2.bf16.msra.mxu0 0
        %6062 = vmatprep.subr.bf16.mxu0 0
        %6063 = vmatpush2.bf16.msra.mxu0 0
        %6064 = vmatprep.subr.bf16.mxu0 0
        %6065 = vmatpush2.bf16.msra.mxu0 0
        %6066 = vmatprep.subr.bf16.mxu0 0
        %6067 = vmatpush2.bf16.msra.mxu0 0
        %6068 = vmatprep.subr.bf16.mxu0 0
        %6069 = vmatpush2.bf16.msra.mxu0 0
        %6070 = vmatprep.mubr.bf16.mxu0 0
        %6071 = vmatmul.mubr.bf16.gmra.mxu0 %v5983
        %v6072 = vpop.f32.mrf.mxu0
        %v6073 = vadd.f32 %v5988, %v6072
        %v6074 = vpop.f32.mrf.mxu0
        %v6075 = vpop.f32.mrf.mxu0
        %v6076 = vadd.f32 %v5988, %v6075
        %v6077 = vpop.f32.mrf.mxu0
        %6078 = vdwg.mxu0
        %v6079 = vadd.f32 %v3643, %v6073
        %v6080 = vadd.f32 %v3644, %v6076
        %v6081 = vld [vmem:[%s1123] sm:$0x1]
        %v6082 = vld [vmem:[%s1126] sm:$0x1]
        %6083 = vadd.xlane.f32.xlu0 %v6079
        %v6084 = vpop.xlane.xlu0 %6083
        %6085 = vadd.xlane.f32.xlu0 %v6080
        %v6086 = vpop.xlane.xlu0 %6085
        %v6087 = vmul.f32 %v6084, %v3610
        %v6088 = vmul.f32 %v6086, %v3610
        %v6089 = vsub.f32 %v6079, %v6087
        %v6090 = vsub.f32 %v6080, %v6088
        %v6091 = vmul.f32 %v6089, %v6089
        %v6092 = vmul.f32 %v6090, %v6090
        %6093 = vadd.xlane.f32.xlu0 %v6091
        %v6094 = vpop.xlane.xlu0 %6093
        %6095 = vadd.xlane.f32.xlu0 %v6092
        %v6096 = vpop.xlane.xlu0 %6095
        %v6097 = vmul.f32 %v6094, %v3610
        %v6098 = vmul.f32 %v6096, %v3610
        %v6099 = vadd.f32 %v6097, 1e-05
        %v6100 = vadd.f32 %v6098, 1e-05
        %v6101 = vrsqrt.pop %v6099
        %v6102 = vrsqrt.pop %v6100
        %v6103 = vmul.f32 %v6089, %v6101
        %v6104 = vmul.f32 %v6090, %v6102
        %v6106 = vlaneseq
        %v6107 = vshrl.u32 %v6106, 7
        %v6108 = vsub.s32 0, %v6107
        %v6109 = vrot.slane %v6081, %v6108
        %v6111 = vmul.f32 %v6103, %v6109
        %v6112 = vmul.f32 %v6104, %v6109
        %v6114 = vlaneseq
        %v6115 = vshrl.u32 %v6114, 7
        %v6116 = vsub.s32 0, %v6115
        %v6117 = vrot.slane %v6082, %v6116
        %v6119 = vadd.f32 %v6111, %v6117
        %v6120 = vadd.f32 %v6112, %v6117
        %v6121 = vld [vmem:[%s1131] sm:$0xff]
        %v6122 = vld [vmem:[%s1131 + $0x8] sm:$0xff]
        %v6123 = vld [vmem:[%s1131 + $0x10] sm:$0xff]
        %v6124 = vld [vmem:[%s1131 + $0x18] sm:$0xff]
        %v6125 = vld [vmem:[%s1131 + $0x20] sm:$0xff]
        %v6126 = vld [vmem:[%s1131 + $0x28] sm:$0xff]
        %v6127 = vld [vmem:[%s1131 + $0x30] sm:$0xff]
        %v6128 = vld [vmem:[%s1131 + $0x38] sm:$0xff]
        %v6129 = vld [vmem:[%s1131 + $0x40] sm:$0xff]
        %v6130 = vld [vmem:[%s1131 + $0x48] sm:$0xff]
        %v6131 = vld [vmem:[%s1131 + $0x50] sm:$0xff]
        %v6132 = vld [vmem:[%s1131 + $0x58] sm:$0xff]
        %v6133 = vld [vmem:[%s1131 + $0x60] sm:$0xff]
        %v6134 = vld [vmem:[%s1131 + $0x68] sm:$0xff]
        %v6135 = vld [vmem:[%s1131 + $0x70] sm:$0xff]
        %v6136 = vld [vmem:[%s1131 + $0x78] sm:$0xff]
        %v6137 = vld [vmem:[%s1135] sm:$0x3]
        %v6138 = vld [vmem:[%s947] sm:$0xf]
        %v6139 = vld [vmem:[%s947 + $0x4] sm:$0xf]
        %v6140 = vld [vmem:[%s947 + $0x8] sm:$0xf]
        %v6141 = vld [vmem:[%s947 + $0xc] sm:$0xf]
        %v6142 = vld [vmem:[%s947 + $0x10] sm:$0xf]
        %v6143 = vld [vmem:[%s947 + $0x14] sm:$0xf]
        %v6144 = vld [vmem:[%s947 + $0x18] sm:$0xf]
        %v6145 = vld [vmem:[%s947 + $0x1c] sm:$0xf]
        %v6146 = vld [vmem:[%s947 + $0x20] sm:$0xf]
        %v6147 = vld [vmem:[%s947 + $0x24] sm:$0xf]
        %v6148 = vld [vmem:[%s947 + $0x28] sm:$0xf]
        %v6149 = vld [vmem:[%s947 + $0x2c] sm:$0xf]
        %v6150 = vld [vmem:[%s947 + $0x30] sm:$0xf]
        %v6151 = vld [vmem:[%s947 + $0x34] sm:$0xf]
        %v6152 = vld [vmem:[%s947 + $0x38] sm:$0xf]
        %v6153 = vld [vmem:[%s947 + $0x3c] sm:$0xf]
        %v6154 = vld [vmem:[%s947 + $0x40] sm:$0xf]
        %v6155 = vld [vmem:[%s947 + $0x44] sm:$0xf]
        %v6156 = vld [vmem:[%s947 + $0x48] sm:$0xf]
        %v6157 = vld [vmem:[%s947 + $0x4c] sm:$0xf]
        %v6158 = vld [vmem:[%s947 + $0x50] sm:$0xf]
        %v6159 = vld [vmem:[%s947 + $0x54] sm:$0xf]
        %v6160 = vld [vmem:[%s947 + $0x58] sm:$0xf]
        %v6161 = vld [vmem:[%s947 + $0x5c] sm:$0xf]
        %v6162 = vld [vmem:[%s947 + $0x60] sm:$0xf]
        %v6163 = vld [vmem:[%s947 + $0x64] sm:$0xf]
        %v6164 = vld [vmem:[%s947 + $0x68] sm:$0xf]
        %v6165 = vld [vmem:[%s947 + $0x6c] sm:$0xf]
        %v6166 = vld [vmem:[%s947 + $0x70] sm:$0xf]
        %v6167 = vld [vmem:[%s947 + $0x74] sm:$0xf]
        %v6168 = vld [vmem:[%s947 + $0x78] sm:$0xf]
        %v6169 = vld [vmem:[%s947 + $0x7c] sm:$0xf]
        %v6170 = vld [vmem:[%s1138] sm:$0x1]
        %v6171 = vpack.c.bf16 %v6120, %v6119
        %v6173 = vlaneseq
        %v6174 = vshrl.u32 %v6173, 7
        %v6175 = vsub.s32 0, %v6174
        %v6176 = vrot.slane %v6137, %v6175
        %v6177 = vlaneseq
        %v6178 = vshrl.u32 %v6177, 7
        %v6179 = vsub.s32 1, %v6178
        %v6180 = vrot.slane %v6137, %v6179
        %v6199 = vunpack.c.l.b16 %v6121
        %v6200 = vunpack.c.h.b16 %v6121
        %v6201 = vunpack.c.l.b16 %v6122
        %v6202 = vunpack.c.h.b16 %v6122
        %v6203 = vunpack.c.l.b16 %v6123
        %v6204 = vunpack.c.h.b16 %v6123
        %v6205 = vunpack.c.l.b16 %v6124
        %v6206 = vunpack.c.h.b16 %v6124
        %v6207 = vunpack.c.l.b16 %v6125
        %v6208 = vunpack.c.h.b16 %v6125
        %v6209 = vunpack.c.l.b16 %v6126
        %v6210 = vunpack.c.h.b16 %v6126
        %v6211 = vunpack.c.l.b16 %v6127
        %v6212 = vunpack.c.h.b16 %v6127
        %v6213 = vunpack.c.l.b16 %v6128
        %v6214 = vunpack.c.h.b16 %v6128
        %v6215 = vunpack.c.l.b16 %v6129
        %v6216 = vunpack.c.h.b16 %v6129
        %v6217 = vunpack.c.l.b16 %v6130
        %v6218 = vunpack.c.h.b16 %v6130
        %v6219 = vunpack.c.l.b16 %v6131
        %v6220 = vunpack.c.h.b16 %v6131
        %v6221 = vunpack.c.l.b16 %v6132
        %v6222 = vunpack.c.h.b16 %v6132
        %v6223 = vunpack.c.l.b16 %v6133
        %v6224 = vunpack.c.h.b16 %v6133
        %v6225 = vunpack.c.l.b16 %v6134
        %v6226 = vunpack.c.h.b16 %v6134
        %v6227 = vunpack.c.l.b16 %v6135
        %v6228 = vunpack.c.h.b16 %v6135
        %v6229 = vunpack.c.l.b16 %v6136
        %v6230 = vunpack.c.h.b16 %v6136
        %v6231 = vpack.c.b16 %v6201, %v6199
        %v6232 = vpack.c.b16 %v6202, %v6200
        %v6233 = vpack.c.b16 %v6205, %v6203
        %v6234 = vpack.c.b16 %v6206, %v6204
        %v6235 = vpack.c.b16 %v6209, %v6207
        %v6236 = vpack.c.b16 %v6210, %v6208
        %v6237 = vpack.c.b16 %v6213, %v6211
        %v6238 = vpack.c.b16 %v6214, %v6212
        %v6239 = vpack.c.b16 %v6217, %v6215
        %v6240 = vpack.c.b16 %v6218, %v6216
        %v6241 = vpack.c.b16 %v6221, %v6219
        %v6242 = vpack.c.b16 %v6222, %v6220
        %v6243 = vpack.c.b16 %v6225, %v6223
        %v6244 = vpack.c.b16 %v6226, %v6224
        %v6245 = vpack.c.b16 %v6229, %v6227
        %v6246 = vpack.c.b16 %v6230, %v6228
        %6263 = vmatprep.subr.bf16.mxu0 %v6246
        %6264 = vmatpush1.bf16.msra.mxu0 %v6245
        %6265 = vmatprep.subr.bf16.mxu0 %v6244
        %6266 = vmatpush1.bf16.msra.mxu0 %v6243
        %6267 = vmatprep.subr.bf16.mxu0 %v6242
        %6268 = vmatpush1.bf16.msra.mxu0 %v6241
        %6269 = vmatprep.subr.bf16.mxu0 %v6240
        %6270 = vmatpush1.bf16.msra.mxu0 %v6239
        %6271 = vmatprep.subr.bf16.mxu0 %v6238
        %6272 = vmatpush1.bf16.msra.mxu0 %v6237
        %6273 = vmatprep.subr.bf16.mxu0 %v6236
        %6274 = vmatpush1.bf16.msra.mxu0 %v6235
        %6275 = vmatprep.subr.bf16.mxu0 %v6234
        %6276 = vmatpush1.bf16.msra.mxu0 %v6233
        %6277 = vmatprep.subr.bf16.mxu0 %v6232
        %6278 = vmatpush1.bf16.msra.mxu0 %v6231
        %6279 = vmatprep.subr.bf16.mxu0 0
        %6280 = vmatpush2.bf16.msra.mxu0 0
        %6281 = vmatprep.subr.bf16.mxu0 0
        %6282 = vmatpush2.bf16.msra.mxu0 0
        %6283 = vmatprep.subr.bf16.mxu0 0
        %6284 = vmatpush2.bf16.msra.mxu0 0
        %6285 = vmatprep.subr.bf16.mxu0 0
        %6286 = vmatpush2.bf16.msra.mxu0 0
        %6287 = vmatprep.subr.bf16.mxu0 0
        %6288 = vmatpush2.bf16.msra.mxu0 0
        %6289 = vmatprep.subr.bf16.mxu0 0
        %6290 = vmatpush2.bf16.msra.mxu0 0
        %6291 = vmatprep.subr.bf16.mxu0 0
        %6292 = vmatpush2.bf16.msra.mxu0 0
        %6293 = vmatprep.subr.bf16.mxu0 0
        %6294 = vmatpush2.bf16.msra.mxu0 0
        %6295 = vmatprep.mubr.bf16.mxu0 0
        %6296 = vmatmul.mubr.bf16.gmra.mxu0 %v6171
        %v6297 = vpop.f32.mrf.mxu0
        %v6298 = vadd.f32 %v6176, %v6297
        %v6299 = vpop.f32.mrf.mxu0
        %v6300 = vadd.f32 %v6180, %v6299
        %v6301 = vpop.f32.mrf.mxu0
        %v6302 = vadd.f32 %v6176, %v6301
        %v6303 = vpop.f32.mrf.mxu0
        %v6304 = vadd.f32 %v6180, %v6303
        %6305 = vdwg.mxu0
        %v6306 = vmax.f32 %v6298, 0.0
        %v6307 = vmax.f32 %v6300, 0.0
        %v6308 = vmax.f32 %v6302, 0.0
        %v6309 = vmax.f32 %v6304, 0.0
        %v6310 = vpack.c.bf16 %v6308, %v6306
        %v6311 = vpack.c.bf16 %v6309, %v6307
        %v6313 = vlaneseq
        %v6314 = vshrl.u32 %v6313, 7
        %v6315 = vsub.s32 0, %v6314
        %v6316 = vrot.slane %v6170, %v6315
        %v6350 = vunpack.c.l.b16 %v6138
        %v6351 = vunpack.c.l.b16 %v6139
        %v6352 = vunpack.c.l.b16 %v6140
        %v6353 = vunpack.c.l.b16 %v6141
        %v6354 = vunpack.c.l.b16 %v6142
        %v6355 = vunpack.c.l.b16 %v6143
        %v6356 = vunpack.c.l.b16 %v6144
        %v6357 = vunpack.c.l.b16 %v6145
        %v6358 = vunpack.c.l.b16 %v6146
        %v6359 = vunpack.c.l.b16 %v6147
        %v6360 = vunpack.c.l.b16 %v6148
        %v6361 = vunpack.c.l.b16 %v6149
        %v6362 = vunpack.c.l.b16 %v6150
        %v6363 = vunpack.c.l.b16 %v6151
        %v6364 = vunpack.c.l.b16 %v6152
        %v6365 = vunpack.c.l.b16 %v6153
        %v6366 = vunpack.c.l.b16 %v6154
        %v6367 = vunpack.c.l.b16 %v6155
        %v6368 = vunpack.c.l.b16 %v6156
        %v6369 = vunpack.c.l.b16 %v6157
        %v6370 = vunpack.c.l.b16 %v6158
        %v6371 = vunpack.c.l.b16 %v6159
        %v6372 = vunpack.c.l.b16 %v6160
        %v6373 = vunpack.c.l.b16 %v6161
        %v6374 = vunpack.c.l.b16 %v6162
        %v6375 = vunpack.c.l.b16 %v6163
        %v6376 = vunpack.c.l.b16 %v6164
        %v6377 = vunpack.c.l.b16 %v6165
        %v6378 = vunpack.c.l.b16 %v6166
        %v6379 = vunpack.c.l.b16 %v6167
        %v6380 = vunpack.c.l.b16 %v6168
        %v6381 = vunpack.c.l.b16 %v6169
        %v6382 = vpack.c.b16 %v6351, %v6350
        %v6383 = vpack.c.b16 %v6353, %v6352
        %v6384 = vpack.c.b16 %v6355, %v6354
        %v6385 = vpack.c.b16 %v6357, %v6356
        %v6386 = vpack.c.b16 %v6359, %v6358
        %v6387 = vpack.c.b16 %v6361, %v6360
        %v6388 = vpack.c.b16 %v6363, %v6362
        %v6389 = vpack.c.b16 %v6365, %v6364
        %v6390 = vpack.c.b16 %v6367, %v6366
        %v6391 = vpack.c.b16 %v6369, %v6368
        %v6392 = vpack.c.b16 %v6371, %v6370
        %v6393 = vpack.c.b16 %v6373, %v6372
        %v6394 = vpack.c.b16 %v6375, %v6374
        %v6395 = vpack.c.b16 %v6377, %v6376
        %v6396 = vpack.c.b16 %v6379, %v6378
        %v6397 = vpack.c.b16 %v6381, %v6380
        %6414 = vmatprep.subr.bf16.mxu0 0
        %6415 = vmatpush1.bf16.msra.mxu0 %v6389
        %6416 = vmatprep.subr.bf16.mxu0 0
        %6417 = vmatpush1.bf16.msra.mxu0 %v6388
        %6418 = vmatprep.subr.bf16.mxu0 0
        %6419 = vmatpush1.bf16.msra.mxu0 %v6387
        %6420 = vmatprep.subr.bf16.mxu0 0
        %6421 = vmatpush1.bf16.msra.mxu0 %v6386
        %6422 = vmatprep.subr.bf16.mxu0 0
        %6423 = vmatpush1.bf16.msra.mxu0 %v6385
        %6424 = vmatprep.subr.bf16.mxu0 0
        %6425 = vmatpush1.bf16.msra.mxu0 %v6384
        %6426 = vmatprep.subr.bf16.mxu0 0
        %6427 = vmatpush1.bf16.msra.mxu0 %v6383
        %6428 = vmatprep.subr.bf16.mxu0 0
        %6429 = vmatpush1.bf16.msra.mxu0 %v6382
        %6430 = vmatprep.subr.bf16.mxu0 0
        %6431 = vmatpush2.bf16.msra.mxu0 %v6397
        %6432 = vmatprep.subr.bf16.mxu0 0
        %6433 = vmatpush2.bf16.msra.mxu0 %v6396
        %6434 = vmatprep.subr.bf16.mxu0 0
        %6435 = vmatpush2.bf16.msra.mxu0 %v6395
        %6436 = vmatprep.subr.bf16.mxu0 0
        %6437 = vmatpush2.bf16.msra.mxu0 %v6394
        %6438 = vmatprep.subr.bf16.mxu0 0
        %6439 = vmatpush2.bf16.msra.mxu0 %v6393
        %6440 = vmatprep.subr.bf16.mxu0 0
        %6441 = vmatpush2.bf16.msra.mxu0 %v6392
        %6442 = vmatprep.subr.bf16.mxu0 0
        %6443 = vmatpush2.bf16.msra.mxu0 %v6391
        %6444 = vmatprep.subr.bf16.mxu0 0
        %6445 = vmatpush2.bf16.msra.mxu0 %v6390
        %6446 = vmatprep.mubr.bf16.mxu0 %v6311
        %6447 = vmatmul.mubr.bf16.gmra.mxu0 %v6310
        %v6448 = vpop.f32.mrf.mxu0
        %v6449 = vadd.f32 %v6316, %v6448
        %v6450 = vpop.f32.mrf.mxu0
        %v6451 = vpop.f32.mrf.mxu0
        %v6452 = vadd.f32 %v6316, %v6451
        %v6453 = vpop.f32.mrf.mxu0
        %6454 = vdwg.mxu0
        %v6455 = vadd.f32 %v6119, %v6449
        %v6456 = vadd.f32 %v6120, %v6452
        %v6457 = vld [vmem:[%s1141] sm:$0x1]
        %v6458 = vld [vmem:[%s1144] sm:$0x1]
        %6459 = vadd.xlane.f32.xlu0 %v6455
        %v6460 = vpop.xlane.xlu0 %6459
        %6461 = vadd.xlane.f32.xlu0 %v6456
        %v6462 = vpop.xlane.xlu0 %6461
        %v6463 = vmul.f32 %v6460, %v3610
        %v6464 = vmul.f32 %v6462, %v3610
        %v6465 = vsub.f32 %v6455, %v6463
        %v6466 = vsub.f32 %v6456, %v6464
        %v6467 = vmul.f32 %v6465, %v6465
        %v6468 = vmul.f32 %v6466, %v6466
        %6469 = vadd.xlane.f32.xlu0 %v6467
        %v6470 = vpop.xlane.xlu0 %6469
        %6471 = vadd.xlane.f32.xlu0 %v6468
        %v6472 = vpop.xlane.xlu0 %6471
        %v6473 = vmul.f32 %v6470, %v3610
        %v6474 = vmul.f32 %v6472, %v3610
        %v6475 = vadd.f32 %v6473, 1e-05
        %v6476 = vadd.f32 %v6474, 1e-05
        %v6477 = vrsqrt.pop %v6475
        %v6478 = vrsqrt.pop %v6476
        %v6479 = vmul.f32 %v6465, %v6477
        %v6480 = vmul.f32 %v6466, %v6478
        %v6482 = vlaneseq
        %v6483 = vshrl.u32 %v6482, 7
        %v6484 = vsub.s32 0, %v6483
        %v6485 = vrot.slane %v6457, %v6484
        %v6487 = vmul.f32 %v6479, %v6485
        %v6488 = vmul.f32 %v6480, %v6485
        %v6490 = vlaneseq
        %v6491 = vshrl.u32 %v6490, 7
        %v6492 = vsub.s32 0, %v6491
        %v6493 = vrot.slane %v6458, %v6492
        %v6495 = vadd.f32 %v6487, %v6493
        %v6496 = vadd.f32 %v6488, %v6493
        %6497 = vst [vmem:[%s26] sm:$0xff] %v6495
        %6498 = vst [vmem:[%s26 + $0x8] sm:$0xff] %v6496
        %p6499 = scmp.eq.s32.totalorder %s43, 1
        // Predicated region
        $region141: #{forward.4} parent=123 // pred_check
          %p6500 = pneg %p6499
        $region142: #{forward.4} parent=123 // pred_check_branch
          %6502 = sbr.rel (%p6500) target = $region144
        $region143: #{forward.4} parent=123 // pred_region
          %v6503 = vld [vmem:[%s24] sm:$0x1]
          %v6504 = vld [vmem:[%s25] sm:$0x1]
          %6505 = vadd.xlane.f32.xlu0 %v6495
          %v6506 = vpop.xlane.xlu0 %6505
          %6507 = vadd.xlane.f32.xlu0 %v6496
          %v6508 = vpop.xlane.xlu0 %6507
          %v6509 = vmul.f32 %v6506, %v3610
          %v6510 = vmul.f32 %v6508, %v3610
          %v6511 = vsub.f32 %v6495, %v6509
          %v6512 = vsub.f32 %v6496, %v6510
          %v6513 = vmul.f32 %v6511, %v6511
          %v6514 = vmul.f32 %v6512, %v6512
          %6515 = vadd.xlane.f32.xlu0 %v6513
          %v6516 = vpop.xlane.xlu0 %6515
          %6517 = vadd.xlane.f32.xlu0 %v6514
          %v6518 = vpop.xlane.xlu0 %6517
          %v6519 = vmul.f32 %v6516, %v3610
          %v6520 = vmul.f32 %v6518, %v3610
          %v6521 = vadd.f32 %v6519, 1e-05
          %v6522 = vadd.f32 %v6520, 1e-05
          %v6523 = vrsqrt.pop %v6521
          %v6524 = vrsqrt.pop %v6522
          %v6525 = vmul.f32 %v6511, %v6523
          %v6526 = vmul.f32 %v6512, %v6524
          %v6528 = vlaneseq
          %v6529 = vshrl.u32 %v6528, 7
          %v6530 = vsub.s32 0, %v6529
          %v6531 = vrot.slane %v6503, %v6530
          %v6533 = vmul.f32 %v6525, %v6531
          %v6534 = vmul.f32 %v6526, %v6531
          %v6536 = vlaneseq
          %v6537 = vshrl.u32 %v6536, 7
          %v6538 = vsub.s32 0, %v6537
          %v6539 = vrot.slane %v6504, %v6538
          %v6541 = vadd.f32 %v6533, %v6539
          %v6542 = vadd.f32 %v6534, %v6539
          %6543 = vst [vmem:[%s26] sm:$0xff] %v6541
          %6544 = vst [vmem:[%s26 + $0x8] sm:$0xff] %v6542
        $region144: #{forward.4} parent=123 // pred_fallthru
          _
        // Predicated region
        $region145: #{forward.4} parent=123 // pred_check
          %p6545 = pneg %p702
        $region146: #{forward.4} parent=123 // pred_check_branch
          %6547 = sbr.rel (%p6545) target = $region148
        $region147: #{forward.4} parent=123 // pred_region
          _
        $region148: #{forward.4} parent=123 // pred_fallthru
          _
        // Predicated region
        $region149: #{forward.4} parent=123 // pred_check
          %p6548 = pneg %p702
        $region150: #{forward.4} parent=123 // pred_check_branch
          %6550 = sbr.rel (%p6548) target = $region152
        $region151: #{forward.4} parent=123 // pred_region
          _
        $region152: #{forward.4} parent=123 // pred_fallthru
          _
      $region124: #{forward.4} parent=5 // pred_fallthru
        _
      %p6551 = scmp.le.s32.totalorder 2, %s38
      // Predicated region
      $region153: #{forward.4} parent=5 // pred_check
        %p6552 = pneg %p6551
      $region154: #{forward.4} parent=5 // pred_check_branch
        %6554 = sbr.rel (%p6552) target = $region156
      $region155: #{forward.4} parent=5 // pred_region
        %s6555 = ssub.s32 %s38, 2
      $region156: #{forward.4} parent=5 // pred_fallthru
        _
    $region6: #{forward.4} parent=1 // loop_footer
      %s42 = sadd.s32 1, %s38
    $region7: #{forward.4} parent=1 // loop_footer_branch
      %37 = sbr.rel target = $region3
    $region8: #{forward.4} parent=1 // loop_exit
      _
    %6556 = vsyncpa [#allocation3], 1
    %s6557 = scalar_lea.sflag [#allocation3], 1
    %6558 = vsyncpa %s6557, 1
    %6559 = vsyncpa [#allocation5], 1
    %s6560 = scalar_lea.sflag [#allocation5], 1
    %6561 = vsyncpa %s6560, 1

</llo_original>
